<compile_context>
chip_gen: v6e
topology: v6e:2x2x1
jax: 0.10.0
libtpu: 0.0.40
codegen_flags: <defaults>
</compile_context>

<pallas_src>
import functools

import jax
import jax.numpy as jnp
from jax import lax
from jax.experimental import pallas as pl
from jax.experimental.pallas import tpu as pltpu


def _enc_block_kernel(x_ref,
                      w0_ref, b0_ref,
                      w1a_ref, b1a_ref, w1b_ref, b1b_ref,
                      w2a_ref, b2a_ref, w2b_ref, b2b_ref,
                      feat_ref, pool_ref,
                      pad_in, pad_nf, m1_ref,
                      *, H, W):
    HW = H * W
    Wh = W // 2
    base = W + 8  # aligned interior start (W % 8 == 0) with >= W+1 zero halo rows each side

    # Column index of every flattened spatial position; zeroes the conv taps that
    # would otherwise wrap around a row boundary in the flat layout.
    col = lax.broadcasted_iota(jnp.int32, (HW, 1), 0) % W
    at_w_first = col == 0
    at_w_last = col == (W - 1)

    def conv3x3(act, pad_ref, w_ref, b_ref):
        # act: (HW, Cin) f32 ; w_ref: (9*Cin, Cout) bf16 ; b_ref: (1, Cout) f32
        pad_ref[base:base + HW, :] = act          # aligned interior store
        patches = []
        for oy in (-1, 0, 1):
            for ox in (-1, 0, 1):
                if oy == 0 and ox == 0:
                    patch = act
                else:
                    start = base + oy * W + ox    # oy shifts stay sublane-aligned
                    patch = pad_ref[start:start + HW, :]
                if ox == -1:
                    patch = jnp.where(at_w_first, 0.0, patch)
                elif ox == 1:
                    patch = jnp.where(at_w_last, 0.0, patch)
                patches.append(patch)
        # im2col slab: one MXU dot per conv (K = 9*Cin) instead of 9 K=Cin dots.
        slab = jnp.concatenate(patches, axis=-1).astype(jnp.bfloat16)
        acc = jnp.dot(slab, w_ref[...], preferred_element_type=jnp.float32)
        return acc + b_ref[...]

    # Zero the padded scratch once per step; only halo rows are relied on afterwards
    # (the interior is fully rewritten by every conv).  Not gated on program_id so the
    # kernel stays correct when the parallel batch axis is sharded across cores.
    pad_in[...] = jnp.zeros(pad_in.shape, pad_in.dtype)
    pad_nf[...] = jnp.zeros(pad_nf.shape, pad_nf.dtype)

    x = x_ref[...].astype(jnp.float32)

    # head Conv2d(input_nc -> nf, k=3, pad=1)
    h = conv3x3(x, pad_in, w0_ref, b0_ref)

    # ResnetBlock 1: h + conv(relu(conv(h)))
    t = jnp.maximum(conv3x3(h, pad_nf, w1a_ref, b1a_ref), 0.0)
    h = h + conv3x3(t, pad_nf, w1b_ref, b1b_ref)

    # ResnetBlock 2
    t = jnp.maximum(conv3x3(h, pad_nf, w2a_ref, b2a_ref), 0.0)
    h = h + conv3x3(t, pad_nf, w2b_ref, b2b_ref)

    # trailing ReLU -> first output
    feat = jnp.maximum(h, 0.0)
    feat_ref[...] = feat.astype(feat_ref.dtype)

    # MaxPool2d(2, 2) without the one-hot gather matmul:
    #  stage 1: horizontal pairs via stride-2 sublane reads of the feat block,
    #  stage 2: vertical pairs via aligned row-block windows (W/2 rows each).
    a = feat_ref[pl.ds(0, HW // 2, stride=2), :]   # (h, even w)
    b = feat_ref[pl.ds(1, HW // 2, stride=2), :]   # (h, odd w)
    m1_ref[...] = jnp.maximum(a, b)                # row r = h*(W/2) + j
    for i in range(H // 2):                        # small static unrolled loop
        top = m1_ref[(2 * i) * Wh:(2 * i + 1) * Wh, :]
        bot = m1_ref[(2 * i + 1) * Wh:(2 * i + 2) * Wh, :]
        pool_ref[i * Wh:(i + 1) * Wh, :] = jnp.maximum(top, bot)


def enc_block_pallas(x_nchw, params):
    """x_nchw: (N, Cin, H, W) float32 -> (feat NCHW, pooled NCHW)."""
    N, Cin, H, W = x_nchw.shape
    nf = params["b0"].shape[-1]
    assert W % 8 == 0 and H % 2 == 0 and W % 2 == 0, \
        "kernel assumes even H, even W and W % 8 == 0"
    HW = H * W
    HWq = (H // 2) * (W // 2)
    PADR = HW + 2 * W + 16  # aligned interior at base=W+8 with zero halos either side

    # glue: NCHW -> (N, H*W, C)
    x_flat = jnp.transpose(x_nchw, (0, 2, 3, 1)).reshape(N, HW, Cin)

    def full_spec(arr):
        nd = arr.ndim
        return pl.BlockSpec(arr.shape, lambda b, _nd=nd: (0,) * _nd)

    kernel = functools.partial(_enc_block_kernel, H=H, W=W)

    feat_flat, pool_flat = pl.pallas_call(
        kernel,
        out_shape=(
            jax.ShapeDtypeStruct((N, HW, nf), jnp.float32),
            jax.ShapeDtypeStruct((N, HWq, nf), jnp.float32),
        ),
        grid_spec=pltpu.PrefetchScalarGridSpec(
            num_scalar_prefetch=0,
            grid=(N,),
            in_specs=[
                pl.BlockSpec((None, HW, Cin), lambda b: (b, 0, 0)),
                full_spec(params["w0"]), full_spec(params["b0"]),
                full_spec(params["w1a"]), full_spec(params["b1a"]),
                full_spec(params["w1b"]), full_spec(params["b1b"]),
                full_spec(params["w2a"]), full_spec(params["b2a"]),
                full_spec(params["w2b"]), full_spec(params["b2b"]),
            ],
            out_specs=(
                pl.BlockSpec((None, HW, nf), lambda b: (b, 0, 0)),
                pl.BlockSpec((None, HWq, nf), lambda b: (b, 0, 0)),
            ),
            scratch_shapes=[
                pltpu.VMEM((PADR, Cin), jnp.float32),   # zero-padded conv buffer (input width)
                pltpu.VMEM((PADR, nf), jnp.float32),    # zero-padded conv buffer (nf width)
                pltpu.VMEM((HW // 2, nf), jnp.float32),  # horizontal-pool intermediate
            ],
        ),
        compiler_params=pltpu.CompilerParams(
            dimension_semantics=("parallel",)),  # batch elements independent (v7x 2 cores)
    )(x_flat,
      params["w0"], params["b0"],
      params["w1a"], params["b1a"], params["w1b"], params["b1b"],
      params["w2a"], params["b2a"], params["w2b"], params["b2b"])

    feat = jnp.transpose(feat_flat.reshape(N, H, W, nf), (0, 3, 1, 2))
    pooled = jnp.transpose(pool_flat.reshape(N, H // 2, W // 2, nf), (0, 3, 1, 2))
    return feat, pooled


def init_params_pt(key, input_nc, nf, scale=0.1):
    """Deterministic synthetic params in PyTorch layout: Conv2d weight (Cout,Cin,3,3), bias (Cout,)."""
    names_shapes = [
        ("w0", (nf, input_nc, 3, 3)), ("b0", (nf,)),
        ("w1a", (nf, nf, 3, 3)), ("b1a", (nf,)),
        ("w1b", (nf, nf, 3, 3)), ("b1b", (nf,)),
        ("w2a", (nf, nf, 3, 3)), ("b2a", (nf,)),
        ("w2b", (nf, nf, 3, 3)), ("b2b", (nf,)),
    ]
    keys = jax.random.split(key, len(names_shapes))
    return {n: scale * jax.random.normal(k, s, jnp.float32)
            for (n, s), k in zip(names_shapes, keys)}


def to_kernel_layout(pt):
    """Fuse conv weights for the im2col matmul and cast MXU operands to bf16."""
    out = {}
    for n, v in pt.items():
        if v.ndim == 4:
            # (Cout, Cin, 3, 3) -> (9*Cin, Cout); row index = (ky*3+kx)*Cin + ci,
            # matching the kernel's (oy, ox)-major / channel-minor patch concatenation.
            cout, cin = v.shape[0], v.shape[1]
            out[n] = (jnp.transpose(v, (2, 3, 1, 0))
                      .reshape(9 * cin, cout)
                      .astype(jnp.bfloat16))
        else:  # (Cout,) -> (1, Cout), bias stays f32
            out[n] = v.reshape(1, -1).astype(jnp.float32)
    return out


def enc_block_ref(x, pt):
    """Plain-JAX reference of the PyTorch forward (NCHW, full f32 precision)."""
    def conv(y, w, b):
        z = lax.conv_general_dilated(
            y, w, window_strides=(1, 1), padding=((1, 1), (1, 1)),
            dimension_numbers=("NCHW", "OIHW", "NCHW"),
            precision=lax.Precision.HIGHEST)
        return z + b[None, :, None, None]

    h = conv(x, pt["w0"], pt["b0"])
    h = h + conv(jax.nn.relu(conv(h, pt["w1a"], pt["b1a"])), pt["w1b"], pt["b1b"])
    h = h + conv(jax.nn.relu(conv(h, pt["w2a"], pt["b2a"])), pt["w2b"], pt["b2b"])
    feat = jax.nn.relu(h)
    pooled = lax.reduce_window(feat, -jnp.inf, lax.max,
                               (1, 1, 2, 2), (1, 1, 2, 2), "VALID")
    return feat, pooled


if __name__ == "__main__":
    key = jax.random.PRNGKey(0)
    k_x, k_p = jax.random.split(key)
    N, Cin, H, W, nf = 2, 4, 16, 16, 8

    x = jax.random.normal(k_x, (N, Cin, H, W), jnp.float32)
    pt_params = init_params_pt(k_p, Cin, nf)
    k_params = to_kernel_layout(pt_params)

    feat, pooled = enc_block_pallas(x, k_params)
    jax.block_until_ready((feat, pooled))

    feat_r, pooled_r = enc_block_ref(x, pt_params)
    assert feat.shape == (N, nf, H, W) and pooled.shape == (N, nf, H // 2, W // 2)
    # Kernel uses bf16 MXU operands (f32 accumulation); reference is full f32,
    # so tolerance is set for bf16 rounding through the 6-conv chain.
    assert jnp.allclose(feat, feat_r, atol=4e-2, rtol=4e-2), \
        float(jnp.max(jnp.abs(feat - feat_r)))
    assert jnp.allclose(pooled, pooled_r, atol=4e-2, rtol=4e-2), \
        float(jnp.max(jnp.abs(pooled - pooled_r)))
    print("KERNEL_OK")
</pallas_src>

<mosaic_0001>
module attributes {stable_mosaic.version = 11 : i64} {
  func.func @_enc_block_kernel(%arg0: i32, %arg1: memref<1x256x4xf32, #tpu.memory_space<vmem>>, %arg2: memref<36x8xbf16, #tpu.memory_space<vmem>>, %arg3: memref<1x8xf32, #tpu.memory_space<vmem>>, %arg4: memref<72x8xbf16, #tpu.memory_space<vmem>>, %arg5: memref<1x8xf32, #tpu.memory_space<vmem>>, %arg6: memref<72x8xbf16, #tpu.memory_space<vmem>>, %arg7: memref<1x8xf32, #tpu.memory_space<vmem>>, %arg8: memref<72x8xbf16, #tpu.memory_space<vmem>>, %arg9: memref<1x8xf32, #tpu.memory_space<vmem>>, %arg10: memref<72x8xbf16, #tpu.memory_space<vmem>>, %arg11: memref<1x8xf32, #tpu.memory_space<vmem>>, %arg12: memref<1x256x8xf32, #tpu.memory_space<vmem>>, %arg13: memref<1x64x8xf32, #tpu.memory_space<vmem>>, %arg14: memref<304x4xf32, #tpu.memory_space<vmem>>, %arg15: memref<304x8xf32, #tpu.memory_space<vmem>>, %arg16: memref<128x8xf32, #tpu.memory_space<vmem>>) attributes {dimension_semantics = [#tpu.dimension_semantics<parallel>], iteration_bounds = array<i64: 2>, scalar_prefetch = 0 : i64, scratch_operands = 3 : i64, tpu.core_type = #tpu.core_type<tc>, window_params = [{transform_indices = @transform_0, window_bounds = array<i64: 1, 256, 4>}, {pipeline_mode = #tpu.pipeline_mode<synchronous>, transform_indices = @transform_1, window_bounds = array<i64: 36, 8>}, {pipeline_mode = #tpu.pipeline_mode<synchronous>, transform_indices = @transform_2, window_bounds = array<i64: 1, 8>}, {pipeline_mode = #tpu.pipeline_mode<synchronous>, transform_indices = @transform_3, window_bounds = array<i64: 72, 8>}, {pipeline_mode = #tpu.pipeline_mode<synchronous>, transform_indices = @transform_4, window_bounds = array<i64: 1, 8>}, {pipeline_mode = #tpu.pipeline_mode<synchronous>, transform_indices = @transform_5, window_bounds = array<i64: 72, 8>}, {pipeline_mode = #tpu.pipeline_mode<synchronous>, transform_indices = @transform_6, window_bounds = array<i64: 1, 8>}, {pipeline_mode = #tpu.pipeline_mode<synchronous>, transform_indices = @transform_7, window_bounds = array<i64: 72, 8>}, {pipeline_mode = #tpu.pipeline_mode<synchronous>, transform_indices = @transform_8, window_bounds = array<i64: 1, 8>}, {pipeline_mode = #tpu.pipeline_mode<synchronous>, transform_indices = @transform_9, window_bounds = array<i64: 72, 8>}, {pipeline_mode = #tpu.pipeline_mode<synchronous>, transform_indices = @transform_10, window_bounds = array<i64: 1, 8>}, {transform_indices = @transform_11, window_bounds = array<i64: 1, 256, 8>}, {transform_indices = @transform_12, window_bounds = array<i64: 1, 64, 8>}]} {
    %0 = tpu.iota {dimensions = array<i32: 0>} : vector<256x1xi32>
    %c16_i32 = arith.constant 16 : i32
    %c0_i32 = arith.constant 0 : i32
    %1 = arith.cmpi eq, %c16_i32, %c0_i32 : i32
    %c1_i32 = arith.constant 1 : i32
    %2 = arith.select %1, %c1_i32, %c16_i32 : i32
    %3 = vector.broadcast %2 : i32 to vector<256x1xi32>
    %4 = arith.remsi %0, %3 : vector<256x1xi32>
    %c0_i32_0 = arith.constant 0 : i32
    %5 = vector.broadcast %c0_i32_0 : i32 to vector<256x1xi32>
    %6 = arith.cmpi ne, %4, %5 : vector<256x1xi32>
    %c0_i32_1 = arith.constant 0 : i32
    %7 = vector.broadcast %c0_i32_1 : i32 to vector<256x1xi32>
    %8 = arith.cmpi slt, %4, %7 : vector<256x1xi32>
    %c0_i32_2 = arith.constant 0 : i32
    %9 = arith.cmpi slt, %2, %c0_i32_2 : i32
    %10 = vector.broadcast %9 : i1 to vector<256x1xi1>
    %11 = vector.broadcast %10 : vector<256x1xi1> to vector<256x1xi1>
    %12 = arith.xori %8, %11 : vector<256x1xi1>
    %13 = arith.andi %12, %6 : vector<256x1xi1>
    %14 = vector.broadcast %2 : i32 to vector<256x1xi32>
    %15 = arith.addi %4, %14 : vector<256x1xi32>
    %16 = arith.select %13, %15, %4 : vector<256x1xi1>, vector<256x1xi32>
    %c0_i32_3 = arith.constant 0 : i32
    %17 = vector.broadcast %c0_i32_3 : i32 to vector<256x1xi32>
    %18 = arith.cmpi eq, %16, %17 : vector<256x1xi32>
    %c15_i32 = arith.constant 15 : i32
    %19 = vector.broadcast %c15_i32 : i32 to vector<256x1xi32>
    %20 = arith.cmpi eq, %16, %19 : vector<256x1xi32>
    %cst = arith.constant 0.000000e+00 : f32
    %21 = vector.broadcast %cst : f32 to vector<304x4xf32>
    %c0 = arith.constant 0 : index
    %c0_4 = arith.constant 0 : index
    %22 = vector.load %arg14[%c0, %c0_4] : memref<304x4xf32, #tpu.memory_space<vmem>>, vector<304x4xf32>
    tpu.vector_store %arg14[%c0, %c0_4], %21 {strides = array<i32>} : memref<304x4xf32, #tpu.memory_space<vmem>>, vector<304x4xf32>,
    %cst_5 = arith.constant 0.000000e+00 : f32
    %23 = vector.broadcast %cst_5 : f32 to vector<304x8xf32>
    %c0_6 = arith.constant 0 : index
    %c0_7 = arith.constant 0 : index
    %24 = vector.load %arg15[%c0_6, %c0_7] : memref<304x8xf32, #tpu.memory_space<vmem>>, vector<304x8xf32>
    tpu.vector_store %arg15[%c0_6, %c0_7], %23 {strides = array<i32>} : memref<304x8xf32, #tpu.memory_space<vmem>>, vector<304x8xf32>,
    %c0_8 = arith.constant 0 : index
    %c0_9 = arith.constant 0 : index
    %c0_10 = arith.constant 0 : index
    %25 = vector.load %arg1[%c0_8, %c0_9, %c0_10] : memref<1x256x4xf32, #tpu.memory_space<vmem>>, vector<1x256x4xf32>
    %26 = vector.shape_cast %25 : vector<1x256x4xf32> to vector<256x4xf32>
    %c24 = arith.constant 24 : index
    %c0_11 = arith.constant 0 : index
    %27 = vector.load %arg14[%c24, %c0_11] : memref<304x4xf32, #tpu.memory_space<vmem>>, vector<256x4xf32>
    tpu.vector_store %arg14[%c24, %c0_11], %26 {strides = array<i32>} : memref<304x4xf32, #tpu.memory_space<vmem>>, vector<256x4xf32>,
    %c7 = arith.constant 7 : index
    %c0_12 = arith.constant 0 : index
    %28 = vector.load %arg14[%c7, %c0_12] : memref<304x4xf32, #tpu.memory_space<vmem>>, vector<256x4xf32>
    %cst_13 = arith.constant 0.000000e+00 : f32
    %29 = vector.shape_cast %18 : vector<256x1xi1> to vector<256x1xi1>
    %30 = vector.broadcast %29 : vector<256x1xi1> to vector<256x4xi1>
    %31 = vector.broadcast %cst_13 : f32 to vector<256x4xf32>
    %32 = arith.select %30, %31, %28 : vector<256x4xi1>, vector<256x4xf32>
    %c8 = arith.constant 8 : index
    %c0_14 = arith.constant 0 : index
    %33 = vector.load %arg14[%c8, %c0_14] : memref<304x4xf32, #tpu.memory_space<vmem>>, vector<256x4xf32>
    %c9 = arith.constant 9 : index
    %c0_15 = arith.constant 0 : index
    %34 = vector.load %arg14[%c9, %c0_15] : memref<304x4xf32, #tpu.memory_space<vmem>>, vector<256x4xf32>
    %cst_16 = arith.constant 0.000000e+00 : f32
    %35 = vector.shape_cast %20 : vector<256x1xi1> to vector<256x1xi1>
    %36 = vector.broadcast %35 : vector<256x1xi1> to vector<256x4xi1>
    %37 = vector.broadcast %cst_16 : f32 to vector<256x4xf32>
    %38 = arith.select %36, %37, %34 : vector<256x4xi1>, vector<256x4xf32>
    %c23 = arith.constant 23 : index
    %c0_17 = arith.constant 0 : index
    %39 = vector.load %arg14[%c23, %c0_17] : memref<304x4xf32, #tpu.memory_space<vmem>>, vector<256x4xf32>
    %cst_18 = arith.constant 0.000000e+00 : f32
    %40 = vector.shape_cast %18 : vector<256x1xi1> to vector<256x1xi1>
    %41 = vector.broadcast %40 : vector<256x1xi1> to vector<256x4xi1>
    %42 = vector.broadcast %cst_18 : f32 to vector<256x4xf32>
    %43 = arith.select %41, %42, %39 : vector<256x4xi1>, vector<256x4xf32>
    %c25 = arith.constant 25 : index
    %c0_19 = arith.constant 0 : index
    %44 = vector.load %arg14[%c25, %c0_19] : memref<304x4xf32, #tpu.memory_space<vmem>>, vector<256x4xf32>
    %cst_20 = arith.constant 0.000000e+00 : f32
    %45 = vector.shape_cast %20 : vector<256x1xi1> to vector<256x1xi1>
    %46 = vector.broadcast %45 : vector<256x1xi1> to vector<256x4xi1>
    %47 = vector.broadcast %cst_20 : f32 to vector<256x4xf32>
    %48 = arith.select %46, %47, %44 : vector<256x4xi1>, vector<256x4xf32>
    %c39 = arith.constant 39 : index
    %c0_21 = arith.constant 0 : index
    %49 = vector.load %arg14[%c39, %c0_21] : memref<304x4xf32, #tpu.memory_space<vmem>>, vector<256x4xf32>
    %cst_22 = arith.constant 0.000000e+00 : f32
    %50 = vector.shape_cast %18 : vector<256x1xi1> to vector<256x1xi1>
    %51 = vector.broadcast %50 : vector<256x1xi1> to vector<256x4xi1>
    %52 = vector.broadcast %cst_22 : f32 to vector<256x4xf32>
    %53 = arith.select %51, %52, %49 : vector<256x4xi1>, vector<256x4xf32>
    %c40 = arith.constant 40 : index
    %c0_23 = arith.constant 0 : index
    %54 = vector.load %arg14[%c40, %c0_23] : memref<304x4xf32, #tpu.memory_space<vmem>>, vector<256x4xf32>
    %c41 = arith.constant 41 : index
    %c0_24 = arith.constant 0 : index
    %55 = vector.load %arg14[%c41, %c0_24] : memref<304x4xf32, #tpu.memory_space<vmem>>, vector<256x4xf32>
    %cst_25 = arith.constant 0.000000e+00 : f32
    %56 = vector.shape_cast %20 : vector<256x1xi1> to vector<256x1xi1>
    %57 = vector.broadcast %56 : vector<256x1xi1> to vector<256x4xi1>
    %58 = vector.broadcast %cst_25 : f32 to vector<256x4xf32>
    %59 = arith.select %57, %58, %55 : vector<256x4xi1>, vector<256x4xf32>
    %60 = tpu.concatenate %32, %33, %38, %43, %26, %48, %53, %54, %59 in 1 : vector<256x4xf32>, vector<256x4xf32>, vector<256x4xf32>, vector<256x4xf32>, vector<256x4xf32>, vector<256x4xf32>, vector<256x4xf32>, vector<256x4xf32>, vector<256x4xf32> -> vector<256x36xf32>
    %61 = arith.truncf %60 : vector<256x36xf32> to vector<256x36xbf16>
    %c0_26 = arith.constant 0 : index
    %c0_27 = arith.constant 0 : index
    %62 = vector.load %arg2[%c0_26, %c0_27] : memref<36x8xbf16, #tpu.memory_space<vmem>>, vector<36x8xbf16>
    %cst_28 = arith.constant dense<0.000000e+00> : vector<256x8xf32>
    %63 = tpu.matmul %61, %62, %cst_28 {dimension_numbers = #tpu.dot_dimension_numbers<[1], [0], [0], [1], [0, 0, 1, 1], [], []>} : vector<256x36xbf16>, vector<36x8xbf16>, vector<256x8xf32> -> vector<256x8xf32>
    %c0_29 = arith.constant 0 : index
    %c0_30 = arith.constant 0 : index
    %64 = vector.load %arg3[%c0_29, %c0_30] : memref<1x8xf32, #tpu.memory_space<vmem>>, vector<1x8xf32>
    %65 = vector.broadcast %64 : vector<1x8xf32> to vector<256x8xf32>
    %66 = arith.addf %63, %65 : vector<256x8xf32>
    %c24_31 = arith.constant 24 : index
    %c0_32 = arith.constant 0 : index
    %67 = vector.load %arg15[%c24_31, %c0_32] : memref<304x8xf32, #tpu.memory_space<vmem>>, vector<256x8xf32>
    tpu.vector_store %arg15[%c24_31, %c0_32], %66 {strides = array<i32>} : memref<304x8xf32, #tpu.memory_space<vmem>>, vector<256x8xf32>,
    %c7_33 = arith.constant 7 : index
    %c0_34 = arith.constant 0 : index
    %68 = vector.load %arg15[%c7_33, %c0_34] : memref<304x8xf32, #tpu.memory_space<vmem>>, vector<256x8xf32>
    %cst_35 = arith.constant 0.000000e+00 : f32
    %69 = vector.shape_cast %18 : vector<256x1xi1> to vector<256x1xi1>
    %70 = vector.broadcast %69 : vector<256x1xi1> to vector<256x8xi1>
    %71 = vector.broadcast %cst_35 : f32 to vector<256x8xf32>
    %72 = arith.select %70, %71, %68 : vector<256x8xi1>, vector<256x8xf32>
    %c8_36 = arith.constant 8 : index
    %c0_37 = arith.constant 0 : index
    %73 = vector.load %arg15[%c8_36, %c0_37] : memref<304x8xf32, #tpu.memory_space<vmem>>, vector<256x8xf32>
    %c9_38 = arith.constant 9 : index
    %c0_39 = arith.constant 0 : index
    %74 = vector.load %arg15[%c9_38, %c0_39] : memref<304x8xf32, #tpu.memory_space<vmem>>, vector<256x8xf32>
    %cst_40 = arith.constant 0.000000e+00 : f32
    %75 = vector.shape_cast %20 : vector<256x1xi1> to vector<256x1xi1>
    %76 = vector.broadcast %75 : vector<256x1xi1> to vector<256x8xi1>
    %77 = vector.broadcast %cst_40 : f32 to vector<256x8xf32>
    %78 = arith.select %76, %77, %74 : vector<256x8xi1>, vector<256x8xf32>
    %c23_41 = arith.constant 23 : index
    %c0_42 = arith.constant 0 : index
    %79 = vector.load %arg15[%c23_41, %c0_42] : memref<304x8xf32, #tpu.memory_space<vmem>>, vector<256x8xf32>
    %cst_43 = arith.constant 0.000000e+00 : f32
    %80 = vector.shape_cast %18 : vector<256x1xi1> to vector<256x1xi1>
    %81 = vector.broadcast %80 : vector<256x1xi1> to vector<256x8xi1>
    %82 = vector.broadcast %cst_43 : f32 to vector<256x8xf32>
    %83 = arith.select %81, %82, %79 : vector<256x8xi1>, vector<256x8xf32>
    %c25_44 = arith.constant 25 : index
    %c0_45 = arith.constant 0 : index
    %84 = vector.load %arg15[%c25_44, %c0_45] : memref<304x8xf32, #tpu.memory_space<vmem>>, vector<256x8xf32>
    %cst_46 = arith.constant 0.000000e+00 : f32
    %85 = vector.shape_cast %20 : vector<256x1xi1> to vector<256x1xi1>
    %86 = vector.broadcast %85 : vector<256x1xi1> to vector<256x8xi1>
    %87 = vector.broadcast %cst_46 : f32 to vector<256x8xf32>
    %88 = arith.select %86, %87, %84 : vector<256x8xi1>, vector<256x8xf32>
    %c39_47 = arith.constant 39 : index
    %c0_48 = arith.constant 0 : index
    %89 = vector.load %arg15[%c39_47, %c0_48] : memref<304x8xf32, #tpu.memory_space<vmem>>, vector<256x8xf32>
    %cst_49 = arith.constant 0.000000e+00 : f32
    %90 = vector.shape_cast %18 : vector<256x1xi1> to vector<256x1xi1>
    %91 = vector.broadcast %90 : vector<256x1xi1> to vector<256x8xi1>
    %92 = vector.broadcast %cst_49 : f32 to vector<256x8xf32>
    %93 = arith.select %91, %92, %89 : vector<256x8xi1>, vector<256x8xf32>
    %c40_50 = arith.constant 40 : index
    %c0_51 = arith.constant 0 : index
    %94 = vector.load %arg15[%c40_50, %c0_51] : memref<304x8xf32, #tpu.memory_space<vmem>>, vector<256x8xf32>
    %c41_52 = arith.constant 41 : index
    %c0_53 = arith.constant 0 : index
    %95 = vector.load %arg15[%c41_52, %c0_53] : memref<304x8xf32, #tpu.memory_space<vmem>>, vector<256x8xf32>
    %cst_54 = arith.constant 0.000000e+00 : f32
    %96 = vector.shape_cast %20 : vector<256x1xi1> to vector<256x1xi1>
    %97 = vector.broadcast %96 : vector<256x1xi1> to vector<256x8xi1>
    %98 = vector.broadcast %cst_54 : f32 to vector<256x8xf32>
    %99 = arith.select %97, %98, %95 : vector<256x8xi1>, vector<256x8xf32>
    %100 = tpu.concatenate %72, %73, %78, %83, %66, %88, %93, %94, %99 in 1 : vector<256x8xf32>, vector<256x8xf32>, vector<256x8xf32>, vector<256x8xf32>, vector<256x8xf32>, vector<256x8xf32>, vector<256x8xf32>, vector<256x8xf32>, vector<256x8xf32> -> vector<256x72xf32>
    %101 = arith.truncf %100 : vector<256x72xf32> to vector<256x72xbf16>
    %c0_55 = arith.constant 0 : index
    %c0_56 = arith.constant 0 : index
    %102 = vector.load %arg4[%c0_55, %c0_56] : memref<72x8xbf16, #tpu.memory_space<vmem>>, vector<72x8xbf16>
    %cst_57 = arith.constant dense<0.000000e+00> : vector<256x8xf32>
    %103 = tpu.matmul %101, %102, %cst_57 {dimension_numbers = #tpu.dot_dimension_numbers<[1], [0], [0], [1], [0, 0, 1, 1], [], []>} : vector<256x72xbf16>, vector<72x8xbf16>, vector<256x8xf32> -> vector<256x8xf32>
    %c0_58 = arith.constant 0 : index
    %c0_59 = arith.constant 0 : index
    %104 = vector.load %arg5[%c0_58, %c0_59] : memref<1x8xf32, #tpu.memory_space<vmem>>, vector<1x8xf32>
    %105 = vector.broadcast %104 : vector<1x8xf32> to vector<256x8xf32>
    %106 = arith.addf %103, %105 : vector<256x8xf32>
    %cst_60 = arith.constant 0.000000e+00 : f32
    %107 = vector.broadcast %cst_60 : f32 to vector<256x8xf32>
    %108 = arith.maximumf %106, %107 : vector<256x8xf32>
    %c24_61 = arith.constant 24 : index
    %c0_62 = arith.constant 0 : index
    %109 = vector.load %arg15[%c24_61, %c0_62] : memref<304x8xf32, #tpu.memory_space<vmem>>, vector<256x8xf32>
    tpu.vector_store %arg15[%c24_61, %c0_62], %108 {strides = array<i32>} : memref<304x8xf32, #tpu.memory_space<vmem>>, vector<256x8xf32>,
    %c7_63 = arith.constant 7 : index
    %c0_64 = arith.constant 0 : index
    %110 = vector.load %arg15[%c7_63, %c0_64] : memref<304x8xf32, #tpu.memory_space<vmem>>, vector<256x8xf32>
    %cst_65 = arith.constant 0.000000e+00 : f32
    %111 = vector.shape_cast %18 : vector<256x1xi1> to vector<256x1xi1>
    %112 = vector.broadcast %111 : vector<256x1xi1> to vector<256x8xi1>
    %113 = vector.broadcast %cst_65 : f32 to vector<256x8xf32>
    %114 = arith.select %112, %113, %110 : vector<256x8xi1>, vector<256x8xf32>
    %c8_66 = arith.constant 8 : index
    %c0_67 = arith.constant 0 : index
    %115 = vector.load %arg15[%c8_66, %c0_67] : memref<304x8xf32, #tpu.memory_space<vmem>>, vector<256x8xf32>
    %c9_68 = arith.constant 9 : index
    %c0_69 = arith.constant 0 : index
    %116 = vector.load %arg15[%c9_68, %c0_69] : memref<304x8xf32, #tpu.memory_space<vmem>>, vector<256x8xf32>
    %cst_70 = arith.constant 0.000000e+00 : f32
    %117 = vector.shape_cast %20 : vector<256x1xi1> to vector<256x1xi1>
    %118 = vector.broadcast %117 : vector<256x1xi1> to vector<256x8xi1>
    %119 = vector.broadcast %cst_70 : f32 to vector<256x8xf32>
    %120 = arith.select %118, %119, %116 : vector<256x8xi1>, vector<256x8xf32>
    %c23_71 = arith.constant 23 : index
    %c0_72 = arith.constant 0 : index
    %121 = vector.load %arg15[%c23_71, %c0_72] : memref<304x8xf32, #tpu.memory_space<vmem>>, vector<256x8xf32>
    %cst_73 = arith.constant 0.000000e+00 : f32
    %122 = vector.shape_cast %18 : vector<256x1xi1> to vector<256x1xi1>
    %123 = vector.broadcast %122 : vector<256x1xi1> to vector<256x8xi1>
    %124 = vector.broadcast %cst_73 : f32 to vector<256x8xf32>
    %125 = arith.select %123, %124, %121 : vector<256x8xi1>, vector<256x8xf32>
    %c25_74 = arith.constant 25 : index
    %c0_75 = arith.constant 0 : index
    %126 = vector.load %arg15[%c25_74, %c0_75] : memref<304x8xf32, #tpu.memory_space<vmem>>, vector<256x8xf32>
    %cst_76 = arith.constant 0.000000e+00 : f32
    %127 = vector.shape_cast %20 : vector<256x1xi1> to vector<256x1xi1>
    %128 = vector.broadcast %127 : vector<256x1xi1> to vector<256x8xi1>
    %129 = vector.broadcast %cst_76 : f32 to vector<256x8xf32>
    %130 = arith.select %128, %129, %126 : vector<256x8xi1>, vector<256x8xf32>
    %c39_77 = arith.constant 39 : index
    %c0_78 = arith.constant 0 : index
    %131 = vector.load %arg15[%c39_77, %c0_78] : memref<304x8xf32, #tpu.memory_space<vmem>>, vector<256x8xf32>
    %cst_79 = arith.constant 0.000000e+00 : f32
    %132 = vector.shape_cast %18 : vector<256x1xi1> to vector<256x1xi1>
    %133 = vector.broadcast %132 : vector<256x1xi1> to vector<256x8xi1>
    %134 = vector.broadcast %cst_79 : f32 to vector<256x8xf32>
    %135 = arith.select %133, %134, %131 : vector<256x8xi1>, vector<256x8xf32>
    %c40_80 = arith.constant 40 : index
    %c0_81 = arith.constant 0 : index
    %136 = vector.load %arg15[%c40_80, %c0_81] : memref<304x8xf32, #tpu.memory_space<vmem>>, vector<256x8xf32>
    %c41_82 = arith.constant 41 : index
    %c0_83 = arith.constant 0 : index
    %137 = vector.load %arg15[%c41_82, %c0_83] : memref<304x8xf32, #tpu.memory_space<vmem>>, vector<256x8xf32>
    %cst_84 = arith.constant 0.000000e+00 : f32
    %138 = vector.shape_cast %20 : vector<256x1xi1> to vector<256x1xi1>
    %139 = vector.broadcast %138 : vector<256x1xi1> to vector<256x8xi1>
    %140 = vector.broadcast %cst_84 : f32 to vector<256x8xf32>
    %141 = arith.select %139, %140, %137 : vector<256x8xi1>, vector<256x8xf32>
    %142 = tpu.concatenate %114, %115, %120, %125, %108, %130, %135, %136, %141 in 1 : vector<256x8xf32>, vector<256x8xf32>, vector<256x8xf32>, vector<256x8xf32>, vector<256x8xf32>, vector<256x8xf32>, vector<256x8xf32>, vector<256x8xf32>, vector<256x8xf32> -> vector<256x72xf32>
    %143 = arith.truncf %142 : vector<256x72xf32> to vector<256x72xbf16>
    %c0_85 = arith.constant 0 : index
    %c0_86 = arith.constant 0 : index
    %144 = vector.load %arg6[%c0_85, %c0_86] : memref<72x8xbf16, #tpu.memory_space<vmem>>, vector<72x8xbf16>
    %cst_87 = arith.constant dense<0.000000e+00> : vector<256x8xf32>
    %145 = tpu.matmul %143, %144, %cst_87 {dimension_numbers = #tpu.dot_dimension_numbers<[1], [0], [0], [1], [0, 0, 1, 1], [], []>} : vector<256x72xbf16>, vector<72x8xbf16>, vector<256x8xf32> -> vector<256x8xf32>
    %c0_88 = arith.constant 0 : index
    %c0_89 = arith.constant 0 : index
    %146 = vector.load %arg7[%c0_88, %c0_89] : memref<1x8xf32, #tpu.memory_space<vmem>>, vector<1x8xf32>
    %147 = vector.broadcast %146 : vector<1x8xf32> to vector<256x8xf32>
    %148 = arith.addf %145, %147 : vector<256x8xf32>
    %149 = arith.addf %66, %148 : vector<256x8xf32>
    %c24_90 = arith.constant 24 : index
    %c0_91 = arith.constant 0 : index
    %150 = vector.load %arg15[%c24_90, %c0_91] : memref<304x8xf32, #tpu.memory_space<vmem>>, vector<256x8xf32>
    tpu.vector_store %arg15[%c24_90, %c0_91], %149 {strides = array<i32>} : memref<304x8xf32, #tpu.memory_space<vmem>>, vector<256x8xf32>,
    %c7_92 = arith.constant 7 : index
    %c0_93 = arith.constant 0 : index
    %151 = vector.load %arg15[%c7_92, %c0_93] : memref<304x8xf32, #tpu.memory_space<vmem>>, vector<256x8xf32>
    %cst_94 = arith.constant 0.000000e+00 : f32
    %152 = vector.shape_cast %18 : vector<256x1xi1> to vector<256x1xi1>
    %153 = vector.broadcast %152 : vector<256x1xi1> to vector<256x8xi1>
    %154 = vector.broadcast %cst_94 : f32 to vector<256x8xf32>
    %155 = arith.select %153, %154, %151 : vector<256x8xi1>, vector<256x8xf32>
    %c8_95 = arith.constant 8 : index
    %c0_96 = arith.constant 0 : index
    %156 = vector.load %arg15[%c8_95, %c0_96] : memref<304x8xf32, #tpu.memory_space<vmem>>, vector<256x8xf32>
    %c9_97 = arith.constant 9 : index
    %c0_98 = arith.constant 0 : index
    %157 = vector.load %arg15[%c9_97, %c0_98] : memref<304x8xf32, #tpu.memory_space<vmem>>, vector<256x8xf32>
    %cst_99 = arith.constant 0.000000e+00 : f32
    %158 = vector.shape_cast %20 : vector<256x1xi1> to vector<256x1xi1>
    %159 = vector.broadcast %158 : vector<256x1xi1> to vector<256x8xi1>
    %160 = vector.broadcast %cst_99 : f32 to vector<256x8xf32>
    %161 = arith.select %159, %160, %157 : vector<256x8xi1>, vector<256x8xf32>
    %c23_100 = arith.constant 23 : index
    %c0_101 = arith.constant 0 : index
    %162 = vector.load %arg15[%c23_100, %c0_101] : memref<304x8xf32, #tpu.memory_space<vmem>>, vector<256x8xf32>
    %cst_102 = arith.constant 0.000000e+00 : f32
    %163 = vector.shape_cast %18 : vector<256x1xi1> to vector<256x1xi1>
    %164 = vector.broadcast %163 : vector<256x1xi1> to vector<256x8xi1>
    %165 = vector.broadcast %cst_102 : f32 to vector<256x8xf32>
    %166 = arith.select %164, %165, %162 : vector<256x8xi1>, vector<256x8xf32>
    %c25_103 = arith.constant 25 : index
    %c0_104 = arith.constant 0 : index
    %167 = vector.load %arg15[%c25_103, %c0_104] : memref<304x8xf32, #tpu.memory_space<vmem>>, vector<256x8xf32>
    %cst_105 = arith.constant 0.000000e+00 : f32
    %168 = vector.shape_cast %20 : vector<256x1xi1> to vector<256x1xi1>
    %169 = vector.broadcast %168 : vector<256x1xi1> to vector<256x8xi1>
    %170 = vector.broadcast %cst_105 : f32 to vector<256x8xf32>
    %171 = arith.select %169, %170, %167 : vector<256x8xi1>, vector<256x8xf32>
    %c39_106 = arith.constant 39 : index
    %c0_107 = arith.constant 0 : index
    %172 = vector.load %arg15[%c39_106, %c0_107] : memref<304x8xf32, #tpu.memory_space<vmem>>, vector<256x8xf32>
    %cst_108 = arith.constant 0.000000e+00 : f32
    %173 = vector.shape_cast %18 : vector<256x1xi1> to vector<256x1xi1>
    %174 = vector.broadcast %173 : vector<256x1xi1> to vector<256x8xi1>
    %175 = vector.broadcast %cst_108 : f32 to vector<256x8xf32>
    %176 = arith.select %174, %175, %172 : vector<256x8xi1>, vector<256x8xf32>
    %c40_109 = arith.constant 40 : index
    %c0_110 = arith.constant 0 : index
    %177 = vector.load %arg15[%c40_109, %c0_110] : memref<304x8xf32, #tpu.memory_space<vmem>>, vector<256x8xf32>
    %c41_111 = arith.constant 41 : index
    %c0_112 = arith.constant 0 : index
    %178 = vector.load %arg15[%c41_111, %c0_112] : memref<304x8xf32, #tpu.memory_space<vmem>>, vector<256x8xf32>
    %cst_113 = arith.constant 0.000000e+00 : f32
    %179 = vector.shape_cast %20 : vector<256x1xi1> to vector<256x1xi1>
    %180 = vector.broadcast %179 : vector<256x1xi1> to vector<256x8xi1>
    %181 = vector.broadcast %cst_113 : f32 to vector<256x8xf32>
    %182 = arith.select %180, %181, %178 : vector<256x8xi1>, vector<256x8xf32>
    %183 = tpu.concatenate %155, %156, %161, %166, %149, %171, %176, %177, %182 in 1 : vector<256x8xf32>, vector<256x8xf32>, vector<256x8xf32>, vector<256x8xf32>, vector<256x8xf32>, vector<256x8xf32>, vector<256x8xf32>, vector<256x8xf32>, vector<256x8xf32> -> vector<256x72xf32>
    %184 = arith.truncf %183 : vector<256x72xf32> to vector<256x72xbf16>
    %c0_114 = arith.constant 0 : index
    %c0_115 = arith.constant 0 : index
    %185 = vector.load %arg8[%c0_114, %c0_115] : memref<72x8xbf16, #tpu.memory_space<vmem>>, vector<72x8xbf16>
    %cst_116 = arith.constant dense<0.000000e+00> : vector<256x8xf32>
    %186 = tpu.matmul %184, %185, %cst_116 {dimension_numbers = #tpu.dot_dimension_numbers<[1], [0], [0], [1], [0, 0, 1, 1], [], []>} : vector<256x72xbf16>, vector<72x8xbf16>, vector<256x8xf32> -> vector<256x8xf32>
    %c0_117 = arith.constant 0 : index
    %c0_118 = arith.constant 0 : index
    %187 = vector.load %arg9[%c0_117, %c0_118] : memref<1x8xf32, #tpu.memory_space<vmem>>, vector<1x8xf32>
    %188 = vector.broadcast %187 : vector<1x8xf32> to vector<256x8xf32>
    %189 = arith.addf %186, %188 : vector<256x8xf32>
    %cst_119 = arith.constant 0.000000e+00 : f32
    %190 = vector.broadcast %cst_119 : f32 to vector<256x8xf32>
    %191 = arith.maximumf %189, %190 : vector<256x8xf32>
    %c24_120 = arith.constant 24 : index
    %c0_121 = arith.constant 0 : index
    %192 = vector.load %arg15[%c24_120, %c0_121] : memref<304x8xf32, #tpu.memory_space<vmem>>, vector<256x8xf32>
    tpu.vector_store %arg15[%c24_120, %c0_121], %191 {strides = array<i32>} : memref<304x8xf32, #tpu.memory_space<vmem>>, vector<256x8xf32>,
    %c7_122 = arith.constant 7 : index
    %c0_123 = arith.constant 0 : index
    %193 = vector.load %arg15[%c7_122, %c0_123] : memref<304x8xf32, #tpu.memory_space<vmem>>, vector<256x8xf32>
    %cst_124 = arith.constant 0.000000e+00 : f32
    %194 = vector.shape_cast %18 : vector<256x1xi1> to vector<256x1xi1>
    %195 = vector.broadcast %194 : vector<256x1xi1> to vector<256x8xi1>
    %196 = vector.broadcast %cst_124 : f32 to vector<256x8xf32>
    %197 = arith.select %195, %196, %193 : vector<256x8xi1>, vector<256x8xf32>
    %c8_125 = arith.constant 8 : index
    %c0_126 = arith.constant 0 : index
    %198 = vector.load %arg15[%c8_125, %c0_126] : memref<304x8xf32, #tpu.memory_space<vmem>>, vector<256x8xf32>
    %c9_127 = arith.constant 9 : index
    %c0_128 = arith.constant 0 : index
    %199 = vector.load %arg15[%c9_127, %c0_128] : memref<304x8xf32, #tpu.memory_space<vmem>>, vector<256x8xf32>
    %cst_129 = arith.constant 0.000000e+00 : f32
    %200 = vector.shape_cast %20 : vector<256x1xi1> to vector<256x1xi1>
    %201 = vector.broadcast %200 : vector<256x1xi1> to vector<256x8xi1>
    %202 = vector.broadcast %cst_129 : f32 to vector<256x8xf32>
    %203 = arith.select %201, %202, %199 : vector<256x8xi1>, vector<256x8xf32>
    %c23_130 = arith.constant 23 : index
    %c0_131 = arith.constant 0 : index
    %204 = vector.load %arg15[%c23_130, %c0_131] : memref<304x8xf32, #tpu.memory_space<vmem>>, vector<256x8xf32>
    %cst_132 = arith.constant 0.000000e+00 : f32
    %205 = vector.shape_cast %18 : vector<256x1xi1> to vector<256x1xi1>
    %206 = vector.broadcast %205 : vector<256x1xi1> to vector<256x8xi1>
    %207 = vector.broadcast %cst_132 : f32 to vector<256x8xf32>
    %208 = arith.select %206, %207, %204 : vector<256x8xi1>, vector<256x8xf32>
    %c25_133 = arith.constant 25 : index
    %c0_134 = arith.constant 0 : index
    %209 = vector.load %arg15[%c25_133, %c0_134] : memref<304x8xf32, #tpu.memory_space<vmem>>, vector<256x8xf32>
    %cst_135 = arith.constant 0.000000e+00 : f32
    %210 = vector.shape_cast %20 : vector<256x1xi1> to vector<256x1xi1>
    %211 = vector.broadcast %210 : vector<256x1xi1> to vector<256x8xi1>
    %212 = vector.broadcast %cst_135 : f32 to vector<256x8xf32>
    %213 = arith.select %211, %212, %209 : vector<256x8xi1>, vector<256x8xf32>
    %c39_136 = arith.constant 39 : index
    %c0_137 = arith.constant 0 : index
    %214 = vector.load %arg15[%c39_136, %c0_137] : memref<304x8xf32, #tpu.memory_space<vmem>>, vector<256x8xf32>
    %cst_138 = arith.constant 0.000000e+00 : f32
    %215 = vector.shape_cast %18 : vector<256x1xi1> to vector<256x1xi1>
    %216 = vector.broadcast %215 : vector<256x1xi1> to vector<256x8xi1>
    %217 = vector.broadcast %cst_138 : f32 to vector<256x8xf32>
    %218 = arith.select %216, %217, %214 : vector<256x8xi1>, vector<256x8xf32>
    %c40_139 = arith.constant 40 : index
    %c0_140 = arith.constant 0 : index
    %219 = vector.load %arg15[%c40_139, %c0_140] : memref<304x8xf32, #tpu.memory_space<vmem>>, vector<256x8xf32>
    %c41_141 = arith.constant 41 : index
    %c0_142 = arith.constant 0 : index
    %220 = vector.load %arg15[%c41_141, %c0_142] : memref<304x8xf32, #tpu.memory_space<vmem>>, vector<256x8xf32>
    %cst_143 = arith.constant 0.000000e+00 : f32
    %221 = vector.shape_cast %20 : vector<256x1xi1> to vector<256x1xi1>
    %222 = vector.broadcast %221 : vector<256x1xi1> to vector<256x8xi1>
    %223 = vector.broadcast %cst_143 : f32 to vector<256x8xf32>
    %224 = arith.select %222, %223, %220 : vector<256x8xi1>, vector<256x8xf32>
    %225 = tpu.concatenate %197, %198, %203, %208, %191, %213, %218, %219, %224 in 1 : vector<256x8xf32>, vector<256x8xf32>, vector<256x8xf32>, vector<256x8xf32>, vector<256x8xf32>, vector<256x8xf32>, vector<256x8xf32>, vector<256x8xf32>, vector<256x8xf32> -> vector<256x72xf32>
    %226 = arith.truncf %225 : vector<256x72xf32> to vector<256x72xbf16>
    %c0_144 = arith.constant 0 : index
    %c0_145 = arith.constant 0 : index
    %227 = vector.load %arg10[%c0_144, %c0_145] : memref<72x8xbf16, #tpu.memory_space<vmem>>, vector<72x8xbf16>
    %cst_146 = arith.constant dense<0.000000e+00> : vector<256x8xf32>
    %228 = tpu.matmul %226, %227, %cst_146 {dimension_numbers = #tpu.dot_dimension_numbers<[1], [0], [0], [1], [0, 0, 1, 1], [], []>} : vector<256x72xbf16>, vector<72x8xbf16>, vector<256x8xf32> -> vector<256x8xf32>
    %c0_147 = arith.constant 0 : index
    %c0_148 = arith.constant 0 : index
    %229 = vector.load %arg11[%c0_147, %c0_148] : memref<1x8xf32, #tpu.memory_space<vmem>>, vector<1x8xf32>
    %230 = vector.broadcast %229 : vector<1x8xf32> to vector<256x8xf32>
    %231 = arith.addf %228, %230 : vector<256x8xf32>
    %232 = arith.addf %149, %231 : vector<256x8xf32>
    %cst_149 = arith.constant 0.000000e+00 : f32
    %233 = vector.broadcast %cst_149 : f32 to vector<256x8xf32>
    %234 = arith.maximumf %232, %233 : vector<256x8xf32>
    %c0_150 = arith.constant 0 : index
    %c0_151 = arith.constant 0 : index
    %c0_152 = arith.constant 0 : index
    %235 = vector.load %arg12[%c0_150, %c0_151, %c0_152] : memref<1x256x8xf32, #tpu.memory_space<vmem>>, vector<1x256x8xf32>
    %236 = vector.shape_cast %235 : vector<1x256x8xf32> to vector<256x8xf32>
    %237 = vector.shape_cast %234 : vector<256x8xf32> to vector<1x256x8xf32>
    tpu.vector_store %arg12[%c0_150, %c0_151, %c0_152], %237 {strides = array<i32>} : memref<1x256x8xf32, #tpu.memory_space<vmem>>, vector<1x256x8xf32>,
    %c0_153 = arith.constant 0 : index
    %c0_154 = arith.constant 0 : index
    %c0_155 = arith.constant 0 : index
    %238 = tpu.strided_load %arg12[%c0_153, %c0_154, %c0_155] {strides = array<i32: 1, 2, 1>} : memref<1x256x8xf32, #tpu.memory_space<vmem>>, vector<1x128x8xf32>
    %239 = vector.shape_cast %238 : vector<1x128x8xf32> to vector<128x8xf32>
    %c0_156 = arith.constant 0 : index
    %c1 = arith.constant 1 : index
    %c0_157 = arith.constant 0 : index
    %240 = tpu.strided_load %arg12[%c0_156, %c1, %c0_157] {strides = array<i32: 1, 2, 1>} : memref<1x256x8xf32, #tpu.memory_space<vmem>>, vector<1x128x8xf32>
    %241 = vector.shape_cast %240 : vector<1x128x8xf32> to vector<128x8xf32>
    %242 = arith.maximumf %239, %241 : vector<128x8xf32>
    %c0_158 = arith.constant 0 : index
    %c0_159 = arith.constant 0 : index
    %243 = vector.load %arg16[%c0_158, %c0_159] : memref<128x8xf32, #tpu.memory_space<vmem>>, vector<128x8xf32>
    tpu.vector_store %arg16[%c0_158, %c0_159], %242 {strides = array<i32>} : memref<128x8xf32, #tpu.memory_space<vmem>>, vector<128x8xf32>,
    %c0_160 = arith.constant 0 : index
    %c0_161 = arith.constant 0 : index
    %244 = vector.load %arg16[%c0_160, %c0_161] : memref<128x8xf32, #tpu.memory_space<vmem>>, vector<8x8xf32>
    %c8_162 = arith.constant 8 : index
    %c0_163 = arith.constant 0 : index
    %245 = vector.load %arg16[%c8_162, %c0_163] : memref<128x8xf32, #tpu.memory_space<vmem>>, vector<8x8xf32>
    %246 = arith.maximumf %244, %245 : vector<8x8xf32>
    %c0_164 = arith.constant 0 : index
    %c0_165 = arith.constant 0 : index
    %c0_166 = arith.constant 0 : index
    %247 = vector.load %arg13[%c0_164, %c0_165, %c0_166] : memref<1x64x8xf32, #tpu.memory_space<vmem>>, vector<1x8x8xf32>
    %248 = vector.shape_cast %247 : vector<1x8x8xf32> to vector<8x8xf32>
    %249 = vector.shape_cast %246 : vector<8x8xf32> to vector<1x8x8xf32>
    tpu.vector_store %arg13[%c0_164, %c0_165, %c0_166], %249 {strides = array<i32>} : memref<1x64x8xf32, #tpu.memory_space<vmem>>, vector<1x8x8xf32>,
    %c16 = arith.constant 16 : index
    %c0_167 = arith.constant 0 : index
    %250 = vector.load %arg16[%c16, %c0_167] : memref<128x8xf32, #tpu.memory_space<vmem>>, vector<8x8xf32>
    %c24_168 = arith.constant 24 : index
    %c0_169 = arith.constant 0 : index
    %251 = vector.load %arg16[%c24_168, %c0_169] : memref<128x8xf32, #tpu.memory_space<vmem>>, vector<8x8xf32>
    %252 = arith.maximumf %250, %251 : vector<8x8xf32>
    %c0_170 = arith.constant 0 : index
    %c8_171 = arith.constant 8 : index
    %c0_172 = arith.constant 0 : index
    %253 = vector.load %arg13[%c0_170, %c8_171, %c0_172] : memref<1x64x8xf32, #tpu.memory_space<vmem>>, vector<1x8x8xf32>
    %254 = vector.shape_cast %253 : vector<1x8x8xf32> to vector<8x8xf32>
    %255 = vector.shape_cast %252 : vector<8x8xf32> to vector<1x8x8xf32>
    tpu.vector_store %arg13[%c0_170, %c8_171, %c0_172], %255 {strides = array<i32>} : memref<1x64x8xf32, #tpu.memory_space<vmem>>, vector<1x8x8xf32>,
    %c32 = arith.constant 32 : index
    %c0_173 = arith.constant 0 : index
    %256 = vector.load %arg16[%c32, %c0_173] : memref<128x8xf32, #tpu.memory_space<vmem>>, vector<8x8xf32>
    %c40_174 = arith.constant 40 : index
    %c0_175 = arith.constant 0 : index
    %257 = vector.load %arg16[%c40_174, %c0_175] : memref<128x8xf32, #tpu.memory_space<vmem>>, vector<8x8xf32>
    %258 = arith.maximumf %256, %257 : vector<8x8xf32>
    %c0_176 = arith.constant 0 : index
    %c16_177 = arith.constant 16 : index
    %c0_178 = arith.constant 0 : index
    %259 = vector.load %arg13[%c0_176, %c16_177, %c0_178] : memref<1x64x8xf32, #tpu.memory_space<vmem>>, vector<1x8x8xf32>
    %260 = vector.shape_cast %259 : vector<1x8x8xf32> to vector<8x8xf32>
    %261 = vector.shape_cast %258 : vector<8x8xf32> to vector<1x8x8xf32>
    tpu.vector_store %arg13[%c0_176, %c16_177, %c0_178], %261 {strides = array<i32>} : memref<1x64x8xf32, #tpu.memory_space<vmem>>, vector<1x8x8xf32>,
    %c48 = arith.constant 48 : index
    %c0_179 = arith.constant 0 : index
    %262 = vector.load %arg16[%c48, %c0_179] : memref<128x8xf32, #tpu.memory_space<vmem>>, vector<8x8xf32>
    %c56 = arith.constant 56 : index
    %c0_180 = arith.constant 0 : index
    %263 = vector.load %arg16[%c56, %c0_180] : memref<128x8xf32, #tpu.memory_space<vmem>>, vector<8x8xf32>
    %264 = arith.maximumf %262, %263 : vector<8x8xf32>
    %c0_181 = arith.constant 0 : index
    %c24_182 = arith.constant 24 : index
    %c0_183 = arith.constant 0 : index
    %265 = vector.load %arg13[%c0_181, %c24_182, %c0_183] : memref<1x64x8xf32, #tpu.memory_space<vmem>>, vector<1x8x8xf32>
    %266 = vector.shape_cast %265 : vector<1x8x8xf32> to vector<8x8xf32>
    %267 = vector.shape_cast %264 : vector<8x8xf32> to vector<1x8x8xf32>
    tpu.vector_store %arg13[%c0_181, %c24_182, %c0_183], %267 {strides = array<i32>} : memref<1x64x8xf32, #tpu.memory_space<vmem>>, vector<1x8x8xf32>,
    %c64 = arith.constant 64 : index
    %c0_184 = arith.constant 0 : index
    %268 = vector.load %arg16[%c64, %c0_184] : memref<128x8xf32, #tpu.memory_space<vmem>>, vector<8x8xf32>
    %c72 = arith.constant 72 : index
    %c0_185 = arith.constant 0 : index
    %269 = vector.load %arg16[%c72, %c0_185] : memref<128x8xf32, #tpu.memory_space<vmem>>, vector<8x8xf32>
    %270 = arith.maximumf %268, %269 : vector<8x8xf32>
    %c0_186 = arith.constant 0 : index
    %c32_187 = arith.constant 32 : index
    %c0_188 = arith.constant 0 : index
    %271 = vector.load %arg13[%c0_186, %c32_187, %c0_188] : memref<1x64x8xf32, #tpu.memory_space<vmem>>, vector<1x8x8xf32>
    %272 = vector.shape_cast %271 : vector<1x8x8xf32> to vector<8x8xf32>
    %273 = vector.shape_cast %270 : vector<8x8xf32> to vector<1x8x8xf32>
    tpu.vector_store %arg13[%c0_186, %c32_187, %c0_188], %273 {strides = array<i32>} : memref<1x64x8xf32, #tpu.memory_space<vmem>>, vector<1x8x8xf32>,
    %c80 = arith.constant 80 : index
    %c0_189 = arith.constant 0 : index
    %274 = vector.load %arg16[%c80, %c0_189] : memref<128x8xf32, #tpu.memory_space<vmem>>, vector<8x8xf32>
    %c88 = arith.constant 88 : index
    %c0_190 = arith.constant 0 : index
    %275 = vector.load %arg16[%c88, %c0_190] : memref<128x8xf32, #tpu.memory_space<vmem>>, vector<8x8xf32>
    %276 = arith.maximumf %274, %275 : vector<8x8xf32>
    %c0_191 = arith.constant 0 : index
    %c40_192 = arith.constant 40 : index
    %c0_193 = arith.constant 0 : index
    %277 = vector.load %arg13[%c0_191, %c40_192, %c0_193] : memref<1x64x8xf32, #tpu.memory_space<vmem>>, vector<1x8x8xf32>
    %278 = vector.shape_cast %277 : vector<1x8x8xf32> to vector<8x8xf32>
    %279 = vector.shape_cast %276 : vector<8x8xf32> to vector<1x8x8xf32>
    tpu.vector_store %arg13[%c0_191, %c40_192, %c0_193], %279 {strides = array<i32>} : memref<1x64x8xf32, #tpu.memory_space<vmem>>, vector<1x8x8xf32>,
    %c96 = arith.constant 96 : index
    %c0_194 = arith.constant 0 : index
    %280 = vector.load %arg16[%c96, %c0_194] : memref<128x8xf32, #tpu.memory_space<vmem>>, vector<8x8xf32>
    %c104 = arith.constant 104 : index
    %c0_195 = arith.constant 0 : index
    %281 = vector.load %arg16[%c104, %c0_195] : memref<128x8xf32, #tpu.memory_space<vmem>>, vector<8x8xf32>
    %282 = arith.maximumf %280, %281 : vector<8x8xf32>
    %c0_196 = arith.constant 0 : index
    %c48_197 = arith.constant 48 : index
    %c0_198 = arith.constant 0 : index
    %283 = vector.load %arg13[%c0_196, %c48_197, %c0_198] : memref<1x64x8xf32, #tpu.memory_space<vmem>>, vector<1x8x8xf32>
    %284 = vector.shape_cast %283 : vector<1x8x8xf32> to vector<8x8xf32>
    %285 = vector.shape_cast %282 : vector<8x8xf32> to vector<1x8x8xf32>
    tpu.vector_store %arg13[%c0_196, %c48_197, %c0_198], %285 {strides = array<i32>} : memref<1x64x8xf32, #tpu.memory_space<vmem>>, vector<1x8x8xf32>,
    %c112 = arith.constant 112 : index
    %c0_199 = arith.constant 0 : index
    %286 = vector.load %arg16[%c112, %c0_199] : memref<128x8xf32, #tpu.memory_space<vmem>>, vector<8x8xf32>
    %c120 = arith.constant 120 : index
    %c0_200 = arith.constant 0 : index
    %287 = vector.load %arg16[%c120, %c0_200] : memref<128x8xf32, #tpu.memory_space<vmem>>, vector<8x8xf32>
    %288 = arith.maximumf %286, %287 : vector<8x8xf32>
    %c0_201 = arith.constant 0 : index
    %c56_202 = arith.constant 56 : index
    %c0_203 = arith.constant 0 : index
    %289 = vector.load %arg13[%c0_201, %c56_202, %c0_203] : memref<1x64x8xf32, #tpu.memory_space<vmem>>, vector<1x8x8xf32>
    %290 = vector.shape_cast %289 : vector<1x8x8xf32> to vector<8x8xf32>
    %291 = vector.shape_cast %288 : vector<8x8xf32> to vector<1x8x8xf32>
    tpu.vector_store %arg13[%c0_201, %c56_202, %c0_203], %291 {strides = array<i32>} : memref<1x64x8xf32, #tpu.memory_space<vmem>>, vector<1x8x8xf32>,
    return
  }
  func.func @transform_0(%arg0: i32) -> (i32, i32, i32) {
    %c0_i32 = arith.constant 0 : i32
    %c0_i32_0 = arith.constant 0 : i32
    %c0_i32_1 = arith.constant 0 : i32
    return %arg0, %c0_i32, %c0_i32_0 : i32, i32, i32
  }
  func.func @transform_1(%arg0: i32) -> (i32, i32) {
    %c0_i32 = arith.constant 0 : i32
    %c0_i32_0 = arith.constant 0 : i32
    %c0_i32_1 = arith.constant 0 : i32
    return %c0_i32, %c0_i32_0 : i32, i32
  }
  func.func @transform_2(%arg0: i32) -> (i32, i32) {
    %c0_i32 = arith.constant 0 : i32
    %c0_i32_0 = arith.constant 0 : i32
    %c0_i32_1 = arith.constant 0 : i32
    return %c0_i32, %c0_i32_0 : i32, i32
  }
  func.func @transform_3(%arg0: i32) -> (i32, i32) {
    %c0_i32 = arith.constant 0 : i32
    %c0_i32_0 = arith.constant 0 : i32
    %c0_i32_1 = arith.constant 0 : i32
    return %c0_i32, %c0_i32_0 : i32, i32
  }
  func.func @transform_4(%arg0: i32) -> (i32, i32) {
    %c0_i32 = arith.constant 0 : i32
    %c0_i32_0 = arith.constant 0 : i32
    %c0_i32_1 = arith.constant 0 : i32
    return %c0_i32, %c0_i32_0 : i32, i32
  }
  func.func @transform_5(%arg0: i32) -> (i32, i32) {
    %c0_i32 = arith.constant 0 : i32
    %c0_i32_0 = arith.constant 0 : i32
    %c0_i32_1 = arith.constant 0 : i32
    return %c0_i32, %c0_i32_0 : i32, i32
  }
  func.func @transform_6(%arg0: i32) -> (i32, i32) {
    %c0_i32 = arith.constant 0 : i32
    %c0_i32_0 = arith.constant 0 : i32
    %c0_i32_1 = arith.constant 0 : i32
    return %c0_i32, %c0_i32_0 : i32, i32
  }
  func.func @transform_7(%arg0: i32) -> (i32, i32) {
    %c0_i32 = arith.constant 0 : i32
    %c0_i32_0 = arith.constant 0 : i32
    %c0_i32_1 = arith.constant 0 : i32
    return %c0_i32, %c0_i32_0 : i32, i32
  }
  func.func @transform_8(%arg0: i32) -> (i32, i32) {
    %c0_i32 = arith.constant 0 : i32
    %c0_i32_0 = arith.constant 0 : i32
    %c0_i32_1 = arith.constant 0 : i32
    return %c0_i32, %c0_i32_0 : i32, i32
  }
  func.func @transform_9(%arg0: i32) -> (i32, i32) {
    %c0_i32 = arith.constant 0 : i32
    %c0_i32_0 = arith.constant 0 : i32
    %c0_i32_1 = arith.constant 0 : i32
    return %c0_i32, %c0_i32_0 : i32, i32
  }
  func.func @transform_10(%arg0: i32) -> (i32, i32) {
    %c0_i32 = arith.constant 0 : i32
    %c0_i32_0 = arith.constant 0 : i32
    %c0_i32_1 = arith.constant 0 : i32
    return %c0_i32, %c0_i32_0 : i32, i32
  }
  func.func @transform_11(%arg0: i32) -> (i32, i32, i32) {
    %c0_i32 = arith.constant 0 : i32
    %c0_i32_0 = arith.constant 0 : i32
    %c0_i32_1 = arith.constant 0 : i32
    return %arg0, %c0_i32, %c0_i32_0 : i32, i32, i32
  }
  func.func @transform_12(%arg0: i32) -> (i32, i32, i32) {
    %c0_i32 = arith.constant 0 : i32
    %c0_i32_0 = arith.constant 0 : i32
    %c0_i32_1 = arith.constant 0 : i32
    return %arg0, %c0_i32, %c0_i32_0 : i32, i32, i32
  }
}

</mosaic_0001>

<llo_original>
// kernel: tpu_custom_call.1
$region0: #{tpu_custom_call.1}
  #allocation0 [shape = 'u32[]', space=smem, size = 0x4, offset = 0x4, fixed_abs, tag = 'smem constant byte address 0x4 - core index']
  #allocation1 [shape = 'u32[144,128]{1,0:T(1,128)}', space=vmem, size = 0x12000, scoped, tag = 'internal scratch']
  #allocation2 [shape = 'f32[304,4]{1,0:T(8,128)}', space=vmem, size = 0x26000, scoped, tag = 'scratch operand']
  #allocation3 [shape = 'f32[304,8]{1,0:T(8,128)}', space=vmem, size = 0x26000, scoped, tag = 'scratch operand']
  #allocation4 [shape = 'f32[128,8]{1,0:T(8,128)}', space=vmem, size = 0x10000, scoped, tag = 'scratch operand']
  %s0 = inlined_call_operand.vmem [shape: f32[2,256,4], index: 0, kind: input, shape index: {}]
  %s1 = inlined_call_operand.vmem [shape: bf16[36,8], index: 1, kind: input, shape index: {}]
  %s2 = inlined_call_operand.vmem [shape: f32[1,8], index: 2, kind: input, shape index: {}]
  %s3 = inlined_call_operand.vmem [shape: bf16[72,8], index: 3, kind: input, shape index: {}]
  %s4 = inlined_call_operand.vmem [shape: f32[1,8], index: 4, kind: input, shape index: {}]
  %s5 = inlined_call_operand.vmem [shape: bf16[72,8], index: 5, kind: input, shape index: {}]
  %s6 = inlined_call_operand.vmem [shape: f32[1,8], index: 6, kind: input, shape index: {}]
  %s7 = inlined_call_operand.vmem [shape: bf16[72,8], index: 7, kind: input, shape index: {}]
  %s8 = inlined_call_operand.vmem [shape: f32[1,8], index: 8, kind: input, shape index: {}]
  %s9 = inlined_call_operand.vmem [shape: bf16[72,8], index: 9, kind: input, shape index: {}]
  %s10 = inlined_call_operand.vmem [shape: f32[1,8], index: 10, kind: input, shape index: {}]
  %s11 = inlined_call_operand.vmem [shape: f32[2,256,8], index: 11, kind: output, shape index: {0}]
  %s12 = inlined_call_operand.vmem [shape: f32[2,64,8], index: 12, kind: output, shape index: {1}]
  %13 = xla_tuple %s11, %s12
  %s14 = sld [smem:[#allocation0]]
  $region85: #{tpu_custom_call.1} parent=0
    _
  %s16 = ssub.s32 1, %s14
  %s17 = scalar_select 0, %s16, %s14
  loop: start=0, step=1, limit=4
  $region2: #{tpu_custom_call.1} parent=0 // loop_pre_header
    _
  $region3: #{tpu_custom_call.1} parent=0 // loop_header
    %s19 = sphi 0, %s23
    %p20 = scmp.ge.s32.totalorder %s19, 4
    %s29 = sphi 0, %s31
    %s32 = sphi 0, %s29
    %s33 = sphi 0, %s32
    %s49 = sphi 0, %s33
    %s53 = sphi 0, %s53
    %s55 = sphi 0, %s53
    %s56 = sphi 0, %s55
    %s70 = sphi 0, %s56
    %s74 = sphi 0, %s74
    %s76 = sphi 0, %s74
    %s77 = sphi 0, %s76
    %s91 = sphi 0, %s77
    %s95 = sphi 0, %s95
    %s97 = sphi 0, %s95
    %s98 = sphi 0, %s97
    %s112 = sphi 0, %s98
    %s116 = sphi 0, %s116
    %s118 = sphi 0, %s116
    %s119 = sphi 0, %s118
    %s133 = sphi 0, %s119
    %s137 = sphi 0, %s137
    %s139 = sphi 0, %s137
    %s140 = sphi 0, %s139
    %s154 = sphi 0, %s140
    %s158 = sphi 0, %s158
    %s160 = sphi 0, %s158
    %s161 = sphi 0, %s160
    %s175 = sphi 0, %s161
    %s179 = sphi 0, %s179
    %s181 = sphi 0, %s179
    %s182 = sphi 0, %s181
    %s196 = sphi 0, %s182
    %s200 = sphi 0, %s200
    %s202 = sphi 0, %s200
    %s203 = sphi 0, %s202
    %s217 = sphi 0, %s203
    %s221 = sphi 0, %s221
    %s223 = sphi 0, %s221
    %s224 = sphi 0, %s223
    %s238 = sphi 0, %s224
    %s242 = sphi 0, %s242
    %s244 = sphi 0, %s242
    %s245 = sphi 0, %s244
    %s259 = sphi 0, %s245
    %s265 = sphi 0, %s267
    %s268 = sphi 0, %s265
    %s269 = sphi 0, %s268
    %s285 = sphi 0, %s269
    %s291 = sphi 0, %s293
    %s294 = sphi 0, %s291
    %s295 = sphi 0, %s294
    %s311 = sphi 0, %s295
  $region4: #{tpu_custom_call.1} parent=0 // loop_header_branch
    %22 = sbr.rel (%p20) target = $region8
  $region5: #{tpu_custom_call.1} parent=0 // loop_body
    %s24 = ssub.s32 %s19, 1
    %s25 = ssub.s32 %s19, 2
    %s26 = sadd.s32 %s19, 1
    %s27 = ssub.s32 %s19, %s26
    %p28 = scmp.eq.s32.totalorder %s27, 0
    %s30 = sadd.s32 %s29, 1
    %s31 = scalar_select %p28, %s29, %s30
    %p34 = pneg %p28
    %p35 = scmp.eq.s32.totalorder %s19, 1
    %p36 = por %p34, %p35
    %p37 = scmp.ne.s32.totalorder %s29, %s32
    %p38 = scmp.eq.s32.totalorder %s19, 0
    %p39 = por %p37, %p38
    %p40 = scmp.ne.s32.totalorder %s29, %s32
    %p41 = scmp.eq.s32.totalorder %s24, 1
    %p42 = por %p40, %p41
    %p43 = scmp.ne.s32.totalorder %s32, %s33
    %p44 = scmp.eq.s32.totalorder %s24, 0
    %p45 = por %p43, %p44
    %p46 = scmp.ne.s32.totalorder %s32, %s33
    %p47 = scmp.eq.s32.totalorder %s25, 1
    %p48 = por %p46, %p47
    %p50 = scmp.ne.s32.totalorder %s33, %s49
    %p51 = scmp.eq.s32.totalorder %s25, 0
    %p52 = por %p50, %p51
    %s54 = sadd.s32 %s53, 1
    %p57 = scmp.eq.s32.totalorder %s19, 1
    %p58 = scmp.ne.s32.totalorder %s53, %s55
    %p59 = scmp.eq.s32.totalorder %s19, 0
    %p60 = por %p58, %p59
    %p61 = scmp.ne.s32.totalorder %s53, %s55
    %p62 = scmp.eq.s32.totalorder %s24, 1
    %p63 = por %p61, %p62
    %p64 = scmp.ne.s32.totalorder %s55, %s56
    %p65 = scmp.eq.s32.totalorder %s24, 0
    %p66 = por %p64, %p65
    %p67 = scmp.ne.s32.totalorder %s55, %s56
    %p68 = scmp.eq.s32.totalorder %s25, 1
    %p69 = por %p67, %p68
    %p71 = scmp.ne.s32.totalorder %s56, %s70
    %p72 = scmp.eq.s32.totalorder %s25, 0
    %p73 = por %p71, %p72
    %s75 = sadd.s32 %s74, 1
    %p78 = scmp.eq.s32.totalorder %s19, 1
    %p79 = scmp.ne.s32.totalorder %s74, %s76
    %p80 = scmp.eq.s32.totalorder %s19, 0
    %p81 = por %p79, %p80
    %p82 = scmp.ne.s32.totalorder %s74, %s76
    %p83 = scmp.eq.s32.totalorder %s24, 1
    %p84 = por %p82, %p83
    %p85 = scmp.ne.s32.totalorder %s76, %s77
    %p86 = scmp.eq.s32.totalorder %s24, 0
    %p87 = por %p85, %p86
    %p88 = scmp.ne.s32.totalorder %s76, %s77
    %p89 = scmp.eq.s32.totalorder %s25, 1
    %p90 = por %p88, %p89
    %p92 = scmp.ne.s32.totalorder %s77, %s91
    %p93 = scmp.eq.s32.totalorder %s25, 0
    %p94 = por %p92, %p93
    %s96 = sadd.s32 %s95, 1
    %p99 = scmp.eq.s32.totalorder %s19, 1
    %p100 = scmp.ne.s32.totalorder %s95, %s97
    %p101 = scmp.eq.s32.totalorder %s19, 0
    %p102 = por %p100, %p101
    %p103 = scmp.ne.s32.totalorder %s95, %s97
    %p104 = scmp.eq.s32.totalorder %s24, 1
    %p105 = por %p103, %p104
    %p106 = scmp.ne.s32.totalorder %s97, %s98
    %p107 = scmp.eq.s32.totalorder %s24, 0
    %p108 = por %p106, %p107
    %p109 = scmp.ne.s32.totalorder %s97, %s98
    %p110 = scmp.eq.s32.totalorder %s25, 1
    %p111 = por %p109, %p110
    %p113 = scmp.ne.s32.totalorder %s98, %s112
    %p114 = scmp.eq.s32.totalorder %s25, 0
    %p115 = por %p113, %p114
    %s117 = sadd.s32 %s116, 1
    %p120 = scmp.eq.s32.totalorder %s19, 1
    %p121 = scmp.ne.s32.totalorder %s116, %s118
    %p122 = scmp.eq.s32.totalorder %s19, 0
    %p123 = por %p121, %p122
    %p124 = scmp.ne.s32.totalorder %s116, %s118
    %p125 = scmp.eq.s32.totalorder %s24, 1
    %p126 = por %p124, %p125
    %p127 = scmp.ne.s32.totalorder %s118, %s119
    %p128 = scmp.eq.s32.totalorder %s24, 0
    %p129 = por %p127, %p128
    %p130 = scmp.ne.s32.totalorder %s118, %s119
    %p131 = scmp.eq.s32.totalorder %s25, 1
    %p132 = por %p130, %p131
    %p134 = scmp.ne.s32.totalorder %s119, %s133
    %p135 = scmp.eq.s32.totalorder %s25, 0
    %p136 = por %p134, %p135
    %s138 = sadd.s32 %s137, 1
    %p141 = scmp.eq.s32.totalorder %s19, 1
    %p142 = scmp.ne.s32.totalorder %s137, %s139
    %p143 = scmp.eq.s32.totalorder %s19, 0
    %p144 = por %p142, %p143
    %p145 = scmp.ne.s32.totalorder %s137, %s139
    %p146 = scmp.eq.s32.totalorder %s24, 1
    %p147 = por %p145, %p146
    %p148 = scmp.ne.s32.totalorder %s139, %s140
    %p149 = scmp.eq.s32.totalorder %s24, 0
    %p150 = por %p148, %p149
    %p151 = scmp.ne.s32.totalorder %s139, %s140
    %p152 = scmp.eq.s32.totalorder %s25, 1
    %p153 = por %p151, %p152
    %p155 = scmp.ne.s32.totalorder %s140, %s154
    %p156 = scmp.eq.s32.totalorder %s25, 0
    %p157 = por %p155, %p156
    %s159 = sadd.s32 %s158, 1
    %p162 = scmp.eq.s32.totalorder %s19, 1
    %p163 = scmp.ne.s32.totalorder %s158, %s160
    %p164 = scmp.eq.s32.totalorder %s19, 0
    %p165 = por %p163, %p164
    %p166 = scmp.ne.s32.totalorder %s158, %s160
    %p167 = scmp.eq.s32.totalorder %s24, 1
    %p168 = por %p166, %p167
    %p169 = scmp.ne.s32.totalorder %s160, %s161
    %p170 = scmp.eq.s32.totalorder %s24, 0
    %p171 = por %p169, %p170
    %p172 = scmp.ne.s32.totalorder %s160, %s161
    %p173 = scmp.eq.s32.totalorder %s25, 1
    %p174 = por %p172, %p173
    %p176 = scmp.ne.s32.totalorder %s161, %s175
    %p177 = scmp.eq.s32.totalorder %s25, 0
    %p178 = por %p176, %p177
    %s180 = sadd.s32 %s179, 1
    %p183 = scmp.eq.s32.totalorder %s19, 1
    %p184 = scmp.ne.s32.totalorder %s179, %s181
    %p185 = scmp.eq.s32.totalorder %s19, 0
    %p186 = por %p184, %p185
    %p187 = scmp.ne.s32.totalorder %s179, %s181
    %p188 = scmp.eq.s32.totalorder %s24, 1
    %p189 = por %p187, %p188
    %p190 = scmp.ne.s32.totalorder %s181, %s182
    %p191 = scmp.eq.s32.totalorder %s24, 0
    %p192 = por %p190, %p191
    %p193 = scmp.ne.s32.totalorder %s181, %s182
    %p194 = scmp.eq.s32.totalorder %s25, 1
    %p195 = por %p193, %p194
    %p197 = scmp.ne.s32.totalorder %s182, %s196
    %p198 = scmp.eq.s32.totalorder %s25, 0
    %p199 = por %p197, %p198
    %s201 = sadd.s32 %s200, 1
    %p204 = scmp.eq.s32.totalorder %s19, 1
    %p205 = scmp.ne.s32.totalorder %s200, %s202
    %p206 = scmp.eq.s32.totalorder %s19, 0
    %p207 = por %p205, %p206
    %p208 = scmp.ne.s32.totalorder %s200, %s202
    %p209 = scmp.eq.s32.totalorder %s24, 1
    %p210 = por %p208, %p209
    %p211 = scmp.ne.s32.totalorder %s202, %s203
    %p212 = scmp.eq.s32.totalorder %s24, 0
    %p213 = por %p211, %p212
    %p214 = scmp.ne.s32.totalorder %s202, %s203
    %p215 = scmp.eq.s32.totalorder %s25, 1
    %p216 = por %p214, %p215
    %p218 = scmp.ne.s32.totalorder %s203, %s217
    %p219 = scmp.eq.s32.totalorder %s25, 0
    %p220 = por %p218, %p219
    %s222 = sadd.s32 %s221, 1
    %p225 = scmp.eq.s32.totalorder %s19, 1
    %p226 = scmp.ne.s32.totalorder %s221, %s223
    %p227 = scmp.eq.s32.totalorder %s19, 0
    %p228 = por %p226, %p227
    %p229 = scmp.ne.s32.totalorder %s221, %s223
    %p230 = scmp.eq.s32.totalorder %s24, 1
    %p231 = por %p229, %p230
    %p232 = scmp.ne.s32.totalorder %s223, %s224
    %p233 = scmp.eq.s32.totalorder %s24, 0
    %p234 = por %p232, %p233
    %p235 = scmp.ne.s32.totalorder %s223, %s224
    %p236 = scmp.eq.s32.totalorder %s25, 1
    %p237 = por %p235, %p236
    %p239 = scmp.ne.s32.totalorder %s224, %s238
    %p240 = scmp.eq.s32.totalorder %s25, 0
    %p241 = por %p239, %p240
    %s243 = sadd.s32 %s242, 1
    %p246 = scmp.eq.s32.totalorder %s19, 1
    %p247 = scmp.ne.s32.totalorder %s242, %s244
    %p248 = scmp.eq.s32.totalorder %s19, 0
    %p249 = por %p247, %p248
    %p250 = scmp.ne.s32.totalorder %s242, %s244
    %p251 = scmp.eq.s32.totalorder %s24, 1
    %p252 = por %p250, %p251
    %p253 = scmp.ne.s32.totalorder %s244, %s245
    %p254 = scmp.eq.s32.totalorder %s24, 0
    %p255 = por %p253, %p254
    %p256 = scmp.ne.s32.totalorder %s244, %s245
    %p257 = scmp.eq.s32.totalorder %s25, 1
    %p258 = por %p256, %p257
    %p260 = scmp.ne.s32.totalorder %s245, %s259
    %p261 = scmp.eq.s32.totalorder %s25, 0
    %p262 = por %p260, %p261
    %s263 = ssub.s32 %s19, %s26
    %p264 = scmp.eq.s32.totalorder %s263, 0
    %s266 = sadd.s32 %s265, 1
    %s267 = scalar_select %p264, %s265, %s266
    %p270 = pneg %p264
    %p271 = scmp.eq.s32.totalorder %s19, 1
    %p272 = por %p270, %p271
    %p273 = scmp.ne.s32.totalorder %s265, %s268
    %p274 = scmp.eq.s32.totalorder %s19, 0
    %p275 = por %p273, %p274
    %p276 = scmp.ne.s32.totalorder %s265, %s268
    %p277 = scmp.eq.s32.totalorder %s24, 1
    %p278 = por %p276, %p277
    %p279 = scmp.ne.s32.totalorder %s268, %s269
    %p280 = scmp.eq.s32.totalorder %s24, 0
    %p281 = por %p279, %p280
    %p282 = scmp.ne.s32.totalorder %s268, %s269
    %p283 = scmp.eq.s32.totalorder %s25, 1
    %p284 = por %p282, %p283
    %p286 = scmp.ne.s32.totalorder %s269, %s285
    %p287 = scmp.eq.s32.totalorder %s25, 0
    %p288 = por %p286, %p287
    %s289 = ssub.s32 %s19, %s26
    %p290 = scmp.eq.s32.totalorder %s289, 0
    %s292 = sadd.s32 %s291, 1
    %s293 = scalar_select %p290, %s291, %s292
    %p296 = pneg %p290
    %p297 = scmp.eq.s32.totalorder %s19, 1
    %p298 = por %p296, %p297
    %p299 = scmp.ne.s32.totalorder %s291, %s294
    %p300 = scmp.eq.s32.totalorder %s19, 0
    %p301 = por %p299, %p300
    %p302 = scmp.ne.s32.totalorder %s291, %s294
    %p303 = scmp.eq.s32.totalorder %s24, 1
    %p304 = por %p302, %p303
    %p305 = scmp.ne.s32.totalorder %s294, %s295
    %p306 = scmp.eq.s32.totalorder %s24, 0
    %p307 = por %p305, %p306
    %p308 = scmp.ne.s32.totalorder %s294, %s295
    %p309 = scmp.eq.s32.totalorder %s25, 1
    %p310 = por %p308, %p309
    %p312 = scmp.ne.s32.totalorder %s295, %s311
    %p313 = scmp.eq.s32.totalorder %s25, 0
    %p314 = por %p312, %p313
    %p315 = scmp.le.s32.totalorder 1, %s19
    %p316 = scmp.lt.s32.totalorder %s19, 3
    %p317 = pnand %p315, %p316
    %p318 = pneg %p317
    // Predicated region
    $region9: #{tpu_custom_call.1} parent=5 // pred_check
      _
    $region10: #{tpu_custom_call.1} parent=5 // pred_check_branch
      %320 = sbr.rel (%p317) target = $region12
    $region11: #{tpu_custom_call.1} parent=5 // pred_region
      %s321 = ssub.s32 %s19, 1
      // Predicated region
      $region13: #{tpu_custom_call.1} parent=11 // pred_check
        %p322 = pneg %p66
      $region14: #{tpu_custom_call.1} parent=11 // pred_check_branch
        %324 = sbr.rel (%p322) target = $region16
      $region15: #{tpu_custom_call.1} parent=11 // pred_region
        _
      $region16: #{tpu_custom_call.1} parent=11 // pred_fallthru
        _
      // Predicated region
      $region17: #{tpu_custom_call.1} parent=11 // pred_check
        %p325 = pneg %p87
      $region18: #{tpu_custom_call.1} parent=11 // pred_check_branch
        %327 = sbr.rel (%p325) target = $region20
      $region19: #{tpu_custom_call.1} parent=11 // pred_region
        _
      $region20: #{tpu_custom_call.1} parent=11 // pred_fallthru
        _
      // Predicated region
      $region21: #{tpu_custom_call.1} parent=11 // pred_check
        %p328 = pneg %p108
      $region22: #{tpu_custom_call.1} parent=11 // pred_check_branch
        %330 = sbr.rel (%p328) target = $region24
      $region23: #{tpu_custom_call.1} parent=11 // pred_region
        _
      $region24: #{tpu_custom_call.1} parent=11 // pred_fallthru
        _
      // Predicated region
      $region25: #{tpu_custom_call.1} parent=11 // pred_check
        %p331 = pneg %p129
      $region26: #{tpu_custom_call.1} parent=11 // pred_check_branch
        %333 = sbr.rel (%p331) target = $region28
      $region27: #{tpu_custom_call.1} parent=11 // pred_region
        _
      $region28: #{tpu_custom_call.1} parent=11 // pred_fallthru
        _
      // Predicated region
      $region29: #{tpu_custom_call.1} parent=11 // pred_check
        %p334 = pneg %p150
      $region30: #{tpu_custom_call.1} parent=11 // pred_check_branch
        %336 = sbr.rel (%p334) target = $region32
      $region31: #{tpu_custom_call.1} parent=11 // pred_region
        _
      $region32: #{tpu_custom_call.1} parent=11 // pred_fallthru
        _
      // Predicated region
      $region33: #{tpu_custom_call.1} parent=11 // pred_check
        %p337 = pneg %p171
      $region34: #{tpu_custom_call.1} parent=11 // pred_check_branch
        %339 = sbr.rel (%p337) target = $region36
      $region35: #{tpu_custom_call.1} parent=11 // pred_region
        _
      $region36: #{tpu_custom_call.1} parent=11 // pred_fallthru
        _
      // Predicated region
      $region37: #{tpu_custom_call.1} parent=11 // pred_check
        %p340 = pneg %p192
      $region38: #{tpu_custom_call.1} parent=11 // pred_check_branch
        %342 = sbr.rel (%p340) target = $region40
      $region39: #{tpu_custom_call.1} parent=11 // pred_region
        _
      $region40: #{tpu_custom_call.1} parent=11 // pred_fallthru
        _
      // Predicated region
      $region41: #{tpu_custom_call.1} parent=11 // pred_check
        %p343 = pneg %p213
      $region42: #{tpu_custom_call.1} parent=11 // pred_check_branch
        %345 = sbr.rel (%p343) target = $region44
      $region43: #{tpu_custom_call.1} parent=11 // pred_region
        _
      $region44: #{tpu_custom_call.1} parent=11 // pred_fallthru
        _
      // Predicated region
      $region45: #{tpu_custom_call.1} parent=11 // pred_check
        %p346 = pneg %p234
      $region46: #{tpu_custom_call.1} parent=11 // pred_check_branch
        %348 = sbr.rel (%p346) target = $region48
      $region47: #{tpu_custom_call.1} parent=11 // pred_region
        _
      $region48: #{tpu_custom_call.1} parent=11 // pred_fallthru
        _
      // Predicated region
      $region49: #{tpu_custom_call.1} parent=11 // pred_check
        %p349 = pneg %p255
      $region50: #{tpu_custom_call.1} parent=11 // pred_check_branch
        %351 = sbr.rel (%p349) target = $region52
      $region51: #{tpu_custom_call.1} parent=11 // pred_region
        _
      $region52: #{tpu_custom_call.1} parent=11 // pred_fallthru
        _
    $region12: #{tpu_custom_call.1} parent=5 // pred_fallthru
      _
    %p352 = scmp.lt.s32.totalorder %s19, 2
    // Predicated region
    $region53: #{tpu_custom_call.1} parent=5 // pred_check
      %p353 = pneg %p352
    $region54: #{tpu_custom_call.1} parent=5 // pred_check_branch
      %355 = sbr.rel (%p353) target = $region56
    $region55: #{tpu_custom_call.1} parent=5 // pred_region
      // Predicated region
      $region57: #{tpu_custom_call.1} parent=55 // pred_check
        %p356 = pneg %p39
      $region58: #{tpu_custom_call.1} parent=55 // pred_check_branch
        %358 = sbr.rel (%p356) target = $region60
      $region59: #{tpu_custom_call.1} parent=55 // pred_region
        %p359 = scmp.lt.s32.totalorder %s19, 1
        %s360 = scalar_select %p359, %s19, 1
        %s361 = smul.addr %s360, 32
        %s362 = smul.addr %s361, 8
        %s363 = scalar_lea.vmem %s0, %s362
      $region60: #{tpu_custom_call.1} parent=55 // pred_fallthru
        _
    $region56: #{tpu_custom_call.1} parent=5 // pred_fallthru
      _
    %p364 = scmp.le.s32.totalorder 1, %s19
    %p365 = scmp.lt.s32.totalorder %s19, 3
    %p366 = pnand %p364, %p365
    %p367 = pneg %p366
    // Predicated region
    $region61: #{tpu_custom_call.1} parent=5 // pred_check
      _
    $region62: #{tpu_custom_call.1} parent=5 // pred_check_branch
      %369 = sbr.rel (%p366) target = $region64
    $region63: #{tpu_custom_call.1} parent=5 // pred_region
      %s370 = ssub.s32 %s19, 1
      %p371 = scmp.lt.s32.totalorder %s24, 1
      %s372 = scalar_select %p371, %s24, 1
      %s373 = smul.addr %s372, 32
      %s374 = smul.addr %s373, 8
      %s375 = scalar_lea.vmem %s0, %s374
      %p376 = pneg %p45
      %p377 = pneg %p42
      %p378 = pneg %p66
      %p379 = pneg %p63
      %p380 = pneg %p87
      %p381 = pneg %p84
      %p382 = pneg %p108
      %p383 = pneg %p105
      %p384 = pneg %p129
      %p385 = pneg %p126
      %p386 = pneg %p150
      %p387 = pneg %p147
      %p388 = pneg %p171
      %p389 = pneg %p168
      %p390 = pneg %p192
      %p391 = pneg %p189
      %p392 = pneg %p213
      %p393 = pneg %p210
      %p394 = pneg %p234
      %p395 = pneg %p231
      %p396 = pneg %p255
      %p397 = pneg %p252
      %p398 = pneg %p281
      %p399 = pneg %p278
      %p400 = scmp.lt.s32.totalorder %s24, 1
      %s401 = scalar_select %p400, %s24, 1
      %s402 = smul.addr %s401, 32
      %s403 = smul.addr %s402, 8
      %s404 = scalar_lea.vmem %s11, %s403
      %p405 = pneg %p307
      %p406 = pneg %p304
      %p407 = scmp.lt.s32.totalorder %s24, 1
      %s408 = scalar_select %p407, %s24, 1
      %s409 = smul.addr %s408, 8
      %s410 = smul.addr %s409, 8
      %s411 = scalar_lea.vmem %s12, %s410
      %p412 = scmp.lt.s32.totalorder %s24, 1
      %s413 = scalar_select %p412, %s24, 1
      %s414 = smul.addr %s413, 32
      %s415 = smul.addr %s414, 8
      %s416 = scalar_lea.vmem %s0, %s415
      %p417 = scmp.lt.s32.totalorder %s24, 1
      %s418 = scalar_select %p417, %s24, 1
      %s419 = smul.addr %s418, 32
      %s420 = smul.addr %s419, 8
      %s421 = scalar_lea.vmem %s11, %s420
      %p422 = scmp.lt.s32.totalorder %s24, 1
      %s423 = scalar_select %p422, %s24, 1
      %s424 = smul.addr %s423, 8
      %s425 = smul.addr %s424, 8
      %s426 = scalar_lea.vmem %s12, %s425
      %v428 = vlaneseq
      %v429 = vshrl.u32 %v428, 7
      %v430 = vadd.s32 %v429, 8
      %v431 = vadd.s32 %v429, 16
      %v432 = vadd.s32 %v429, 24
      %v433 = vadd.s32 %v429, 32
      %v434 = vadd.s32 %v429, 40
      %v435 = vadd.s32 %v429, 48
      %v436 = vadd.s32 %v429, 56
      %v437 = vadd.s32 %v429, 64
      %v438 = vadd.s32 %v429, 72
      %v439 = vadd.s32 %v429, 80
      %v440 = vadd.s32 %v429, 88
      %v441 = vadd.s32 %v429, 96
      %v442 = vadd.s32 %v429, 104
      %v443 = vadd.s32 %v429, 112
      %v444 = vadd.s32 %v429, 120
      %v445 = vadd.s32 %v429, 128
      %v446 = vadd.s32 %v429, 136
      %v447 = vadd.s32 %v429, 144
      %v448 = vadd.s32 %v429, 152
      %v449 = vadd.s32 %v429, 160
      %v450 = vadd.s32 %v429, 168
      %v451 = vadd.s32 %v429, 176
      %v452 = vadd.s32 %v429, 184
      %v453 = vadd.s32 %v429, 192
      %v454 = vadd.s32 %v429, 200
      %v455 = vadd.s32 %v429, 208
      %v456 = vadd.s32 %v429, 216
      %v457 = vadd.s32 %v429, 224
      %v458 = vadd.s32 %v429, 232
      %v459 = vadd.s32 %v429, 240
      %v460 = vadd.s32 %v429, 248
      %vm461 = vcmp.lt.s32.totalorder %v429, 0
      %v462 = vsub.s32 0, %v429
      %v463 = vsel %vm461, %v462, %v429
      %v464 = vshrl.u32 %v463, 4
      %v465 = vand.u32 %v463, 15
      %v466 = vsub.s32 0, %v465
      %v467 = vsel %vm461, %v466, %v465
      %vm468 = vcmp.lt.s32.totalorder %v430, 0
      %v469 = vsub.s32 0, %v430
      %v470 = vsel %vm468, %v469, %v430
      %v471 = vshrl.u32 %v470, 4
      %v472 = vand.u32 %v470, 15
      %v473 = vsub.s32 0, %v472
      %v474 = vsel %vm468, %v473, %v472
      %vm475 = vcmp.lt.s32.totalorder %v431, 0
      %v476 = vsub.s32 0, %v431
      %v477 = vsel %vm475, %v476, %v431
      %v478 = vshrl.u32 %v477, 4
      %v479 = vand.u32 %v477, 15
      %v480 = vsub.s32 0, %v479
      %v481 = vsel %vm475, %v480, %v479
      %vm482 = vcmp.lt.s32.totalorder %v432, 0
      %v483 = vsub.s32 0, %v432
      %v484 = vsel %vm482, %v483, %v432
      %v485 = vshrl.u32 %v484, 4
      %v486 = vand.u32 %v484, 15
      %v487 = vsub.s32 0, %v486
      %v488 = vsel %vm482, %v487, %v486
      %vm489 = vcmp.lt.s32.totalorder %v433, 0
      %v490 = vsub.s32 0, %v433
      %v491 = vsel %vm489, %v490, %v433
      %v492 = vshrl.u32 %v491, 4
      %v493 = vand.u32 %v491, 15
      %v494 = vsub.s32 0, %v493
      %v495 = vsel %vm489, %v494, %v493
      %vm496 = vcmp.lt.s32.totalorder %v434, 0
      %v497 = vsub.s32 0, %v434
      %v498 = vsel %vm496, %v497, %v434
      %v499 = vshrl.u32 %v498, 4
      %v500 = vand.u32 %v498, 15
      %v501 = vsub.s32 0, %v500
      %v502 = vsel %vm496, %v501, %v500
      %vm503 = vcmp.lt.s32.totalorder %v435, 0
      %v504 = vsub.s32 0, %v435
      %v505 = vsel %vm503, %v504, %v435
      %v506 = vshrl.u32 %v505, 4
      %v507 = vand.u32 %v505, 15
      %v508 = vsub.s32 0, %v507
      %v509 = vsel %vm503, %v508, %v507
      %vm510 = vcmp.lt.s32.totalorder %v436, 0
      %v511 = vsub.s32 0, %v436
      %v512 = vsel %vm510, %v511, %v436
      %v513 = vshrl.u32 %v512, 4
      %v514 = vand.u32 %v512, 15
      %v515 = vsub.s32 0, %v514
      %v516 = vsel %vm510, %v515, %v514
      %vm517 = vcmp.lt.s32.totalorder %v437, 0
      %v518 = vsub.s32 0, %v437
      %v519 = vsel %vm517, %v518, %v437
      %v520 = vshrl.u32 %v519, 4
      %v521 = vand.u32 %v519, 15
      %v522 = vsub.s32 0, %v521
      %v523 = vsel %vm517, %v522, %v521
      %vm524 = vcmp.lt.s32.totalorder %v438, 0
      %v525 = vsub.s32 0, %v438
      %v526 = vsel %vm524, %v525, %v438
      %v527 = vshrl.u32 %v526, 4
      %v528 = vand.u32 %v526, 15
      %v529 = vsub.s32 0, %v528
      %v530 = vsel %vm524, %v529, %v528
      %vm531 = vcmp.lt.s32.totalorder %v439, 0
      %v532 = vsub.s32 0, %v439
      %v533 = vsel %vm531, %v532, %v439
      %v534 = vshrl.u32 %v533, 4
      %v535 = vand.u32 %v533, 15
      %v536 = vsub.s32 0, %v535
      %v537 = vsel %vm531, %v536, %v535
      %vm538 = vcmp.lt.s32.totalorder %v440, 0
      %v539 = vsub.s32 0, %v440
      %v540 = vsel %vm538, %v539, %v440
      %v541 = vshrl.u32 %v540, 4
      %v542 = vand.u32 %v540, 15
      %v543 = vsub.s32 0, %v542
      %v544 = vsel %vm538, %v543, %v542
      %vm545 = vcmp.lt.s32.totalorder %v441, 0
      %v546 = vsub.s32 0, %v441
      %v547 = vsel %vm545, %v546, %v441
      %v548 = vshrl.u32 %v547, 4
      %v549 = vand.u32 %v547, 15
      %v550 = vsub.s32 0, %v549
      %v551 = vsel %vm545, %v550, %v549
      %vm552 = vcmp.lt.s32.totalorder %v442, 0
      %v553 = vsub.s32 0, %v442
      %v554 = vsel %vm552, %v553, %v442
      %v555 = vshrl.u32 %v554, 4
      %v556 = vand.u32 %v554, 15
      %v557 = vsub.s32 0, %v556
      %v558 = vsel %vm552, %v557, %v556
      %vm559 = vcmp.lt.s32.totalorder %v443, 0
      %v560 = vsub.s32 0, %v443
      %v561 = vsel %vm559, %v560, %v443
      %v562 = vshrl.u32 %v561, 4
      %v563 = vand.u32 %v561, 15
      %v564 = vsub.s32 0, %v563
      %v565 = vsel %vm559, %v564, %v563
      %vm566 = vcmp.lt.s32.totalorder %v444, 0
      %v567 = vsub.s32 0, %v444
      %v568 = vsel %vm566, %v567, %v444
      %v569 = vshrl.u32 %v568, 4
      %v570 = vand.u32 %v568, 15
      %v571 = vsub.s32 0, %v570
      %v572 = vsel %vm566, %v571, %v570
      %vm573 = vcmp.lt.s32.totalorder %v445, 0
      %v574 = vsub.s32 0, %v445
      %v575 = vsel %vm573, %v574, %v445
      %v576 = vshrl.u32 %v575, 4
      %v577 = vand.u32 %v575, 15
      %v578 = vsub.s32 0, %v577
      %v579 = vsel %vm573, %v578, %v577
      %vm580 = vcmp.lt.s32.totalorder %v446, 0
      %v581 = vsub.s32 0, %v446
      %v582 = vsel %vm580, %v581, %v446
      %v583 = vshrl.u32 %v582, 4
      %v584 = vand.u32 %v582, 15
      %v585 = vsub.s32 0, %v584
      %v586 = vsel %vm580, %v585, %v584
      %vm587 = vcmp.lt.s32.totalorder %v447, 0
      %v588 = vsub.s32 0, %v447
      %v589 = vsel %vm587, %v588, %v447
      %v590 = vshrl.u32 %v589, 4
      %v591 = vand.u32 %v589, 15
      %v592 = vsub.s32 0, %v591
      %v593 = vsel %vm587, %v592, %v591
      %vm594 = vcmp.lt.s32.totalorder %v448, 0
      %v595 = vsub.s32 0, %v448
      %v596 = vsel %vm594, %v595, %v448
      %v597 = vshrl.u32 %v596, 4
      %v598 = vand.u32 %v596, 15
      %v599 = vsub.s32 0, %v598
      %v600 = vsel %vm594, %v599, %v598
      %vm601 = vcmp.lt.s32.totalorder %v449, 0
      %v602 = vsub.s32 0, %v449
      %v603 = vsel %vm601, %v602, %v449
      %v604 = vshrl.u32 %v603, 4
      %v605 = vand.u32 %v603, 15
      %v606 = vsub.s32 0, %v605
      %v607 = vsel %vm601, %v606, %v605
      %vm608 = vcmp.lt.s32.totalorder %v450, 0
      %v609 = vsub.s32 0, %v450
      %v610 = vsel %vm608, %v609, %v450
      %v611 = vshrl.u32 %v610, 4
      %v612 = vand.u32 %v610, 15
      %v613 = vsub.s32 0, %v612
      %v614 = vsel %vm608, %v613, %v612
      %vm615 = vcmp.lt.s32.totalorder %v451, 0
      %v616 = vsub.s32 0, %v451
      %v617 = vsel %vm615, %v616, %v451
      %v618 = vshrl.u32 %v617, 4
      %v619 = vand.u32 %v617, 15
      %v620 = vsub.s32 0, %v619
      %v621 = vsel %vm615, %v620, %v619
      %vm622 = vcmp.lt.s32.totalorder %v452, 0
      %v623 = vsub.s32 0, %v452
      %v624 = vsel %vm622, %v623, %v452
      %v625 = vshrl.u32 %v624, 4
      %v626 = vand.u32 %v624, 15
      %v627 = vsub.s32 0, %v626
      %v628 = vsel %vm622, %v627, %v626
      %vm629 = vcmp.lt.s32.totalorder %v453, 0
      %v630 = vsub.s32 0, %v453
      %v631 = vsel %vm629, %v630, %v453
      %v632 = vshrl.u32 %v631, 4
      %v633 = vand.u32 %v631, 15
      %v634 = vsub.s32 0, %v633
      %v635 = vsel %vm629, %v634, %v633
      %vm636 = vcmp.lt.s32.totalorder %v454, 0
      %v637 = vsub.s32 0, %v454
      %v638 = vsel %vm636, %v637, %v454
      %v639 = vshrl.u32 %v638, 4
      %v640 = vand.u32 %v638, 15
      %v641 = vsub.s32 0, %v640
      %v642 = vsel %vm636, %v641, %v640
      %vm643 = vcmp.lt.s32.totalorder %v455, 0
      %v644 = vsub.s32 0, %v455
      %v645 = vsel %vm643, %v644, %v455
      %v646 = vshrl.u32 %v645, 4
      %v647 = vand.u32 %v645, 15
      %v648 = vsub.s32 0, %v647
      %v649 = vsel %vm643, %v648, %v647
      %vm650 = vcmp.lt.s32.totalorder %v456, 0
      %v651 = vsub.s32 0, %v456
      %v652 = vsel %vm650, %v651, %v456
      %v653 = vshrl.u32 %v652, 4
      %v654 = vand.u32 %v652, 15
      %v655 = vsub.s32 0, %v654
      %v656 = vsel %vm650, %v655, %v654
      %vm657 = vcmp.lt.s32.totalorder %v457, 0
      %v658 = vsub.s32 0, %v457
      %v659 = vsel %vm657, %v658, %v457
      %v660 = vshrl.u32 %v659, 4
      %v661 = vand.u32 %v659, 15
      %v662 = vsub.s32 0, %v661
      %v663 = vsel %vm657, %v662, %v661
      %vm664 = vcmp.lt.s32.totalorder %v458, 0
      %v665 = vsub.s32 0, %v458
      %v666 = vsel %vm664, %v665, %v458
      %v667 = vshrl.u32 %v666, 4
      %v668 = vand.u32 %v666, 15
      %v669 = vsub.s32 0, %v668
      %v670 = vsel %vm664, %v669, %v668
      %vm671 = vcmp.lt.s32.totalorder %v459, 0
      %v672 = vsub.s32 0, %v459
      %v673 = vsel %vm671, %v672, %v459
      %v674 = vshrl.u32 %v673, 4
      %v675 = vand.u32 %v673, 15
      %v676 = vsub.s32 0, %v675
      %v677 = vsel %vm671, %v676, %v675
      %vm678 = vcmp.lt.s32.totalorder %v460, 0
      %v679 = vsub.s32 0, %v460
      %v680 = vsel %vm678, %v679, %v460
      %v681 = vshrl.u32 %v680, 4
      %v682 = vand.u32 %v680, 15
      %v683 = vsub.s32 0, %v682
      %v684 = vsel %vm678, %v683, %v682
      %vm685 = vcmp.ne.s32.totalorder %v467, 0
      %vm686 = vcmp.ne.s32.totalorder %v474, 0
      %vm687 = vcmp.ne.s32.totalorder %v481, 0
      %vm688 = vcmp.ne.s32.totalorder %v488, 0
      %vm689 = vcmp.ne.s32.totalorder %v495, 0
      %vm690 = vcmp.ne.s32.totalorder %v502, 0
      %vm691 = vcmp.ne.s32.totalorder %v509, 0
      %vm692 = vcmp.ne.s32.totalorder %v516, 0
      %vm693 = vcmp.ne.s32.totalorder %v523, 0
      %vm694 = vcmp.ne.s32.totalorder %v530, 0
      %vm695 = vcmp.ne.s32.totalorder %v537, 0
      %vm696 = vcmp.ne.s32.totalorder %v544, 0
      %vm697 = vcmp.ne.s32.totalorder %v551, 0
      %vm698 = vcmp.ne.s32.totalorder %v558, 0
      %vm699 = vcmp.ne.s32.totalorder %v565, 0
      %vm700 = vcmp.ne.s32.totalorder %v572, 0
      %vm701 = vcmp.ne.s32.totalorder %v579, 0
      %vm702 = vcmp.ne.s32.totalorder %v586, 0
      %vm703 = vcmp.ne.s32.totalorder %v593, 0
      %vm704 = vcmp.ne.s32.totalorder %v600, 0
      %vm705 = vcmp.ne.s32.totalorder %v607, 0
      %vm706 = vcmp.ne.s32.totalorder %v614, 0
      %vm707 = vcmp.ne.s32.totalorder %v621, 0
      %vm708 = vcmp.ne.s32.totalorder %v628, 0
      %vm709 = vcmp.ne.s32.totalorder %v635, 0
      %vm710 = vcmp.ne.s32.totalorder %v642, 0
      %vm711 = vcmp.ne.s32.totalorder %v649, 0
      %vm712 = vcmp.ne.s32.totalorder %v656, 0
      %vm713 = vcmp.ne.s32.totalorder %v663, 0
      %vm714 = vcmp.ne.s32.totalorder %v670, 0
      %vm715 = vcmp.ne.s32.totalorder %v677, 0
      %vm716 = vcmp.ne.s32.totalorder %v684, 0
      %vm717 = vcmp.lt.s32.totalorder %v467, 0
      %vm718 = vcmp.lt.s32.totalorder %v474, 0
      %vm719 = vcmp.lt.s32.totalorder %v481, 0
      %vm720 = vcmp.lt.s32.totalorder %v488, 0
      %vm721 = vcmp.lt.s32.totalorder %v495, 0
      %vm722 = vcmp.lt.s32.totalorder %v502, 0
      %vm723 = vcmp.lt.s32.totalorder %v509, 0
      %vm724 = vcmp.lt.s32.totalorder %v516, 0
      %vm725 = vcmp.lt.s32.totalorder %v523, 0
      %vm726 = vcmp.lt.s32.totalorder %v530, 0
      %vm727 = vcmp.lt.s32.totalorder %v537, 0
      %vm728 = vcmp.lt.s32.totalorder %v544, 0
      %vm729 = vcmp.lt.s32.totalorder %v551, 0
      %vm730 = vcmp.lt.s32.totalorder %v558, 0
      %vm731 = vcmp.lt.s32.totalorder %v565, 0
      %vm732 = vcmp.lt.s32.totalorder %v572, 0
      %vm733 = vcmp.lt.s32.totalorder %v579, 0
      %vm734 = vcmp.lt.s32.totalorder %v586, 0
      %vm735 = vcmp.lt.s32.totalorder %v593, 0
      %vm736 = vcmp.lt.s32.totalorder %v600, 0
      %vm737 = vcmp.lt.s32.totalorder %v607, 0
      %vm738 = vcmp.lt.s32.totalorder %v614, 0
      %vm739 = vcmp.lt.s32.totalorder %v621, 0
      %vm740 = vcmp.lt.s32.totalorder %v628, 0
      %vm741 = vcmp.lt.s32.totalorder %v635, 0
      %vm742 = vcmp.lt.s32.totalorder %v642, 0
      %vm743 = vcmp.lt.s32.totalorder %v649, 0
      %vm744 = vcmp.lt.s32.totalorder %v656, 0
      %vm745 = vcmp.lt.s32.totalorder %v663, 0
      %vm746 = vcmp.lt.s32.totalorder %v670, 0
      %vm747 = vcmp.lt.s32.totalorder %v677, 0
      %vm748 = vcmp.lt.s32.totalorder %v684, 0
      %vm749 = vmand %vm717, %vm685
      %vm750 = vmand %vm718, %vm686
      %vm751 = vmand %vm719, %vm687
      %vm752 = vmand %vm720, %vm688
      %vm753 = vmand %vm721, %vm689
      %vm754 = vmand %vm722, %vm690
      %vm755 = vmand %vm723, %vm691
      %vm756 = vmand %vm724, %vm692
      %vm757 = vmand %vm725, %vm693
      %vm758 = vmand %vm726, %vm694
      %vm759 = vmand %vm727, %vm695
      %vm760 = vmand %vm728, %vm696
      %vm761 = vmand %vm729, %vm697
      %vm762 = vmand %vm730, %vm698
      %vm763 = vmand %vm731, %vm699
      %vm764 = vmand %vm732, %vm700
      %vm765 = vmand %vm733, %vm701
      %vm766 = vmand %vm734, %vm702
      %vm767 = vmand %vm735, %vm703
      %vm768 = vmand %vm736, %vm704
      %vm769 = vmand %vm737, %vm705
      %vm770 = vmand %vm738, %vm706
      %vm771 = vmand %vm739, %vm707
      %vm772 = vmand %vm740, %vm708
      %vm773 = vmand %vm741, %vm709
      %vm774 = vmand %vm742, %vm710
      %vm775 = vmand %vm743, %vm711
      %vm776 = vmand %vm744, %vm712
      %vm777 = vmand %vm745, %vm713
      %vm778 = vmand %vm746, %vm714
      %vm779 = vmand %vm747, %vm715
      %vm780 = vmand %vm748, %vm716
      %v781 = vadd.s32 %v467, 16
      %v782 = vadd.s32 %v474, 16
      %v783 = vadd.s32 %v481, 16
      %v784 = vadd.s32 %v488, 16
      %v785 = vadd.s32 %v495, 16
      %v786 = vadd.s32 %v502, 16
      %v787 = vadd.s32 %v509, 16
      %v788 = vadd.s32 %v516, 16
      %v789 = vadd.s32 %v523, 16
      %v790 = vadd.s32 %v530, 16
      %v791 = vadd.s32 %v537, 16
      %v792 = vadd.s32 %v544, 16
      %v793 = vadd.s32 %v551, 16
      %v794 = vadd.s32 %v558, 16
      %v795 = vadd.s32 %v565, 16
      %v796 = vadd.s32 %v572, 16
      %v797 = vadd.s32 %v579, 16
      %v798 = vadd.s32 %v586, 16
      %v799 = vadd.s32 %v593, 16
      %v800 = vadd.s32 %v600, 16
      %v801 = vadd.s32 %v607, 16
      %v802 = vadd.s32 %v614, 16
      %v803 = vadd.s32 %v621, 16
      %v804 = vadd.s32 %v628, 16
      %v805 = vadd.s32 %v635, 16
      %v806 = vadd.s32 %v642, 16
      %v807 = vadd.s32 %v649, 16
      %v808 = vadd.s32 %v656, 16
      %v809 = vadd.s32 %v663, 16
      %v810 = vadd.s32 %v670, 16
      %v811 = vadd.s32 %v677, 16
      %v812 = vadd.s32 %v684, 16
      %v813 = vsel %vm749, %v781, %v467
      %v814 = vsel %vm750, %v782, %v474
      %v815 = vsel %vm751, %v783, %v481
      %v816 = vsel %vm752, %v784, %v488
      %v817 = vsel %vm753, %v785, %v495
      %v818 = vsel %vm754, %v786, %v502
      %v819 = vsel %vm755, %v787, %v509
      %v820 = vsel %vm756, %v788, %v516
      %v821 = vsel %vm757, %v789, %v523
      %v822 = vsel %vm758, %v790, %v530
      %v823 = vsel %vm759, %v791, %v537
      %v824 = vsel %vm760, %v792, %v544
      %v825 = vsel %vm761, %v793, %v551
      %v826 = vsel %vm762, %v794, %v558
      %v827 = vsel %vm763, %v795, %v565
      %v828 = vsel %vm764, %v796, %v572
      %v829 = vsel %vm765, %v797, %v579
      %v830 = vsel %vm766, %v798, %v586
      %v831 = vsel %vm767, %v799, %v593
      %v832 = vsel %vm768, %v800, %v600
      %v833 = vsel %vm769, %v801, %v607
      %v834 = vsel %vm770, %v802, %v614
      %v835 = vsel %vm771, %v803, %v621
      %v836 = vsel %vm772, %v804, %v628
      %v837 = vsel %vm773, %v805, %v635
      %v838 = vsel %vm774, %v806, %v642
      %v839 = vsel %vm775, %v807, %v649
      %v840 = vsel %vm776, %v808, %v656
      %v841 = vsel %vm777, %v809, %v663
      %v842 = vsel %vm778, %v810, %v670
      %v843 = vsel %vm779, %v811, %v677
      %v844 = vsel %vm780, %v812, %v684
      %vm845 = vcmp.eq.s32.totalorder %v813, 0
      %vm846 = vcmp.eq.s32.totalorder %v814, 0
      %vm847 = vcmp.eq.s32.totalorder %v815, 0
      %vm848 = vcmp.eq.s32.totalorder %v816, 0
      %vm849 = vcmp.eq.s32.totalorder %v817, 0
      %vm850 = vcmp.eq.s32.totalorder %v818, 0
      %vm851 = vcmp.eq.s32.totalorder %v819, 0
      %vm852 = vcmp.eq.s32.totalorder %v820, 0
      %vm853 = vcmp.eq.s32.totalorder %v821, 0
      %vm854 = vcmp.eq.s32.totalorder %v822, 0
      %vm855 = vcmp.eq.s32.totalorder %v823, 0
      %vm856 = vcmp.eq.s32.totalorder %v824, 0
      %vm857 = vcmp.eq.s32.totalorder %v825, 0
      %vm858 = vcmp.eq.s32.totalorder %v826, 0
      %vm859 = vcmp.eq.s32.totalorder %v827, 0
      %vm860 = vcmp.eq.s32.totalorder %v828, 0
      %vm861 = vcmp.eq.s32.totalorder %v829, 0
      %vm862 = vcmp.eq.s32.totalorder %v830, 0
      %vm863 = vcmp.eq.s32.totalorder %v831, 0
      %vm864 = vcmp.eq.s32.totalorder %v832, 0
      %vm865 = vcmp.eq.s32.totalorder %v833, 0
      %vm866 = vcmp.eq.s32.totalorder %v834, 0
      %vm867 = vcmp.eq.s32.totalorder %v835, 0
      %vm868 = vcmp.eq.s32.totalorder %v836, 0
      %vm869 = vcmp.eq.s32.totalorder %v837, 0
      %vm870 = vcmp.eq.s32.totalorder %v838, 0
      %vm871 = vcmp.eq.s32.totalorder %v839, 0
      %vm872 = vcmp.eq.s32.totalorder %v840, 0
      %vm873 = vcmp.eq.s32.totalorder %v841, 0
      %vm874 = vcmp.eq.s32.totalorder %v842, 0
      %vm875 = vcmp.eq.s32.totalorder %v843, 0
      %vm876 = vcmp.eq.s32.totalorder %v844, 0
      %vm877 = vcmp.eq.s32.totalorder %v813, 15
      %vm878 = vcmp.eq.s32.totalorder %v814, 15
      %vm879 = vcmp.eq.s32.totalorder %v815, 15
      %vm880 = vcmp.eq.s32.totalorder %v816, 15
      %vm881 = vcmp.eq.s32.totalorder %v817, 15
      %vm882 = vcmp.eq.s32.totalorder %v818, 15
      %vm883 = vcmp.eq.s32.totalorder %v819, 15
      %vm884 = vcmp.eq.s32.totalorder %v820, 15
      %vm885 = vcmp.eq.s32.totalorder %v821, 15
      %vm886 = vcmp.eq.s32.totalorder %v822, 15
      %vm887 = vcmp.eq.s32.totalorder %v823, 15
      %vm888 = vcmp.eq.s32.totalorder %v824, 15
      %vm889 = vcmp.eq.s32.totalorder %v825, 15
      %vm890 = vcmp.eq.s32.totalorder %v826, 15
      %vm891 = vcmp.eq.s32.totalorder %v827, 15
      %vm892 = vcmp.eq.s32.totalorder %v828, 15
      %vm893 = vcmp.eq.s32.totalorder %v829, 15
      %vm894 = vcmp.eq.s32.totalorder %v830, 15
      %vm895 = vcmp.eq.s32.totalorder %v831, 15
      %vm896 = vcmp.eq.s32.totalorder %v832, 15
      %vm897 = vcmp.eq.s32.totalorder %v833, 15
      %vm898 = vcmp.eq.s32.totalorder %v834, 15
      %vm899 = vcmp.eq.s32.totalorder %v835, 15
      %vm900 = vcmp.eq.s32.totalorder %v836, 15
      %vm901 = vcmp.eq.s32.totalorder %v837, 15
      %vm902 = vcmp.eq.s32.totalorder %v838, 15
      %vm903 = vcmp.eq.s32.totalorder %v839, 15
      %vm904 = vcmp.eq.s32.totalorder %v840, 15
      %vm905 = vcmp.eq.s32.totalorder %v841, 15
      %vm906 = vcmp.eq.s32.totalorder %v842, 15
      %vm907 = vcmp.eq.s32.totalorder %v843, 15
      %vm908 = vcmp.eq.s32.totalorder %v844, 15
      %vm909 = vcmask 31744
      %910 = vst.msk [vmem:[#allocation2] sm:$0xff] %vm909, 0.0
      %911 = vst.msk [vmem:[#allocation2 + $0x8] sm:$0xff] %vm909, 0.0
      %912 = vst.msk [vmem:[#allocation2 + $0x10] sm:$0xff] %vm909, 0.0
      %913 = vst.msk [vmem:[#allocation2 + $0x18] sm:$0xff] %vm909, 0.0
      %914 = vst.msk [vmem:[#allocation2 + $0x20] sm:$0xff] %vm909, 0.0
      %915 = vst.msk [vmem:[#allocation2 + $0x28] sm:$0xff] %vm909, 0.0
      %916 = vst.msk [vmem:[#allocation2 + $0x30] sm:$0xff] %vm909, 0.0
      %917 = vst.msk [vmem:[#allocation2 + $0x38] sm:$0xff] %vm909, 0.0
      %918 = vst.msk [vmem:[#allocation2 + $0x40] sm:$0xff] %vm909, 0.0
      %919 = vst.msk [vmem:[#allocation2 + $0x48] sm:$0xff] %vm909, 0.0
      %920 = vst.msk [vmem:[#allocation2 + $0x50] sm:$0xff] %vm909, 0.0
      %921 = vst.msk [vmem:[#allocation2 + $0x58] sm:$0xff] %vm909, 0.0
      %922 = vst.msk [vmem:[#allocation2 + $0x60] sm:$0xff] %vm909, 0.0
      %923 = vst.msk [vmem:[#allocation2 + $0x68] sm:$0xff] %vm909, 0.0
      %924 = vst.msk [vmem:[#allocation2 + $0x70] sm:$0xff] %vm909, 0.0
      %925 = vst.msk [vmem:[#allocation2 + $0x78] sm:$0xff] %vm909, 0.0
      %926 = vst.msk [vmem:[#allocation2 + $0x80] sm:$0xff] %vm909, 0.0
      %927 = vst.msk [vmem:[#allocation2 + $0x88] sm:$0xff] %vm909, 0.0
      %928 = vst.msk [vmem:[#allocation2 + $0x90] sm:$0xff] %vm909, 0.0
      %929 = vst.msk [vmem:[#allocation2 + $0x98] sm:$0xff] %vm909, 0.0
      %930 = vst.msk [vmem:[#allocation2 + $0xa0] sm:$0xff] %vm909, 0.0
      %931 = vst.msk [vmem:[#allocation2 + $0xa8] sm:$0xff] %vm909, 0.0
      %932 = vst.msk [vmem:[#allocation2 + $0xb0] sm:$0xff] %vm909, 0.0
      %933 = vst.msk [vmem:[#allocation2 + $0xb8] sm:$0xff] %vm909, 0.0
      %934 = vst.msk [vmem:[#allocation2 + $0xc0] sm:$0xff] %vm909, 0.0
      %935 = vst.msk [vmem:[#allocation2 + $0xc8] sm:$0xff] %vm909, 0.0
      %936 = vst.msk [vmem:[#allocation2 + $0xd0] sm:$0xff] %vm909, 0.0
      %937 = vst.msk [vmem:[#allocation2 + $0xd8] sm:$0xff] %vm909, 0.0
      %938 = vst.msk [vmem:[#allocation2 + $0xe0] sm:$0xff] %vm909, 0.0
      %939 = vst.msk [vmem:[#allocation2 + $0xe8] sm:$0xff] %vm909, 0.0
      %940 = vst.msk [vmem:[#allocation2 + $0xf0] sm:$0xff] %vm909, 0.0
      %941 = vst.msk [vmem:[#allocation2 + $0xf8] sm:$0xff] %vm909, 0.0
      %942 = vst.msk [vmem:[#allocation2 + $0x100] sm:$0xff] %vm909, 0.0
      %943 = vst.msk [vmem:[#allocation2 + $0x108] sm:$0xff] %vm909, 0.0
      %944 = vst.msk [vmem:[#allocation2 + $0x110] sm:$0xff] %vm909, 0.0
      %945 = vst.msk [vmem:[#allocation2 + $0x118] sm:$0xff] %vm909, 0.0
      %946 = vst.msk [vmem:[#allocation2 + $0x120] sm:$0xff] %vm909, 0.0
      %947 = vst.msk [vmem:[#allocation2 + $0x128] sm:$0xff] %vm909, 0.0
      %vm948 = vcmask 64512
      %949 = vst.msk [vmem:[#allocation3] sm:$0xff] %vm948, 0.0
      %950 = vst.msk [vmem:[#allocation3 + $0x8] sm:$0xff] %vm948, 0.0
      %951 = vst.msk [vmem:[#allocation3 + $0x10] sm:$0xff] %vm948, 0.0
      %952 = vst.msk [vmem:[#allocation3 + $0x18] sm:$0xff] %vm948, 0.0
      %953 = vst.msk [vmem:[#allocation3 + $0x20] sm:$0xff] %vm948, 0.0
      %954 = vst.msk [vmem:[#allocation3 + $0x28] sm:$0xff] %vm948, 0.0
      %955 = vst.msk [vmem:[#allocation3 + $0x30] sm:$0xff] %vm948, 0.0
      %956 = vst.msk [vmem:[#allocation3 + $0x38] sm:$0xff] %vm948, 0.0
      %957 = vst.msk [vmem:[#allocation3 + $0x40] sm:$0xff] %vm948, 0.0
      %958 = vst.msk [vmem:[#allocation3 + $0x48] sm:$0xff] %vm948, 0.0
      %959 = vst.msk [vmem:[#allocation3 + $0x50] sm:$0xff] %vm948, 0.0
      %960 = vst.msk [vmem:[#allocation3 + $0x58] sm:$0xff] %vm948, 0.0
      %961 = vst.msk [vmem:[#allocation3 + $0x60] sm:$0xff] %vm948, 0.0
      %962 = vst.msk [vmem:[#allocation3 + $0x68] sm:$0xff] %vm948, 0.0
      %963 = vst.msk [vmem:[#allocation3 + $0x70] sm:$0xff] %vm948, 0.0
      %964 = vst.msk [vmem:[#allocation3 + $0x78] sm:$0xff] %vm948, 0.0
      %965 = vst.msk [vmem:[#allocation3 + $0x80] sm:$0xff] %vm948, 0.0
      %966 = vst.msk [vmem:[#allocation3 + $0x88] sm:$0xff] %vm948, 0.0
      %967 = vst.msk [vmem:[#allocation3 + $0x90] sm:$0xff] %vm948, 0.0
      %968 = vst.msk [vmem:[#allocation3 + $0x98] sm:$0xff] %vm948, 0.0
      %969 = vst.msk [vmem:[#allocation3 + $0xa0] sm:$0xff] %vm948, 0.0
      %970 = vst.msk [vmem:[#allocation3 + $0xa8] sm:$0xff] %vm948, 0.0
      %971 = vst.msk [vmem:[#allocation3 + $0xb0] sm:$0xff] %vm948, 0.0
      %972 = vst.msk [vmem:[#allocation3 + $0xb8] sm:$0xff] %vm948, 0.0
      %973 = vst.msk [vmem:[#allocation3 + $0xc0] sm:$0xff] %vm948, 0.0
      %974 = vst.msk [vmem:[#allocation3 + $0xc8] sm:$0xff] %vm948, 0.0
      %975 = vst.msk [vmem:[#allocation3 + $0xd0] sm:$0xff] %vm948, 0.0
      %976 = vst.msk [vmem:[#allocation3 + $0xd8] sm:$0xff] %vm948, 0.0
      %977 = vst.msk [vmem:[#allocation3 + $0xe0] sm:$0xff] %vm948, 0.0
      %978 = vst.msk [vmem:[#allocation3 + $0xe8] sm:$0xff] %vm948, 0.0
      %979 = vst.msk [vmem:[#allocation3 + $0xf0] sm:$0xff] %vm948, 0.0
      %980 = vst.msk [vmem:[#allocation3 + $0xf8] sm:$0xff] %vm948, 0.0
      %981 = vst.msk [vmem:[#allocation3 + $0x100] sm:$0xff] %vm948, 0.0
      %982 = vst.msk [vmem:[#allocation3 + $0x108] sm:$0xff] %vm948, 0.0
      %983 = vst.msk [vmem:[#allocation3 + $0x110] sm:$0xff] %vm948, 0.0
      %984 = vst.msk [vmem:[#allocation3 + $0x118] sm:$0xff] %vm948, 0.0
      %985 = vst.msk [vmem:[#allocation3 + $0x120] sm:$0xff] %vm948, 0.0
      %986 = vst.msk [vmem:[#allocation3 + $0x128] sm:$0xff] %vm948, 0.0
      %v987 = vld [vmem:[%s416] sm:$0xff]
      %v988 = vld [vmem:[%s416 + $0x8] sm:$0xff]
      %v989 = vld [vmem:[%s416 + $0x10] sm:$0xff]
      %v990 = vld [vmem:[%s416 + $0x18] sm:$0xff]
      %v991 = vld [vmem:[%s416 + $0x20] sm:$0xff]
      %v992 = vld [vmem:[%s416 + $0x28] sm:$0xff]
      %v993 = vld [vmem:[%s416 + $0x30] sm:$0xff]
      %v994 = vld [vmem:[%s416 + $0x38] sm:$0xff]
      %v995 = vld [vmem:[%s416 + $0x40] sm:$0xff]
      %v996 = vld [vmem:[%s416 + $0x48] sm:$0xff]
      %v997 = vld [vmem:[%s416 + $0x50] sm:$0xff]
      %v998 = vld [vmem:[%s416 + $0x58] sm:$0xff]
      %v999 = vld [vmem:[%s416 + $0x60] sm:$0xff]
      %v1000 = vld [vmem:[%s416 + $0x68] sm:$0xff]
      %v1001 = vld [vmem:[%s416 + $0x70] sm:$0xff]
      %v1002 = vld [vmem:[%s416 + $0x78] sm:$0xff]
      %v1003 = vld [vmem:[%s416 + $0x80] sm:$0xff]
      %v1004 = vld [vmem:[%s416 + $0x88] sm:$0xff]
      %v1005 = vld [vmem:[%s416 + $0x90] sm:$0xff]
      %v1006 = vld [vmem:[%s416 + $0x98] sm:$0xff]
      %v1007 = vld [vmem:[%s416 + $0xa0] sm:$0xff]
      %v1008 = vld [vmem:[%s416 + $0xa8] sm:$0xff]
      %v1009 = vld [vmem:[%s416 + $0xb0] sm:$0xff]
      %v1010 = vld [vmem:[%s416 + $0xb8] sm:$0xff]
      %v1011 = vld [vmem:[%s416 + $0xc0] sm:$0xff]
      %v1012 = vld [vmem:[%s416 + $0xc8] sm:$0xff]
      %v1013 = vld [vmem:[%s416 + $0xd0] sm:$0xff]
      %v1014 = vld [vmem:[%s416 + $0xd8] sm:$0xff]
      %v1015 = vld [vmem:[%s416 + $0xe0] sm:$0xff]
      %v1016 = vld [vmem:[%s416 + $0xe8] sm:$0xff]
      %v1017 = vld [vmem:[%s416 + $0xf0] sm:$0xff]
      %v1018 = vld [vmem:[%s416 + $0xf8] sm:$0xff]
      %1019 = vst.msk [vmem:[#allocation2 + $0x18] sm:$0xff] %vm909, %v987
      %1020 = vst.msk [vmem:[#allocation2 + $0x20] sm:$0xff] %vm909, %v988
      %1021 = vst.msk [vmem:[#allocation2 + $0x28] sm:$0xff] %vm909, %v989
      %1022 = vst.msk [vmem:[#allocation2 + $0x30] sm:$0xff] %vm909, %v990
      %1023 = vst.msk [vmem:[#allocation2 + $0x38] sm:$0xff] %vm909, %v991
      %1024 = vst.msk [vmem:[#allocation2 + $0x40] sm:$0xff] %vm909, %v992
      %1025 = vst.msk [vmem:[#allocation2 + $0x48] sm:$0xff] %vm909, %v993
      %1026 = vst.msk [vmem:[#allocation2 + $0x50] sm:$0xff] %vm909, %v994
      %1027 = vst.msk [vmem:[#allocation2 + $0x58] sm:$0xff] %vm909, %v995
      %1028 = vst.msk [vmem:[#allocation2 + $0x60] sm:$0xff] %vm909, %v996
      %1029 = vst.msk [vmem:[#allocation2 + $0x68] sm:$0xff] %vm909, %v997
      %1030 = vst.msk [vmem:[#allocation2 + $0x70] sm:$0xff] %vm909, %v998
      %1031 = vst.msk [vmem:[#allocation2 + $0x78] sm:$0xff] %vm909, %v999
      %1032 = vst.msk [vmem:[#allocation2 + $0x80] sm:$0xff] %vm909, %v1000
      %1033 = vst.msk [vmem:[#allocation2 + $0x88] sm:$0xff] %vm909, %v1001
      %1034 = vst.msk [vmem:[#allocation2 + $0x90] sm:$0xff] %vm909, %v1002
      %1035 = vst.msk [vmem:[#allocation2 + $0x98] sm:$0xff] %vm909, %v1003
      %1036 = vst.msk [vmem:[#allocation2 + $0xa0] sm:$0xff] %vm909, %v1004
      %1037 = vst.msk [vmem:[#allocation2 + $0xa8] sm:$0xff] %vm909, %v1005
      %1038 = vst.msk [vmem:[#allocation2 + $0xb0] sm:$0xff] %vm909, %v1006
      %1039 = vst.msk [vmem:[#allocation2 + $0xb8] sm:$0xff] %vm909, %v1007
      %1040 = vst.msk [vmem:[#allocation2 + $0xc0] sm:$0xff] %vm909, %v1008
      %1041 = vst.msk [vmem:[#allocation2 + $0xc8] sm:$0xff] %vm909, %v1009
      %1042 = vst.msk [vmem:[#allocation2 + $0xd0] sm:$0xff] %vm909, %v1010
      %1043 = vst.msk [vmem:[#allocation2 + $0xd8] sm:$0xff] %vm909, %v1011
      %1044 = vst.msk [vmem:[#allocation2 + $0xe0] sm:$0xff] %vm909, %v1012
      %1045 = vst.msk [vmem:[#allocation2 + $0xe8] sm:$0xff] %vm909, %v1013
      %1046 = vst.msk [vmem:[#allocation2 + $0xf0] sm:$0xff] %vm909, %v1014
      %1047 = vst.msk [vmem:[#allocation2 + $0xf8] sm:$0xff] %vm909, %v1015
      %1048 = vst.msk [vmem:[#allocation2 + $0x100] sm:$0xff] %vm909, %v1016
      %1049 = vst.msk [vmem:[#allocation2 + $0x108] sm:$0xff] %vm909, %v1017
      %1050 = vst.msk [vmem:[#allocation2 + $0x110] sm:$0xff] %vm909, %v1018
      %v1051 = vld [vmem:[#allocation2 + $0x7] sm:$0xff]
      %v1052 = vld [vmem:[#allocation2 + $0xf] sm:$0xff]
      %v1053 = vld [vmem:[#allocation2 + $0x17] sm:$0xff]
      %v1054 = vld [vmem:[#allocation2 + $0x1f] sm:$0xff]
      %v1055 = vld [vmem:[#allocation2 + $0x27] sm:$0xff]
      %v1056 = vld [vmem:[#allocation2 + $0x2f] sm:$0xff]
      %v1057 = vld [vmem:[#allocation2 + $0x37] sm:$0xff]
      %v1058 = vld [vmem:[#allocation2 + $0x3f] sm:$0xff]
      %v1059 = vld [vmem:[#allocation2 + $0x47] sm:$0xff]
      %v1060 = vld [vmem:[#allocation2 + $0x4f] sm:$0xff]
      %v1061 = vld [vmem:[#allocation2 + $0x57] sm:$0xff]
      %v1062 = vld [vmem:[#allocation2 + $0x5f] sm:$0xff]
      %v1063 = vld [vmem:[#allocation2 + $0x67] sm:$0xff]
      %v1064 = vld [vmem:[#allocation2 + $0x6f] sm:$0xff]
      %v1065 = vld [vmem:[#allocation2 + $0x77] sm:$0xff]
      %v1066 = vld [vmem:[#allocation2 + $0x7f] sm:$0xff]
      %v1067 = vld [vmem:[#allocation2 + $0x87] sm:$0xff]
      %v1068 = vld [vmem:[#allocation2 + $0x8f] sm:$0xff]
      %v1069 = vld [vmem:[#allocation2 + $0x97] sm:$0xff]
      %v1070 = vld [vmem:[#allocation2 + $0x9f] sm:$0xff]
      %v1071 = vld [vmem:[#allocation2 + $0xa7] sm:$0xff]
      %v1072 = vld [vmem:[#allocation2 + $0xaf] sm:$0xff]
      %v1073 = vld [vmem:[#allocation2 + $0xb7] sm:$0xff]
      %v1074 = vld [vmem:[#allocation2 + $0xbf] sm:$0xff]
      %v1075 = vld [vmem:[#allocation2 + $0xc7] sm:$0xff]
      %v1076 = vld [vmem:[#allocation2 + $0xcf] sm:$0xff]
      %v1077 = vld [vmem:[#allocation2 + $0xd7] sm:$0xff]
      %v1078 = vld [vmem:[#allocation2 + $0xdf] sm:$0xff]
      %v1079 = vld [vmem:[#allocation2 + $0xe7] sm:$0xff]
      %v1080 = vld [vmem:[#allocation2 + $0xef] sm:$0xff]
      %v1081 = vld [vmem:[#allocation2 + $0xf7] sm:$0xff]
      %v1082 = vld [vmem:[#allocation2 + $0xff] sm:$0xff]
      %v1083 = vsel %vm845, 1, 0
      %v1084 = vsel %vm846, 1, 0
      %v1085 = vsel %vm847, 1, 0
      %v1086 = vsel %vm848, 1, 0
      %v1087 = vsel %vm849, 1, 0
      %v1088 = vsel %vm850, 1, 0
      %v1089 = vsel %vm851, 1, 0
      %v1090 = vsel %vm852, 1, 0
      %v1091 = vsel %vm853, 1, 0
      %v1092 = vsel %vm854, 1, 0
      %v1093 = vsel %vm855, 1, 0
      %v1094 = vsel %vm856, 1, 0
      %v1095 = vsel %vm857, 1, 0
      %v1096 = vsel %vm858, 1, 0
      %v1097 = vsel %vm859, 1, 0
      %v1098 = vsel %vm860, 1, 0
      %v1099 = vsel %vm861, 1, 0
      %v1100 = vsel %vm862, 1, 0
      %v1101 = vsel %vm863, 1, 0
      %v1102 = vsel %vm864, 1, 0
      %v1103 = vsel %vm865, 1, 0
      %v1104 = vsel %vm866, 1, 0
      %v1105 = vsel %vm867, 1, 0
      %v1106 = vsel %vm868, 1, 0
      %v1107 = vsel %vm869, 1, 0
      %v1108 = vsel %vm870, 1, 0
      %v1109 = vsel %vm871, 1, 0
      %v1110 = vsel %vm872, 1, 0
      %v1111 = vsel %vm873, 1, 0
      %v1112 = vsel %vm874, 1, 0
      %v1113 = vsel %vm875, 1, 0
      %v1114 = vsel %vm876, 1, 0
      %vm1115 = vcmp.eq.s32.totalorder %v1083, 1
      %vm1116 = vcmp.eq.s32.totalorder %v1084, 1
      %vm1117 = vcmp.eq.s32.totalorder %v1085, 1
      %vm1118 = vcmp.eq.s32.totalorder %v1086, 1
      %vm1119 = vcmp.eq.s32.totalorder %v1087, 1
      %vm1120 = vcmp.eq.s32.totalorder %v1088, 1
      %vm1121 = vcmp.eq.s32.totalorder %v1089, 1
      %vm1122 = vcmp.eq.s32.totalorder %v1090, 1
      %vm1123 = vcmp.eq.s32.totalorder %v1091, 1
      %vm1124 = vcmp.eq.s32.totalorder %v1092, 1
      %vm1125 = vcmp.eq.s32.totalorder %v1093, 1
      %vm1126 = vcmp.eq.s32.totalorder %v1094, 1
      %vm1127 = vcmp.eq.s32.totalorder %v1095, 1
      %vm1128 = vcmp.eq.s32.totalorder %v1096, 1
      %vm1129 = vcmp.eq.s32.totalorder %v1097, 1
      %vm1130 = vcmp.eq.s32.totalorder %v1098, 1
      %vm1131 = vcmp.eq.s32.totalorder %v1099, 1
      %vm1132 = vcmp.eq.s32.totalorder %v1100, 1
      %vm1133 = vcmp.eq.s32.totalorder %v1101, 1
      %vm1134 = vcmp.eq.s32.totalorder %v1102, 1
      %vm1135 = vcmp.eq.s32.totalorder %v1103, 1
      %vm1136 = vcmp.eq.s32.totalorder %v1104, 1
      %vm1137 = vcmp.eq.s32.totalorder %v1105, 1
      %vm1138 = vcmp.eq.s32.totalorder %v1106, 1
      %vm1139 = vcmp.eq.s32.totalorder %v1107, 1
      %vm1140 = vcmp.eq.s32.totalorder %v1108, 1
      %vm1141 = vcmp.eq.s32.totalorder %v1109, 1
      %vm1142 = vcmp.eq.s32.totalorder %v1110, 1
      %vm1143 = vcmp.eq.s32.totalorder %v1111, 1
      %vm1144 = vcmp.eq.s32.totalorder %v1112, 1
      %vm1145 = vcmp.eq.s32.totalorder %v1113, 1
      %vm1146 = vcmp.eq.s32.totalorder %v1114, 1
      %v1147 = vsel %vm1115, 0.0, %v1051
      %v1148 = vsel %vm1116, 0.0, %v1052
      %v1149 = vsel %vm1117, 0.0, %v1053
      %v1150 = vsel %vm1118, 0.0, %v1054
      %v1151 = vsel %vm1119, 0.0, %v1055
      %v1152 = vsel %vm1120, 0.0, %v1056
      %v1153 = vsel %vm1121, 0.0, %v1057
      %v1154 = vsel %vm1122, 0.0, %v1058
      %v1155 = vsel %vm1123, 0.0, %v1059
      %v1156 = vsel %vm1124, 0.0, %v1060
      %v1157 = vsel %vm1125, 0.0, %v1061
      %v1158 = vsel %vm1126, 0.0, %v1062
      %v1159 = vsel %vm1127, 0.0, %v1063
      %v1160 = vsel %vm1128, 0.0, %v1064
      %v1161 = vsel %vm1129, 0.0, %v1065
      %v1162 = vsel %vm1130, 0.0, %v1066
      %v1163 = vsel %vm1131, 0.0, %v1067
      %v1164 = vsel %vm1132, 0.0, %v1068
      %v1165 = vsel %vm1133, 0.0, %v1069
      %v1166 = vsel %vm1134, 0.0, %v1070
      %v1167 = vsel %vm1135, 0.0, %v1071
      %v1168 = vsel %vm1136, 0.0, %v1072
      %v1169 = vsel %vm1137, 0.0, %v1073
      %v1170 = vsel %vm1138, 0.0, %v1074
      %v1171 = vsel %vm1139, 0.0, %v1075
      %v1172 = vsel %vm1140, 0.0, %v1076
      %v1173 = vsel %vm1141, 0.0, %v1077
      %v1174 = vsel %vm1142, 0.0, %v1078
      %v1175 = vsel %vm1143, 0.0, %v1079
      %v1176 = vsel %vm1144, 0.0, %v1080
      %v1177 = vsel %vm1145, 0.0, %v1081
      %v1178 = vsel %vm1146, 0.0, %v1082
      %v1179 = vld [vmem:[#allocation2 + $0x8] sm:$0xff]
      %v1180 = vld [vmem:[#allocation2 + $0x10] sm:$0xff]
      %v1181 = vld [vmem:[#allocation2 + $0x18] sm:$0xff]
      %v1182 = vld [vmem:[#allocation2 + $0x20] sm:$0xff]
      %v1183 = vld [vmem:[#allocation2 + $0x28] sm:$0xff]
      %v1184 = vld [vmem:[#allocation2 + $0x30] sm:$0xff]
      %v1185 = vld [vmem:[#allocation2 + $0x38] sm:$0xff]
      %v1186 = vld [vmem:[#allocation2 + $0x40] sm:$0xff]
      %v1187 = vld [vmem:[#allocation2 + $0x48] sm:$0xff]
      %v1188 = vld [vmem:[#allocation2 + $0x50] sm:$0xff]
      %v1189 = vld [vmem:[#allocation2 + $0x58] sm:$0xff]
      %v1190 = vld [vmem:[#allocation2 + $0x60] sm:$0xff]
      %v1191 = vld [vmem:[#allocation2 + $0x68] sm:$0xff]
      %v1192 = vld [vmem:[#allocation2 + $0x70] sm:$0xff]
      %v1193 = vld [vmem:[#allocation2 + $0x78] sm:$0xff]
      %v1194 = vld [vmem:[#allocation2 + $0x80] sm:$0xff]
      %v1195 = vld [vmem:[#allocation2 + $0x88] sm:$0xff]
      %v1196 = vld [vmem:[#allocation2 + $0x90] sm:$0xff]
      %v1197 = vld [vmem:[#allocation2 + $0x98] sm:$0xff]
      %v1198 = vld [vmem:[#allocation2 + $0xa0] sm:$0xff]
      %v1199 = vld [vmem:[#allocation2 + $0xa8] sm:$0xff]
      %v1200 = vld [vmem:[#allocation2 + $0xb0] sm:$0xff]
      %v1201 = vld [vmem:[#allocation2 + $0xb8] sm:$0xff]
      %v1202 = vld [vmem:[#allocation2 + $0xc0] sm:$0xff]
      %v1203 = vld [vmem:[#allocation2 + $0xc8] sm:$0xff]
      %v1204 = vld [vmem:[#allocation2 + $0xd0] sm:$0xff]
      %v1205 = vld [vmem:[#allocation2 + $0xd8] sm:$0xff]
      %v1206 = vld [vmem:[#allocation2 + $0xe0] sm:$0xff]
      %v1207 = vld [vmem:[#allocation2 + $0xe8] sm:$0xff]
      %v1208 = vld [vmem:[#allocation2 + $0xf0] sm:$0xff]
      %v1209 = vld [vmem:[#allocation2 + $0xf8] sm:$0xff]
      %v1210 = vld [vmem:[#allocation2 + $0x100] sm:$0xff]
      %v1211 = vld [vmem:[#allocation2 + $0x9] sm:$0xff]
      %v1212 = vld [vmem:[#allocation2 + $0x11] sm:$0xff]
      %v1213 = vld [vmem:[#allocation2 + $0x19] sm:$0xff]
      %v1214 = vld [vmem:[#allocation2 + $0x21] sm:$0xff]
      %v1215 = vld [vmem:[#allocation2 + $0x29] sm:$0xff]
      %v1216 = vld [vmem:[#allocation2 + $0x31] sm:$0xff]
      %v1217 = vld [vmem:[#allocation2 + $0x39] sm:$0xff]
      %v1218 = vld [vmem:[#allocation2 + $0x41] sm:$0xff]
      %v1219 = vld [vmem:[#allocation2 + $0x49] sm:$0xff]
      %v1220 = vld [vmem:[#allocation2 + $0x51] sm:$0xff]
      %v1221 = vld [vmem:[#allocation2 + $0x59] sm:$0xff]
      %v1222 = vld [vmem:[#allocation2 + $0x61] sm:$0xff]
      %v1223 = vld [vmem:[#allocation2 + $0x69] sm:$0xff]
      %v1224 = vld [vmem:[#allocation2 + $0x71] sm:$0xff]
      %v1225 = vld [vmem:[#allocation2 + $0x79] sm:$0xff]
      %v1226 = vld [vmem:[#allocation2 + $0x81] sm:$0xff]
      %v1227 = vld [vmem:[#allocation2 + $0x89] sm:$0xff]
      %v1228 = vld [vmem:[#allocation2 + $0x91] sm:$0xff]
      %v1229 = vld [vmem:[#allocation2 + $0x99] sm:$0xff]
      %v1230 = vld [vmem:[#allocation2 + $0xa1] sm:$0xff]
      %v1231 = vld [vmem:[#allocation2 + $0xa9] sm:$0xff]
      %v1232 = vld [vmem:[#allocation2 + $0xb1] sm:$0xff]
      %v1233 = vld [vmem:[#allocation2 + $0xb9] sm:$0xff]
      %v1234 = vld [vmem:[#allocation2 + $0xc1] sm:$0xff]
      %v1235 = vld [vmem:[#allocation2 + $0xc9] sm:$0xff]
      %v1236 = vld [vmem:[#allocation2 + $0xd1] sm:$0xff]
      %v1237 = vld [vmem:[#allocation2 + $0xd9] sm:$0xff]
      %v1238 = vld [vmem:[#allocation2 + $0xe1] sm:$0xff]
      %v1239 = vld [vmem:[#allocation2 + $0xe9] sm:$0xff]
      %v1240 = vld [vmem:[#allocation2 + $0xf1] sm:$0xff]
      %v1241 = vld [vmem:[#allocation2 + $0xf9] sm:$0xff]
      %v1242 = vld [vmem:[#allocation2 + $0x101] sm:$0xff]
      %v1243 = vsel %vm877, 1, 0
      %v1244 = vsel %vm878, 1, 0
      %v1245 = vsel %vm879, 1, 0
      %v1246 = vsel %vm880, 1, 0
      %v1247 = vsel %vm881, 1, 0
      %v1248 = vsel %vm882, 1, 0
      %v1249 = vsel %vm883, 1, 0
      %v1250 = vsel %vm884, 1, 0
      %v1251 = vsel %vm885, 1, 0
      %v1252 = vsel %vm886, 1, 0
      %v1253 = vsel %vm887, 1, 0
      %v1254 = vsel %vm888, 1, 0
      %v1255 = vsel %vm889, 1, 0
      %v1256 = vsel %vm890, 1, 0
      %v1257 = vsel %vm891, 1, 0
      %v1258 = vsel %vm892, 1, 0
      %v1259 = vsel %vm893, 1, 0
      %v1260 = vsel %vm894, 1, 0
      %v1261 = vsel %vm895, 1, 0
      %v1262 = vsel %vm896, 1, 0
      %v1263 = vsel %vm897, 1, 0
      %v1264 = vsel %vm898, 1, 0
      %v1265 = vsel %vm899, 1, 0
      %v1266 = vsel %vm900, 1, 0
      %v1267 = vsel %vm901, 1, 0
      %v1268 = vsel %vm902, 1, 0
      %v1269 = vsel %vm903, 1, 0
      %v1270 = vsel %vm904, 1, 0
      %v1271 = vsel %vm905, 1, 0
      %v1272 = vsel %vm906, 1, 0
      %v1273 = vsel %vm907, 1, 0
      %v1274 = vsel %vm908, 1, 0
      %vm1275 = vcmp.eq.s32.totalorder %v1243, 1
      %vm1276 = vcmp.eq.s32.totalorder %v1244, 1
      %vm1277 = vcmp.eq.s32.totalorder %v1245, 1
      %vm1278 = vcmp.eq.s32.totalorder %v1246, 1
      %vm1279 = vcmp.eq.s32.totalorder %v1247, 1
      %vm1280 = vcmp.eq.s32.totalorder %v1248, 1
      %vm1281 = vcmp.eq.s32.totalorder %v1249, 1
      %vm1282 = vcmp.eq.s32.totalorder %v1250, 1
      %vm1283 = vcmp.eq.s32.totalorder %v1251, 1
      %vm1284 = vcmp.eq.s32.totalorder %v1252, 1
      %vm1285 = vcmp.eq.s32.totalorder %v1253, 1
      %vm1286 = vcmp.eq.s32.totalorder %v1254, 1
      %vm1287 = vcmp.eq.s32.totalorder %v1255, 1
      %vm1288 = vcmp.eq.s32.totalorder %v1256, 1
      %vm1289 = vcmp.eq.s32.totalorder %v1257, 1
      %vm1290 = vcmp.eq.s32.totalorder %v1258, 1
      %vm1291 = vcmp.eq.s32.totalorder %v1259, 1
      %vm1292 = vcmp.eq.s32.totalorder %v1260, 1
      %vm1293 = vcmp.eq.s32.totalorder %v1261, 1
      %vm1294 = vcmp.eq.s32.totalorder %v1262, 1
      %vm1295 = vcmp.eq.s32.totalorder %v1263, 1
      %vm1296 = vcmp.eq.s32.totalorder %v1264, 1
      %vm1297 = vcmp.eq.s32.totalorder %v1265, 1
      %vm1298 = vcmp.eq.s32.totalorder %v1266, 1
      %vm1299 = vcmp.eq.s32.totalorder %v1267, 1
      %vm1300 = vcmp.eq.s32.totalorder %v1268, 1
      %vm1301 = vcmp.eq.s32.totalorder %v1269, 1
      %vm1302 = vcmp.eq.s32.totalorder %v1270, 1
      %vm1303 = vcmp.eq.s32.totalorder %v1271, 1
      %vm1304 = vcmp.eq.s32.totalorder %v1272, 1
      %vm1305 = vcmp.eq.s32.totalorder %v1273, 1
      %vm1306 = vcmp.eq.s32.totalorder %v1274, 1
      %v1307 = vsel %vm1275, 0.0, %v1211
      %v1308 = vsel %vm1276, 0.0, %v1212
      %v1309 = vsel %vm1277, 0.0, %v1213
      %v1310 = vsel %vm1278, 0.0, %v1214
      %v1311 = vsel %vm1279, 0.0, %v1215
      %v1312 = vsel %vm1280, 0.0, %v1216
      %v1313 = vsel %vm1281, 0.0, %v1217
      %v1314 = vsel %vm1282, 0.0, %v1218
      %v1315 = vsel %vm1283, 0.0, %v1219
      %v1316 = vsel %vm1284, 0.0, %v1220
      %v1317 = vsel %vm1285, 0.0, %v1221
      %v1318 = vsel %vm1286, 0.0, %v1222
      %v1319 = vsel %vm1287, 0.0, %v1223
      %v1320 = vsel %vm1288, 0.0, %v1224
      %v1321 = vsel %vm1289, 0.0, %v1225
      %v1322 = vsel %vm1290, 0.0, %v1226
      %v1323 = vsel %vm1291, 0.0, %v1227
      %v1324 = vsel %vm1292, 0.0, %v1228
      %v1325 = vsel %vm1293, 0.0, %v1229
      %v1326 = vsel %vm1294, 0.0, %v1230
      %v1327 = vsel %vm1295, 0.0, %v1231
      %v1328 = vsel %vm1296, 0.0, %v1232
      %v1329 = vsel %vm1297, 0.0, %v1233
      %v1330 = vsel %vm1298, 0.0, %v1234
      %v1331 = vsel %vm1299, 0.0, %v1235
      %v1332 = vsel %vm1300, 0.0, %v1236
      %v1333 = vsel %vm1301, 0.0, %v1237
      %v1334 = vsel %vm1302, 0.0, %v1238
      %v1335 = vsel %vm1303, 0.0, %v1239
      %v1336 = vsel %vm1304, 0.0, %v1240
      %v1337 = vsel %vm1305, 0.0, %v1241
      %v1338 = vsel %vm1306, 0.0, %v1242
      %v1339 = vld [vmem:[#allocation2 + $0x107] sm:$0xff]
      %v1340 = vld [vmem:[#allocation2 + $0x10f] sm:$0xff]
      %v1341 = vsel %vm1115, 0.0, %v1053
      %v1342 = vsel %vm1116, 0.0, %v1054
      %v1343 = vsel %vm1117, 0.0, %v1055
      %v1344 = vsel %vm1118, 0.0, %v1056
      %v1345 = vsel %vm1119, 0.0, %v1057
      %v1346 = vsel %vm1120, 0.0, %v1058
      %v1347 = vsel %vm1121, 0.0, %v1059
      %v1348 = vsel %vm1122, 0.0, %v1060
      %v1349 = vsel %vm1123, 0.0, %v1061
      %v1350 = vsel %vm1124, 0.0, %v1062
      %v1351 = vsel %vm1125, 0.0, %v1063
      %v1352 = vsel %vm1126, 0.0, %v1064
      %v1353 = vsel %vm1127, 0.0, %v1065
      %v1354 = vsel %vm1128, 0.0, %v1066
      %v1355 = vsel %vm1129, 0.0, %v1067
      %v1356 = vsel %vm1130, 0.0, %v1068
      %v1357 = vsel %vm1131, 0.0, %v1069
      %v1358 = vsel %vm1132, 0.0, %v1070
      %v1359 = vsel %vm1133, 0.0, %v1071
      %v1360 = vsel %vm1134, 0.0, %v1072
      %v1361 = vsel %vm1135, 0.0, %v1073
      %v1362 = vsel %vm1136, 0.0, %v1074
      %v1363 = vsel %vm1137, 0.0, %v1075
      %v1364 = vsel %vm1138, 0.0, %v1076
      %v1365 = vsel %vm1139, 0.0, %v1077
      %v1366 = vsel %vm1140, 0.0, %v1078
      %v1367 = vsel %vm1141, 0.0, %v1079
      %v1368 = vsel %vm1142, 0.0, %v1080
      %v1369 = vsel %vm1143, 0.0, %v1081
      %v1370 = vsel %vm1144, 0.0, %v1082
      %v1371 = vsel %vm1145, 0.0, %v1339
      %v1372 = vsel %vm1146, 0.0, %v1340
      %v1373 = vld [vmem:[#allocation2 + $0x109] sm:$0xff]
      %v1374 = vld [vmem:[#allocation2 + $0x111] sm:$0xff]
      %v1375 = vsel %vm1275, 0.0, %v1213
      %v1376 = vsel %vm1276, 0.0, %v1214
      %v1377 = vsel %vm1277, 0.0, %v1215
      %v1378 = vsel %vm1278, 0.0, %v1216
      %v1379 = vsel %vm1279, 0.0, %v1217
      %v1380 = vsel %vm1280, 0.0, %v1218
      %v1381 = vsel %vm1281, 0.0, %v1219
      %v1382 = vsel %vm1282, 0.0, %v1220
      %v1383 = vsel %vm1283, 0.0, %v1221
      %v1384 = vsel %vm1284, 0.0, %v1222
      %v1385 = vsel %vm1285, 0.0, %v1223
      %v1386 = vsel %vm1286, 0.0, %v1224
      %v1387 = vsel %vm1287, 0.0, %v1225
      %v1388 = vsel %vm1288, 0.0, %v1226
      %v1389 = vsel %vm1289, 0.0, %v1227
      %v1390 = vsel %vm1290, 0.0, %v1228
      %v1391 = vsel %vm1291, 0.0, %v1229
      %v1392 = vsel %vm1292, 0.0, %v1230
      %v1393 = vsel %vm1293, 0.0, %v1231
      %v1394 = vsel %vm1294, 0.0, %v1232
      %v1395 = vsel %vm1295, 0.0, %v1233
      %v1396 = vsel %vm1296, 0.0, %v1234
      %v1397 = vsel %vm1297, 0.0, %v1235
      %v1398 = vsel %vm1298, 0.0, %v1236
      %v1399 = vsel %vm1299, 0.0, %v1237
      %v1400 = vsel %vm1300, 0.0, %v1238
      %v1401 = vsel %vm1301, 0.0, %v1239
      %v1402 = vsel %vm1302, 0.0, %v1240
      %v1403 = vsel %vm1303, 0.0, %v1241
      %v1404 = vsel %vm1304, 0.0, %v1242
      %v1405 = vsel %vm1305, 0.0, %v1373
      %v1406 = vsel %vm1306, 0.0, %v1374
      %v1407 = vld [vmem:[#allocation2 + $0x117] sm:$0xff]
      %v1408 = vld [vmem:[#allocation2 + $0x11f] sm:$0xff]
      %v1409 = vsel %vm1115, 0.0, %v1055
      %v1410 = vsel %vm1116, 0.0, %v1056
      %v1411 = vsel %vm1117, 0.0, %v1057
      %v1412 = vsel %vm1118, 0.0, %v1058
      %v1413 = vsel %vm1119, 0.0, %v1059
      %v1414 = vsel %vm1120, 0.0, %v1060
      %v1415 = vsel %vm1121, 0.0, %v1061
      %v1416 = vsel %vm1122, 0.0, %v1062
      %v1417 = vsel %vm1123, 0.0, %v1063
      %v1418 = vsel %vm1124, 0.0, %v1064
      %v1419 = vsel %vm1125, 0.0, %v1065
      %v1420 = vsel %vm1126, 0.0, %v1066
      %v1421 = vsel %vm1127, 0.0, %v1067
      %v1422 = vsel %vm1128, 0.0, %v1068
      %v1423 = vsel %vm1129, 0.0, %v1069
      %v1424 = vsel %vm1130, 0.0, %v1070
      %v1425 = vsel %vm1131, 0.0, %v1071
      %v1426 = vsel %vm1132, 0.0, %v1072
      %v1427 = vsel %vm1133, 0.0, %v1073
      %v1428 = vsel %vm1134, 0.0, %v1074
      %v1429 = vsel %vm1135, 0.0, %v1075
      %v1430 = vsel %vm1136, 0.0, %v1076
      %v1431 = vsel %vm1137, 0.0, %v1077
      %v1432 = vsel %vm1138, 0.0, %v1078
      %v1433 = vsel %vm1139, 0.0, %v1079
      %v1434 = vsel %vm1140, 0.0, %v1080
      %v1435 = vsel %vm1141, 0.0, %v1081
      %v1436 = vsel %vm1142, 0.0, %v1082
      %v1437 = vsel %vm1143, 0.0, %v1339
      %v1438 = vsel %vm1144, 0.0, %v1340
      %v1439 = vsel %vm1145, 0.0, %v1407
      %v1440 = vsel %vm1146, 0.0, %v1408
      %v1441 = vld [vmem:[#allocation2 + $0x108] sm:$0xff]
      %v1442 = vld [vmem:[#allocation2 + $0x110] sm:$0xff]
      %v1443 = vld [vmem:[#allocation2 + $0x118] sm:$0xff]
      %v1444 = vld [vmem:[#allocation2 + $0x120] sm:$0xff]
      %v1445 = vld [vmem:[#allocation2 + $0x119] sm:$0xff]
      %v1446 = vld [vmem:[#allocation2 + $0x121] sm:$0xff]
      %v1447 = vsel %vm1275, 0.0, %v1215
      %v1448 = vsel %vm1276, 0.0, %v1216
      %v1449 = vsel %vm1277, 0.0, %v1217
      %v1450 = vsel %vm1278, 0.0, %v1218
      %v1451 = vsel %vm1279, 0.0, %v1219
      %v1452 = vsel %vm1280, 0.0, %v1220
      %v1453 = vsel %vm1281, 0.0, %v1221
      %v1454 = vsel %vm1282, 0.0, %v1222
      %v1455 = vsel %vm1283, 0.0, %v1223
      %v1456 = vsel %vm1284, 0.0, %v1224
      %v1457 = vsel %vm1285, 0.0, %v1225
      %v1458 = vsel %vm1286, 0.0, %v1226
      %v1459 = vsel %vm1287, 0.0, %v1227
      %v1460 = vsel %vm1288, 0.0, %v1228
      %v1461 = vsel %vm1289, 0.0, %v1229
      %v1462 = vsel %vm1290, 0.0, %v1230
      %v1463 = vsel %vm1291, 0.0, %v1231
      %v1464 = vsel %vm1292, 0.0, %v1232
      %v1465 = vsel %vm1293, 0.0, %v1233
      %v1466 = vsel %vm1294, 0.0, %v1234
      %v1467 = vsel %vm1295, 0.0, %v1235
      %v1468 = vsel %vm1296, 0.0, %v1236
      %v1469 = vsel %vm1297, 0.0, %v1237
      %v1470 = vsel %vm1298, 0.0, %v1238
      %v1471 = vsel %vm1299, 0.0, %v1239
      %v1472 = vsel %vm1300, 0.0, %v1240
      %v1473 = vsel %vm1301, 0.0, %v1241
      %v1474 = vsel %vm1302, 0.0, %v1242
      %v1475 = vsel %vm1303, 0.0, %v1373
      %v1476 = vsel %vm1304, 0.0, %v1374
      %v1477 = vsel %vm1305, 0.0, %v1445
      %v1478 = vsel %vm1306, 0.0, %v1446
      %1511 = vrot.lane.b32.xlu0 %v1179, 4
      %v1512 = vpop.permute.xlu0 %1511
      %1513 = vrot.lane.b32.xlu0 %v1180, 4
      %v1514 = vpop.permute.xlu0 %1513
      %1515 = vrot.lane.b32.xlu0 %v1181, 4
      %v1516 = vpop.permute.xlu0 %1515
      %1517 = vrot.lane.b32.xlu0 %v1182, 4
      %v1518 = vpop.permute.xlu0 %1517
      %1519 = vrot.lane.b32.xlu0 %v1183, 4
      %v1520 = vpop.permute.xlu0 %1519
      %1521 = vrot.lane.b32.xlu0 %v1184, 4
      %v1522 = vpop.permute.xlu0 %1521
      %1523 = vrot.lane.b32.xlu0 %v1185, 4
      %v1524 = vpop.permute.xlu0 %1523
      %1525 = vrot.lane.b32.xlu0 %v1186, 4
      %v1526 = vpop.permute.xlu0 %1525
      %1527 = vrot.lane.b32.xlu0 %v1187, 4
      %v1528 = vpop.permute.xlu0 %1527
      %1529 = vrot.lane.b32.xlu0 %v1188, 4
      %v1530 = vpop.permute.xlu0 %1529
      %1531 = vrot.lane.b32.xlu0 %v1189, 4
      %v1532 = vpop.permute.xlu0 %1531
      %1533 = vrot.lane.b32.xlu0 %v1190, 4
      %v1534 = vpop.permute.xlu0 %1533
      %1535 = vrot.lane.b32.xlu0 %v1191, 4
      %v1536 = vpop.permute.xlu0 %1535
      %1537 = vrot.lane.b32.xlu0 %v1192, 4
      %v1538 = vpop.permute.xlu0 %1537
      %1539 = vrot.lane.b32.xlu0 %v1193, 4
      %v1540 = vpop.permute.xlu0 %1539
      %1541 = vrot.lane.b32.xlu0 %v1194, 4
      %v1542 = vpop.permute.xlu0 %1541
      %1543 = vrot.lane.b32.xlu0 %v1195, 4
      %v1544 = vpop.permute.xlu0 %1543
      %1545 = vrot.lane.b32.xlu0 %v1196, 4
      %v1546 = vpop.permute.xlu0 %1545
      %1547 = vrot.lane.b32.xlu0 %v1197, 4
      %v1548 = vpop.permute.xlu0 %1547
      %1549 = vrot.lane.b32.xlu0 %v1198, 4
      %v1550 = vpop.permute.xlu0 %1549
      %1551 = vrot.lane.b32.xlu0 %v1199, 4
      %v1552 = vpop.permute.xlu0 %1551
      %1553 = vrot.lane.b32.xlu0 %v1200, 4
      %v1554 = vpop.permute.xlu0 %1553
      %1555 = vrot.lane.b32.xlu0 %v1201, 4
      %v1556 = vpop.permute.xlu0 %1555
      %1557 = vrot.lane.b32.xlu0 %v1202, 4
      %v1558 = vpop.permute.xlu0 %1557
      %1559 = vrot.lane.b32.xlu0 %v1203, 4
      %v1560 = vpop.permute.xlu0 %1559
      %1561 = vrot.lane.b32.xlu0 %v1204, 4
      %v1562 = vpop.permute.xlu0 %1561
      %1563 = vrot.lane.b32.xlu0 %v1205, 4
      %v1564 = vpop.permute.xlu0 %1563
      %1565 = vrot.lane.b32.xlu0 %v1206, 4
      %v1566 = vpop.permute.xlu0 %1565
      %1567 = vrot.lane.b32.xlu0 %v1207, 4
      %v1568 = vpop.permute.xlu0 %1567
      %1569 = vrot.lane.b32.xlu0 %v1208, 4
      %v1570 = vpop.permute.xlu0 %1569
      %1571 = vrot.lane.b32.xlu0 %v1209, 4
      %v1572 = vpop.permute.xlu0 %1571
      %1573 = vrot.lane.b32.xlu0 %v1210, 4
      %v1574 = vpop.permute.xlu0 %1573
      %1639 = vrot.lane.b32.xlu0 %v1307, 8
      %v1640 = vpop.permute.xlu0 %1639
      %1641 = vrot.lane.b32.xlu0 %v1308, 8
      %v1642 = vpop.permute.xlu0 %1641
      %1643 = vrot.lane.b32.xlu0 %v1309, 8
      %v1644 = vpop.permute.xlu0 %1643
      %1645 = vrot.lane.b32.xlu0 %v1310, 8
      %v1646 = vpop.permute.xlu0 %1645
      %1647 = vrot.lane.b32.xlu0 %v1311, 8
      %v1648 = vpop.permute.xlu0 %1647
      %1649 = vrot.lane.b32.xlu0 %v1312, 8
      %v1650 = vpop.permute.xlu0 %1649
      %1651 = vrot.lane.b32.xlu0 %v1313, 8
      %v1652 = vpop.permute.xlu0 %1651
      %1653 = vrot.lane.b32.xlu0 %v1314, 8
      %v1654 = vpop.permute.xlu0 %1653
      %1655 = vrot.lane.b32.xlu0 %v1315, 8
      %v1656 = vpop.permute.xlu0 %1655
      %1657 = vrot.lane.b32.xlu0 %v1316, 8
      %v1658 = vpop.permute.xlu0 %1657
      %1659 = vrot.lane.b32.xlu0 %v1317, 8
      %v1660 = vpop.permute.xlu0 %1659
      %1661 = vrot.lane.b32.xlu0 %v1318, 8
      %v1662 = vpop.permute.xlu0 %1661
      %1663 = vrot.lane.b32.xlu0 %v1319, 8
      %v1664 = vpop.permute.xlu0 %1663
      %1665 = vrot.lane.b32.xlu0 %v1320, 8
      %v1666 = vpop.permute.xlu0 %1665
      %1667 = vrot.lane.b32.xlu0 %v1321, 8
      %v1668 = vpop.permute.xlu0 %1667
      %1669 = vrot.lane.b32.xlu0 %v1322, 8
      %v1670 = vpop.permute.xlu0 %1669
      %1671 = vrot.lane.b32.xlu0 %v1323, 8
      %v1672 = vpop.permute.xlu0 %1671
      %1673 = vrot.lane.b32.xlu0 %v1324, 8
      %v1674 = vpop.permute.xlu0 %1673
      %1675 = vrot.lane.b32.xlu0 %v1325, 8
      %v1676 = vpop.permute.xlu0 %1675
      %1677 = vrot.lane.b32.xlu0 %v1326, 8
      %v1678 = vpop.permute.xlu0 %1677
      %1679 = vrot.lane.b32.xlu0 %v1327, 8
      %v1680 = vpop.permute.xlu0 %1679
      %1681 = vrot.lane.b32.xlu0 %v1328, 8
      %v1682 = vpop.permute.xlu0 %1681
      %1683 = vrot.lane.b32.xlu0 %v1329, 8
      %v1684 = vpop.permute.xlu0 %1683
      %1685 = vrot.lane.b32.xlu0 %v1330, 8
      %v1686 = vpop.permute.xlu0 %1685
      %1687 = vrot.lane.b32.xlu0 %v1331, 8
      %v1688 = vpop.permute.xlu0 %1687
      %1689 = vrot.lane.b32.xlu0 %v1332, 8
      %v1690 = vpop.permute.xlu0 %1689
      %1691 = vrot.lane.b32.xlu0 %v1333, 8
      %v1692 = vpop.permute.xlu0 %1691
      %1693 = vrot.lane.b32.xlu0 %v1334, 8
      %v1694 = vpop.permute.xlu0 %1693
      %1695 = vrot.lane.b32.xlu0 %v1335, 8
      %v1696 = vpop.permute.xlu0 %1695
      %1697 = vrot.lane.b32.xlu0 %v1336, 8
      %v1698 = vpop.permute.xlu0 %1697
      %1699 = vrot.lane.b32.xlu0 %v1337, 8
      %v1700 = vpop.permute.xlu0 %1699
      %1701 = vrot.lane.b32.xlu0 %v1338, 8
      %v1702 = vpop.permute.xlu0 %1701
      %1767 = vrot.lane.b32.xlu0 %v1341, 12
      %v1768 = vpop.permute.xlu0 %1767
      %1769 = vrot.lane.b32.xlu0 %v1342, 12
      %v1770 = vpop.permute.xlu0 %1769
      %1771 = vrot.lane.b32.xlu0 %v1343, 12
      %v1772 = vpop.permute.xlu0 %1771
      %1773 = vrot.lane.b32.xlu0 %v1344, 12
      %v1774 = vpop.permute.xlu0 %1773
      %1775 = vrot.lane.b32.xlu0 %v1345, 12
      %v1776 = vpop.permute.xlu0 %1775
      %1777 = vrot.lane.b32.xlu0 %v1346, 12
      %v1778 = vpop.permute.xlu0 %1777
      %1779 = vrot.lane.b32.xlu0 %v1347, 12
      %v1780 = vpop.permute.xlu0 %1779
      %1781 = vrot.lane.b32.xlu0 %v1348, 12
      %v1782 = vpop.permute.xlu0 %1781
      %1783 = vrot.lane.b32.xlu0 %v1349, 12
      %v1784 = vpop.permute.xlu0 %1783
      %1785 = vrot.lane.b32.xlu0 %v1350, 12
      %v1786 = vpop.permute.xlu0 %1785
      %1787 = vrot.lane.b32.xlu0 %v1351, 12
      %v1788 = vpop.permute.xlu0 %1787
      %1789 = vrot.lane.b32.xlu0 %v1352, 12
      %v1790 = vpop.permute.xlu0 %1789
      %1791 = vrot.lane.b32.xlu0 %v1353, 12
      %v1792 = vpop.permute.xlu0 %1791
      %1793 = vrot.lane.b32.xlu0 %v1354, 12
      %v1794 = vpop.permute.xlu0 %1793
      %1795 = vrot.lane.b32.xlu0 %v1355, 12
      %v1796 = vpop.permute.xlu0 %1795
      %1797 = vrot.lane.b32.xlu0 %v1356, 12
      %v1798 = vpop.permute.xlu0 %1797
      %1799 = vrot.lane.b32.xlu0 %v1357, 12
      %v1800 = vpop.permute.xlu0 %1799
      %1801 = vrot.lane.b32.xlu0 %v1358, 12
      %v1802 = vpop.permute.xlu0 %1801
      %1803 = vrot.lane.b32.xlu0 %v1359, 12
      %v1804 = vpop.permute.xlu0 %1803
      %1805 = vrot.lane.b32.xlu0 %v1360, 12
      %v1806 = vpop.permute.xlu0 %1805
      %1807 = vrot.lane.b32.xlu0 %v1361, 12
      %v1808 = vpop.permute.xlu0 %1807
      %1809 = vrot.lane.b32.xlu0 %v1362, 12
      %v1810 = vpop.permute.xlu0 %1809
      %1811 = vrot.lane.b32.xlu0 %v1363, 12
      %v1812 = vpop.permute.xlu0 %1811
      %1813 = vrot.lane.b32.xlu0 %v1364, 12
      %v1814 = vpop.permute.xlu0 %1813
      %1815 = vrot.lane.b32.xlu0 %v1365, 12
      %v1816 = vpop.permute.xlu0 %1815
      %1817 = vrot.lane.b32.xlu0 %v1366, 12
      %v1818 = vpop.permute.xlu0 %1817
      %1819 = vrot.lane.b32.xlu0 %v1367, 12
      %v1820 = vpop.permute.xlu0 %1819
      %1821 = vrot.lane.b32.xlu0 %v1368, 12
      %v1822 = vpop.permute.xlu0 %1821
      %1823 = vrot.lane.b32.xlu0 %v1369, 12
      %v1824 = vpop.permute.xlu0 %1823
      %1825 = vrot.lane.b32.xlu0 %v1370, 12
      %v1826 = vpop.permute.xlu0 %1825
      %1827 = vrot.lane.b32.xlu0 %v1371, 12
      %v1828 = vpop.permute.xlu0 %1827
      %1829 = vrot.lane.b32.xlu0 %v1372, 12
      %v1830 = vpop.permute.xlu0 %1829
      %1895 = vrot.lane.b32.xlu0 %v987, 16
      %v1896 = vpop.permute.xlu0 %1895
      %1897 = vrot.lane.b32.xlu0 %v988, 16
      %v1898 = vpop.permute.xlu0 %1897
      %1899 = vrot.lane.b32.xlu0 %v989, 16
      %v1900 = vpop.permute.xlu0 %1899
      %1901 = vrot.lane.b32.xlu0 %v990, 16
      %v1902 = vpop.permute.xlu0 %1901
      %1903 = vrot.lane.b32.xlu0 %v991, 16
      %v1904 = vpop.permute.xlu0 %1903
      %1905 = vrot.lane.b32.xlu0 %v992, 16
      %v1906 = vpop.permute.xlu0 %1905
      %1907 = vrot.lane.b32.xlu0 %v993, 16
      %v1908 = vpop.permute.xlu0 %1907
      %1909 = vrot.lane.b32.xlu0 %v994, 16
      %v1910 = vpop.permute.xlu0 %1909
      %1911 = vrot.lane.b32.xlu0 %v995, 16
      %v1912 = vpop.permute.xlu0 %1911
      %1913 = vrot.lane.b32.xlu0 %v996, 16
      %v1914 = vpop.permute.xlu0 %1913
      %1915 = vrot.lane.b32.xlu0 %v997, 16
      %v1916 = vpop.permute.xlu0 %1915
      %1917 = vrot.lane.b32.xlu0 %v998, 16
      %v1918 = vpop.permute.xlu0 %1917
      %1919 = vrot.lane.b32.xlu0 %v999, 16
      %v1920 = vpop.permute.xlu0 %1919
      %1921 = vrot.lane.b32.xlu0 %v1000, 16
      %v1922 = vpop.permute.xlu0 %1921
      %1923 = vrot.lane.b32.xlu0 %v1001, 16
      %v1924 = vpop.permute.xlu0 %1923
      %1925 = vrot.lane.b32.xlu0 %v1002, 16
      %v1926 = vpop.permute.xlu0 %1925
      %1927 = vrot.lane.b32.xlu0 %v1003, 16
      %v1928 = vpop.permute.xlu0 %1927
      %1929 = vrot.lane.b32.xlu0 %v1004, 16
      %v1930 = vpop.permute.xlu0 %1929
      %1931 = vrot.lane.b32.xlu0 %v1005, 16
      %v1932 = vpop.permute.xlu0 %1931
      %1933 = vrot.lane.b32.xlu0 %v1006, 16
      %v1934 = vpop.permute.xlu0 %1933
      %1935 = vrot.lane.b32.xlu0 %v1007, 16
      %v1936 = vpop.permute.xlu0 %1935
      %1937 = vrot.lane.b32.xlu0 %v1008, 16
      %v1938 = vpop.permute.xlu0 %1937
      %1939 = vrot.lane.b32.xlu0 %v1009, 16
      %v1940 = vpop.permute.xlu0 %1939
      %1941 = vrot.lane.b32.xlu0 %v1010, 16
      %v1942 = vpop.permute.xlu0 %1941
      %1943 = vrot.lane.b32.xlu0 %v1011, 16
      %v1944 = vpop.permute.xlu0 %1943
      %1945 = vrot.lane.b32.xlu0 %v1012, 16
      %v1946 = vpop.permute.xlu0 %1945
      %1947 = vrot.lane.b32.xlu0 %v1013, 16
      %v1948 = vpop.permute.xlu0 %1947
      %1949 = vrot.lane.b32.xlu0 %v1014, 16
      %v1950 = vpop.permute.xlu0 %1949
      %1951 = vrot.lane.b32.xlu0 %v1015, 16
      %v1952 = vpop.permute.xlu0 %1951
      %1953 = vrot.lane.b32.xlu0 %v1016, 16
      %v1954 = vpop.permute.xlu0 %1953
      %1955 = vrot.lane.b32.xlu0 %v1017, 16
      %v1956 = vpop.permute.xlu0 %1955
      %1957 = vrot.lane.b32.xlu0 %v1018, 16
      %v1958 = vpop.permute.xlu0 %1957
      %2023 = vrot.lane.b32.xlu0 %v1375, 20
      %v2024 = vpop.permute.xlu0 %2023
      %2025 = vrot.lane.b32.xlu0 %v1376, 20
      %v2026 = vpop.permute.xlu0 %2025
      %2027 = vrot.lane.b32.xlu0 %v1377, 20
      %v2028 = vpop.permute.xlu0 %2027
      %2029 = vrot.lane.b32.xlu0 %v1378, 20
      %v2030 = vpop.permute.xlu0 %2029
      %2031 = vrot.lane.b32.xlu0 %v1379, 20
      %v2032 = vpop.permute.xlu0 %2031
      %2033 = vrot.lane.b32.xlu0 %v1380, 20
      %v2034 = vpop.permute.xlu0 %2033
      %2035 = vrot.lane.b32.xlu0 %v1381, 20
      %v2036 = vpop.permute.xlu0 %2035
      %2037 = vrot.lane.b32.xlu0 %v1382, 20
      %v2038 = vpop.permute.xlu0 %2037
      %2039 = vrot.lane.b32.xlu0 %v1383, 20
      %v2040 = vpop.permute.xlu0 %2039
      %2041 = vrot.lane.b32.xlu0 %v1384, 20
      %v2042 = vpop.permute.xlu0 %2041
      %2043 = vrot.lane.b32.xlu0 %v1385, 20
      %v2044 = vpop.permute.xlu0 %2043
      %2045 = vrot.lane.b32.xlu0 %v1386, 20
      %v2046 = vpop.permute.xlu0 %2045
      %2047 = vrot.lane.b32.xlu0 %v1387, 20
      %v2048 = vpop.permute.xlu0 %2047
      %2049 = vrot.lane.b32.xlu0 %v1388, 20
      %v2050 = vpop.permute.xlu0 %2049
      %2051 = vrot.lane.b32.xlu0 %v1389, 20
      %v2052 = vpop.permute.xlu0 %2051
      %2053 = vrot.lane.b32.xlu0 %v1390, 20
      %v2054 = vpop.permute.xlu0 %2053
      %2055 = vrot.lane.b32.xlu0 %v1391, 20
      %v2056 = vpop.permute.xlu0 %2055
      %2057 = vrot.lane.b32.xlu0 %v1392, 20
      %v2058 = vpop.permute.xlu0 %2057
      %2059 = vrot.lane.b32.xlu0 %v1393, 20
      %v2060 = vpop.permute.xlu0 %2059
      %2061 = vrot.lane.b32.xlu0 %v1394, 20
      %v2062 = vpop.permute.xlu0 %2061
      %2063 = vrot.lane.b32.xlu0 %v1395, 20
      %v2064 = vpop.permute.xlu0 %2063
      %2065 = vrot.lane.b32.xlu0 %v1396, 20
      %v2066 = vpop.permute.xlu0 %2065
      %2067 = vrot.lane.b32.xlu0 %v1397, 20
      %v2068 = vpop.permute.xlu0 %2067
      %2069 = vrot.lane.b32.xlu0 %v1398, 20
      %v2070 = vpop.permute.xlu0 %2069
      %2071 = vrot.lane.b32.xlu0 %v1399, 20
      %v2072 = vpop.permute.xlu0 %2071
      %2073 = vrot.lane.b32.xlu0 %v1400, 20
      %v2074 = vpop.permute.xlu0 %2073
      %2075 = vrot.lane.b32.xlu0 %v1401, 20
      %v2076 = vpop.permute.xlu0 %2075
      %2077 = vrot.lane.b32.xlu0 %v1402, 20
      %v2078 = vpop.permute.xlu0 %2077
      %2079 = vrot.lane.b32.xlu0 %v1403, 20
      %v2080 = vpop.permute.xlu0 %2079
      %2081 = vrot.lane.b32.xlu0 %v1404, 20
      %v2082 = vpop.permute.xlu0 %2081
      %2083 = vrot.lane.b32.xlu0 %v1405, 20
      %v2084 = vpop.permute.xlu0 %2083
      %2085 = vrot.lane.b32.xlu0 %v1406, 20
      %v2086 = vpop.permute.xlu0 %2085
      %2151 = vrot.lane.b32.xlu0 %v1409, 24
      %v2152 = vpop.permute.xlu0 %2151
      %2153 = vrot.lane.b32.xlu0 %v1410, 24
      %v2154 = vpop.permute.xlu0 %2153
      %2155 = vrot.lane.b32.xlu0 %v1411, 24
      %v2156 = vpop.permute.xlu0 %2155
      %2157 = vrot.lane.b32.xlu0 %v1412, 24
      %v2158 = vpop.permute.xlu0 %2157
      %2159 = vrot.lane.b32.xlu0 %v1413, 24
      %v2160 = vpop.permute.xlu0 %2159
      %2161 = vrot.lane.b32.xlu0 %v1414, 24
      %v2162 = vpop.permute.xlu0 %2161
      %2163 = vrot.lane.b32.xlu0 %v1415, 24
      %v2164 = vpop.permute.xlu0 %2163
      %2165 = vrot.lane.b32.xlu0 %v1416, 24
      %v2166 = vpop.permute.xlu0 %2165
      %2167 = vrot.lane.b32.xlu0 %v1417, 24
      %v2168 = vpop.permute.xlu0 %2167
      %2169 = vrot.lane.b32.xlu0 %v1418, 24
      %v2170 = vpop.permute.xlu0 %2169
      %2171 = vrot.lane.b32.xlu0 %v1419, 24
      %v2172 = vpop.permute.xlu0 %2171
      %2173 = vrot.lane.b32.xlu0 %v1420, 24
      %v2174 = vpop.permute.xlu0 %2173
      %2175 = vrot.lane.b32.xlu0 %v1421, 24
      %v2176 = vpop.permute.xlu0 %2175
      %2177 = vrot.lane.b32.xlu0 %v1422, 24
      %v2178 = vpop.permute.xlu0 %2177
      %2179 = vrot.lane.b32.xlu0 %v1423, 24
      %v2180 = vpop.permute.xlu0 %2179
      %2181 = vrot.lane.b32.xlu0 %v1424, 24
      %v2182 = vpop.permute.xlu0 %2181
      %2183 = vrot.lane.b32.xlu0 %v1425, 24
      %v2184 = vpop.permute.xlu0 %2183
      %2185 = vrot.lane.b32.xlu0 %v1426, 24
      %v2186 = vpop.permute.xlu0 %2185
      %2187 = vrot.lane.b32.xlu0 %v1427, 24
      %v2188 = vpop.permute.xlu0 %2187
      %2189 = vrot.lane.b32.xlu0 %v1428, 24
      %v2190 = vpop.permute.xlu0 %2189
      %2191 = vrot.lane.b32.xlu0 %v1429, 24
      %v2192 = vpop.permute.xlu0 %2191
      %2193 = vrot.lane.b32.xlu0 %v1430, 24
      %v2194 = vpop.permute.xlu0 %2193
      %2195 = vrot.lane.b32.xlu0 %v1431, 24
      %v2196 = vpop.permute.xlu0 %2195
      %2197 = vrot.lane.b32.xlu0 %v1432, 24
      %v2198 = vpop.permute.xlu0 %2197
      %2199 = vrot.lane.b32.xlu0 %v1433, 24
      %v2200 = vpop.permute.xlu0 %2199
      %2201 = vrot.lane.b32.xlu0 %v1434, 24
      %v2202 = vpop.permute.xlu0 %2201
      %2203 = vrot.lane.b32.xlu0 %v1435, 24
      %v2204 = vpop.permute.xlu0 %2203
      %2205 = vrot.lane.b32.xlu0 %v1436, 24
      %v2206 = vpop.permute.xlu0 %2205
      %2207 = vrot.lane.b32.xlu0 %v1437, 24
      %v2208 = vpop.permute.xlu0 %2207
      %2209 = vrot.lane.b32.xlu0 %v1438, 24
      %v2210 = vpop.permute.xlu0 %2209
      %2211 = vrot.lane.b32.xlu0 %v1439, 24
      %v2212 = vpop.permute.xlu0 %2211
      %2213 = vrot.lane.b32.xlu0 %v1440, 24
      %v2214 = vpop.permute.xlu0 %2213
      %2251 = vrot.lane.b32.xlu0 %v1183, 28
      %v2252 = vpop.permute.xlu0 %2251
      %2253 = vrot.lane.b32.xlu0 %v1184, 28
      %v2254 = vpop.permute.xlu0 %2253
      %2255 = vrot.lane.b32.xlu0 %v1185, 28
      %v2256 = vpop.permute.xlu0 %2255
      %2257 = vrot.lane.b32.xlu0 %v1186, 28
      %v2258 = vpop.permute.xlu0 %2257
      %2259 = vrot.lane.b32.xlu0 %v1187, 28
      %v2260 = vpop.permute.xlu0 %2259
      %2261 = vrot.lane.b32.xlu0 %v1188, 28
      %v2262 = vpop.permute.xlu0 %2261
      %2263 = vrot.lane.b32.xlu0 %v1189, 28
      %v2264 = vpop.permute.xlu0 %2263
      %2265 = vrot.lane.b32.xlu0 %v1190, 28
      %v2266 = vpop.permute.xlu0 %2265
      %2267 = vrot.lane.b32.xlu0 %v1191, 28
      %v2268 = vpop.permute.xlu0 %2267
      %2269 = vrot.lane.b32.xlu0 %v1192, 28
      %v2270 = vpop.permute.xlu0 %2269
      %2271 = vrot.lane.b32.xlu0 %v1193, 28
      %v2272 = vpop.permute.xlu0 %2271
      %2273 = vrot.lane.b32.xlu0 %v1194, 28
      %v2274 = vpop.permute.xlu0 %2273
      %2275 = vrot.lane.b32.xlu0 %v1195, 28
      %v2276 = vpop.permute.xlu0 %2275
      %2277 = vrot.lane.b32.xlu0 %v1196, 28
      %v2278 = vpop.permute.xlu0 %2277
      %2279 = vrot.lane.b32.xlu0 %v1197, 28
      %v2280 = vpop.permute.xlu0 %2279
      %2281 = vrot.lane.b32.xlu0 %v1198, 28
      %v2282 = vpop.permute.xlu0 %2281
      %2283 = vrot.lane.b32.xlu0 %v1199, 28
      %v2284 = vpop.permute.xlu0 %2283
      %2285 = vrot.lane.b32.xlu0 %v1200, 28
      %v2286 = vpop.permute.xlu0 %2285
      %2287 = vrot.lane.b32.xlu0 %v1201, 28
      %v2288 = vpop.permute.xlu0 %2287
      %2289 = vrot.lane.b32.xlu0 %v1202, 28
      %v2290 = vpop.permute.xlu0 %2289
      %2291 = vrot.lane.b32.xlu0 %v1203, 28
      %v2292 = vpop.permute.xlu0 %2291
      %2293 = vrot.lane.b32.xlu0 %v1204, 28
      %v2294 = vpop.permute.xlu0 %2293
      %2295 = vrot.lane.b32.xlu0 %v1205, 28
      %v2296 = vpop.permute.xlu0 %2295
      %2297 = vrot.lane.b32.xlu0 %v1206, 28
      %v2298 = vpop.permute.xlu0 %2297
      %2299 = vrot.lane.b32.xlu0 %v1207, 28
      %v2300 = vpop.permute.xlu0 %2299
      %2301 = vrot.lane.b32.xlu0 %v1208, 28
      %v2302 = vpop.permute.xlu0 %2301
      %2303 = vrot.lane.b32.xlu0 %v1209, 28
      %v2304 = vpop.permute.xlu0 %2303
      %2305 = vrot.lane.b32.xlu0 %v1210, 28
      %v2306 = vpop.permute.xlu0 %2305
      %2307 = vrot.lane.b32.xlu0 %v1441, 28
      %v2308 = vpop.permute.xlu0 %2307
      %2309 = vrot.lane.b32.xlu0 %v1442, 28
      %v2310 = vpop.permute.xlu0 %2309
      %2311 = vrot.lane.b32.xlu0 %v1443, 28
      %v2312 = vpop.permute.xlu0 %2311
      %2313 = vrot.lane.b32.xlu0 %v1444, 28
      %v2314 = vpop.permute.xlu0 %2313
      %2379 = vrot.lane.b32.xlu0 %v1447, 32
      %v2380 = vpop.permute.xlu0 %2379
      %2381 = vrot.lane.b32.xlu0 %v1448, 32
      %v2382 = vpop.permute.xlu0 %2381
      %2383 = vrot.lane.b32.xlu0 %v1449, 32
      %v2384 = vpop.permute.xlu0 %2383
      %2385 = vrot.lane.b32.xlu0 %v1450, 32
      %v2386 = vpop.permute.xlu0 %2385
      %2387 = vrot.lane.b32.xlu0 %v1451, 32
      %v2388 = vpop.permute.xlu0 %2387
      %2389 = vrot.lane.b32.xlu0 %v1452, 32
      %v2390 = vpop.permute.xlu0 %2389
      %2391 = vrot.lane.b32.xlu0 %v1453, 32
      %v2392 = vpop.permute.xlu0 %2391
      %2393 = vrot.lane.b32.xlu0 %v1454, 32
      %v2394 = vpop.permute.xlu0 %2393
      %2395 = vrot.lane.b32.xlu0 %v1455, 32
      %v2396 = vpop.permute.xlu0 %2395
      %2397 = vrot.lane.b32.xlu0 %v1456, 32
      %v2398 = vpop.permute.xlu0 %2397
      %2399 = vrot.lane.b32.xlu0 %v1457, 32
      %v2400 = vpop.permute.xlu0 %2399
      %2401 = vrot.lane.b32.xlu0 %v1458, 32
      %v2402 = vpop.permute.xlu0 %2401
      %2403 = vrot.lane.b32.xlu0 %v1459, 32
      %v2404 = vpop.permute.xlu0 %2403
      %2405 = vrot.lane.b32.xlu0 %v1460, 32
      %v2406 = vpop.permute.xlu0 %2405
      %2407 = vrot.lane.b32.xlu0 %v1461, 32
      %v2408 = vpop.permute.xlu0 %2407
      %2409 = vrot.lane.b32.xlu0 %v1462, 32
      %v2410 = vpop.permute.xlu0 %2409
      %2411 = vrot.lane.b32.xlu0 %v1463, 32
      %v2412 = vpop.permute.xlu0 %2411
      %2413 = vrot.lane.b32.xlu0 %v1464, 32
      %v2414 = vpop.permute.xlu0 %2413
      %2415 = vrot.lane.b32.xlu0 %v1465, 32
      %v2416 = vpop.permute.xlu0 %2415
      %2417 = vrot.lane.b32.xlu0 %v1466, 32
      %v2418 = vpop.permute.xlu0 %2417
      %2419 = vrot.lane.b32.xlu0 %v1467, 32
      %v2420 = vpop.permute.xlu0 %2419
      %2421 = vrot.lane.b32.xlu0 %v1468, 32
      %v2422 = vpop.permute.xlu0 %2421
      %2423 = vrot.lane.b32.xlu0 %v1469, 32
      %v2424 = vpop.permute.xlu0 %2423
      %2425 = vrot.lane.b32.xlu0 %v1470, 32
      %v2426 = vpop.permute.xlu0 %2425
      %2427 = vrot.lane.b32.xlu0 %v1471, 32
      %v2428 = vpop.permute.xlu0 %2427
      %2429 = vrot.lane.b32.xlu0 %v1472, 32
      %v2430 = vpop.permute.xlu0 %2429
      %2431 = vrot.lane.b32.xlu0 %v1473, 32
      %v2432 = vpop.permute.xlu0 %2431
      %2433 = vrot.lane.b32.xlu0 %v1474, 32
      %v2434 = vpop.permute.xlu0 %2433
      %2435 = vrot.lane.b32.xlu0 %v1475, 32
      %v2436 = vpop.permute.xlu0 %2435
      %2437 = vrot.lane.b32.xlu0 %v1476, 32
      %v2438 = vpop.permute.xlu0 %2437
      %2439 = vrot.lane.b32.xlu0 %v1477, 32
      %v2440 = vpop.permute.xlu0 %2439
      %2441 = vrot.lane.b32.xlu0 %v1478, 32
      %v2442 = vpop.permute.xlu0 %2441
      %v2475 = vsel %vm909, %v1147, %v1512
      %v2476 = vsel %vm909, %v1148, %v1514
      %v2477 = vsel %vm909, %v1149, %v1516
      %v2478 = vsel %vm909, %v1150, %v1518
      %v2479 = vsel %vm909, %v1151, %v1520
      %v2480 = vsel %vm909, %v1152, %v1522
      %v2481 = vsel %vm909, %v1153, %v1524
      %v2482 = vsel %vm909, %v1154, %v1526
      %v2483 = vsel %vm909, %v1155, %v1528
      %v2484 = vsel %vm909, %v1156, %v1530
      %v2485 = vsel %vm909, %v1157, %v1532
      %v2486 = vsel %vm909, %v1158, %v1534
      %v2487 = vsel %vm909, %v1159, %v1536
      %v2488 = vsel %vm909, %v1160, %v1538
      %v2489 = vsel %vm909, %v1161, %v1540
      %v2490 = vsel %vm909, %v1162, %v1542
      %v2491 = vsel %vm909, %v1163, %v1544
      %v2492 = vsel %vm909, %v1164, %v1546
      %v2493 = vsel %vm909, %v1165, %v1548
      %v2494 = vsel %vm909, %v1166, %v1550
      %v2495 = vsel %vm909, %v1167, %v1552
      %v2496 = vsel %vm909, %v1168, %v1554
      %v2497 = vsel %vm909, %v1169, %v1556
      %v2498 = vsel %vm909, %v1170, %v1558
      %v2499 = vsel %vm909, %v1171, %v1560
      %v2500 = vsel %vm909, %v1172, %v1562
      %v2501 = vsel %vm909, %v1173, %v1564
      %v2502 = vsel %vm909, %v1174, %v1566
      %v2503 = vsel %vm909, %v1175, %v1568
      %v2504 = vsel %vm909, %v1176, %v1570
      %v2505 = vsel %vm909, %v1177, %v1572
      %v2506 = vsel %vm909, %v1178, %v1574
      %v2507 = vsel %vm948, %v2475, %v1640
      %v2508 = vsel %vm948, %v2476, %v1642
      %v2509 = vsel %vm948, %v2477, %v1644
      %v2510 = vsel %vm948, %v2478, %v1646
      %v2511 = vsel %vm948, %v2479, %v1648
      %v2512 = vsel %vm948, %v2480, %v1650
      %v2513 = vsel %vm948, %v2481, %v1652
      %v2514 = vsel %vm948, %v2482, %v1654
      %v2515 = vsel %vm948, %v2483, %v1656
      %v2516 = vsel %vm948, %v2484, %v1658
      %v2517 = vsel %vm948, %v2485, %v1660
      %v2518 = vsel %vm948, %v2486, %v1662
      %v2519 = vsel %vm948, %v2487, %v1664
      %v2520 = vsel %vm948, %v2488, %v1666
      %v2521 = vsel %vm948, %v2489, %v1668
      %v2522 = vsel %vm948, %v2490, %v1670
      %v2523 = vsel %vm948, %v2491, %v1672
      %v2524 = vsel %vm948, %v2492, %v1674
      %v2525 = vsel %vm948, %v2493, %v1676
      %v2526 = vsel %vm948, %v2494, %v1678
      %v2527 = vsel %vm948, %v2495, %v1680
      %v2528 = vsel %vm948, %v2496, %v1682
      %v2529 = vsel %vm948, %v2497, %v1684
      %v2530 = vsel %vm948, %v2498, %v1686
      %v2531 = vsel %vm948, %v2499, %v1688
      %v2532 = vsel %vm948, %v2500, %v1690
      %v2533 = vsel %vm948, %v2501, %v1692
      %v2534 = vsel %vm948, %v2502, %v1694
      %v2535 = vsel %vm948, %v2503, %v1696
      %v2536 = vsel %vm948, %v2504, %v1698
      %v2537 = vsel %vm948, %v2505, %v1700
      %v2538 = vsel %vm948, %v2506, %v1702
      %vm2539 = vcmask 97280
      %v2540 = vsel %vm2539, %v2507, %v1768
      %v2541 = vsel %vm2539, %v2508, %v1770
      %v2542 = vsel %vm2539, %v2509, %v1772
      %v2543 = vsel %vm2539, %v2510, %v1774
      %v2544 = vsel %vm2539, %v2511, %v1776
      %v2545 = vsel %vm2539, %v2512, %v1778
      %v2546 = vsel %vm2539, %v2513, %v1780
      %v2547 = vsel %vm2539, %v2514, %v1782
      %v2548 = vsel %vm2539, %v2515, %v1784
      %v2549 = vsel %vm2539, %v2516, %v1786
      %v2550 = vsel %vm2539, %v2517, %v1788
      %v2551 = vsel %vm2539, %v2518, %v1790
      %v2552 = vsel %vm2539, %v2519, %v1792
      %v2553 = vsel %vm2539, %v2520, %v1794
      %v2554 = vsel %vm2539, %v2521, %v1796
      %v2555 = vsel %vm2539, %v2522, %v1798
      %v2556 = vsel %vm2539, %v2523, %v1800
      %v2557 = vsel %vm2539, %v2524, %v1802
      %v2558 = vsel %vm2539, %v2525, %v1804
      %v2559 = vsel %vm2539, %v2526, %v1806
      %v2560 = vsel %vm2539, %v2527, %v1808
      %v2561 = vsel %vm2539, %v2528, %v1810
      %v2562 = vsel %vm2539, %v2529, %v1812
      %v2563 = vsel %vm2539, %v2530, %v1814
      %v2564 = vsel %vm2539, %v2531, %v1816
      %v2565 = vsel %vm2539, %v2532, %v1818
      %v2566 = vsel %vm2539, %v2533, %v1820
      %v2567 = vsel %vm2539, %v2534, %v1822
      %v2568 = vsel %vm2539, %v2535, %v1824
      %v2569 = vsel %vm2539, %v2536, %v1826
      %v2570 = vsel %vm2539, %v2537, %v1828
      %v2571 = vsel %vm2539, %v2538, %v1830
      %vm2572 = vcmask 130048
      %v2573 = vsel %vm2572, %v2540, %v1896
      %v2574 = vsel %vm2572, %v2541, %v1898
      %v2575 = vsel %vm2572, %v2542, %v1900
      %v2576 = vsel %vm2572, %v2543, %v1902
      %v2577 = vsel %vm2572, %v2544, %v1904
      %v2578 = vsel %vm2572, %v2545, %v1906
      %v2579 = vsel %vm2572, %v2546, %v1908
      %v2580 = vsel %vm2572, %v2547, %v1910
      %v2581 = vsel %vm2572, %v2548, %v1912
      %v2582 = vsel %vm2572, %v2549, %v1914
      %v2583 = vsel %vm2572, %v2550, %v1916
      %v2584 = vsel %vm2572, %v2551, %v1918
      %v2585 = vsel %vm2572, %v2552, %v1920
      %v2586 = vsel %vm2572, %v2553, %v1922
      %v2587 = vsel %vm2572, %v2554, %v1924
      %v2588 = vsel %vm2572, %v2555, %v1926
      %v2589 = vsel %vm2572, %v2556, %v1928
      %v2590 = vsel %vm2572, %v2557, %v1930
      %v2591 = vsel %vm2572, %v2558, %v1932
      %v2592 = vsel %vm2572, %v2559, %v1934
      %v2593 = vsel %vm2572, %v2560, %v1936
      %v2594 = vsel %vm2572, %v2561, %v1938
      %v2595 = vsel %vm2572, %v2562, %v1940
      %v2596 = vsel %vm2572, %v2563, %v1942
      %v2597 = vsel %vm2572, %v2564, %v1944
      %v2598 = vsel %vm2572, %v2565, %v1946
      %v2599 = vsel %vm2572, %v2566, %v1948
      %v2600 = vsel %vm2572, %v2567, %v1950
      %v2601 = vsel %vm2572, %v2568, %v1952
      %v2602 = vsel %vm2572, %v2569, %v1954
      %v2603 = vsel %vm2572, %v2570, %v1956
      %v2604 = vsel %vm2572, %v2571, %v1958
      %vm2605 = vcmask 162816
      %v2606 = vsel %vm2605, %v2573, %v2024
      %v2607 = vsel %vm2605, %v2574, %v2026
      %v2608 = vsel %vm2605, %v2575, %v2028
      %v2609 = vsel %vm2605, %v2576, %v2030
      %v2610 = vsel %vm2605, %v2577, %v2032
      %v2611 = vsel %vm2605, %v2578, %v2034
      %v2612 = vsel %vm2605, %v2579, %v2036
      %v2613 = vsel %vm2605, %v2580, %v2038
      %v2614 = vsel %vm2605, %v2581, %v2040
      %v2615 = vsel %vm2605, %v2582, %v2042
      %v2616 = vsel %vm2605, %v2583, %v2044
      %v2617 = vsel %vm2605, %v2584, %v2046
      %v2618 = vsel %vm2605, %v2585, %v2048
      %v2619 = vsel %vm2605, %v2586, %v2050
      %v2620 = vsel %vm2605, %v2587, %v2052
      %v2621 = vsel %vm2605, %v2588, %v2054
      %v2622 = vsel %vm2605, %v2589, %v2056
      %v2623 = vsel %vm2605, %v2590, %v2058
      %v2624 = vsel %vm2605, %v2591, %v2060
      %v2625 = vsel %vm2605, %v2592, %v2062
      %v2626 = vsel %vm2605, %v2593, %v2064
      %v2627 = vsel %vm2605, %v2594, %v2066
      %v2628 = vsel %vm2605, %v2595, %v2068
      %v2629 = vsel %vm2605, %v2596, %v2070
      %v2630 = vsel %vm2605, %v2597, %v2072
      %v2631 = vsel %vm2605, %v2598, %v2074
      %v2632 = vsel %vm2605, %v2599, %v2076
      %v2633 = vsel %vm2605, %v2600, %v2078
      %v2634 = vsel %vm2605, %v2601, %v2080
      %v2635 = vsel %vm2605, %v2602, %v2082
      %v2636 = vsel %vm2605, %v2603, %v2084
      %v2637 = vsel %vm2605, %v2604, %v2086
      %vm2638 = vcmask 195584
      %v2639 = vsel %vm2638, %v2606, %v2152
      %v2640 = vsel %vm2638, %v2607, %v2154
      %v2641 = vsel %vm2638, %v2608, %v2156
      %v2642 = vsel %vm2638, %v2609, %v2158
      %v2643 = vsel %vm2638, %v2610, %v2160
      %v2644 = vsel %vm2638, %v2611, %v2162
      %v2645 = vsel %vm2638, %v2612, %v2164
      %v2646 = vsel %vm2638, %v2613, %v2166
      %v2647 = vsel %vm2638, %v2614, %v2168
      %v2648 = vsel %vm2638, %v2615, %v2170
      %v2649 = vsel %vm2638, %v2616, %v2172
      %v2650 = vsel %vm2638, %v2617, %v2174
      %v2651 = vsel %vm2638, %v2618, %v2176
      %v2652 = vsel %vm2638, %v2619, %v2178
      %v2653 = vsel %vm2638, %v2620, %v2180
      %v2654 = vsel %vm2638, %v2621, %v2182
      %v2655 = vsel %vm2638, %v2622, %v2184
      %v2656 = vsel %vm2638, %v2623, %v2186
      %v2657 = vsel %vm2638, %v2624, %v2188
      %v2658 = vsel %vm2638, %v2625, %v2190
      %v2659 = vsel %vm2638, %v2626, %v2192
      %v2660 = vsel %vm2638, %v2627, %v2194
      %v2661 = vsel %vm2638, %v2628, %v2196
      %v2662 = vsel %vm2638, %v2629, %v2198
      %v2663 = vsel %vm2638, %v2630, %v2200
      %v2664 = vsel %vm2638, %v2631, %v2202
      %v2665 = vsel %vm2638, %v2632, %v2204
      %v2666 = vsel %vm2638, %v2633, %v2206
      %v2667 = vsel %vm2638, %v2634, %v2208
      %v2668 = vsel %vm2638, %v2635, %v2210
      %v2669 = vsel %vm2638, %v2636, %v2212
      %v2670 = vsel %vm2638, %v2637, %v2214
      %vm2671 = vcmask 228352
      %v2672 = vsel %vm2671, %v2639, %v2252
      %v2673 = vsel %vm2671, %v2640, %v2254
      %v2674 = vsel %vm2671, %v2641, %v2256
      %v2675 = vsel %vm2671, %v2642, %v2258
      %v2676 = vsel %vm2671, %v2643, %v2260
      %v2677 = vsel %vm2671, %v2644, %v2262
      %v2678 = vsel %vm2671, %v2645, %v2264
      %v2679 = vsel %vm2671, %v2646, %v2266
      %v2680 = vsel %vm2671, %v2647, %v2268
      %v2681 = vsel %vm2671, %v2648, %v2270
      %v2682 = vsel %vm2671, %v2649, %v2272
      %v2683 = vsel %vm2671, %v2650, %v2274
      %v2684 = vsel %vm2671, %v2651, %v2276
      %v2685 = vsel %vm2671, %v2652, %v2278
      %v2686 = vsel %vm2671, %v2653, %v2280
      %v2687 = vsel %vm2671, %v2654, %v2282
      %v2688 = vsel %vm2671, %v2655, %v2284
      %v2689 = vsel %vm2671, %v2656, %v2286
      %v2690 = vsel %vm2671, %v2657, %v2288
      %v2691 = vsel %vm2671, %v2658, %v2290
      %v2692 = vsel %vm2671, %v2659, %v2292
      %v2693 = vsel %vm2671, %v2660, %v2294
      %v2694 = vsel %vm2671, %v2661, %v2296
      %v2695 = vsel %vm2671, %v2662, %v2298
      %v2696 = vsel %vm2671, %v2663, %v2300
      %v2697 = vsel %vm2671, %v2664, %v2302
      %v2698 = vsel %vm2671, %v2665, %v2304
      %v2699 = vsel %vm2671, %v2666, %v2306
      %v2700 = vsel %vm2671, %v2667, %v2308
      %v2701 = vsel %vm2671, %v2668, %v2310
      %v2702 = vsel %vm2671, %v2669, %v2312
      %v2703 = vsel %vm2671, %v2670, %v2314
      %vm2704 = vcmask 261120
      %v2705 = vsel %vm2704, %v2672, %v2380
      %v2706 = vsel %vm2704, %v2673, %v2382
      %v2707 = vsel %vm2704, %v2674, %v2384
      %v2708 = vsel %vm2704, %v2675, %v2386
      %v2709 = vsel %vm2704, %v2676, %v2388
      %v2710 = vsel %vm2704, %v2677, %v2390
      %v2711 = vsel %vm2704, %v2678, %v2392
      %v2712 = vsel %vm2704, %v2679, %v2394
      %v2713 = vsel %vm2704, %v2680, %v2396
      %v2714 = vsel %vm2704, %v2681, %v2398
      %v2715 = vsel %vm2704, %v2682, %v2400
      %v2716 = vsel %vm2704, %v2683, %v2402
      %v2717 = vsel %vm2704, %v2684, %v2404
      %v2718 = vsel %vm2704, %v2685, %v2406
      %v2719 = vsel %vm2704, %v2686, %v2408
      %v2720 = vsel %vm2704, %v2687, %v2410
      %v2721 = vsel %vm2704, %v2688, %v2412
      %v2722 = vsel %vm2704, %v2689, %v2414
      %v2723 = vsel %vm2704, %v2690, %v2416
      %v2724 = vsel %vm2704, %v2691, %v2418
      %v2725 = vsel %vm2704, %v2692, %v2420
      %v2726 = vsel %vm2704, %v2693, %v2422
      %v2727 = vsel %vm2704, %v2694, %v2424
      %v2728 = vsel %vm2704, %v2695, %v2426
      %v2729 = vsel %vm2704, %v2696, %v2428
      %v2730 = vsel %vm2704, %v2697, %v2430
      %v2731 = vsel %vm2704, %v2698, %v2432
      %v2732 = vsel %vm2704, %v2699, %v2434
      %v2733 = vsel %vm2704, %v2700, %v2436
      %v2734 = vsel %vm2704, %v2701, %v2438
      %v2735 = vsel %vm2704, %v2702, %v2440
      %v2736 = vsel %vm2704, %v2703, %v2442
      %v2737 = vpack.c.bf16 %v2706, %v2705
      %v2738 = vpack.c.bf16 %v2708, %v2707
      %v2739 = vpack.c.bf16 %v2710, %v2709
      %v2740 = vpack.c.bf16 %v2712, %v2711
      %v2741 = vpack.c.bf16 %v2714, %v2713
      %v2742 = vpack.c.bf16 %v2716, %v2715
      %v2743 = vpack.c.bf16 %v2718, %v2717
      %v2744 = vpack.c.bf16 %v2720, %v2719
      %v2745 = vpack.c.bf16 %v2722, %v2721
      %v2746 = vpack.c.bf16 %v2724, %v2723
      %v2747 = vpack.c.bf16 %v2726, %v2725
      %v2748 = vpack.c.bf16 %v2728, %v2727
      %v2749 = vpack.c.bf16 %v2730, %v2729
      %v2750 = vpack.c.bf16 %v2732, %v2731
      %v2751 = vpack.c.bf16 %v2734, %v2733
      %v2752 = vpack.c.bf16 %v2736, %v2735
      %v2753 = vld [vmem:[%s1] sm:$0xf]
      %v2754 = vld [vmem:[%s1 + $0x4] sm:$0xf]
      %v2755 = vld [vmem:[%s1 + $0x8] sm:$0xf]
      %v2756 = vld [vmem:[%s1 + $0xc] sm:$0xf]
      %v2757 = vld [vmem:[%s1 + $0x10] sm:$0x3]
      %v2758 = vld [vmem:[%s2] sm:$0x1]
      %v2760 = vlaneseq
      %v2761 = vshrl.u32 %v2760, 7
      %v2762 = vsub.s32 0, %v2761
      %v2763 = vrot.slane %v2758, %v2762
      %v2770 = vunpack.c.l.b16 %v2753
      %v2771 = vunpack.c.l.b16 %v2754
      %v2772 = vunpack.c.l.b16 %v2755
      %v2773 = vunpack.c.l.b16 %v2756
      %v2774 = vunpack.c.l.b16 %v2757
      %v2775 = vpack.c.b16 %v2771, %v2770
      %v2776 = vpack.c.b16 %v2773, %v2772
      %v2777 = vpack.c.b16 %v2774, %v2774
      %vm2780 = vcmask 293888
      %v2782 = vsel %vm2780, %v2737, 0
      %v2785 = vsel %vm2780, %v2738, 0
      %v2788 = vsel %vm2780, %v2739, 0
      %v2791 = vsel %vm2780, %v2740, 0
      %v2794 = vsel %vm2780, %v2741, 0
      %v2797 = vsel %vm2780, %v2742, 0
      %v2800 = vsel %vm2780, %v2743, 0
      %v2803 = vsel %vm2780, %v2744, 0
      %v2806 = vsel %vm2780, %v2745, 0
      %v2809 = vsel %vm2780, %v2746, 0
      %v2812 = vsel %vm2780, %v2747, 0
      %v2815 = vsel %vm2780, %v2748, 0
      %v2818 = vsel %vm2780, %v2749, 0
      %v2821 = vsel %vm2780, %v2750, 0
      %v2824 = vsel %vm2780, %v2751, 0
      %v2827 = vsel %vm2780, %v2752, 0
      %vm2829 = vcmask 1041408
      %v2831 = vsel %vm2829, %v2777, 0
      %2833 = vmatprep.subr.bf16.mxu0 0
      %2834 = vmatpush1.bf16.msra.mxu0 0
      %2835 = vmatprep.subr.bf16.mxu0 0
      %2836 = vmatpush1.bf16.msra.mxu0 0
      %2837 = vmatprep.subr.bf16.mxu0 0
      %2838 = vmatpush1.bf16.msra.mxu0 0
      %2839 = vmatprep.subr.bf16.mxu0 0
      %2840 = vmatpush1.bf16.msra.mxu0 0
      %2841 = vmatprep.subr.bf16.mxu0 0
      %2842 = vmatpush1.bf16.msra.mxu0 0
      %2843 = vmatprep.subr.bf16.mxu0 0
      %2844 = vmatpush1.bf16.msra.mxu0 %v2831
      %2845 = vmatprep.subr.bf16.mxu0 0
      %2846 = vmatpush1.bf16.msra.mxu0 %v2776
      %2847 = vmatprep.subr.bf16.mxu0 0
      %2848 = vmatpush1.bf16.msra.mxu0 %v2775
      %2849 = vmatprep.subr.bf16.mxu0 0
      %2850 = vmatpush2.bf16.msra.mxu0 0
      %2851 = vmatprep.subr.bf16.mxu0 0
      %2852 = vmatpush2.bf16.msra.mxu0 0
      %2853 = vmatprep.subr.bf16.mxu0 0
      %2854 = vmatpush2.bf16.msra.mxu0 0
      %2855 = vmatprep.subr.bf16.mxu0 0
      %2856 = vmatpush2.bf16.msra.mxu0 0
      %2857 = vmatprep.subr.bf16.mxu0 0
      %2858 = vmatpush2.bf16.msra.mxu0 0
      %2859 = vmatprep.subr.bf16.mxu0 0
      %2860 = vmatpush2.bf16.msra.mxu0 0
      %2861 = vmatprep.subr.bf16.mxu0 0
      %2862 = vmatpush2.bf16.msra.mxu0 0
      %2863 = vmatprep.subr.bf16.mxu0 0
      %2864 = vmatpush2.bf16.msra.mxu0 0
      %2865 = vmatprep.mubr.bf16.mxu0 0
      %2866 = vmatmul.mubr.bf16.gmra.mxu0 %v2782
      %v2867 = vpop.f32.mrf.mxu0
      %v2868 = vadd.f32 %v2763, %v2867
      %v2869 = vpop.f32.mrf.mxu0
      %v2870 = vpop.f32.mrf.mxu0
      %v2871 = vadd.f32 %v2763, %v2870
      %v2872 = vpop.f32.mrf.mxu0
      %2873 = vmatprep.mubr.bf16.mxu0 0
      %2874 = vmatmul.mubr.bf16.gmra.mxu0 %v2785
      %v2875 = vpop.f32.mrf.mxu0
      %v2876 = vadd.f32 %v2763, %v2875
      %v2877 = vpop.f32.mrf.mxu0
      %v2878 = vpop.f32.mrf.mxu0
      %v2879 = vadd.f32 %v2763, %v2878
      %v2880 = vpop.f32.mrf.mxu0
      %2881 = vmatprep.mubr.bf16.mxu0 0
      %2882 = vmatmul.mubr.bf16.gmra.mxu0 %v2788
      %v2883 = vpop.f32.mrf.mxu0
      %v2884 = vadd.f32 %v2763, %v2883
      %v2885 = vpop.f32.mrf.mxu0
      %v2886 = vpop.f32.mrf.mxu0
      %v2887 = vadd.f32 %v2763, %v2886
      %v2888 = vpop.f32.mrf.mxu0
      %2889 = vmatprep.mubr.bf16.mxu0 0
      %2890 = vmatmul.mubr.bf16.gmra.mxu0 %v2791
      %v2891 = vpop.f32.mrf.mxu0
      %v2892 = vadd.f32 %v2763, %v2891
      %v2893 = vpop.f32.mrf.mxu0
      %v2894 = vpop.f32.mrf.mxu0
      %v2895 = vadd.f32 %v2763, %v2894
      %v2896 = vpop.f32.mrf.mxu0
      %2897 = vmatprep.mubr.bf16.mxu0 0
      %2898 = vmatmul.mubr.bf16.gmra.mxu0 %v2794
      %v2899 = vpop.f32.mrf.mxu0
      %v2900 = vadd.f32 %v2763, %v2899
      %v2901 = vpop.f32.mrf.mxu0
      %v2902 = vpop.f32.mrf.mxu0
      %v2903 = vadd.f32 %v2763, %v2902
      %v2904 = vpop.f32.mrf.mxu0
      %2905 = vmatprep.mubr.bf16.mxu0 0
      %2906 = vmatmul.mubr.bf16.gmra.mxu0 %v2797
      %v2907 = vpop.f32.mrf.mxu0
      %v2908 = vadd.f32 %v2763, %v2907
      %v2909 = vpop.f32.mrf.mxu0
      %v2910 = vpop.f32.mrf.mxu0
      %v2911 = vadd.f32 %v2763, %v2910
      %v2912 = vpop.f32.mrf.mxu0
      %2913 = vmatprep.mubr.bf16.mxu0 0
      %2914 = vmatmul.mubr.bf16.gmra.mxu0 %v2800
      %v2915 = vpop.f32.mrf.mxu0
      %v2916 = vadd.f32 %v2763, %v2915
      %v2917 = vpop.f32.mrf.mxu0
      %v2918 = vpop.f32.mrf.mxu0
      %v2919 = vadd.f32 %v2763, %v2918
      %v2920 = vpop.f32.mrf.mxu0
      %2921 = vmatprep.mubr.bf16.mxu0 0
      %2922 = vmatmul.mubr.bf16.gmra.mxu0 %v2803
      %v2923 = vpop.f32.mrf.mxu0
      %v2924 = vadd.f32 %v2763, %v2923
      %v2925 = vpop.f32.mrf.mxu0
      %v2926 = vpop.f32.mrf.mxu0
      %v2927 = vadd.f32 %v2763, %v2926
      %v2928 = vpop.f32.mrf.mxu0
      %2929 = vmatprep.mubr.bf16.mxu0 0
      %2930 = vmatmul.mubr.bf16.gmra.mxu0 %v2806
      %v2931 = vpop.f32.mrf.mxu0
      %v2932 = vadd.f32 %v2763, %v2931
      %v2933 = vpop.f32.mrf.mxu0
      %v2934 = vpop.f32.mrf.mxu0
      %v2935 = vadd.f32 %v2763, %v2934
      %v2936 = vpop.f32.mrf.mxu0
      %2937 = vmatprep.mubr.bf16.mxu0 0
      %2938 = vmatmul.mubr.bf16.gmra.mxu0 %v2809
      %v2939 = vpop.f32.mrf.mxu0
      %v2940 = vadd.f32 %v2763, %v2939
      %v2941 = vpop.f32.mrf.mxu0
      %v2942 = vpop.f32.mrf.mxu0
      %v2943 = vadd.f32 %v2763, %v2942
      %v2944 = vpop.f32.mrf.mxu0
      %2945 = vmatprep.mubr.bf16.mxu0 0
      %2946 = vmatmul.mubr.bf16.gmra.mxu0 %v2812
      %v2947 = vpop.f32.mrf.mxu0
      %v2948 = vadd.f32 %v2763, %v2947
      %v2949 = vpop.f32.mrf.mxu0
      %v2950 = vpop.f32.mrf.mxu0
      %v2951 = vadd.f32 %v2763, %v2950
      %v2952 = vpop.f32.mrf.mxu0
      %2953 = vmatprep.mubr.bf16.mxu0 0
      %2954 = vmatmul.mubr.bf16.gmra.mxu0 %v2815
      %v2955 = vpop.f32.mrf.mxu0
      %v2956 = vadd.f32 %v2763, %v2955
      %v2957 = vpop.f32.mrf.mxu0
      %v2958 = vpop.f32.mrf.mxu0
      %v2959 = vadd.f32 %v2763, %v2958
      %v2960 = vpop.f32.mrf.mxu0
      %2961 = vmatprep.mubr.bf16.mxu0 0
      %2962 = vmatmul.mubr.bf16.gmra.mxu0 %v2818
      %v2963 = vpop.f32.mrf.mxu0
      %v2964 = vadd.f32 %v2763, %v2963
      %v2965 = vpop.f32.mrf.mxu0
      %v2966 = vpop.f32.mrf.mxu0
      %v2967 = vadd.f32 %v2763, %v2966
      %v2968 = vpop.f32.mrf.mxu0
      %2969 = vmatprep.mubr.bf16.mxu0 0
      %2970 = vmatmul.mubr.bf16.gmra.mxu0 %v2821
      %v2971 = vpop.f32.mrf.mxu0
      %v2972 = vadd.f32 %v2763, %v2971
      %v2973 = vpop.f32.mrf.mxu0
      %v2974 = vpop.f32.mrf.mxu0
      %v2975 = vadd.f32 %v2763, %v2974
      %v2976 = vpop.f32.mrf.mxu0
      %2977 = vmatprep.mubr.bf16.mxu0 0
      %2978 = vmatmul.mubr.bf16.gmra.mxu0 %v2824
      %v2979 = vpop.f32.mrf.mxu0
      %v2980 = vadd.f32 %v2763, %v2979
      %v2981 = vpop.f32.mrf.mxu0
      %v2982 = vpop.f32.mrf.mxu0
      %v2983 = vadd.f32 %v2763, %v2982
      %v2984 = vpop.f32.mrf.mxu0
      %2985 = vmatprep.mubr.bf16.mxu0 0
      %2986 = vmatmul.mubr.bf16.gmra.mxu0 %v2827
      %v2987 = vpop.f32.mrf.mxu0
      %v2988 = vadd.f32 %v2763, %v2987
      %v2989 = vpop.f32.mrf.mxu0
      %v2990 = vpop.f32.mrf.mxu0
      %v2991 = vadd.f32 %v2763, %v2990
      %v2992 = vpop.f32.mrf.mxu0
      %2993 = vdwg.mxu0
      %2994 = vst.msk [vmem:[#allocation3 + $0x18] sm:$0xff] %vm948, %v2868
      %2995 = vst.msk [vmem:[#allocation3 + $0x20] sm:$0xff] %vm948, %v2871
      %2996 = vst.msk [vmem:[#allocation3 + $0x28] sm:$0xff] %vm948, %v2876
      %2997 = vst.msk [vmem:[#allocation3 + $0x30] sm:$0xff] %vm948, %v2879
      %2998 = vst.msk [vmem:[#allocation3 + $0x38] sm:$0xff] %vm948, %v2884
      %2999 = vst.msk [vmem:[#allocation3 + $0x40] sm:$0xff] %vm948, %v2887
      %3000 = vst.msk [vmem:[#allocation3 + $0x48] sm:$0xff] %vm948, %v2892
      %3001 = vst.msk [vmem:[#allocation3 + $0x50] sm:$0xff] %vm948, %v2895
      %3002 = vst.msk [vmem:[#allocation3 + $0x58] sm:$0xff] %vm948, %v2900
      %3003 = vst.msk [vmem:[#allocation3 + $0x60] sm:$0xff] %vm948, %v2903
      %3004 = vst.msk [vmem:[#allocation3 + $0x68] sm:$0xff] %vm948, %v2908
      %3005 = vst.msk [vmem:[#allocation3 + $0x70] sm:$0xff] %vm948, %v2911
      %3006 = vst.msk [vmem:[#allocation3 + $0x78] sm:$0xff] %vm948, %v2916
      %3007 = vst.msk [vmem:[#allocation3 + $0x80] sm:$0xff] %vm948, %v2919
      %3008 = vst.msk [vmem:[#allocation3 + $0x88] sm:$0xff] %vm948, %v2924
      %3009 = vst.msk [vmem:[#allocation3 + $0x90] sm:$0xff] %vm948, %v2927
      %3010 = vst.msk [vmem:[#allocation3 + $0x98] sm:$0xff] %vm948, %v2932
      %3011 = vst.msk [vmem:[#allocation3 + $0xa0] sm:$0xff] %vm948, %v2935
      %3012 = vst.msk [vmem:[#allocation3 + $0xa8] sm:$0xff] %vm948, %v2940
      %3013 = vst.msk [vmem:[#allocation3 + $0xb0] sm:$0xff] %vm948, %v2943
      %3014 = vst.msk [vmem:[#allocation3 + $0xb8] sm:$0xff] %vm948, %v2948
      %3015 = vst.msk [vmem:[#allocation3 + $0xc0] sm:$0xff] %vm948, %v2951
      %3016 = vst.msk [vmem:[#allocation3 + $0xc8] sm:$0xff] %vm948, %v2956
      %3017 = vst.msk [vmem:[#allocation3 + $0xd0] sm:$0xff] %vm948, %v2959
      %3018 = vst.msk [vmem:[#allocation3 + $0xd8] sm:$0xff] %vm948, %v2964
      %3019 = vst.msk [vmem:[#allocation3 + $0xe0] sm:$0xff] %vm948, %v2967
      %3020 = vst.msk [vmem:[#allocation3 + $0xe8] sm:$0xff] %vm948, %v2972
      %3021 = vst.msk [vmem:[#allocation3 + $0xf0] sm:$0xff] %vm948, %v2975
      %3022 = vst.msk [vmem:[#allocation3 + $0xf8] sm:$0xff] %vm948, %v2980
      %3023 = vst.msk [vmem:[#allocation3 + $0x100] sm:$0xff] %vm948, %v2983
      %3024 = vst.msk [vmem:[#allocation3 + $0x108] sm:$0xff] %vm948, %v2988
      %3025 = vst.msk [vmem:[#allocation3 + $0x110] sm:$0xff] %vm948, %v2991
      %v3026 = vld [vmem:[#allocation3 + $0x7] sm:$0xff]
      %v3027 = vld [vmem:[#allocation3 + $0xf] sm:$0xff]
      %v3028 = vld [vmem:[#allocation3 + $0x17] sm:$0xff]
      %v3029 = vld [vmem:[#allocation3 + $0x1f] sm:$0xff]
      %v3030 = vld [vmem:[#allocation3 + $0x27] sm:$0xff]
      %v3031 = vld [vmem:[#allocation3 + $0x2f] sm:$0xff]
      %v3032 = vld [vmem:[#allocation3 + $0x37] sm:$0xff]
      %v3033 = vld [vmem:[#allocation3 + $0x3f] sm:$0xff]
      %v3034 = vld [vmem:[#allocation3 + $0x47] sm:$0xff]
      %v3035 = vld [vmem:[#allocation3 + $0x4f] sm:$0xff]
      %v3036 = vld [vmem:[#allocation3 + $0x57] sm:$0xff]
      %v3037 = vld [vmem:[#allocation3 + $0x5f] sm:$0xff]
      %v3038 = vld [vmem:[#allocation3 + $0x67] sm:$0xff]
      %v3039 = vld [vmem:[#allocation3 + $0x6f] sm:$0xff]
      %v3040 = vld [vmem:[#allocation3 + $0x77] sm:$0xff]
      %v3041 = vld [vmem:[#allocation3 + $0x7f] sm:$0xff]
      %v3042 = vld [vmem:[#allocation3 + $0x87] sm:$0xff]
      %v3043 = vld [vmem:[#allocation3 + $0x8f] sm:$0xff]
      %v3044 = vld [vmem:[#allocation3 + $0x97] sm:$0xff]
      %v3045 = vld [vmem:[#allocation3 + $0x9f] sm:$0xff]
      %v3046 = vld [vmem:[#allocation3 + $0xa7] sm:$0xff]
      %v3047 = vld [vmem:[#allocation3 + $0xaf] sm:$0xff]
      %v3048 = vld [vmem:[#allocation3 + $0xb7] sm:$0xff]
      %v3049 = vld [vmem:[#allocation3 + $0xbf] sm:$0xff]
      %v3050 = vld [vmem:[#allocation3 + $0xc7] sm:$0xff]
      %v3051 = vld [vmem:[#allocation3 + $0xcf] sm:$0xff]
      %v3052 = vld [vmem:[#allocation3 + $0xd7] sm:$0xff]
      %v3053 = vld [vmem:[#allocation3 + $0xdf] sm:$0xff]
      %v3054 = vld [vmem:[#allocation3 + $0xe7] sm:$0xff]
      %v3055 = vld [vmem:[#allocation3 + $0xef] sm:$0xff]
      %v3056 = vld [vmem:[#allocation3 + $0xf7] sm:$0xff]
      %v3057 = vld [vmem:[#allocation3 + $0xff] sm:$0xff]
      %v3058 = vsel %vm1115, 0.0, %v3026
      %v3059 = vsel %vm1116, 0.0, %v3027
      %v3060 = vsel %vm1117, 0.0, %v3028
      %v3061 = vsel %vm1118, 0.0, %v3029
      %v3062 = vsel %vm1119, 0.0, %v3030
      %v3063 = vsel %vm1120, 0.0, %v3031
      %v3064 = vsel %vm1121, 0.0, %v3032
      %v3065 = vsel %vm1122, 0.0, %v3033
      %v3066 = vsel %vm1123, 0.0, %v3034
      %v3067 = vsel %vm1124, 0.0, %v3035
      %v3068 = vsel %vm1125, 0.0, %v3036
      %v3069 = vsel %vm1126, 0.0, %v3037
      %v3070 = vsel %vm1127, 0.0, %v3038
      %v3071 = vsel %vm1128, 0.0, %v3039
      %v3072 = vsel %vm1129, 0.0, %v3040
      %v3073 = vsel %vm1130, 0.0, %v3041
      %v3074 = vsel %vm1131, 0.0, %v3042
      %v3075 = vsel %vm1132, 0.0, %v3043
      %v3076 = vsel %vm1133, 0.0, %v3044
      %v3077 = vsel %vm1134, 0.0, %v3045
      %v3078 = vsel %vm1135, 0.0, %v3046
      %v3079 = vsel %vm1136, 0.0, %v3047
      %v3080 = vsel %vm1137, 0.0, %v3048
      %v3081 = vsel %vm1138, 0.0, %v3049
      %v3082 = vsel %vm1139, 0.0, %v3050
      %v3083 = vsel %vm1140, 0.0, %v3051
      %v3084 = vsel %vm1141, 0.0, %v3052
      %v3085 = vsel %vm1142, 0.0, %v3053
      %v3086 = vsel %vm1143, 0.0, %v3054
      %v3087 = vsel %vm1144, 0.0, %v3055
      %v3088 = vsel %vm1145, 0.0, %v3056
      %v3089 = vsel %vm1146, 0.0, %v3057
      %v3090 = vld [vmem:[#allocation3 + $0x8] sm:$0xff]
      %v3091 = vld [vmem:[#allocation3 + $0x10] sm:$0xff]
      %v3092 = vld [vmem:[#allocation3 + $0x18] sm:$0xff]
      %v3093 = vld [vmem:[#allocation3 + $0x20] sm:$0xff]
      %v3094 = vld [vmem:[#allocation3 + $0x28] sm:$0xff]
      %v3095 = vld [vmem:[#allocation3 + $0x30] sm:$0xff]
      %v3096 = vld [vmem:[#allocation3 + $0x38] sm:$0xff]
      %v3097 = vld [vmem:[#allocation3 + $0x40] sm:$0xff]
      %v3098 = vld [vmem:[#allocation3 + $0x48] sm:$0xff]
      %v3099 = vld [vmem:[#allocation3 + $0x50] sm:$0xff]
      %v3100 = vld [vmem:[#allocation3 + $0x58] sm:$0xff]
      %v3101 = vld [vmem:[#allocation3 + $0x60] sm:$0xff]
      %v3102 = vld [vmem:[#allocation3 + $0x68] sm:$0xff]
      %v3103 = vld [vmem:[#allocation3 + $0x70] sm:$0xff]
      %v3104 = vld [vmem:[#allocation3 + $0x78] sm:$0xff]
      %v3105 = vld [vmem:[#allocation3 + $0x80] sm:$0xff]
      %v3106 = vld [vmem:[#allocation3 + $0x88] sm:$0xff]
      %v3107 = vld [vmem:[#allocation3 + $0x90] sm:$0xff]
      %v3108 = vld [vmem:[#allocation3 + $0x98] sm:$0xff]
      %v3109 = vld [vmem:[#allocation3 + $0xa0] sm:$0xff]
      %v3110 = vld [vmem:[#allocation3 + $0xa8] sm:$0xff]
      %v3111 = vld [vmem:[#allocation3 + $0xb0] sm:$0xff]
      %v3112 = vld [vmem:[#allocation3 + $0xb8] sm:$0xff]
      %v3113 = vld [vmem:[#allocation3 + $0xc0] sm:$0xff]
      %v3114 = vld [vmem:[#allocation3 + $0xc8] sm:$0xff]
      %v3115 = vld [vmem:[#allocation3 + $0xd0] sm:$0xff]
      %v3116 = vld [vmem:[#allocation3 + $0xd8] sm:$0xff]
      %v3117 = vld [vmem:[#allocation3 + $0xe0] sm:$0xff]
      %v3118 = vld [vmem:[#allocation3 + $0xe8] sm:$0xff]
      %v3119 = vld [vmem:[#allocation3 + $0xf0] sm:$0xff]
      %v3120 = vld [vmem:[#allocation3 + $0xf8] sm:$0xff]
      %v3121 = vld [vmem:[#allocation3 + $0x100] sm:$0xff]
      %v3122 = vld [vmem:[#allocation3 + $0x9] sm:$0xff]
      %v3123 = vld [vmem:[#allocation3 + $0x11] sm:$0xff]
      %v3124 = vld [vmem:[#allocation3 + $0x19] sm:$0xff]
      %v3125 = vld [vmem:[#allocation3 + $0x21] sm:$0xff]
      %v3126 = vld [vmem:[#allocation3 + $0x29] sm:$0xff]
      %v3127 = vld [vmem:[#allocation3 + $0x31] sm:$0xff]
      %v3128 = vld [vmem:[#allocation3 + $0x39] sm:$0xff]
      %v3129 = vld [vmem:[#allocation3 + $0x41] sm:$0xff]
      %v3130 = vld [vmem:[#allocation3 + $0x49] sm:$0xff]
      %v3131 = vld [vmem:[#allocation3 + $0x51] sm:$0xff]
      %v3132 = vld [vmem:[#allocation3 + $0x59] sm:$0xff]
      %v3133 = vld [vmem:[#allocation3 + $0x61] sm:$0xff]
      %v3134 = vld [vmem:[#allocation3 + $0x69] sm:$0xff]
      %v3135 = vld [vmem:[#allocation3 + $0x71] sm:$0xff]
      %v3136 = vld [vmem:[#allocation3 + $0x79] sm:$0xff]
      %v3137 = vld [vmem:[#allocation3 + $0x81] sm:$0xff]
      %v3138 = vld [vmem:[#allocation3 + $0x89] sm:$0xff]
      %v3139 = vld [vmem:[#allocation3 + $0x91] sm:$0xff]
      %v3140 = vld [vmem:[#allocation3 + $0x99] sm:$0xff]
      %v3141 = vld [vmem:[#allocation3 + $0xa1] sm:$0xff]
      %v3142 = vld [vmem:[#allocation3 + $0xa9] sm:$0xff]
      %v3143 = vld [vmem:[#allocation3 + $0xb1] sm:$0xff]
      %v3144 = vld [vmem:[#allocation3 + $0xb9] sm:$0xff]
      %v3145 = vld [vmem:[#allocation3 + $0xc1] sm:$0xff]
      %v3146 = vld [vmem:[#allocation3 + $0xc9] sm:$0xff]
      %v3147 = vld [vmem:[#allocation3 + $0xd1] sm:$0xff]
      %v3148 = vld [vmem:[#allocation3 + $0xd9] sm:$0xff]
      %v3149 = vld [vmem:[#allocation3 + $0xe1] sm:$0xff]
      %v3150 = vld [vmem:[#allocation3 + $0xe9] sm:$0xff]
      %v3151 = vld [vmem:[#allocation3 + $0xf1] sm:$0xff]
      %v3152 = vld [vmem:[#allocation3 + $0xf9] sm:$0xff]
      %v3153 = vld [vmem:[#allocation3 + $0x101] sm:$0xff]
      %v3154 = vsel %vm1275, 0.0, %v3122
      %v3155 = vsel %vm1276, 0.0, %v3123
      %v3156 = vsel %vm1277, 0.0, %v3124
      %v3157 = vsel %vm1278, 0.0, %v3125
      %v3158 = vsel %vm1279, 0.0, %v3126
      %v3159 = vsel %vm1280, 0.0, %v3127
      %v3160 = vsel %vm1281, 0.0, %v3128
      %v3161 = vsel %vm1282, 0.0, %v3129
      %v3162 = vsel %vm1283, 0.0, %v3130
      %v3163 = vsel %vm1284, 0.0, %v3131
      %v3164 = vsel %vm1285, 0.0, %v3132
      %v3165 = vsel %vm1286, 0.0, %v3133
      %v3166 = vsel %vm1287, 0.0, %v3134
      %v3167 = vsel %vm1288, 0.0, %v3135
      %v3168 = vsel %vm1289, 0.0, %v3136
      %v3169 = vsel %vm1290, 0.0, %v3137
      %v3170 = vsel %vm1291, 0.0, %v3138
      %v3171 = vsel %vm1292, 0.0, %v3139
      %v3172 = vsel %vm1293, 0.0, %v3140
      %v3173 = vsel %vm1294, 0.0, %v3141
      %v3174 = vsel %vm1295, 0.0, %v3142
      %v3175 = vsel %vm1296, 0.0, %v3143
      %v3176 = vsel %vm1297, 0.0, %v3144
      %v3177 = vsel %vm1298, 0.0, %v3145
      %v3178 = vsel %vm1299, 0.0, %v3146
      %v3179 = vsel %vm1300, 0.0, %v3147
      %v3180 = vsel %vm1301, 0.0, %v3148
      %v3181 = vsel %vm1302, 0.0, %v3149
      %v3182 = vsel %vm1303, 0.0, %v3150
      %v3183 = vsel %vm1304, 0.0, %v3151
      %v3184 = vsel %vm1305, 0.0, %v3152
      %v3185 = vsel %vm1306, 0.0, %v3153
      %v3186 = vld [vmem:[#allocation3 + $0x107] sm:$0xff]
      %v3187 = vld [vmem:[#allocation3 + $0x10f] sm:$0xff]
      %v3188 = vsel %vm1115, 0.0, %v3028
      %v3189 = vsel %vm1116, 0.0, %v3029
      %v3190 = vsel %vm1117, 0.0, %v3030
      %v3191 = vsel %vm1118, 0.0, %v3031
      %v3192 = vsel %vm1119, 0.0, %v3032
      %v3193 = vsel %vm1120, 0.0, %v3033
      %v3194 = vsel %vm1121, 0.0, %v3034
      %v3195 = vsel %vm1122, 0.0, %v3035
      %v3196 = vsel %vm1123, 0.0, %v3036
      %v3197 = vsel %vm1124, 0.0, %v3037
      %v3198 = vsel %vm1125, 0.0, %v3038
      %v3199 = vsel %vm1126, 0.0, %v3039
      %v3200 = vsel %vm1127, 0.0, %v3040
      %v3201 = vsel %vm1128, 0.0, %v3041
      %v3202 = vsel %vm1129, 0.0, %v3042
      %v3203 = vsel %vm1130, 0.0, %v3043
      %v3204 = vsel %vm1131, 0.0, %v3044
      %v3205 = vsel %vm1132, 0.0, %v3045
      %v3206 = vsel %vm1133, 0.0, %v3046
      %v3207 = vsel %vm1134, 0.0, %v3047
      %v3208 = vsel %vm1135, 0.0, %v3048
      %v3209 = vsel %vm1136, 0.0, %v3049
      %v3210 = vsel %vm1137, 0.0, %v3050
      %v3211 = vsel %vm1138, 0.0, %v3051
      %v3212 = vsel %vm1139, 0.0, %v3052
      %v3213 = vsel %vm1140, 0.0, %v3053
      %v3214 = vsel %vm1141, 0.0, %v3054
      %v3215 = vsel %vm1142, 0.0, %v3055
      %v3216 = vsel %vm1143, 0.0, %v3056
      %v3217 = vsel %vm1144, 0.0, %v3057
      %v3218 = vsel %vm1145, 0.0, %v3186
      %v3219 = vsel %vm1146, 0.0, %v3187
      %v3220 = vld [vmem:[#allocation3 + $0x109] sm:$0xff]
      %v3221 = vld [vmem:[#allocation3 + $0x111] sm:$0xff]
      %v3222 = vsel %vm1275, 0.0, %v3124
      %v3223 = vsel %vm1276, 0.0, %v3125
      %v3224 = vsel %vm1277, 0.0, %v3126
      %v3225 = vsel %vm1278, 0.0, %v3127
      %v3226 = vsel %vm1279, 0.0, %v3128
      %v3227 = vsel %vm1280, 0.0, %v3129
      %v3228 = vsel %vm1281, 0.0, %v3130
      %v3229 = vsel %vm1282, 0.0, %v3131
      %v3230 = vsel %vm1283, 0.0, %v3132
      %v3231 = vsel %vm1284, 0.0, %v3133
      %v3232 = vsel %vm1285, 0.0, %v3134
      %v3233 = vsel %vm1286, 0.0, %v3135
      %v3234 = vsel %vm1287, 0.0, %v3136
      %v3235 = vsel %vm1288, 0.0, %v3137
      %v3236 = vsel %vm1289, 0.0, %v3138
      %v3237 = vsel %vm1290, 0.0, %v3139
      %v3238 = vsel %vm1291, 0.0, %v3140
      %v3239 = vsel %vm1292, 0.0, %v3141
      %v3240 = vsel %vm1293, 0.0, %v3142
      %v3241 = vsel %vm1294, 0.0, %v3143
      %v3242 = vsel %vm1295, 0.0, %v3144
      %v3243 = vsel %vm1296, 0.0, %v3145
      %v3244 = vsel %vm1297, 0.0, %v3146
      %v3245 = vsel %vm1298, 0.0, %v3147
      %v3246 = vsel %vm1299, 0.0, %v3148
      %v3247 = vsel %vm1300, 0.0, %v3149
      %v3248 = vsel %vm1301, 0.0, %v3150
      %v3249 = vsel %vm1302, 0.0, %v3151
      %v3250 = vsel %vm1303, 0.0, %v3152
      %v3251 = vsel %vm1304, 0.0, %v3153
      %v3252 = vsel %vm1305, 0.0, %v3220
      %v3253 = vsel %vm1306, 0.0, %v3221
      %v3254 = vld [vmem:[#allocation3 + $0x117] sm:$0xff]
      %v3255 = vld [vmem:[#allocation3 + $0x11f] sm:$0xff]
      %v3256 = vsel %vm1115, 0.0, %v3030
      %v3257 = vsel %vm1116, 0.0, %v3031
      %v3258 = vsel %vm1117, 0.0, %v3032
      %v3259 = vsel %vm1118, 0.0, %v3033
      %v3260 = vsel %vm1119, 0.0, %v3034
      %v3261 = vsel %vm1120, 0.0, %v3035
      %v3262 = vsel %vm1121, 0.0, %v3036
      %v3263 = vsel %vm1122, 0.0, %v3037
      %v3264 = vsel %vm1123, 0.0, %v3038
      %v3265 = vsel %vm1124, 0.0, %v3039
      %v3266 = vsel %vm1125, 0.0, %v3040
      %v3267 = vsel %vm1126, 0.0, %v3041
      %v3268 = vsel %vm1127, 0.0, %v3042
      %v3269 = vsel %vm1128, 0.0, %v3043
      %v3270 = vsel %vm1129, 0.0, %v3044
      %v3271 = vsel %vm1130, 0.0, %v3045
      %v3272 = vsel %vm1131, 0.0, %v3046
      %v3273 = vsel %vm1132, 0.0, %v3047
      %v3274 = vsel %vm1133, 0.0, %v3048
      %v3275 = vsel %vm1134, 0.0, %v3049
      %v3276 = vsel %vm1135, 0.0, %v3050
      %v3277 = vsel %vm1136, 0.0, %v3051
      %v3278 = vsel %vm1137, 0.0, %v3052
      %v3279 = vsel %vm1138, 0.0, %v3053
      %v3280 = vsel %vm1139, 0.0, %v3054
      %v3281 = vsel %vm1140, 0.0, %v3055
      %v3282 = vsel %vm1141, 0.0, %v3056
      %v3283 = vsel %vm1142, 0.0, %v3057
      %v3284 = vsel %vm1143, 0.0, %v3186
      %v3285 = vsel %vm1144, 0.0, %v3187
      %v3286 = vsel %vm1145, 0.0, %v3254
      %v3287 = vsel %vm1146, 0.0, %v3255
      %v3288 = vld [vmem:[#allocation3 + $0x108] sm:$0xff]
      %v3289 = vld [vmem:[#allocation3 + $0x110] sm:$0xff]
      %v3290 = vld [vmem:[#allocation3 + $0x118] sm:$0xff]
      %v3291 = vld [vmem:[#allocation3 + $0x120] sm:$0xff]
      %v3292 = vld [vmem:[#allocation3 + $0x119] sm:$0xff]
      %v3293 = vld [vmem:[#allocation3 + $0x121] sm:$0xff]
      %v3294 = vsel %vm1275, 0.0, %v3126
      %v3295 = vsel %vm1276, 0.0, %v3127
      %v3296 = vsel %vm1277, 0.0, %v3128
      %v3297 = vsel %vm1278, 0.0, %v3129
      %v3298 = vsel %vm1279, 0.0, %v3130
      %v3299 = vsel %vm1280, 0.0, %v3131
      %v3300 = vsel %vm1281, 0.0, %v3132
      %v3301 = vsel %vm1282, 0.0, %v3133
      %v3302 = vsel %vm1283, 0.0, %v3134
      %v3303 = vsel %vm1284, 0.0, %v3135
      %v3304 = vsel %vm1285, 0.0, %v3136
      %v3305 = vsel %vm1286, 0.0, %v3137
      %v3306 = vsel %vm1287, 0.0, %v3138
      %v3307 = vsel %vm1288, 0.0, %v3139
      %v3308 = vsel %vm1289, 0.0, %v3140
      %v3309 = vsel %vm1290, 0.0, %v3141
      %v3310 = vsel %vm1291, 0.0, %v3142
      %v3311 = vsel %vm1292, 0.0, %v3143
      %v3312 = vsel %vm1293, 0.0, %v3144
      %v3313 = vsel %vm1294, 0.0, %v3145
      %v3314 = vsel %vm1295, 0.0, %v3146
      %v3315 = vsel %vm1296, 0.0, %v3147
      %v3316 = vsel %vm1297, 0.0, %v3148
      %v3317 = vsel %vm1298, 0.0, %v3149
      %v3318 = vsel %vm1299, 0.0, %v3150
      %v3319 = vsel %vm1300, 0.0, %v3151
      %v3320 = vsel %vm1301, 0.0, %v3152
      %v3321 = vsel %vm1302, 0.0, %v3153
      %v3322 = vsel %vm1303, 0.0, %v3220
      %v3323 = vsel %vm1304, 0.0, %v3221
      %v3324 = vsel %vm1305, 0.0, %v3292
      %v3325 = vsel %vm1306, 0.0, %v3293
      %3358 = vrot.lane.b32.xlu0 %v3090, 8
      %v3359 = vpop.permute.xlu0 %3358
      %3360 = vrot.lane.b32.xlu0 %v3091, 8
      %v3361 = vpop.permute.xlu0 %3360
      %3362 = vrot.lane.b32.xlu0 %v3092, 8
      %v3363 = vpop.permute.xlu0 %3362
      %3364 = vrot.lane.b32.xlu0 %v3093, 8
      %v3365 = vpop.permute.xlu0 %3364
      %3366 = vrot.lane.b32.xlu0 %v3094, 8
      %v3367 = vpop.permute.xlu0 %3366
      %3368 = vrot.lane.b32.xlu0 %v3095, 8
      %v3369 = vpop.permute.xlu0 %3368
      %3370 = vrot.lane.b32.xlu0 %v3096, 8
      %v3371 = vpop.permute.xlu0 %3370
      %3372 = vrot.lane.b32.xlu0 %v3097, 8
      %v3373 = vpop.permute.xlu0 %3372
      %3374 = vrot.lane.b32.xlu0 %v3098, 8
      %v3375 = vpop.permute.xlu0 %3374
      %3376 = vrot.lane.b32.xlu0 %v3099, 8
      %v3377 = vpop.permute.xlu0 %3376
      %3378 = vrot.lane.b32.xlu0 %v3100, 8
      %v3379 = vpop.permute.xlu0 %3378
      %3380 = vrot.lane.b32.xlu0 %v3101, 8
      %v3381 = vpop.permute.xlu0 %3380
      %3382 = vrot.lane.b32.xlu0 %v3102, 8
      %v3383 = vpop.permute.xlu0 %3382
      %3384 = vrot.lane.b32.xlu0 %v3103, 8
      %v3385 = vpop.permute.xlu0 %3384
      %3386 = vrot.lane.b32.xlu0 %v3104, 8
      %v3387 = vpop.permute.xlu0 %3386
      %3388 = vrot.lane.b32.xlu0 %v3105, 8
      %v3389 = vpop.permute.xlu0 %3388
      %3390 = vrot.lane.b32.xlu0 %v3106, 8
      %v3391 = vpop.permute.xlu0 %3390
      %3392 = vrot.lane.b32.xlu0 %v3107, 8
      %v3393 = vpop.permute.xlu0 %3392
      %3394 = vrot.lane.b32.xlu0 %v3108, 8
      %v3395 = vpop.permute.xlu0 %3394
      %3396 = vrot.lane.b32.xlu0 %v3109, 8
      %v3397 = vpop.permute.xlu0 %3396
      %3398 = vrot.lane.b32.xlu0 %v3110, 8
      %v3399 = vpop.permute.xlu0 %3398
      %3400 = vrot.lane.b32.xlu0 %v3111, 8
      %v3401 = vpop.permute.xlu0 %3400
      %3402 = vrot.lane.b32.xlu0 %v3112, 8
      %v3403 = vpop.permute.xlu0 %3402
      %3404 = vrot.lane.b32.xlu0 %v3113, 8
      %v3405 = vpop.permute.xlu0 %3404
      %3406 = vrot.lane.b32.xlu0 %v3114, 8
      %v3407 = vpop.permute.xlu0 %3406
      %3408 = vrot.lane.b32.xlu0 %v3115, 8
      %v3409 = vpop.permute.xlu0 %3408
      %3410 = vrot.lane.b32.xlu0 %v3116, 8
      %v3411 = vpop.permute.xlu0 %3410
      %3412 = vrot.lane.b32.xlu0 %v3117, 8
      %v3413 = vpop.permute.xlu0 %3412
      %3414 = vrot.lane.b32.xlu0 %v3118, 8
      %v3415 = vpop.permute.xlu0 %3414
      %3416 = vrot.lane.b32.xlu0 %v3119, 8
      %v3417 = vpop.permute.xlu0 %3416
      %3418 = vrot.lane.b32.xlu0 %v3120, 8
      %v3419 = vpop.permute.xlu0 %3418
      %3420 = vrot.lane.b32.xlu0 %v3121, 8
      %v3421 = vpop.permute.xlu0 %3420
      %3486 = vrot.lane.b32.xlu0 %v3154, 16
      %v3487 = vpop.permute.xlu0 %3486
      %3488 = vrot.lane.b32.xlu0 %v3155, 16
      %v3489 = vpop.permute.xlu0 %3488
      %3490 = vrot.lane.b32.xlu0 %v3156, 16
      %v3491 = vpop.permute.xlu0 %3490
      %3492 = vrot.lane.b32.xlu0 %v3157, 16
      %v3493 = vpop.permute.xlu0 %3492
      %3494 = vrot.lane.b32.xlu0 %v3158, 16
      %v3495 = vpop.permute.xlu0 %3494
      %3496 = vrot.lane.b32.xlu0 %v3159, 16
      %v3497 = vpop.permute.xlu0 %3496
      %3498 = vrot.lane.b32.xlu0 %v3160, 16
      %v3499 = vpop.permute.xlu0 %3498
      %3500 = vrot.lane.b32.xlu0 %v3161, 16
      %v3501 = vpop.permute.xlu0 %3500
      %3502 = vrot.lane.b32.xlu0 %v3162, 16
      %v3503 = vpop.permute.xlu0 %3502
      %3504 = vrot.lane.b32.xlu0 %v3163, 16
      %v3505 = vpop.permute.xlu0 %3504
      %3506 = vrot.lane.b32.xlu0 %v3164, 16
      %v3507 = vpop.permute.xlu0 %3506
      %3508 = vrot.lane.b32.xlu0 %v3165, 16
      %v3509 = vpop.permute.xlu0 %3508
      %3510 = vrot.lane.b32.xlu0 %v3166, 16
      %v3511 = vpop.permute.xlu0 %3510
      %3512 = vrot.lane.b32.xlu0 %v3167, 16
      %v3513 = vpop.permute.xlu0 %3512
      %3514 = vrot.lane.b32.xlu0 %v3168, 16
      %v3515 = vpop.permute.xlu0 %3514
      %3516 = vrot.lane.b32.xlu0 %v3169, 16
      %v3517 = vpop.permute.xlu0 %3516
      %3518 = vrot.lane.b32.xlu0 %v3170, 16
      %v3519 = vpop.permute.xlu0 %3518
      %3520 = vrot.lane.b32.xlu0 %v3171, 16
      %v3521 = vpop.permute.xlu0 %3520
      %3522 = vrot.lane.b32.xlu0 %v3172, 16
      %v3523 = vpop.permute.xlu0 %3522
      %3524 = vrot.lane.b32.xlu0 %v3173, 16
      %v3525 = vpop.permute.xlu0 %3524
      %3526 = vrot.lane.b32.xlu0 %v3174, 16
      %v3527 = vpop.permute.xlu0 %3526
      %3528 = vrot.lane.b32.xlu0 %v3175, 16
      %v3529 = vpop.permute.xlu0 %3528
      %3530 = vrot.lane.b32.xlu0 %v3176, 16
      %v3531 = vpop.permute.xlu0 %3530
      %3532 = vrot.lane.b32.xlu0 %v3177, 16
      %v3533 = vpop.permute.xlu0 %3532
      %3534 = vrot.lane.b32.xlu0 %v3178, 16
      %v3535 = vpop.permute.xlu0 %3534
      %3536 = vrot.lane.b32.xlu0 %v3179, 16
      %v3537 = vpop.permute.xlu0 %3536
      %3538 = vrot.lane.b32.xlu0 %v3180, 16
      %v3539 = vpop.permute.xlu0 %3538
      %3540 = vrot.lane.b32.xlu0 %v3181, 16
      %v3541 = vpop.permute.xlu0 %3540
      %3542 = vrot.lane.b32.xlu0 %v3182, 16
      %v3543 = vpop.permute.xlu0 %3542
      %3544 = vrot.lane.b32.xlu0 %v3183, 16
      %v3545 = vpop.permute.xlu0 %3544
      %3546 = vrot.lane.b32.xlu0 %v3184, 16
      %v3547 = vpop.permute.xlu0 %3546
      %3548 = vrot.lane.b32.xlu0 %v3185, 16
      %v3549 = vpop.permute.xlu0 %3548
      %3614 = vrot.lane.b32.xlu0 %v3188, 24
      %v3615 = vpop.permute.xlu0 %3614
      %3616 = vrot.lane.b32.xlu0 %v3189, 24
      %v3617 = vpop.permute.xlu0 %3616
      %3618 = vrot.lane.b32.xlu0 %v3190, 24
      %v3619 = vpop.permute.xlu0 %3618
      %3620 = vrot.lane.b32.xlu0 %v3191, 24
      %v3621 = vpop.permute.xlu0 %3620
      %3622 = vrot.lane.b32.xlu0 %v3192, 24
      %v3623 = vpop.permute.xlu0 %3622
      %3624 = vrot.lane.b32.xlu0 %v3193, 24
      %v3625 = vpop.permute.xlu0 %3624
      %3626 = vrot.lane.b32.xlu0 %v3194, 24
      %v3627 = vpop.permute.xlu0 %3626
      %3628 = vrot.lane.b32.xlu0 %v3195, 24
      %v3629 = vpop.permute.xlu0 %3628
      %3630 = vrot.lane.b32.xlu0 %v3196, 24
      %v3631 = vpop.permute.xlu0 %3630
      %3632 = vrot.lane.b32.xlu0 %v3197, 24
      %v3633 = vpop.permute.xlu0 %3632
      %3634 = vrot.lane.b32.xlu0 %v3198, 24
      %v3635 = vpop.permute.xlu0 %3634
      %3636 = vrot.lane.b32.xlu0 %v3199, 24
      %v3637 = vpop.permute.xlu0 %3636
      %3638 = vrot.lane.b32.xlu0 %v3200, 24
      %v3639 = vpop.permute.xlu0 %3638
      %3640 = vrot.lane.b32.xlu0 %v3201, 24
      %v3641 = vpop.permute.xlu0 %3640
      %3642 = vrot.lane.b32.xlu0 %v3202, 24
      %v3643 = vpop.permute.xlu0 %3642
      %3644 = vrot.lane.b32.xlu0 %v3203, 24
      %v3645 = vpop.permute.xlu0 %3644
      %3646 = vrot.lane.b32.xlu0 %v3204, 24
      %v3647 = vpop.permute.xlu0 %3646
      %3648 = vrot.lane.b32.xlu0 %v3205, 24
      %v3649 = vpop.permute.xlu0 %3648
      %3650 = vrot.lane.b32.xlu0 %v3206, 24
      %v3651 = vpop.permute.xlu0 %3650
      %3652 = vrot.lane.b32.xlu0 %v3207, 24
      %v3653 = vpop.permute.xlu0 %3652
      %3654 = vrot.lane.b32.xlu0 %v3208, 24
      %v3655 = vpop.permute.xlu0 %3654
      %3656 = vrot.lane.b32.xlu0 %v3209, 24
      %v3657 = vpop.permute.xlu0 %3656
      %3658 = vrot.lane.b32.xlu0 %v3210, 24
      %v3659 = vpop.permute.xlu0 %3658
      %3660 = vrot.lane.b32.xlu0 %v3211, 24
      %v3661 = vpop.permute.xlu0 %3660
      %3662 = vrot.lane.b32.xlu0 %v3212, 24
      %v3663 = vpop.permute.xlu0 %3662
      %3664 = vrot.lane.b32.xlu0 %v3213, 24
      %v3665 = vpop.permute.xlu0 %3664
      %3666 = vrot.lane.b32.xlu0 %v3214, 24
      %v3667 = vpop.permute.xlu0 %3666
      %3668 = vrot.lane.b32.xlu0 %v3215, 24
      %v3669 = vpop.permute.xlu0 %3668
      %3670 = vrot.lane.b32.xlu0 %v3216, 24
      %v3671 = vpop.permute.xlu0 %3670
      %3672 = vrot.lane.b32.xlu0 %v3217, 24
      %v3673 = vpop.permute.xlu0 %3672
      %3674 = vrot.lane.b32.xlu0 %v3218, 24
      %v3675 = vpop.permute.xlu0 %3674
      %3676 = vrot.lane.b32.xlu0 %v3219, 24
      %v3677 = vpop.permute.xlu0 %3676
      %3742 = vrot.lane.b32.xlu0 %v2868, 32
      %v3743 = vpop.permute.xlu0 %3742
      %3744 = vrot.lane.b32.xlu0 %v2871, 32
      %v3745 = vpop.permute.xlu0 %3744
      %3746 = vrot.lane.b32.xlu0 %v2876, 32
      %v3747 = vpop.permute.xlu0 %3746
      %3748 = vrot.lane.b32.xlu0 %v2879, 32
      %v3749 = vpop.permute.xlu0 %3748
      %3750 = vrot.lane.b32.xlu0 %v2884, 32
      %v3751 = vpop.permute.xlu0 %3750
      %3752 = vrot.lane.b32.xlu0 %v2887, 32
      %v3753 = vpop.permute.xlu0 %3752
      %3754 = vrot.lane.b32.xlu0 %v2892, 32
      %v3755 = vpop.permute.xlu0 %3754
      %3756 = vrot.lane.b32.xlu0 %v2895, 32
      %v3757 = vpop.permute.xlu0 %3756
      %3758 = vrot.lane.b32.xlu0 %v2900, 32
      %v3759 = vpop.permute.xlu0 %3758
      %3760 = vrot.lane.b32.xlu0 %v2903, 32
      %v3761 = vpop.permute.xlu0 %3760
      %3762 = vrot.lane.b32.xlu0 %v2908, 32
      %v3763 = vpop.permute.xlu0 %3762
      %3764 = vrot.lane.b32.xlu0 %v2911, 32
      %v3765 = vpop.permute.xlu0 %3764
      %3766 = vrot.lane.b32.xlu0 %v2916, 32
      %v3767 = vpop.permute.xlu0 %3766
      %3768 = vrot.lane.b32.xlu0 %v2919, 32
      %v3769 = vpop.permute.xlu0 %3768
      %3770 = vrot.lane.b32.xlu0 %v2924, 32
      %v3771 = vpop.permute.xlu0 %3770
      %3772 = vrot.lane.b32.xlu0 %v2927, 32
      %v3773 = vpop.permute.xlu0 %3772
      %3774 = vrot.lane.b32.xlu0 %v2932, 32
      %v3775 = vpop.permute.xlu0 %3774
      %3776 = vrot.lane.b32.xlu0 %v2935, 32
      %v3777 = vpop.permute.xlu0 %3776
      %3778 = vrot.lane.b32.xlu0 %v2940, 32
      %v3779 = vpop.permute.xlu0 %3778
      %3780 = vrot.lane.b32.xlu0 %v2943, 32
      %v3781 = vpop.permute.xlu0 %3780
      %3782 = vrot.lane.b32.xlu0 %v2948, 32
      %v3783 = vpop.permute.xlu0 %3782
      %3784 = vrot.lane.b32.xlu0 %v2951, 32
      %v3785 = vpop.permute.xlu0 %3784
      %3786 = vrot.lane.b32.xlu0 %v2956, 32
      %v3787 = vpop.permute.xlu0 %3786
      %3788 = vrot.lane.b32.xlu0 %v2959, 32
      %v3789 = vpop.permute.xlu0 %3788
      %3790 = vrot.lane.b32.xlu0 %v2964, 32
      %v3791 = vpop.permute.xlu0 %3790
      %3792 = vrot.lane.b32.xlu0 %v2967, 32
      %v3793 = vpop.permute.xlu0 %3792
      %3794 = vrot.lane.b32.xlu0 %v2972, 32
      %v3795 = vpop.permute.xlu0 %3794
      %3796 = vrot.lane.b32.xlu0 %v2975, 32
      %v3797 = vpop.permute.xlu0 %3796
      %3798 = vrot.lane.b32.xlu0 %v2980, 32
      %v3799 = vpop.permute.xlu0 %3798
      %3800 = vrot.lane.b32.xlu0 %v2983, 32
      %v3801 = vpop.permute.xlu0 %3800
      %3802 = vrot.lane.b32.xlu0 %v2988, 32
      %v3803 = vpop.permute.xlu0 %3802
      %3804 = vrot.lane.b32.xlu0 %v2991, 32
      %v3805 = vpop.permute.xlu0 %3804
      %3870 = vrot.lane.b32.xlu0 %v3222, 40
      %v3871 = vpop.permute.xlu0 %3870
      %3872 = vrot.lane.b32.xlu0 %v3223, 40
      %v3873 = vpop.permute.xlu0 %3872
      %3874 = vrot.lane.b32.xlu0 %v3224, 40
      %v3875 = vpop.permute.xlu0 %3874
      %3876 = vrot.lane.b32.xlu0 %v3225, 40
      %v3877 = vpop.permute.xlu0 %3876
      %3878 = vrot.lane.b32.xlu0 %v3226, 40
      %v3879 = vpop.permute.xlu0 %3878
      %3880 = vrot.lane.b32.xlu0 %v3227, 40
      %v3881 = vpop.permute.xlu0 %3880
      %3882 = vrot.lane.b32.xlu0 %v3228, 40
      %v3883 = vpop.permute.xlu0 %3882
      %3884 = vrot.lane.b32.xlu0 %v3229, 40
      %v3885 = vpop.permute.xlu0 %3884
      %3886 = vrot.lane.b32.xlu0 %v3230, 40
      %v3887 = vpop.permute.xlu0 %3886
      %3888 = vrot.lane.b32.xlu0 %v3231, 40
      %v3889 = vpop.permute.xlu0 %3888
      %3890 = vrot.lane.b32.xlu0 %v3232, 40
      %v3891 = vpop.permute.xlu0 %3890
      %3892 = vrot.lane.b32.xlu0 %v3233, 40
      %v3893 = vpop.permute.xlu0 %3892
      %3894 = vrot.lane.b32.xlu0 %v3234, 40
      %v3895 = vpop.permute.xlu0 %3894
      %3896 = vrot.lane.b32.xlu0 %v3235, 40
      %v3897 = vpop.permute.xlu0 %3896
      %3898 = vrot.lane.b32.xlu0 %v3236, 40
      %v3899 = vpop.permute.xlu0 %3898
      %3900 = vrot.lane.b32.xlu0 %v3237, 40
      %v3901 = vpop.permute.xlu0 %3900
      %3902 = vrot.lane.b32.xlu0 %v3238, 40
      %v3903 = vpop.permute.xlu0 %3902
      %3904 = vrot.lane.b32.xlu0 %v3239, 40
      %v3905 = vpop.permute.xlu0 %3904
      %3906 = vrot.lane.b32.xlu0 %v3240, 40
      %v3907 = vpop.permute.xlu0 %3906
      %3908 = vrot.lane.b32.xlu0 %v3241, 40
      %v3909 = vpop.permute.xlu0 %3908
      %3910 = vrot.lane.b32.xlu0 %v3242, 40
      %v3911 = vpop.permute.xlu0 %3910
      %3912 = vrot.lane.b32.xlu0 %v3243, 40
      %v3913 = vpop.permute.xlu0 %3912
      %3914 = vrot.lane.b32.xlu0 %v3244, 40
      %v3915 = vpop.permute.xlu0 %3914
      %3916 = vrot.lane.b32.xlu0 %v3245, 40
      %v3917 = vpop.permute.xlu0 %3916
      %3918 = vrot.lane.b32.xlu0 %v3246, 40
      %v3919 = vpop.permute.xlu0 %3918
      %3920 = vrot.lane.b32.xlu0 %v3247, 40
      %v3921 = vpop.permute.xlu0 %3920
      %3922 = vrot.lane.b32.xlu0 %v3248, 40
      %v3923 = vpop.permute.xlu0 %3922
      %3924 = vrot.lane.b32.xlu0 %v3249, 40
      %v3925 = vpop.permute.xlu0 %3924
      %3926 = vrot.lane.b32.xlu0 %v3250, 40
      %v3927 = vpop.permute.xlu0 %3926
      %3928 = vrot.lane.b32.xlu0 %v3251, 40
      %v3929 = vpop.permute.xlu0 %3928
      %3930 = vrot.lane.b32.xlu0 %v3252, 40
      %v3931 = vpop.permute.xlu0 %3930
      %3932 = vrot.lane.b32.xlu0 %v3253, 40
      %v3933 = vpop.permute.xlu0 %3932
      %3998 = vrot.lane.b32.xlu0 %v3256, 48
      %v3999 = vpop.permute.xlu0 %3998
      %4000 = vrot.lane.b32.xlu0 %v3257, 48
      %v4001 = vpop.permute.xlu0 %4000
      %4002 = vrot.lane.b32.xlu0 %v3258, 48
      %v4003 = vpop.permute.xlu0 %4002
      %4004 = vrot.lane.b32.xlu0 %v3259, 48
      %v4005 = vpop.permute.xlu0 %4004
      %4006 = vrot.lane.b32.xlu0 %v3260, 48
      %v4007 = vpop.permute.xlu0 %4006
      %4008 = vrot.lane.b32.xlu0 %v3261, 48
      %v4009 = vpop.permute.xlu0 %4008
      %4010 = vrot.lane.b32.xlu0 %v3262, 48
      %v4011 = vpop.permute.xlu0 %4010
      %4012 = vrot.lane.b32.xlu0 %v3263, 48
      %v4013 = vpop.permute.xlu0 %4012
      %4014 = vrot.lane.b32.xlu0 %v3264, 48
      %v4015 = vpop.permute.xlu0 %4014
      %4016 = vrot.lane.b32.xlu0 %v3265, 48
      %v4017 = vpop.permute.xlu0 %4016
      %4018 = vrot.lane.b32.xlu0 %v3266, 48
      %v4019 = vpop.permute.xlu0 %4018
      %4020 = vrot.lane.b32.xlu0 %v3267, 48
      %v4021 = vpop.permute.xlu0 %4020
      %4022 = vrot.lane.b32.xlu0 %v3268, 48
      %v4023 = vpop.permute.xlu0 %4022
      %4024 = vrot.lane.b32.xlu0 %v3269, 48
      %v4025 = vpop.permute.xlu0 %4024
      %4026 = vrot.lane.b32.xlu0 %v3270, 48
      %v4027 = vpop.permute.xlu0 %4026
      %4028 = vrot.lane.b32.xlu0 %v3271, 48
      %v4029 = vpop.permute.xlu0 %4028
      %4030 = vrot.lane.b32.xlu0 %v3272, 48
      %v4031 = vpop.permute.xlu0 %4030
      %4032 = vrot.lane.b32.xlu0 %v3273, 48
      %v4033 = vpop.permute.xlu0 %4032
      %4034 = vrot.lane.b32.xlu0 %v3274, 48
      %v4035 = vpop.permute.xlu0 %4034
      %4036 = vrot.lane.b32.xlu0 %v3275, 48
      %v4037 = vpop.permute.xlu0 %4036
      %4038 = vrot.lane.b32.xlu0 %v3276, 48
      %v4039 = vpop.permute.xlu0 %4038
      %4040 = vrot.lane.b32.xlu0 %v3277, 48
      %v4041 = vpop.permute.xlu0 %4040
      %4042 = vrot.lane.b32.xlu0 %v3278, 48
      %v4043 = vpop.permute.xlu0 %4042
      %4044 = vrot.lane.b32.xlu0 %v3279, 48
      %v4045 = vpop.permute.xlu0 %4044
      %4046 = vrot.lane.b32.xlu0 %v3280, 48
      %v4047 = vpop.permute.xlu0 %4046
      %4048 = vrot.lane.b32.xlu0 %v3281, 48
      %v4049 = vpop.permute.xlu0 %4048
      %4050 = vrot.lane.b32.xlu0 %v3282, 48
      %v4051 = vpop.permute.xlu0 %4050
      %4052 = vrot.lane.b32.xlu0 %v3283, 48
      %v4053 = vpop.permute.xlu0 %4052
      %4054 = vrot.lane.b32.xlu0 %v3284, 48
      %v4055 = vpop.permute.xlu0 %4054
      %4056 = vrot.lane.b32.xlu0 %v3285, 48
      %v4057 = vpop.permute.xlu0 %4056
      %4058 = vrot.lane.b32.xlu0 %v3286, 48
      %v4059 = vpop.permute.xlu0 %4058
      %4060 = vrot.lane.b32.xlu0 %v3287, 48
      %v4061 = vpop.permute.xlu0 %4060
      %4098 = vrot.lane.b32.xlu0 %v3094, 56
      %v4099 = vpop.permute.xlu0 %4098
      %4100 = vrot.lane.b32.xlu0 %v3095, 56
      %v4101 = vpop.permute.xlu0 %4100
      %4102 = vrot.lane.b32.xlu0 %v3096, 56
      %v4103 = vpop.permute.xlu0 %4102
      %4104 = vrot.lane.b32.xlu0 %v3097, 56
      %v4105 = vpop.permute.xlu0 %4104
      %4106 = vrot.lane.b32.xlu0 %v3098, 56
      %v4107 = vpop.permute.xlu0 %4106
      %4108 = vrot.lane.b32.xlu0 %v3099, 56
      %v4109 = vpop.permute.xlu0 %4108
      %4110 = vrot.lane.b32.xlu0 %v3100, 56
      %v4111 = vpop.permute.xlu0 %4110
      %4112 = vrot.lane.b32.xlu0 %v3101, 56
      %v4113 = vpop.permute.xlu0 %4112
      %4114 = vrot.lane.b32.xlu0 %v3102, 56
      %v4115 = vpop.permute.xlu0 %4114
      %4116 = vrot.lane.b32.xlu0 %v3103, 56
      %v4117 = vpop.permute.xlu0 %4116
      %4118 = vrot.lane.b32.xlu0 %v3104, 56
      %v4119 = vpop.permute.xlu0 %4118
      %4120 = vrot.lane.b32.xlu0 %v3105, 56
      %v4121 = vpop.permute.xlu0 %4120
      %4122 = vrot.lane.b32.xlu0 %v3106, 56
      %v4123 = vpop.permute.xlu0 %4122
      %4124 = vrot.lane.b32.xlu0 %v3107, 56
      %v4125 = vpop.permute.xlu0 %4124
      %4126 = vrot.lane.b32.xlu0 %v3108, 56
      %v4127 = vpop.permute.xlu0 %4126
      %4128 = vrot.lane.b32.xlu0 %v3109, 56
      %v4129 = vpop.permute.xlu0 %4128
      %4130 = vrot.lane.b32.xlu0 %v3110, 56
      %v4131 = vpop.permute.xlu0 %4130
      %4132 = vrot.lane.b32.xlu0 %v3111, 56
      %v4133 = vpop.permute.xlu0 %4132
      %4134 = vrot.lane.b32.xlu0 %v3112, 56
      %v4135 = vpop.permute.xlu0 %4134
      %4136 = vrot.lane.b32.xlu0 %v3113, 56
      %v4137 = vpop.permute.xlu0 %4136
      %4138 = vrot.lane.b32.xlu0 %v3114, 56
      %v4139 = vpop.permute.xlu0 %4138
      %4140 = vrot.lane.b32.xlu0 %v3115, 56
      %v4141 = vpop.permute.xlu0 %4140
      %4142 = vrot.lane.b32.xlu0 %v3116, 56
      %v4143 = vpop.permute.xlu0 %4142
      %4144 = vrot.lane.b32.xlu0 %v3117, 56
      %v4145 = vpop.permute.xlu0 %4144
      %4146 = vrot.lane.b32.xlu0 %v3118, 56
      %v4147 = vpop.permute.xlu0 %4146
      %4148 = vrot.lane.b32.xlu0 %v3119, 56
      %v4149 = vpop.permute.xlu0 %4148
      %4150 = vrot.lane.b32.xlu0 %v3120, 56
      %v4151 = vpop.permute.xlu0 %4150
      %4152 = vrot.lane.b32.xlu0 %v3121, 56
      %v4153 = vpop.permute.xlu0 %4152
      %4154 = vrot.lane.b32.xlu0 %v3288, 56
      %v4155 = vpop.permute.xlu0 %4154
      %4156 = vrot.lane.b32.xlu0 %v3289, 56
      %v4157 = vpop.permute.xlu0 %4156
      %4158 = vrot.lane.b32.xlu0 %v3290, 56
      %v4159 = vpop.permute.xlu0 %4158
      %4160 = vrot.lane.b32.xlu0 %v3291, 56
      %v4161 = vpop.permute.xlu0 %4160
      %4226 = vrot.lane.b32.xlu0 %v3294, 64
      %v4227 = vpop.permute.xlu0 %4226
      %4228 = vrot.lane.b32.xlu0 %v3295, 64
      %v4229 = vpop.permute.xlu0 %4228
      %4230 = vrot.lane.b32.xlu0 %v3296, 64
      %v4231 = vpop.permute.xlu0 %4230
      %4232 = vrot.lane.b32.xlu0 %v3297, 64
      %v4233 = vpop.permute.xlu0 %4232
      %4234 = vrot.lane.b32.xlu0 %v3298, 64
      %v4235 = vpop.permute.xlu0 %4234
      %4236 = vrot.lane.b32.xlu0 %v3299, 64
      %v4237 = vpop.permute.xlu0 %4236
      %4238 = vrot.lane.b32.xlu0 %v3300, 64
      %v4239 = vpop.permute.xlu0 %4238
      %4240 = vrot.lane.b32.xlu0 %v3301, 64
      %v4241 = vpop.permute.xlu0 %4240
      %4242 = vrot.lane.b32.xlu0 %v3302, 64
      %v4243 = vpop.permute.xlu0 %4242
      %4244 = vrot.lane.b32.xlu0 %v3303, 64
      %v4245 = vpop.permute.xlu0 %4244
      %4246 = vrot.lane.b32.xlu0 %v3304, 64
      %v4247 = vpop.permute.xlu0 %4246
      %4248 = vrot.lane.b32.xlu0 %v3305, 64
      %v4249 = vpop.permute.xlu0 %4248
      %4250 = vrot.lane.b32.xlu0 %v3306, 64
      %v4251 = vpop.permute.xlu0 %4250
      %4252 = vrot.lane.b32.xlu0 %v3307, 64
      %v4253 = vpop.permute.xlu0 %4252
      %4254 = vrot.lane.b32.xlu0 %v3308, 64
      %v4255 = vpop.permute.xlu0 %4254
      %4256 = vrot.lane.b32.xlu0 %v3309, 64
      %v4257 = vpop.permute.xlu0 %4256
      %4258 = vrot.lane.b32.xlu0 %v3310, 64
      %v4259 = vpop.permute.xlu0 %4258
      %4260 = vrot.lane.b32.xlu0 %v3311, 64
      %v4261 = vpop.permute.xlu0 %4260
      %4262 = vrot.lane.b32.xlu0 %v3312, 64
      %v4263 = vpop.permute.xlu0 %4262
      %4264 = vrot.lane.b32.xlu0 %v3313, 64
      %v4265 = vpop.permute.xlu0 %4264
      %4266 = vrot.lane.b32.xlu0 %v3314, 64
      %v4267 = vpop.permute.xlu0 %4266
      %4268 = vrot.lane.b32.xlu0 %v3315, 64
      %v4269 = vpop.permute.xlu0 %4268
      %4270 = vrot.lane.b32.xlu0 %v3316, 64
      %v4271 = vpop.permute.xlu0 %4270
      %4272 = vrot.lane.b32.xlu0 %v3317, 64
      %v4273 = vpop.permute.xlu0 %4272
      %4274 = vrot.lane.b32.xlu0 %v3318, 64
      %v4275 = vpop.permute.xlu0 %4274
      %4276 = vrot.lane.b32.xlu0 %v3319, 64
      %v4277 = vpop.permute.xlu0 %4276
      %4278 = vrot.lane.b32.xlu0 %v3320, 64
      %v4279 = vpop.permute.xlu0 %4278
      %4280 = vrot.lane.b32.xlu0 %v3321, 64
      %v4281 = vpop.permute.xlu0 %4280
      %4282 = vrot.lane.b32.xlu0 %v3322, 64
      %v4283 = vpop.permute.xlu0 %4282
      %4284 = vrot.lane.b32.xlu0 %v3323, 64
      %v4285 = vpop.permute.xlu0 %4284
      %4286 = vrot.lane.b32.xlu0 %v3324, 64
      %v4287 = vpop.permute.xlu0 %4286
      %4288 = vrot.lane.b32.xlu0 %v3325, 64
      %v4289 = vpop.permute.xlu0 %4288
      %v4322 = vsel %vm948, %v3058, %v3359
      %v4323 = vsel %vm948, %v3059, %v3361
      %v4324 = vsel %vm948, %v3060, %v3363
      %v4325 = vsel %vm948, %v3061, %v3365
      %v4326 = vsel %vm948, %v3062, %v3367
      %v4327 = vsel %vm948, %v3063, %v3369
      %v4328 = vsel %vm948, %v3064, %v3371
      %v4329 = vsel %vm948, %v3065, %v3373
      %v4330 = vsel %vm948, %v3066, %v3375
      %v4331 = vsel %vm948, %v3067, %v3377
      %v4332 = vsel %vm948, %v3068, %v3379
      %v4333 = vsel %vm948, %v3069, %v3381
      %v4334 = vsel %vm948, %v3070, %v3383
      %v4335 = vsel %vm948, %v3071, %v3385
      %v4336 = vsel %vm948, %v3072, %v3387
      %v4337 = vsel %vm948, %v3073, %v3389
      %v4338 = vsel %vm948, %v3074, %v3391
      %v4339 = vsel %vm948, %v3075, %v3393
      %v4340 = vsel %vm948, %v3076, %v3395
      %v4341 = vsel %vm948, %v3077, %v3397
      %v4342 = vsel %vm948, %v3078, %v3399
      %v4343 = vsel %vm948, %v3079, %v3401
      %v4344 = vsel %vm948, %v3080, %v3403
      %v4345 = vsel %vm948, %v3081, %v3405
      %v4346 = vsel %vm948, %v3082, %v3407
      %v4347 = vsel %vm948, %v3083, %v3409
      %v4348 = vsel %vm948, %v3084, %v3411
      %v4349 = vsel %vm948, %v3085, %v3413
      %v4350 = vsel %vm948, %v3086, %v3415
      %v4351 = vsel %vm948, %v3087, %v3417
      %v4352 = vsel %vm948, %v3088, %v3419
      %v4353 = vsel %vm948, %v3089, %v3421
      %v4354 = vsel %vm2572, %v4322, %v3487
      %v4355 = vsel %vm2572, %v4323, %v3489
      %v4356 = vsel %vm2572, %v4324, %v3491
      %v4357 = vsel %vm2572, %v4325, %v3493
      %v4358 = vsel %vm2572, %v4326, %v3495
      %v4359 = vsel %vm2572, %v4327, %v3497
      %v4360 = vsel %vm2572, %v4328, %v3499
      %v4361 = vsel %vm2572, %v4329, %v3501
      %v4362 = vsel %vm2572, %v4330, %v3503
      %v4363 = vsel %vm2572, %v4331, %v3505
      %v4364 = vsel %vm2572, %v4332, %v3507
      %v4365 = vsel %vm2572, %v4333, %v3509
      %v4366 = vsel %vm2572, %v4334, %v3511
      %v4367 = vsel %vm2572, %v4335, %v3513
      %v4368 = vsel %vm2572, %v4336, %v3515
      %v4369 = vsel %vm2572, %v4337, %v3517
      %v4370 = vsel %vm2572, %v4338, %v3519
      %v4371 = vsel %vm2572, %v4339, %v3521
      %v4372 = vsel %vm2572, %v4340, %v3523
      %v4373 = vsel %vm2572, %v4341, %v3525
      %v4374 = vsel %vm2572, %v4342, %v3527
      %v4375 = vsel %vm2572, %v4343, %v3529
      %v4376 = vsel %vm2572, %v4344, %v3531
      %v4377 = vsel %vm2572, %v4345, %v3533
      %v4378 = vsel %vm2572, %v4346, %v3535
      %v4379 = vsel %vm2572, %v4347, %v3537
      %v4380 = vsel %vm2572, %v4348, %v3539
      %v4381 = vsel %vm2572, %v4349, %v3541
      %v4382 = vsel %vm2572, %v4350, %v3543
      %v4383 = vsel %vm2572, %v4351, %v3545
      %v4384 = vsel %vm2572, %v4352, %v3547
      %v4385 = vsel %vm2572, %v4353, %v3549
      %v4386 = vsel %vm2638, %v4354, %v3615
      %v4387 = vsel %vm2638, %v4355, %v3617
      %v4388 = vsel %vm2638, %v4356, %v3619
      %v4389 = vsel %vm2638, %v4357, %v3621
      %v4390 = vsel %vm2638, %v4358, %v3623
      %v4391 = vsel %vm2638, %v4359, %v3625
      %v4392 = vsel %vm2638, %v4360, %v3627
      %v4393 = vsel %vm2638, %v4361, %v3629
      %v4394 = vsel %vm2638, %v4362, %v3631
      %v4395 = vsel %vm2638, %v4363, %v3633
      %v4396 = vsel %vm2638, %v4364, %v3635
      %v4397 = vsel %vm2638, %v4365, %v3637
      %v4398 = vsel %vm2638, %v4366, %v3639
      %v4399 = vsel %vm2638, %v4367, %v3641
      %v4400 = vsel %vm2638, %v4368, %v3643
      %v4401 = vsel %vm2638, %v4369, %v3645
      %v4402 = vsel %vm2638, %v4370, %v3647
      %v4403 = vsel %vm2638, %v4371, %v3649
      %v4404 = vsel %vm2638, %v4372, %v3651
      %v4405 = vsel %vm2638, %v4373, %v3653
      %v4406 = vsel %vm2638, %v4374, %v3655
      %v4407 = vsel %vm2638, %v4375, %v3657
      %v4408 = vsel %vm2638, %v4376, %v3659
      %v4409 = vsel %vm2638, %v4377, %v3661
      %v4410 = vsel %vm2638, %v4378, %v3663
      %v4411 = vsel %vm2638, %v4379, %v3665
      %v4412 = vsel %vm2638, %v4380, %v3667
      %v4413 = vsel %vm2638, %v4381, %v3669
      %v4414 = vsel %vm2638, %v4382, %v3671
      %v4415 = vsel %vm2638, %v4383, %v3673
      %v4416 = vsel %vm2638, %v4384, %v3675
      %v4417 = vsel %vm2638, %v4385, %v3677
      %v4418 = vsel %vm2704, %v4386, %v3743
      %v4419 = vsel %vm2704, %v4387, %v3745
      %v4420 = vsel %vm2704, %v4388, %v3747
      %v4421 = vsel %vm2704, %v4389, %v3749
      %v4422 = vsel %vm2704, %v4390, %v3751
      %v4423 = vsel %vm2704, %v4391, %v3753
      %v4424 = vsel %vm2704, %v4392, %v3755
      %v4425 = vsel %vm2704, %v4393, %v3757
      %v4426 = vsel %vm2704, %v4394, %v3759
      %v4427 = vsel %vm2704, %v4395, %v3761
      %v4428 = vsel %vm2704, %v4396, %v3763
      %v4429 = vsel %vm2704, %v4397, %v3765
      %v4430 = vsel %vm2704, %v4398, %v3767
      %v4431 = vsel %vm2704, %v4399, %v3769
      %v4432 = vsel %vm2704, %v4400, %v3771
      %v4433 = vsel %vm2704, %v4401, %v3773
      %v4434 = vsel %vm2704, %v4402, %v3775
      %v4435 = vsel %vm2704, %v4403, %v3777
      %v4436 = vsel %vm2704, %v4404, %v3779
      %v4437 = vsel %vm2704, %v4405, %v3781
      %v4438 = vsel %vm2704, %v4406, %v3783
      %v4439 = vsel %vm2704, %v4407, %v3785
      %v4440 = vsel %vm2704, %v4408, %v3787
      %v4441 = vsel %vm2704, %v4409, %v3789
      %v4442 = vsel %vm2704, %v4410, %v3791
      %v4443 = vsel %vm2704, %v4411, %v3793
      %v4444 = vsel %vm2704, %v4412, %v3795
      %v4445 = vsel %vm2704, %v4413, %v3797
      %v4446 = vsel %vm2704, %v4414, %v3799
      %v4447 = vsel %vm2704, %v4415, %v3801
      %v4448 = vsel %vm2704, %v4416, %v3803
      %v4449 = vsel %vm2704, %v4417, %v3805
      %vm4450 = vcmask 326656
      %v4451 = vsel %vm4450, %v4418, %v3871
      %v4452 = vsel %vm4450, %v4419, %v3873
      %v4453 = vsel %vm4450, %v4420, %v3875
      %v4454 = vsel %vm4450, %v4421, %v3877
      %v4455 = vsel %vm4450, %v4422, %v3879
      %v4456 = vsel %vm4450, %v4423, %v3881
      %v4457 = vsel %vm4450, %v4424, %v3883
      %v4458 = vsel %vm4450, %v4425, %v3885
      %v4459 = vsel %vm4450, %v4426, %v3887
      %v4460 = vsel %vm4450, %v4427, %v3889
      %v4461 = vsel %vm4450, %v4428, %v3891
      %v4462 = vsel %vm4450, %v4429, %v3893
      %v4463 = vsel %vm4450, %v4430, %v3895
      %v4464 = vsel %vm4450, %v4431, %v3897
      %v4465 = vsel %vm4450, %v4432, %v3899
      %v4466 = vsel %vm4450, %v4433, %v3901
      %v4467 = vsel %vm4450, %v4434, %v3903
      %v4468 = vsel %vm4450, %v4435, %v3905
      %v4469 = vsel %vm4450, %v4436, %v3907
      %v4470 = vsel %vm4450, %v4437, %v3909
      %v4471 = vsel %vm4450, %v4438, %v3911
      %v4472 = vsel %vm4450, %v4439, %v3913
      %v4473 = vsel %vm4450, %v4440, %v3915
      %v4474 = vsel %vm4450, %v4441, %v3917
      %v4475 = vsel %vm4450, %v4442, %v3919
      %v4476 = vsel %vm4450, %v4443, %v3921
      %v4477 = vsel %vm4450, %v4444, %v3923
      %v4478 = vsel %vm4450, %v4445, %v3925
      %v4479 = vsel %vm4450, %v4446, %v3927
      %v4480 = vsel %vm4450, %v4447, %v3929
      %v4481 = vsel %vm4450, %v4448, %v3931
      %v4482 = vsel %vm4450, %v4449, %v3933
      %vm4483 = vcmask 392192
      %v4484 = vsel %vm4483, %v4451, %v3999
      %v4485 = vsel %vm4483, %v4452, %v4001
      %v4486 = vsel %vm4483, %v4453, %v4003
      %v4487 = vsel %vm4483, %v4454, %v4005
      %v4488 = vsel %vm4483, %v4455, %v4007
      %v4489 = vsel %vm4483, %v4456, %v4009
      %v4490 = vsel %vm4483, %v4457, %v4011
      %v4491 = vsel %vm4483, %v4458, %v4013
      %v4492 = vsel %vm4483, %v4459, %v4015
      %v4493 = vsel %vm4483, %v4460, %v4017
      %v4494 = vsel %vm4483, %v4461, %v4019
      %v4495 = vsel %vm4483, %v4462, %v4021
      %v4496 = vsel %vm4483, %v4463, %v4023
      %v4497 = vsel %vm4483, %v4464, %v4025
      %v4498 = vsel %vm4483, %v4465, %v4027
      %v4499 = vsel %vm4483, %v4466, %v4029
      %v4500 = vsel %vm4483, %v4467, %v4031
      %v4501 = vsel %vm4483, %v4468, %v4033
      %v4502 = vsel %vm4483, %v4469, %v4035
      %v4503 = vsel %vm4483, %v4470, %v4037
      %v4504 = vsel %vm4483, %v4471, %v4039
      %v4505 = vsel %vm4483, %v4472, %v4041
      %v4506 = vsel %vm4483, %v4473, %v4043
      %v4507 = vsel %vm4483, %v4474, %v4045
      %v4508 = vsel %vm4483, %v4475, %v4047
      %v4509 = vsel %vm4483, %v4476, %v4049
      %v4510 = vsel %vm4483, %v4477, %v4051
      %v4511 = vsel %vm4483, %v4478, %v4053
      %v4512 = vsel %vm4483, %v4479, %v4055
      %v4513 = vsel %vm4483, %v4480, %v4057
      %v4514 = vsel %vm4483, %v4481, %v4059
      %v4515 = vsel %vm4483, %v4482, %v4061
      %vm4516 = vcmask 457728
      %v4517 = vsel %vm4516, %v4484, %v4099
      %v4518 = vsel %vm4516, %v4485, %v4101
      %v4519 = vsel %vm4516, %v4486, %v4103
      %v4520 = vsel %vm4516, %v4487, %v4105
      %v4521 = vsel %vm4516, %v4488, %v4107
      %v4522 = vsel %vm4516, %v4489, %v4109
      %v4523 = vsel %vm4516, %v4490, %v4111
      %v4524 = vsel %vm4516, %v4491, %v4113
      %v4525 = vsel %vm4516, %v4492, %v4115
      %v4526 = vsel %vm4516, %v4493, %v4117
      %v4527 = vsel %vm4516, %v4494, %v4119
      %v4528 = vsel %vm4516, %v4495, %v4121
      %v4529 = vsel %vm4516, %v4496, %v4123
      %v4530 = vsel %vm4516, %v4497, %v4125
      %v4531 = vsel %vm4516, %v4498, %v4127
      %v4532 = vsel %vm4516, %v4499, %v4129
      %v4533 = vsel %vm4516, %v4500, %v4131
      %v4534 = vsel %vm4516, %v4501, %v4133
      %v4535 = vsel %vm4516, %v4502, %v4135
      %v4536 = vsel %vm4516, %v4503, %v4137
      %v4537 = vsel %vm4516, %v4504, %v4139
      %v4538 = vsel %vm4516, %v4505, %v4141
      %v4539 = vsel %vm4516, %v4506, %v4143
      %v4540 = vsel %vm4516, %v4507, %v4145
      %v4541 = vsel %vm4516, %v4508, %v4147
      %v4542 = vsel %vm4516, %v4509, %v4149
      %v4543 = vsel %vm4516, %v4510, %v4151
      %v4544 = vsel %vm4516, %v4511, %v4153
      %v4545 = vsel %vm4516, %v4512, %v4155
      %v4546 = vsel %vm4516, %v4513, %v4157
      %v4547 = vsel %vm4516, %v4514, %v4159
      %v4548 = vsel %vm4516, %v4515, %v4161
      %vm4549 = vcmask 523264
      %v4550 = vsel %vm4549, %v4517, %v4227
      %v4551 = vsel %vm4549, %v4518, %v4229
      %v4552 = vsel %vm4549, %v4519, %v4231
      %v4553 = vsel %vm4549, %v4520, %v4233
      %v4554 = vsel %vm4549, %v4521, %v4235
      %v4555 = vsel %vm4549, %v4522, %v4237
      %v4556 = vsel %vm4549, %v4523, %v4239
      %v4557 = vsel %vm4549, %v4524, %v4241
      %v4558 = vsel %vm4549, %v4525, %v4243
      %v4559 = vsel %vm4549, %v4526, %v4245
      %v4560 = vsel %vm4549, %v4527, %v4247
      %v4561 = vsel %vm4549, %v4528, %v4249
      %v4562 = vsel %vm4549, %v4529, %v4251
      %v4563 = vsel %vm4549, %v4530, %v4253
      %v4564 = vsel %vm4549, %v4531, %v4255
      %v4565 = vsel %vm4549, %v4532, %v4257
      %v4566 = vsel %vm4549, %v4533, %v4259
      %v4567 = vsel %vm4549, %v4534, %v4261
      %v4568 = vsel %vm4549, %v4535, %v4263
      %v4569 = vsel %vm4549, %v4536, %v4265
      %v4570 = vsel %vm4549, %v4537, %v4267
      %v4571 = vsel %vm4549, %v4538, %v4269
      %v4572 = vsel %vm4549, %v4539, %v4271
      %v4573 = vsel %vm4549, %v4540, %v4273
      %v4574 = vsel %vm4549, %v4541, %v4275
      %v4575 = vsel %vm4549, %v4542, %v4277
      %v4576 = vsel %vm4549, %v4543, %v4279
      %v4577 = vsel %vm4549, %v4544, %v4281
      %v4578 = vsel %vm4549, %v4545, %v4283
      %v4579 = vsel %vm4549, %v4546, %v4285
      %v4580 = vsel %vm4549, %v4547, %v4287
      %v4581 = vsel %vm4549, %v4548, %v4289
      %v4582 = vpack.c.bf16 %v4551, %v4550
      %v4583 = vpack.c.bf16 %v4553, %v4552
      %v4584 = vpack.c.bf16 %v4555, %v4554
      %v4585 = vpack.c.bf16 %v4557, %v4556
      %v4586 = vpack.c.bf16 %v4559, %v4558
      %v4587 = vpack.c.bf16 %v4561, %v4560
      %v4588 = vpack.c.bf16 %v4563, %v4562
      %v4589 = vpack.c.bf16 %v4565, %v4564
      %v4590 = vpack.c.bf16 %v4567, %v4566
      %v4591 = vpack.c.bf16 %v4569, %v4568
      %v4592 = vpack.c.bf16 %v4571, %v4570
      %v4593 = vpack.c.bf16 %v4573, %v4572
      %v4594 = vpack.c.bf16 %v4575, %v4574
      %v4595 = vpack.c.bf16 %v4577, %v4576
      %v4596 = vpack.c.bf16 %v4579, %v4578
      %v4597 = vpack.c.bf16 %v4581, %v4580
      %v4598 = vld [vmem:[%s3] sm:$0xf]
      %v4599 = vld [vmem:[%s3 + $0x4] sm:$0xf]
      %v4600 = vld [vmem:[%s3 + $0x8] sm:$0xf]
      %v4601 = vld [vmem:[%s3 + $0xc] sm:$0xf]
      %v4602 = vld [vmem:[%s3 + $0x10] sm:$0xf]
      %v4603 = vld [vmem:[%s3 + $0x14] sm:$0xf]
      %v4604 = vld [vmem:[%s3 + $0x18] sm:$0xf]
      %v4605 = vld [vmem:[%s3 + $0x1c] sm:$0xf]
      %v4606 = vld [vmem:[%s3 + $0x20] sm:$0xf]
      %v4607 = vld [vmem:[%s4] sm:$0x1]
      %v4609 = vlaneseq
      %v4610 = vshrl.u32 %v4609, 7
      %v4611 = vsub.s32 0, %v4610
      %v4612 = vrot.slane %v4607, %v4611
      %v4623 = vunpack.c.l.b16 %v4598
      %v4624 = vunpack.c.l.b16 %v4599
      %v4625 = vunpack.c.l.b16 %v4600
      %v4626 = vunpack.c.l.b16 %v4601
      %v4627 = vunpack.c.l.b16 %v4602
      %v4628 = vunpack.c.l.b16 %v4603
      %v4629 = vunpack.c.l.b16 %v4604
      %v4630 = vunpack.c.l.b16 %v4605
      %v4631 = vunpack.c.l.b16 %v4606
      %v4632 = vpack.c.b16 %v4624, %v4623
      %v4633 = vpack.c.b16 %v4626, %v4625
      %v4634 = vpack.c.b16 %v4628, %v4627
      %v4635 = vpack.c.b16 %v4630, %v4629
      %v4636 = vpack.c.b16 %v4631, %v4631
      %vm4641 = vcmask 588800
      %v4643 = vsel %vm4641, %v4582, 0
      %v4646 = vsel %vm4641, %v4583, 0
      %v4649 = vsel %vm4641, %v4584, 0
      %v4652 = vsel %vm4641, %v4585, 0
      %v4655 = vsel %vm4641, %v4586, 0
      %v4658 = vsel %vm4641, %v4587, 0
      %v4661 = vsel %vm4641, %v4588, 0
      %v4664 = vsel %vm4641, %v4589, 0
      %v4667 = vsel %vm4641, %v4590, 0
      %v4670 = vsel %vm4641, %v4591, 0
      %v4673 = vsel %vm4641, %v4592, 0
      %v4676 = vsel %vm4641, %v4593, 0
      %v4679 = vsel %vm4641, %v4594, 0
      %v4682 = vsel %vm4641, %v4595, 0
      %v4685 = vsel %vm4641, %v4596, 0
      %v4688 = vsel %vm4641, %v4597, 0
      %vm4690 = vcmask 1043456
      %v4692 = vsel %vm4690, %v4636, 0
      %4694 = vmatprep.subr.bf16.mxu0 0
      %4695 = vmatpush1.bf16.msra.mxu0 0
      %4696 = vmatprep.subr.bf16.mxu0 0
      %4697 = vmatpush1.bf16.msra.mxu0 0
      %4698 = vmatprep.subr.bf16.mxu0 0
      %4699 = vmatpush1.bf16.msra.mxu0 0
      %4700 = vmatprep.subr.bf16.mxu0 0
      %4701 = vmatpush1.bf16.msra.mxu0 %v4692
      %4702 = vmatprep.subr.bf16.mxu0 0
      %4703 = vmatpush1.bf16.msra.mxu0 %v4635
      %4704 = vmatprep.subr.bf16.mxu0 0
      %4705 = vmatpush1.bf16.msra.mxu0 %v4634
      %4706 = vmatprep.subr.bf16.mxu0 0
      %4707 = vmatpush1.bf16.msra.mxu0 %v4633
      %4708 = vmatprep.subr.bf16.mxu0 0
      %4709 = vmatpush1.bf16.msra.mxu0 %v4632
      %4710 = vmatprep.subr.bf16.mxu0 0
      %4711 = vmatpush2.bf16.msra.mxu0 0
      %4712 = vmatprep.subr.bf16.mxu0 0
      %4713 = vmatpush2.bf16.msra.mxu0 0
      %4714 = vmatprep.subr.bf16.mxu0 0
      %4715 = vmatpush2.bf16.msra.mxu0 0
      %4716 = vmatprep.subr.bf16.mxu0 0
      %4717 = vmatpush2.bf16.msra.mxu0 0
      %4718 = vmatprep.subr.bf16.mxu0 0
      %4719 = vmatpush2.bf16.msra.mxu0 0
      %4720 = vmatprep.subr.bf16.mxu0 0
      %4721 = vmatpush2.bf16.msra.mxu0 0
      %4722 = vmatprep.subr.bf16.mxu0 0
      %4723 = vmatpush2.bf16.msra.mxu0 0
      %4724 = vmatprep.subr.bf16.mxu0 0
      %4725 = vmatpush2.bf16.msra.mxu0 0
      %4726 = vmatprep.mubr.bf16.mxu0 0
      %4727 = vmatmul.mubr.bf16.gmra.mxu0 %v4643
      %v4728 = vpop.f32.mrf.mxu0
      %v4729 = vadd.f32 %v4612, %v4728
      %v4730 = vpop.f32.mrf.mxu0
      %v4731 = vpop.f32.mrf.mxu0
      %v4732 = vadd.f32 %v4612, %v4731
      %v4733 = vpop.f32.mrf.mxu0
      %4734 = vmatprep.mubr.bf16.mxu0 0
      %4735 = vmatmul.mubr.bf16.gmra.mxu0 %v4646
      %v4736 = vpop.f32.mrf.mxu0
      %v4737 = vadd.f32 %v4612, %v4736
      %v4738 = vpop.f32.mrf.mxu0
      %v4739 = vpop.f32.mrf.mxu0
      %v4740 = vadd.f32 %v4612, %v4739
      %v4741 = vpop.f32.mrf.mxu0
      %4742 = vmatprep.mubr.bf16.mxu0 0
      %4743 = vmatmul.mubr.bf16.gmra.mxu0 %v4649
      %v4744 = vpop.f32.mrf.mxu0
      %v4745 = vadd.f32 %v4612, %v4744
      %v4746 = vpop.f32.mrf.mxu0
      %v4747 = vpop.f32.mrf.mxu0
      %v4748 = vadd.f32 %v4612, %v4747
      %v4749 = vpop.f32.mrf.mxu0
      %4750 = vmatprep.mubr.bf16.mxu0 0
      %4751 = vmatmul.mubr.bf16.gmra.mxu0 %v4652
      %v4752 = vpop.f32.mrf.mxu0
      %v4753 = vadd.f32 %v4612, %v4752
      %v4754 = vpop.f32.mrf.mxu0
      %v4755 = vpop.f32.mrf.mxu0
      %v4756 = vadd.f32 %v4612, %v4755
      %v4757 = vpop.f32.mrf.mxu0
      %4758 = vmatprep.mubr.bf16.mxu0 0
      %4759 = vmatmul.mubr.bf16.gmra.mxu0 %v4655
      %v4760 = vpop.f32.mrf.mxu0
      %v4761 = vadd.f32 %v4612, %v4760
      %v4762 = vpop.f32.mrf.mxu0
      %v4763 = vpop.f32.mrf.mxu0
      %v4764 = vadd.f32 %v4612, %v4763
      %v4765 = vpop.f32.mrf.mxu0
      %4766 = vmatprep.mubr.bf16.mxu0 0
      %4767 = vmatmul.mubr.bf16.gmra.mxu0 %v4658
      %v4768 = vpop.f32.mrf.mxu0
      %v4769 = vadd.f32 %v4612, %v4768
      %v4770 = vpop.f32.mrf.mxu0
      %v4771 = vpop.f32.mrf.mxu0
      %v4772 = vadd.f32 %v4612, %v4771
      %v4773 = vpop.f32.mrf.mxu0
      %4774 = vmatprep.mubr.bf16.mxu0 0
      %4775 = vmatmul.mubr.bf16.gmra.mxu0 %v4661
      %v4776 = vpop.f32.mrf.mxu0
      %v4777 = vadd.f32 %v4612, %v4776
      %v4778 = vpop.f32.mrf.mxu0
      %v4779 = vpop.f32.mrf.mxu0
      %v4780 = vadd.f32 %v4612, %v4779
      %v4781 = vpop.f32.mrf.mxu0
      %4782 = vmatprep.mubr.bf16.mxu0 0
      %4783 = vmatmul.mubr.bf16.gmra.mxu0 %v4664
      %v4784 = vpop.f32.mrf.mxu0
      %v4785 = vadd.f32 %v4612, %v4784
      %v4786 = vpop.f32.mrf.mxu0
      %v4787 = vpop.f32.mrf.mxu0
      %v4788 = vadd.f32 %v4612, %v4787
      %v4789 = vpop.f32.mrf.mxu0
      %4790 = vmatprep.mubr.bf16.mxu0 0
      %4791 = vmatmul.mubr.bf16.gmra.mxu0 %v4667
      %v4792 = vpop.f32.mrf.mxu0
      %v4793 = vadd.f32 %v4612, %v4792
      %v4794 = vpop.f32.mrf.mxu0
      %v4795 = vpop.f32.mrf.mxu0
      %v4796 = vadd.f32 %v4612, %v4795
      %v4797 = vpop.f32.mrf.mxu0
      %4798 = vmatprep.mubr.bf16.mxu0 0
      %4799 = vmatmul.mubr.bf16.gmra.mxu0 %v4670
      %v4800 = vpop.f32.mrf.mxu0
      %v4801 = vadd.f32 %v4612, %v4800
      %v4802 = vpop.f32.mrf.mxu0
      %v4803 = vpop.f32.mrf.mxu0
      %v4804 = vadd.f32 %v4612, %v4803
      %v4805 = vpop.f32.mrf.mxu0
      %4806 = vmatprep.mubr.bf16.mxu0 0
      %4807 = vmatmul.mubr.bf16.gmra.mxu0 %v4673
      %v4808 = vpop.f32.mrf.mxu0
      %v4809 = vadd.f32 %v4612, %v4808
      %v4810 = vpop.f32.mrf.mxu0
      %v4811 = vpop.f32.mrf.mxu0
      %v4812 = vadd.f32 %v4612, %v4811
      %v4813 = vpop.f32.mrf.mxu0
      %4814 = vmatprep.mubr.bf16.mxu0 0
      %4815 = vmatmul.mubr.bf16.gmra.mxu0 %v4676
      %v4816 = vpop.f32.mrf.mxu0
      %v4817 = vadd.f32 %v4612, %v4816
      %v4818 = vpop.f32.mrf.mxu0
      %v4819 = vpop.f32.mrf.mxu0
      %v4820 = vadd.f32 %v4612, %v4819
      %v4821 = vpop.f32.mrf.mxu0
      %4822 = vmatprep.mubr.bf16.mxu0 0
      %4823 = vmatmul.mubr.bf16.gmra.mxu0 %v4679
      %v4824 = vpop.f32.mrf.mxu0
      %v4825 = vadd.f32 %v4612, %v4824
      %v4826 = vpop.f32.mrf.mxu0
      %v4827 = vpop.f32.mrf.mxu0
      %v4828 = vadd.f32 %v4612, %v4827
      %v4829 = vpop.f32.mrf.mxu0
      %4830 = vmatprep.mubr.bf16.mxu0 0
      %4831 = vmatmul.mubr.bf16.gmra.mxu0 %v4682
      %v4832 = vpop.f32.mrf.mxu0
      %v4833 = vadd.f32 %v4612, %v4832
      %v4834 = vpop.f32.mrf.mxu0
      %v4835 = vpop.f32.mrf.mxu0
      %v4836 = vadd.f32 %v4612, %v4835
      %v4837 = vpop.f32.mrf.mxu0
      %4838 = vmatprep.mubr.bf16.mxu0 0
      %4839 = vmatmul.mubr.bf16.gmra.mxu0 %v4685
      %v4840 = vpop.f32.mrf.mxu0
      %v4841 = vadd.f32 %v4612, %v4840
      %v4842 = vpop.f32.mrf.mxu0
      %v4843 = vpop.f32.mrf.mxu0
      %v4844 = vadd.f32 %v4612, %v4843
      %v4845 = vpop.f32.mrf.mxu0
      %4846 = vmatprep.mubr.bf16.mxu0 0
      %4847 = vmatmul.mubr.bf16.gmra.mxu0 %v4688
      %v4848 = vpop.f32.mrf.mxu0
      %v4849 = vadd.f32 %v4612, %v4848
      %v4850 = vpop.f32.mrf.mxu0
      %v4851 = vpop.f32.mrf.mxu0
      %v4852 = vadd.f32 %v4612, %v4851
      %v4853 = vpop.f32.mrf.mxu0
      %4854 = vdwg.mxu0
      %v4855 = vmax.f32 %v4729, 0.0
      %v4856 = vmax.f32 %v4732, 0.0
      %v4857 = vmax.f32 %v4737, 0.0
      %v4858 = vmax.f32 %v4740, 0.0
      %v4859 = vmax.f32 %v4745, 0.0
      %v4860 = vmax.f32 %v4748, 0.0
      %v4861 = vmax.f32 %v4753, 0.0
      %v4862 = vmax.f32 %v4756, 0.0
      %v4863 = vmax.f32 %v4761, 0.0
      %v4864 = vmax.f32 %v4764, 0.0
      %v4865 = vmax.f32 %v4769, 0.0
      %v4866 = vmax.f32 %v4772, 0.0
      %v4867 = vmax.f32 %v4777, 0.0
      %v4868 = vmax.f32 %v4780, 0.0
      %v4869 = vmax.f32 %v4785, 0.0
      %v4870 = vmax.f32 %v4788, 0.0
      %v4871 = vmax.f32 %v4793, 0.0
      %v4872 = vmax.f32 %v4796, 0.0
      %v4873 = vmax.f32 %v4801, 0.0
      %v4874 = vmax.f32 %v4804, 0.0
      %v4875 = vmax.f32 %v4809, 0.0
      %v4876 = vmax.f32 %v4812, 0.0
      %v4877 = vmax.f32 %v4817, 0.0
      %v4878 = vmax.f32 %v4820, 0.0
      %v4879 = vmax.f32 %v4825, 0.0
      %v4880 = vmax.f32 %v4828, 0.0
      %v4881 = vmax.f32 %v4833, 0.0
      %v4882 = vmax.f32 %v4836, 0.0
      %v4883 = vmax.f32 %v4841, 0.0
      %v4884 = vmax.f32 %v4844, 0.0
      %v4885 = vmax.f32 %v4849, 0.0
      %v4886 = vmax.f32 %v4852, 0.0
      %4887 = vst.msk [vmem:[#allocation3 + $0x18] sm:$0xff] %vm948, %v4855
      %4888 = vst.msk [vmem:[#allocation3 + $0x20] sm:$0xff] %vm948, %v4856
      %4889 = vst.msk [vmem:[#allocation3 + $0x28] sm:$0xff] %vm948, %v4857
      %4890 = vst.msk [vmem:[#allocation3 + $0x30] sm:$0xff] %vm948, %v4858
      %4891 = vst.msk [vmem:[#allocation3 + $0x38] sm:$0xff] %vm948, %v4859
      %4892 = vst.msk [vmem:[#allocation3 + $0x40] sm:$0xff] %vm948, %v4860
      %4893 = vst.msk [vmem:[#allocation3 + $0x48] sm:$0xff] %vm948, %v4861
      %4894 = vst.msk [vmem:[#allocation3 + $0x50] sm:$0xff] %vm948, %v4862
      %4895 = vst.msk [vmem:[#allocation3 + $0x58] sm:$0xff] %vm948, %v4863
      %4896 = vst.msk [vmem:[#allocation3 + $0x60] sm:$0xff] %vm948, %v4864
      %4897 = vst.msk [vmem:[#allocation3 + $0x68] sm:$0xff] %vm948, %v4865
      %4898 = vst.msk [vmem:[#allocation3 + $0x70] sm:$0xff] %vm948, %v4866
      %4899 = vst.msk [vmem:[#allocation3 + $0x78] sm:$0xff] %vm948, %v4867
      %4900 = vst.msk [vmem:[#allocation3 + $0x80] sm:$0xff] %vm948, %v4868
      %4901 = vst.msk [vmem:[#allocation3 + $0x88] sm:$0xff] %vm948, %v4869
      %4902 = vst.msk [vmem:[#allocation3 + $0x90] sm:$0xff] %vm948, %v4870
      %4903 = vst.msk [vmem:[#allocation3 + $0x98] sm:$0xff] %vm948, %v4871
      %4904 = vst.msk [vmem:[#allocation3 + $0xa0] sm:$0xff] %vm948, %v4872
      %4905 = vst.msk [vmem:[#allocation3 + $0xa8] sm:$0xff] %vm948, %v4873
      %4906 = vst.msk [vmem:[#allocation3 + $0xb0] sm:$0xff] %vm948, %v4874
      %4907 = vst.msk [vmem:[#allocation3 + $0xb8] sm:$0xff] %vm948, %v4875
      %4908 = vst.msk [vmem:[#allocation3 + $0xc0] sm:$0xff] %vm948, %v4876
      %4909 = vst.msk [vmem:[#allocation3 + $0xc8] sm:$0xff] %vm948, %v4877
      %4910 = vst.msk [vmem:[#allocation3 + $0xd0] sm:$0xff] %vm948, %v4878
      %4911 = vst.msk [vmem:[#allocation3 + $0xd8] sm:$0xff] %vm948, %v4879
      %4912 = vst.msk [vmem:[#allocation3 + $0xe0] sm:$0xff] %vm948, %v4880
      %4913 = vst.msk [vmem:[#allocation3 + $0xe8] sm:$0xff] %vm948, %v4881
      %4914 = vst.msk [vmem:[#allocation3 + $0xf0] sm:$0xff] %vm948, %v4882
      %4915 = vst.msk [vmem:[#allocation3 + $0xf8] sm:$0xff] %vm948, %v4883
      %4916 = vst.msk [vmem:[#allocation3 + $0x100] sm:$0xff] %vm948, %v4884
      %4917 = vst.msk [vmem:[#allocation3 + $0x108] sm:$0xff] %vm948, %v4885
      %4918 = vst.msk [vmem:[#allocation3 + $0x110] sm:$0xff] %vm948, %v4886
      %v4919 = vld [vmem:[#allocation3 + $0x7] sm:$0xff]
      %v4920 = vld [vmem:[#allocation3 + $0xf] sm:$0xff]
      %v4921 = vld [vmem:[#allocation3 + $0x17] sm:$0xff]
      %v4922 = vld [vmem:[#allocation3 + $0x1f] sm:$0xff]
      %v4923 = vld [vmem:[#allocation3 + $0x27] sm:$0xff]
      %v4924 = vld [vmem:[#allocation3 + $0x2f] sm:$0xff]
      %v4925 = vld [vmem:[#allocation3 + $0x37] sm:$0xff]
      %v4926 = vld [vmem:[#allocation3 + $0x3f] sm:$0xff]
      %v4927 = vld [vmem:[#allocation3 + $0x47] sm:$0xff]
      %v4928 = vld [vmem:[#allocation3 + $0x4f] sm:$0xff]
      %v4929 = vld [vmem:[#allocation3 + $0x57] sm:$0xff]
      %v4930 = vld [vmem:[#allocation3 + $0x5f] sm:$0xff]
      %v4931 = vld [vmem:[#allocation3 + $0x67] sm:$0xff]
      %v4932 = vld [vmem:[#allocation3 + $0x6f] sm:$0xff]
      %v4933 = vld [vmem:[#allocation3 + $0x77] sm:$0xff]
      %v4934 = vld [vmem:[#allocation3 + $0x7f] sm:$0xff]
      %v4935 = vld [vmem:[#allocation3 + $0x87] sm:$0xff]
      %v4936 = vld [vmem:[#allocation3 + $0x8f] sm:$0xff]
      %v4937 = vld [vmem:[#allocation3 + $0x97] sm:$0xff]
      %v4938 = vld [vmem:[#allocation3 + $0x9f] sm:$0xff]
      %v4939 = vld [vmem:[#allocation3 + $0xa7] sm:$0xff]
      %v4940 = vld [vmem:[#allocation3 + $0xaf] sm:$0xff]
      %v4941 = vld [vmem:[#allocation3 + $0xb7] sm:$0xff]
      %v4942 = vld [vmem:[#allocation3 + $0xbf] sm:$0xff]
      %v4943 = vld [vmem:[#allocation3 + $0xc7] sm:$0xff]
      %v4944 = vld [vmem:[#allocation3 + $0xcf] sm:$0xff]
      %v4945 = vld [vmem:[#allocation3 + $0xd7] sm:$0xff]
      %v4946 = vld [vmem:[#allocation3 + $0xdf] sm:$0xff]
      %v4947 = vld [vmem:[#allocation3 + $0xe7] sm:$0xff]
      %v4948 = vld [vmem:[#allocation3 + $0xef] sm:$0xff]
      %v4949 = vld [vmem:[#allocation3 + $0xf7] sm:$0xff]
      %v4950 = vld [vmem:[#allocation3 + $0xff] sm:$0xff]
      %v4951 = vsel %vm1115, 0.0, %v4919
      %v4952 = vsel %vm1116, 0.0, %v4920
      %v4953 = vsel %vm1117, 0.0, %v4921
      %v4954 = vsel %vm1118, 0.0, %v4922
      %v4955 = vsel %vm1119, 0.0, %v4923
      %v4956 = vsel %vm1120, 0.0, %v4924
      %v4957 = vsel %vm1121, 0.0, %v4925
      %v4958 = vsel %vm1122, 0.0, %v4926
      %v4959 = vsel %vm1123, 0.0, %v4927
      %v4960 = vsel %vm1124, 0.0, %v4928
      %v4961 = vsel %vm1125, 0.0, %v4929
      %v4962 = vsel %vm1126, 0.0, %v4930
      %v4963 = vsel %vm1127, 0.0, %v4931
      %v4964 = vsel %vm1128, 0.0, %v4932
      %v4965 = vsel %vm1129, 0.0, %v4933
      %v4966 = vsel %vm1130, 0.0, %v4934
      %v4967 = vsel %vm1131, 0.0, %v4935
      %v4968 = vsel %vm1132, 0.0, %v4936
      %v4969 = vsel %vm1133, 0.0, %v4937
      %v4970 = vsel %vm1134, 0.0, %v4938
      %v4971 = vsel %vm1135, 0.0, %v4939
      %v4972 = vsel %vm1136, 0.0, %v4940
      %v4973 = vsel %vm1137, 0.0, %v4941
      %v4974 = vsel %vm1138, 0.0, %v4942
      %v4975 = vsel %vm1139, 0.0, %v4943
      %v4976 = vsel %vm1140, 0.0, %v4944
      %v4977 = vsel %vm1141, 0.0, %v4945
      %v4978 = vsel %vm1142, 0.0, %v4946
      %v4979 = vsel %vm1143, 0.0, %v4947
      %v4980 = vsel %vm1144, 0.0, %v4948
      %v4981 = vsel %vm1145, 0.0, %v4949
      %v4982 = vsel %vm1146, 0.0, %v4950
      %v4983 = vld [vmem:[#allocation3 + $0x8] sm:$0xff]
      %v4984 = vld [vmem:[#allocation3 + $0x10] sm:$0xff]
      %v4985 = vld [vmem:[#allocation3 + $0x18] sm:$0xff]
      %v4986 = vld [vmem:[#allocation3 + $0x20] sm:$0xff]
      %v4987 = vld [vmem:[#allocation3 + $0x28] sm:$0xff]
      %v4988 = vld [vmem:[#allocation3 + $0x30] sm:$0xff]
      %v4989 = vld [vmem:[#allocation3 + $0x38] sm:$0xff]
      %v4990 = vld [vmem:[#allocation3 + $0x40] sm:$0xff]
      %v4991 = vld [vmem:[#allocation3 + $0x48] sm:$0xff]
      %v4992 = vld [vmem:[#allocation3 + $0x50] sm:$0xff]
      %v4993 = vld [vmem:[#allocation3 + $0x58] sm:$0xff]
      %v4994 = vld [vmem:[#allocation3 + $0x60] sm:$0xff]
      %v4995 = vld [vmem:[#allocation3 + $0x68] sm:$0xff]
      %v4996 = vld [vmem:[#allocation3 + $0x70] sm:$0xff]
      %v4997 = vld [vmem:[#allocation3 + $0x78] sm:$0xff]
      %v4998 = vld [vmem:[#allocation3 + $0x80] sm:$0xff]
      %v4999 = vld [vmem:[#allocation3 + $0x88] sm:$0xff]
      %v5000 = vld [vmem:[#allocation3 + $0x90] sm:$0xff]
      %v5001 = vld [vmem:[#allocation3 + $0x98] sm:$0xff]
      %v5002 = vld [vmem:[#allocation3 + $0xa0] sm:$0xff]
      %v5003 = vld [vmem:[#allocation3 + $0xa8] sm:$0xff]
      %v5004 = vld [vmem:[#allocation3 + $0xb0] sm:$0xff]
      %v5005 = vld [vmem:[#allocation3 + $0xb8] sm:$0xff]
      %v5006 = vld [vmem:[#allocation3 + $0xc0] sm:$0xff]
      %v5007 = vld [vmem:[#allocation3 + $0xc8] sm:$0xff]
      %v5008 = vld [vmem:[#allocation3 + $0xd0] sm:$0xff]
      %v5009 = vld [vmem:[#allocation3 + $0xd8] sm:$0xff]
      %v5010 = vld [vmem:[#allocation3 + $0xe0] sm:$0xff]
      %v5011 = vld [vmem:[#allocation3 + $0xe8] sm:$0xff]
      %v5012 = vld [vmem:[#allocation3 + $0xf0] sm:$0xff]
      %v5013 = vld [vmem:[#allocation3 + $0xf8] sm:$0xff]
      %v5014 = vld [vmem:[#allocation3 + $0x100] sm:$0xff]
      %v5015 = vld [vmem:[#allocation3 + $0x9] sm:$0xff]
      %v5016 = vld [vmem:[#allocation3 + $0x11] sm:$0xff]
      %v5017 = vld [vmem:[#allocation3 + $0x19] sm:$0xff]
      %v5018 = vld [vmem:[#allocation3 + $0x21] sm:$0xff]
      %v5019 = vld [vmem:[#allocation3 + $0x29] sm:$0xff]
      %v5020 = vld [vmem:[#allocation3 + $0x31] sm:$0xff]
      %v5021 = vld [vmem:[#allocation3 + $0x39] sm:$0xff]
      %v5022 = vld [vmem:[#allocation3 + $0x41] sm:$0xff]
      %v5023 = vld [vmem:[#allocation3 + $0x49] sm:$0xff]
      %v5024 = vld [vmem:[#allocation3 + $0x51] sm:$0xff]
      %v5025 = vld [vmem:[#allocation3 + $0x59] sm:$0xff]
      %v5026 = vld [vmem:[#allocation3 + $0x61] sm:$0xff]
      %v5027 = vld [vmem:[#allocation3 + $0x69] sm:$0xff]
      %v5028 = vld [vmem:[#allocation3 + $0x71] sm:$0xff]
      %v5029 = vld [vmem:[#allocation3 + $0x79] sm:$0xff]
      %v5030 = vld [vmem:[#allocation3 + $0x81] sm:$0xff]
      %v5031 = vld [vmem:[#allocation3 + $0x89] sm:$0xff]
      %v5032 = vld [vmem:[#allocation3 + $0x91] sm:$0xff]
      %v5033 = vld [vmem:[#allocation3 + $0x99] sm:$0xff]
      %v5034 = vld [vmem:[#allocation3 + $0xa1] sm:$0xff]
      %v5035 = vld [vmem:[#allocation3 + $0xa9] sm:$0xff]
      %v5036 = vld [vmem:[#allocation3 + $0xb1] sm:$0xff]
      %v5037 = vld [vmem:[#allocation3 + $0xb9] sm:$0xff]
      %v5038 = vld [vmem:[#allocation3 + $0xc1] sm:$0xff]
      %v5039 = vld [vmem:[#allocation3 + $0xc9] sm:$0xff]
      %v5040 = vld [vmem:[#allocation3 + $0xd1] sm:$0xff]
      %v5041 = vld [vmem:[#allocation3 + $0xd9] sm:$0xff]
      %v5042 = vld [vmem:[#allocation3 + $0xe1] sm:$0xff]
      %v5043 = vld [vmem:[#allocation3 + $0xe9] sm:$0xff]
      %v5044 = vld [vmem:[#allocation3 + $0xf1] sm:$0xff]
      %v5045 = vld [vmem:[#allocation3 + $0xf9] sm:$0xff]
      %v5046 = vld [vmem:[#allocation3 + $0x101] sm:$0xff]
      %v5047 = vsel %vm1275, 0.0, %v5015
      %v5048 = vsel %vm1276, 0.0, %v5016
      %v5049 = vsel %vm1277, 0.0, %v5017
      %v5050 = vsel %vm1278, 0.0, %v5018
      %v5051 = vsel %vm1279, 0.0, %v5019
      %v5052 = vsel %vm1280, 0.0, %v5020
      %v5053 = vsel %vm1281, 0.0, %v5021
      %v5054 = vsel %vm1282, 0.0, %v5022
      %v5055 = vsel %vm1283, 0.0, %v5023
      %v5056 = vsel %vm1284, 0.0, %v5024
      %v5057 = vsel %vm1285, 0.0, %v5025
      %v5058 = vsel %vm1286, 0.0, %v5026
      %v5059 = vsel %vm1287, 0.0, %v5027
      %v5060 = vsel %vm1288, 0.0, %v5028
      %v5061 = vsel %vm1289, 0.0, %v5029
      %v5062 = vsel %vm1290, 0.0, %v5030
      %v5063 = vsel %vm1291, 0.0, %v5031
      %v5064 = vsel %vm1292, 0.0, %v5032
      %v5065 = vsel %vm1293, 0.0, %v5033
      %v5066 = vsel %vm1294, 0.0, %v5034
      %v5067 = vsel %vm1295, 0.0, %v5035
      %v5068 = vsel %vm1296, 0.0, %v5036
      %v5069 = vsel %vm1297, 0.0, %v5037
      %v5070 = vsel %vm1298, 0.0, %v5038
      %v5071 = vsel %vm1299, 0.0, %v5039
      %v5072 = vsel %vm1300, 0.0, %v5040
      %v5073 = vsel %vm1301, 0.0, %v5041
      %v5074 = vsel %vm1302, 0.0, %v5042
      %v5075 = vsel %vm1303, 0.0, %v5043
      %v5076 = vsel %vm1304, 0.0, %v5044
      %v5077 = vsel %vm1305, 0.0, %v5045
      %v5078 = vsel %vm1306, 0.0, %v5046
      %v5079 = vld [vmem:[#allocation3 + $0x107] sm:$0xff]
      %v5080 = vld [vmem:[#allocation3 + $0x10f] sm:$0xff]
      %v5081 = vsel %vm1115, 0.0, %v4921
      %v5082 = vsel %vm1116, 0.0, %v4922
      %v5083 = vsel %vm1117, 0.0, %v4923
      %v5084 = vsel %vm1118, 0.0, %v4924
      %v5085 = vsel %vm1119, 0.0, %v4925
      %v5086 = vsel %vm1120, 0.0, %v4926
      %v5087 = vsel %vm1121, 0.0, %v4927
      %v5088 = vsel %vm1122, 0.0, %v4928
      %v5089 = vsel %vm1123, 0.0, %v4929
      %v5090 = vsel %vm1124, 0.0, %v4930
      %v5091 = vsel %vm1125, 0.0, %v4931
      %v5092 = vsel %vm1126, 0.0, %v4932
      %v5093 = vsel %vm1127, 0.0, %v4933
      %v5094 = vsel %vm1128, 0.0, %v4934
      %v5095 = vsel %vm1129, 0.0, %v4935
      %v5096 = vsel %vm1130, 0.0, %v4936
      %v5097 = vsel %vm1131, 0.0, %v4937
      %v5098 = vsel %vm1132, 0.0, %v4938
      %v5099 = vsel %vm1133, 0.0, %v4939
      %v5100 = vsel %vm1134, 0.0, %v4940
      %v5101 = vsel %vm1135, 0.0, %v4941
      %v5102 = vsel %vm1136, 0.0, %v4942
      %v5103 = vsel %vm1137, 0.0, %v4943
      %v5104 = vsel %vm1138, 0.0, %v4944
      %v5105 = vsel %vm1139, 0.0, %v4945
      %v5106 = vsel %vm1140, 0.0, %v4946
      %v5107 = vsel %vm1141, 0.0, %v4947
      %v5108 = vsel %vm1142, 0.0, %v4948
      %v5109 = vsel %vm1143, 0.0, %v4949
      %v5110 = vsel %vm1144, 0.0, %v4950
      %v5111 = vsel %vm1145, 0.0, %v5079
      %v5112 = vsel %vm1146, 0.0, %v5080
      %v5113 = vld [vmem:[#allocation3 + $0x109] sm:$0xff]
      %v5114 = vld [vmem:[#allocation3 + $0x111] sm:$0xff]
      %v5115 = vsel %vm1275, 0.0, %v5017
      %v5116 = vsel %vm1276, 0.0, %v5018
      %v5117 = vsel %vm1277, 0.0, %v5019
      %v5118 = vsel %vm1278, 0.0, %v5020
      %v5119 = vsel %vm1279, 0.0, %v5021
      %v5120 = vsel %vm1280, 0.0, %v5022
      %v5121 = vsel %vm1281, 0.0, %v5023
      %v5122 = vsel %vm1282, 0.0, %v5024
      %v5123 = vsel %vm1283, 0.0, %v5025
      %v5124 = vsel %vm1284, 0.0, %v5026
      %v5125 = vsel %vm1285, 0.0, %v5027
      %v5126 = vsel %vm1286, 0.0, %v5028
      %v5127 = vsel %vm1287, 0.0, %v5029
      %v5128 = vsel %vm1288, 0.0, %v5030
      %v5129 = vsel %vm1289, 0.0, %v5031
      %v5130 = vsel %vm1290, 0.0, %v5032
      %v5131 = vsel %vm1291, 0.0, %v5033
      %v5132 = vsel %vm1292, 0.0, %v5034
      %v5133 = vsel %vm1293, 0.0, %v5035
      %v5134 = vsel %vm1294, 0.0, %v5036
      %v5135 = vsel %vm1295, 0.0, %v5037
      %v5136 = vsel %vm1296, 0.0, %v5038
      %v5137 = vsel %vm1297, 0.0, %v5039
      %v5138 = vsel %vm1298, 0.0, %v5040
      %v5139 = vsel %vm1299, 0.0, %v5041
      %v5140 = vsel %vm1300, 0.0, %v5042
      %v5141 = vsel %vm1301, 0.0, %v5043
      %v5142 = vsel %vm1302, 0.0, %v5044
      %v5143 = vsel %vm1303, 0.0, %v5045
      %v5144 = vsel %vm1304, 0.0, %v5046
      %v5145 = vsel %vm1305, 0.0, %v5113
      %v5146 = vsel %vm1306, 0.0, %v5114
      %v5147 = vld [vmem:[#allocation3 + $0x117] sm:$0xff]
      %v5148 = vld [vmem:[#allocation3 + $0x11f] sm:$0xff]
      %v5149 = vsel %vm1115, 0.0, %v4923
      %v5150 = vsel %vm1116, 0.0, %v4924
      %v5151 = vsel %vm1117, 0.0, %v4925
      %v5152 = vsel %vm1118, 0.0, %v4926
      %v5153 = vsel %vm1119, 0.0, %v4927
      %v5154 = vsel %vm1120, 0.0, %v4928
      %v5155 = vsel %vm1121, 0.0, %v4929
      %v5156 = vsel %vm1122, 0.0, %v4930
      %v5157 = vsel %vm1123, 0.0, %v4931
      %v5158 = vsel %vm1124, 0.0, %v4932
      %v5159 = vsel %vm1125, 0.0, %v4933
      %v5160 = vsel %vm1126, 0.0, %v4934
      %v5161 = vsel %vm1127, 0.0, %v4935
      %v5162 = vsel %vm1128, 0.0, %v4936
      %v5163 = vsel %vm1129, 0.0, %v4937
      %v5164 = vsel %vm1130, 0.0, %v4938
      %v5165 = vsel %vm1131, 0.0, %v4939
      %v5166 = vsel %vm1132, 0.0, %v4940
      %v5167 = vsel %vm1133, 0.0, %v4941
      %v5168 = vsel %vm1134, 0.0, %v4942
      %v5169 = vsel %vm1135, 0.0, %v4943
      %v5170 = vsel %vm1136, 0.0, %v4944
      %v5171 = vsel %vm1137, 0.0, %v4945
      %v5172 = vsel %vm1138, 0.0, %v4946
      %v5173 = vsel %vm1139, 0.0, %v4947
      %v5174 = vsel %vm1140, 0.0, %v4948
      %v5175 = vsel %vm1141, 0.0, %v4949
      %v5176 = vsel %vm1142, 0.0, %v4950
      %v5177 = vsel %vm1143, 0.0, %v5079
      %v5178 = vsel %vm1144, 0.0, %v5080
      %v5179 = vsel %vm1145, 0.0, %v5147
      %v5180 = vsel %vm1146, 0.0, %v5148
      %v5181 = vld [vmem:[#allocation3 + $0x108] sm:$0xff]
      %v5182 = vld [vmem:[#allocation3 + $0x110] sm:$0xff]
      %v5183 = vld [vmem:[#allocation3 + $0x118] sm:$0xff]
      %v5184 = vld [vmem:[#allocation3 + $0x120] sm:$0xff]
      %v5185 = vld [vmem:[#allocation3 + $0x119] sm:$0xff]
      %v5186 = vld [vmem:[#allocation3 + $0x121] sm:$0xff]
      %v5187 = vsel %vm1275, 0.0, %v5019
      %v5188 = vsel %vm1276, 0.0, %v5020
      %v5189 = vsel %vm1277, 0.0, %v5021
      %v5190 = vsel %vm1278, 0.0, %v5022
      %v5191 = vsel %vm1279, 0.0, %v5023
      %v5192 = vsel %vm1280, 0.0, %v5024
      %v5193 = vsel %vm1281, 0.0, %v5025
      %v5194 = vsel %vm1282, 0.0, %v5026
      %v5195 = vsel %vm1283, 0.0, %v5027
      %v5196 = vsel %vm1284, 0.0, %v5028
      %v5197 = vsel %vm1285, 0.0, %v5029
      %v5198 = vsel %vm1286, 0.0, %v5030
      %v5199 = vsel %vm1287, 0.0, %v5031
      %v5200 = vsel %vm1288, 0.0, %v5032
      %v5201 = vsel %vm1289, 0.0, %v5033
      %v5202 = vsel %vm1290, 0.0, %v5034
      %v5203 = vsel %vm1291, 0.0, %v5035
      %v5204 = vsel %vm1292, 0.0, %v5036
      %v5205 = vsel %vm1293, 0.0, %v5037
      %v5206 = vsel %vm1294, 0.0, %v5038
      %v5207 = vsel %vm1295, 0.0, %v5039
      %v5208 = vsel %vm1296, 0.0, %v5040
      %v5209 = vsel %vm1297, 0.0, %v5041
      %v5210 = vsel %vm1298, 0.0, %v5042
      %v5211 = vsel %vm1299, 0.0, %v5043
      %v5212 = vsel %vm1300, 0.0, %v5044
      %v5213 = vsel %vm1301, 0.0, %v5045
      %v5214 = vsel %vm1302, 0.0, %v5046
      %v5215 = vsel %vm1303, 0.0, %v5113
      %v5216 = vsel %vm1304, 0.0, %v5114
      %v5217 = vsel %vm1305, 0.0, %v5185
      %v5218 = vsel %vm1306, 0.0, %v5186
      %5251 = vrot.lane.b32.xlu0 %v4983, 8
      %v5252 = vpop.permute.xlu0 %5251
      %5253 = vrot.lane.b32.xlu0 %v4984, 8
      %v5254 = vpop.permute.xlu0 %5253
      %5255 = vrot.lane.b32.xlu0 %v4985, 8
      %v5256 = vpop.permute.xlu0 %5255
      %5257 = vrot.lane.b32.xlu0 %v4986, 8
      %v5258 = vpop.permute.xlu0 %5257
      %5259 = vrot.lane.b32.xlu0 %v4987, 8
      %v5260 = vpop.permute.xlu0 %5259
      %5261 = vrot.lane.b32.xlu0 %v4988, 8
      %v5262 = vpop.permute.xlu0 %5261
      %5263 = vrot.lane.b32.xlu0 %v4989, 8
      %v5264 = vpop.permute.xlu0 %5263
      %5265 = vrot.lane.b32.xlu0 %v4990, 8
      %v5266 = vpop.permute.xlu0 %5265
      %5267 = vrot.lane.b32.xlu0 %v4991, 8
      %v5268 = vpop.permute.xlu0 %5267
      %5269 = vrot.lane.b32.xlu0 %v4992, 8
      %v5270 = vpop.permute.xlu0 %5269
      %5271 = vrot.lane.b32.xlu0 %v4993, 8
      %v5272 = vpop.permute.xlu0 %5271
      %5273 = vrot.lane.b32.xlu0 %v4994, 8
      %v5274 = vpop.permute.xlu0 %5273
      %5275 = vrot.lane.b32.xlu0 %v4995, 8
      %v5276 = vpop.permute.xlu0 %5275
      %5277 = vrot.lane.b32.xlu0 %v4996, 8
      %v5278 = vpop.permute.xlu0 %5277
      %5279 = vrot.lane.b32.xlu0 %v4997, 8
      %v5280 = vpop.permute.xlu0 %5279
      %5281 = vrot.lane.b32.xlu0 %v4998, 8
      %v5282 = vpop.permute.xlu0 %5281
      %5283 = vrot.lane.b32.xlu0 %v4999, 8
      %v5284 = vpop.permute.xlu0 %5283
      %5285 = vrot.lane.b32.xlu0 %v5000, 8
      %v5286 = vpop.permute.xlu0 %5285
      %5287 = vrot.lane.b32.xlu0 %v5001, 8
      %v5288 = vpop.permute.xlu0 %5287
      %5289 = vrot.lane.b32.xlu0 %v5002, 8
      %v5290 = vpop.permute.xlu0 %5289
      %5291 = vrot.lane.b32.xlu0 %v5003, 8
      %v5292 = vpop.permute.xlu0 %5291
      %5293 = vrot.lane.b32.xlu0 %v5004, 8
      %v5294 = vpop.permute.xlu0 %5293
      %5295 = vrot.lane.b32.xlu0 %v5005, 8
      %v5296 = vpop.permute.xlu0 %5295
      %5297 = vrot.lane.b32.xlu0 %v5006, 8
      %v5298 = vpop.permute.xlu0 %5297
      %5299 = vrot.lane.b32.xlu0 %v5007, 8
      %v5300 = vpop.permute.xlu0 %5299
      %5301 = vrot.lane.b32.xlu0 %v5008, 8
      %v5302 = vpop.permute.xlu0 %5301
      %5303 = vrot.lane.b32.xlu0 %v5009, 8
      %v5304 = vpop.permute.xlu0 %5303
      %5305 = vrot.lane.b32.xlu0 %v5010, 8
      %v5306 = vpop.permute.xlu0 %5305
      %5307 = vrot.lane.b32.xlu0 %v5011, 8
      %v5308 = vpop.permute.xlu0 %5307
      %5309 = vrot.lane.b32.xlu0 %v5012, 8
      %v5310 = vpop.permute.xlu0 %5309
      %5311 = vrot.lane.b32.xlu0 %v5013, 8
      %v5312 = vpop.permute.xlu0 %5311
      %5313 = vrot.lane.b32.xlu0 %v5014, 8
      %v5314 = vpop.permute.xlu0 %5313
      %5379 = vrot.lane.b32.xlu0 %v5047, 16
      %v5380 = vpop.permute.xlu0 %5379
      %5381 = vrot.lane.b32.xlu0 %v5048, 16
      %v5382 = vpop.permute.xlu0 %5381
      %5383 = vrot.lane.b32.xlu0 %v5049, 16
      %v5384 = vpop.permute.xlu0 %5383
      %5385 = vrot.lane.b32.xlu0 %v5050, 16
      %v5386 = vpop.permute.xlu0 %5385
      %5387 = vrot.lane.b32.xlu0 %v5051, 16
      %v5388 = vpop.permute.xlu0 %5387
      %5389 = vrot.lane.b32.xlu0 %v5052, 16
      %v5390 = vpop.permute.xlu0 %5389
      %5391 = vrot.lane.b32.xlu0 %v5053, 16
      %v5392 = vpop.permute.xlu0 %5391
      %5393 = vrot.lane.b32.xlu0 %v5054, 16
      %v5394 = vpop.permute.xlu0 %5393
      %5395 = vrot.lane.b32.xlu0 %v5055, 16
      %v5396 = vpop.permute.xlu0 %5395
      %5397 = vrot.lane.b32.xlu0 %v5056, 16
      %v5398 = vpop.permute.xlu0 %5397
      %5399 = vrot.lane.b32.xlu0 %v5057, 16
      %v5400 = vpop.permute.xlu0 %5399
      %5401 = vrot.lane.b32.xlu0 %v5058, 16
      %v5402 = vpop.permute.xlu0 %5401
      %5403 = vrot.lane.b32.xlu0 %v5059, 16
      %v5404 = vpop.permute.xlu0 %5403
      %5405 = vrot.lane.b32.xlu0 %v5060, 16
      %v5406 = vpop.permute.xlu0 %5405
      %5407 = vrot.lane.b32.xlu0 %v5061, 16
      %v5408 = vpop.permute.xlu0 %5407
      %5409 = vrot.lane.b32.xlu0 %v5062, 16
      %v5410 = vpop.permute.xlu0 %5409
      %5411 = vrot.lane.b32.xlu0 %v5063, 16
      %v5412 = vpop.permute.xlu0 %5411
      %5413 = vrot.lane.b32.xlu0 %v5064, 16
      %v5414 = vpop.permute.xlu0 %5413
      %5415 = vrot.lane.b32.xlu0 %v5065, 16
      %v5416 = vpop.permute.xlu0 %5415
      %5417 = vrot.lane.b32.xlu0 %v5066, 16
      %v5418 = vpop.permute.xlu0 %5417
      %5419 = vrot.lane.b32.xlu0 %v5067, 16
      %v5420 = vpop.permute.xlu0 %5419
      %5421 = vrot.lane.b32.xlu0 %v5068, 16
      %v5422 = vpop.permute.xlu0 %5421
      %5423 = vrot.lane.b32.xlu0 %v5069, 16
      %v5424 = vpop.permute.xlu0 %5423
      %5425 = vrot.lane.b32.xlu0 %v5070, 16
      %v5426 = vpop.permute.xlu0 %5425
      %5427 = vrot.lane.b32.xlu0 %v5071, 16
      %v5428 = vpop.permute.xlu0 %5427
      %5429 = vrot.lane.b32.xlu0 %v5072, 16
      %v5430 = vpop.permute.xlu0 %5429
      %5431 = vrot.lane.b32.xlu0 %v5073, 16
      %v5432 = vpop.permute.xlu0 %5431
      %5433 = vrot.lane.b32.xlu0 %v5074, 16
      %v5434 = vpop.permute.xlu0 %5433
      %5435 = vrot.lane.b32.xlu0 %v5075, 16
      %v5436 = vpop.permute.xlu0 %5435
      %5437 = vrot.lane.b32.xlu0 %v5076, 16
      %v5438 = vpop.permute.xlu0 %5437
      %5439 = vrot.lane.b32.xlu0 %v5077, 16
      %v5440 = vpop.permute.xlu0 %5439
      %5441 = vrot.lane.b32.xlu0 %v5078, 16
      %v5442 = vpop.permute.xlu0 %5441
      %5507 = vrot.lane.b32.xlu0 %v5081, 24
      %v5508 = vpop.permute.xlu0 %5507
      %5509 = vrot.lane.b32.xlu0 %v5082, 24
      %v5510 = vpop.permute.xlu0 %5509
      %5511 = vrot.lane.b32.xlu0 %v5083, 24
      %v5512 = vpop.permute.xlu0 %5511
      %5513 = vrot.lane.b32.xlu0 %v5084, 24
      %v5514 = vpop.permute.xlu0 %5513
      %5515 = vrot.lane.b32.xlu0 %v5085, 24
      %v5516 = vpop.permute.xlu0 %5515
      %5517 = vrot.lane.b32.xlu0 %v5086, 24
      %v5518 = vpop.permute.xlu0 %5517
      %5519 = vrot.lane.b32.xlu0 %v5087, 24
      %v5520 = vpop.permute.xlu0 %5519
      %5521 = vrot.lane.b32.xlu0 %v5088, 24
      %v5522 = vpop.permute.xlu0 %5521
      %5523 = vrot.lane.b32.xlu0 %v5089, 24
      %v5524 = vpop.permute.xlu0 %5523
      %5525 = vrot.lane.b32.xlu0 %v5090, 24
      %v5526 = vpop.permute.xlu0 %5525
      %5527 = vrot.lane.b32.xlu0 %v5091, 24
      %v5528 = vpop.permute.xlu0 %5527
      %5529 = vrot.lane.b32.xlu0 %v5092, 24
      %v5530 = vpop.permute.xlu0 %5529
      %5531 = vrot.lane.b32.xlu0 %v5093, 24
      %v5532 = vpop.permute.xlu0 %5531
      %5533 = vrot.lane.b32.xlu0 %v5094, 24
      %v5534 = vpop.permute.xlu0 %5533
      %5535 = vrot.lane.b32.xlu0 %v5095, 24
      %v5536 = vpop.permute.xlu0 %5535
      %5537 = vrot.lane.b32.xlu0 %v5096, 24
      %v5538 = vpop.permute.xlu0 %5537
      %5539 = vrot.lane.b32.xlu0 %v5097, 24
      %v5540 = vpop.permute.xlu0 %5539
      %5541 = vrot.lane.b32.xlu0 %v5098, 24
      %v5542 = vpop.permute.xlu0 %5541
      %5543 = vrot.lane.b32.xlu0 %v5099, 24
      %v5544 = vpop.permute.xlu0 %5543
      %5545 = vrot.lane.b32.xlu0 %v5100, 24
      %v5546 = vpop.permute.xlu0 %5545
      %5547 = vrot.lane.b32.xlu0 %v5101, 24
      %v5548 = vpop.permute.xlu0 %5547
      %5549 = vrot.lane.b32.xlu0 %v5102, 24
      %v5550 = vpop.permute.xlu0 %5549
      %5551 = vrot.lane.b32.xlu0 %v5103, 24
      %v5552 = vpop.permute.xlu0 %5551
      %5553 = vrot.lane.b32.xlu0 %v5104, 24
      %v5554 = vpop.permute.xlu0 %5553
      %5555 = vrot.lane.b32.xlu0 %v5105, 24
      %v5556 = vpop.permute.xlu0 %5555
      %5557 = vrot.lane.b32.xlu0 %v5106, 24
      %v5558 = vpop.permute.xlu0 %5557
      %5559 = vrot.lane.b32.xlu0 %v5107, 24
      %v5560 = vpop.permute.xlu0 %5559
      %5561 = vrot.lane.b32.xlu0 %v5108, 24
      %v5562 = vpop.permute.xlu0 %5561
      %5563 = vrot.lane.b32.xlu0 %v5109, 24
      %v5564 = vpop.permute.xlu0 %5563
      %5565 = vrot.lane.b32.xlu0 %v5110, 24
      %v5566 = vpop.permute.xlu0 %5565
      %5567 = vrot.lane.b32.xlu0 %v5111, 24
      %v5568 = vpop.permute.xlu0 %5567
      %5569 = vrot.lane.b32.xlu0 %v5112, 24
      %v5570 = vpop.permute.xlu0 %5569
      %5635 = vrot.lane.b32.xlu0 %v4855, 32
      %v5636 = vpop.permute.xlu0 %5635
      %5637 = vrot.lane.b32.xlu0 %v4856, 32
      %v5638 = vpop.permute.xlu0 %5637
      %5639 = vrot.lane.b32.xlu0 %v4857, 32
      %v5640 = vpop.permute.xlu0 %5639
      %5641 = vrot.lane.b32.xlu0 %v4858, 32
      %v5642 = vpop.permute.xlu0 %5641
      %5643 = vrot.lane.b32.xlu0 %v4859, 32
      %v5644 = vpop.permute.xlu0 %5643
      %5645 = vrot.lane.b32.xlu0 %v4860, 32
      %v5646 = vpop.permute.xlu0 %5645
      %5647 = vrot.lane.b32.xlu0 %v4861, 32
      %v5648 = vpop.permute.xlu0 %5647
      %5649 = vrot.lane.b32.xlu0 %v4862, 32
      %v5650 = vpop.permute.xlu0 %5649
      %5651 = vrot.lane.b32.xlu0 %v4863, 32
      %v5652 = vpop.permute.xlu0 %5651
      %5653 = vrot.lane.b32.xlu0 %v4864, 32
      %v5654 = vpop.permute.xlu0 %5653
      %5655 = vrot.lane.b32.xlu0 %v4865, 32
      %v5656 = vpop.permute.xlu0 %5655
      %5657 = vrot.lane.b32.xlu0 %v4866, 32
      %v5658 = vpop.permute.xlu0 %5657
      %5659 = vrot.lane.b32.xlu0 %v4867, 32
      %v5660 = vpop.permute.xlu0 %5659
      %5661 = vrot.lane.b32.xlu0 %v4868, 32
      %v5662 = vpop.permute.xlu0 %5661
      %5663 = vrot.lane.b32.xlu0 %v4869, 32
      %v5664 = vpop.permute.xlu0 %5663
      %5665 = vrot.lane.b32.xlu0 %v4870, 32
      %v5666 = vpop.permute.xlu0 %5665
      %5667 = vrot.lane.b32.xlu0 %v4871, 32
      %v5668 = vpop.permute.xlu0 %5667
      %5669 = vrot.lane.b32.xlu0 %v4872, 32
      %v5670 = vpop.permute.xlu0 %5669
      %5671 = vrot.lane.b32.xlu0 %v4873, 32
      %v5672 = vpop.permute.xlu0 %5671
      %5673 = vrot.lane.b32.xlu0 %v4874, 32
      %v5674 = vpop.permute.xlu0 %5673
      %5675 = vrot.lane.b32.xlu0 %v4875, 32
      %v5676 = vpop.permute.xlu0 %5675
      %5677 = vrot.lane.b32.xlu0 %v4876, 32
      %v5678 = vpop.permute.xlu0 %5677
      %5679 = vrot.lane.b32.xlu0 %v4877, 32
      %v5680 = vpop.permute.xlu0 %5679
      %5681 = vrot.lane.b32.xlu0 %v4878, 32
      %v5682 = vpop.permute.xlu0 %5681
      %5683 = vrot.lane.b32.xlu0 %v4879, 32
      %v5684 = vpop.permute.xlu0 %5683
      %5685 = vrot.lane.b32.xlu0 %v4880, 32
      %v5686 = vpop.permute.xlu0 %5685
      %5687 = vrot.lane.b32.xlu0 %v4881, 32
      %v5688 = vpop.permute.xlu0 %5687
      %5689 = vrot.lane.b32.xlu0 %v4882, 32
      %v5690 = vpop.permute.xlu0 %5689
      %5691 = vrot.lane.b32.xlu0 %v4883, 32
      %v5692 = vpop.permute.xlu0 %5691
      %5693 = vrot.lane.b32.xlu0 %v4884, 32
      %v5694 = vpop.permute.xlu0 %5693
      %5695 = vrot.lane.b32.xlu0 %v4885, 32
      %v5696 = vpop.permute.xlu0 %5695
      %5697 = vrot.lane.b32.xlu0 %v4886, 32
      %v5698 = vpop.permute.xlu0 %5697
      %5763 = vrot.lane.b32.xlu0 %v5115, 40
      %v5764 = vpop.permute.xlu0 %5763
      %5765 = vrot.lane.b32.xlu0 %v5116, 40
      %v5766 = vpop.permute.xlu0 %5765
      %5767 = vrot.lane.b32.xlu0 %v5117, 40
      %v5768 = vpop.permute.xlu0 %5767
      %5769 = vrot.lane.b32.xlu0 %v5118, 40
      %v5770 = vpop.permute.xlu0 %5769
      %5771 = vrot.lane.b32.xlu0 %v5119, 40
      %v5772 = vpop.permute.xlu0 %5771
      %5773 = vrot.lane.b32.xlu0 %v5120, 40
      %v5774 = vpop.permute.xlu0 %5773
      %5775 = vrot.lane.b32.xlu0 %v5121, 40
      %v5776 = vpop.permute.xlu0 %5775
      %5777 = vrot.lane.b32.xlu0 %v5122, 40
      %v5778 = vpop.permute.xlu0 %5777
      %5779 = vrot.lane.b32.xlu0 %v5123, 40
      %v5780 = vpop.permute.xlu0 %5779
      %5781 = vrot.lane.b32.xlu0 %v5124, 40
      %v5782 = vpop.permute.xlu0 %5781
      %5783 = vrot.lane.b32.xlu0 %v5125, 40
      %v5784 = vpop.permute.xlu0 %5783
      %5785 = vrot.lane.b32.xlu0 %v5126, 40
      %v5786 = vpop.permute.xlu0 %5785
      %5787 = vrot.lane.b32.xlu0 %v5127, 40
      %v5788 = vpop.permute.xlu0 %5787
      %5789 = vrot.lane.b32.xlu0 %v5128, 40
      %v5790 = vpop.permute.xlu0 %5789
      %5791 = vrot.lane.b32.xlu0 %v5129, 40
      %v5792 = vpop.permute.xlu0 %5791
      %5793 = vrot.lane.b32.xlu0 %v5130, 40
      %v5794 = vpop.permute.xlu0 %5793
      %5795 = vrot.lane.b32.xlu0 %v5131, 40
      %v5796 = vpop.permute.xlu0 %5795
      %5797 = vrot.lane.b32.xlu0 %v5132, 40
      %v5798 = vpop.permute.xlu0 %5797
      %5799 = vrot.lane.b32.xlu0 %v5133, 40
      %v5800 = vpop.permute.xlu0 %5799
      %5801 = vrot.lane.b32.xlu0 %v5134, 40
      %v5802 = vpop.permute.xlu0 %5801
      %5803 = vrot.lane.b32.xlu0 %v5135, 40
      %v5804 = vpop.permute.xlu0 %5803
      %5805 = vrot.lane.b32.xlu0 %v5136, 40
      %v5806 = vpop.permute.xlu0 %5805
      %5807 = vrot.lane.b32.xlu0 %v5137, 40
      %v5808 = vpop.permute.xlu0 %5807
      %5809 = vrot.lane.b32.xlu0 %v5138, 40
      %v5810 = vpop.permute.xlu0 %5809
      %5811 = vrot.lane.b32.xlu0 %v5139, 40
      %v5812 = vpop.permute.xlu0 %5811
      %5813 = vrot.lane.b32.xlu0 %v5140, 40
      %v5814 = vpop.permute.xlu0 %5813
      %5815 = vrot.lane.b32.xlu0 %v5141, 40
      %v5816 = vpop.permute.xlu0 %5815
      %5817 = vrot.lane.b32.xlu0 %v5142, 40
      %v5818 = vpop.permute.xlu0 %5817
      %5819 = vrot.lane.b32.xlu0 %v5143, 40
      %v5820 = vpop.permute.xlu0 %5819
      %5821 = vrot.lane.b32.xlu0 %v5144, 40
      %v5822 = vpop.permute.xlu0 %5821
      %5823 = vrot.lane.b32.xlu0 %v5145, 40
      %v5824 = vpop.permute.xlu0 %5823
      %5825 = vrot.lane.b32.xlu0 %v5146, 40
      %v5826 = vpop.permute.xlu0 %5825
      %5891 = vrot.lane.b32.xlu0 %v5149, 48
      %v5892 = vpop.permute.xlu0 %5891
      %5893 = vrot.lane.b32.xlu0 %v5150, 48
      %v5894 = vpop.permute.xlu0 %5893
      %5895 = vrot.lane.b32.xlu0 %v5151, 48
      %v5896 = vpop.permute.xlu0 %5895
      %5897 = vrot.lane.b32.xlu0 %v5152, 48
      %v5898 = vpop.permute.xlu0 %5897
      %5899 = vrot.lane.b32.xlu0 %v5153, 48
      %v5900 = vpop.permute.xlu0 %5899
      %5901 = vrot.lane.b32.xlu0 %v5154, 48
      %v5902 = vpop.permute.xlu0 %5901
      %5903 = vrot.lane.b32.xlu0 %v5155, 48
      %v5904 = vpop.permute.xlu0 %5903
      %5905 = vrot.lane.b32.xlu0 %v5156, 48
      %v5906 = vpop.permute.xlu0 %5905
      %5907 = vrot.lane.b32.xlu0 %v5157, 48
      %v5908 = vpop.permute.xlu0 %5907
      %5909 = vrot.lane.b32.xlu0 %v5158, 48
      %v5910 = vpop.permute.xlu0 %5909
      %5911 = vrot.lane.b32.xlu0 %v5159, 48
      %v5912 = vpop.permute.xlu0 %5911
      %5913 = vrot.lane.b32.xlu0 %v5160, 48
      %v5914 = vpop.permute.xlu0 %5913
      %5915 = vrot.lane.b32.xlu0 %v5161, 48
      %v5916 = vpop.permute.xlu0 %5915
      %5917 = vrot.lane.b32.xlu0 %v5162, 48
      %v5918 = vpop.permute.xlu0 %5917
      %5919 = vrot.lane.b32.xlu0 %v5163, 48
      %v5920 = vpop.permute.xlu0 %5919
      %5921 = vrot.lane.b32.xlu0 %v5164, 48
      %v5922 = vpop.permute.xlu0 %5921
      %5923 = vrot.lane.b32.xlu0 %v5165, 48
      %v5924 = vpop.permute.xlu0 %5923
      %5925 = vrot.lane.b32.xlu0 %v5166, 48
      %v5926 = vpop.permute.xlu0 %5925
      %5927 = vrot.lane.b32.xlu0 %v5167, 48
      %v5928 = vpop.permute.xlu0 %5927
      %5929 = vrot.lane.b32.xlu0 %v5168, 48
      %v5930 = vpop.permute.xlu0 %5929
      %5931 = vrot.lane.b32.xlu0 %v5169, 48
      %v5932 = vpop.permute.xlu0 %5931
      %5933 = vrot.lane.b32.xlu0 %v5170, 48
      %v5934 = vpop.permute.xlu0 %5933
      %5935 = vrot.lane.b32.xlu0 %v5171, 48
      %v5936 = vpop.permute.xlu0 %5935
      %5937 = vrot.lane.b32.xlu0 %v5172, 48
      %v5938 = vpop.permute.xlu0 %5937
      %5939 = vrot.lane.b32.xlu0 %v5173, 48
      %v5940 = vpop.permute.xlu0 %5939
      %5941 = vrot.lane.b32.xlu0 %v5174, 48
      %v5942 = vpop.permute.xlu0 %5941
      %5943 = vrot.lane.b32.xlu0 %v5175, 48
      %v5944 = vpop.permute.xlu0 %5943
      %5945 = vrot.lane.b32.xlu0 %v5176, 48
      %v5946 = vpop.permute.xlu0 %5945
      %5947 = vrot.lane.b32.xlu0 %v5177, 48
      %v5948 = vpop.permute.xlu0 %5947
      %5949 = vrot.lane.b32.xlu0 %v5178, 48
      %v5950 = vpop.permute.xlu0 %5949
      %5951 = vrot.lane.b32.xlu0 %v5179, 48
      %v5952 = vpop.permute.xlu0 %5951
      %5953 = vrot.lane.b32.xlu0 %v5180, 48
      %v5954 = vpop.permute.xlu0 %5953
      %5991 = vrot.lane.b32.xlu0 %v4987, 56
      %v5992 = vpop.permute.xlu0 %5991
      %5993 = vrot.lane.b32.xlu0 %v4988, 56
      %v5994 = vpop.permute.xlu0 %5993
      %5995 = vrot.lane.b32.xlu0 %v4989, 56
      %v5996 = vpop.permute.xlu0 %5995
      %5997 = vrot.lane.b32.xlu0 %v4990, 56
      %v5998 = vpop.permute.xlu0 %5997
      %5999 = vrot.lane.b32.xlu0 %v4991, 56
      %v6000 = vpop.permute.xlu0 %5999
      %6001 = vrot.lane.b32.xlu0 %v4992, 56
      %v6002 = vpop.permute.xlu0 %6001
      %6003 = vrot.lane.b32.xlu0 %v4993, 56
      %v6004 = vpop.permute.xlu0 %6003
      %6005 = vrot.lane.b32.xlu0 %v4994, 56
      %v6006 = vpop.permute.xlu0 %6005
      %6007 = vrot.lane.b32.xlu0 %v4995, 56
      %v6008 = vpop.permute.xlu0 %6007
      %6009 = vrot.lane.b32.xlu0 %v4996, 56
      %v6010 = vpop.permute.xlu0 %6009
      %6011 = vrot.lane.b32.xlu0 %v4997, 56
      %v6012 = vpop.permute.xlu0 %6011
      %6013 = vrot.lane.b32.xlu0 %v4998, 56
      %v6014 = vpop.permute.xlu0 %6013
      %6015 = vrot.lane.b32.xlu0 %v4999, 56
      %v6016 = vpop.permute.xlu0 %6015
      %6017 = vrot.lane.b32.xlu0 %v5000, 56
      %v6018 = vpop.permute.xlu0 %6017
      %6019 = vrot.lane.b32.xlu0 %v5001, 56
      %v6020 = vpop.permute.xlu0 %6019
      %6021 = vrot.lane.b32.xlu0 %v5002, 56
      %v6022 = vpop.permute.xlu0 %6021
      %6023 = vrot.lane.b32.xlu0 %v5003, 56
      %v6024 = vpop.permute.xlu0 %6023
      %6025 = vrot.lane.b32.xlu0 %v5004, 56
      %v6026 = vpop.permute.xlu0 %6025
      %6027 = vrot.lane.b32.xlu0 %v5005, 56
      %v6028 = vpop.permute.xlu0 %6027
      %6029 = vrot.lane.b32.xlu0 %v5006, 56
      %v6030 = vpop.permute.xlu0 %6029
      %6031 = vrot.lane.b32.xlu0 %v5007, 56
      %v6032 = vpop.permute.xlu0 %6031
      %6033 = vrot.lane.b32.xlu0 %v5008, 56
      %v6034 = vpop.permute.xlu0 %6033
      %6035 = vrot.lane.b32.xlu0 %v5009, 56
      %v6036 = vpop.permute.xlu0 %6035
      %6037 = vrot.lane.b32.xlu0 %v5010, 56
      %v6038 = vpop.permute.xlu0 %6037
      %6039 = vrot.lane.b32.xlu0 %v5011, 56
      %v6040 = vpop.permute.xlu0 %6039
      %6041 = vrot.lane.b32.xlu0 %v5012, 56
      %v6042 = vpop.permute.xlu0 %6041
      %6043 = vrot.lane.b32.xlu0 %v5013, 56
      %v6044 = vpop.permute.xlu0 %6043
      %6045 = vrot.lane.b32.xlu0 %v5014, 56
      %v6046 = vpop.permute.xlu0 %6045
      %6047 = vrot.lane.b32.xlu0 %v5181, 56
      %v6048 = vpop.permute.xlu0 %6047
      %6049 = vrot.lane.b32.xlu0 %v5182, 56
      %v6050 = vpop.permute.xlu0 %6049
      %6051 = vrot.lane.b32.xlu0 %v5183, 56
      %v6052 = vpop.permute.xlu0 %6051
      %6053 = vrot.lane.b32.xlu0 %v5184, 56
      %v6054 = vpop.permute.xlu0 %6053
      %6119 = vrot.lane.b32.xlu0 %v5187, 64
      %v6120 = vpop.permute.xlu0 %6119
      %6121 = vrot.lane.b32.xlu0 %v5188, 64
      %v6122 = vpop.permute.xlu0 %6121
      %6123 = vrot.lane.b32.xlu0 %v5189, 64
      %v6124 = vpop.permute.xlu0 %6123
      %6125 = vrot.lane.b32.xlu0 %v5190, 64
      %v6126 = vpop.permute.xlu0 %6125
      %6127 = vrot.lane.b32.xlu0 %v5191, 64
      %v6128 = vpop.permute.xlu0 %6127
      %6129 = vrot.lane.b32.xlu0 %v5192, 64
      %v6130 = vpop.permute.xlu0 %6129
      %6131 = vrot.lane.b32.xlu0 %v5193, 64
      %v6132 = vpop.permute.xlu0 %6131
      %6133 = vrot.lane.b32.xlu0 %v5194, 64
      %v6134 = vpop.permute.xlu0 %6133
      %6135 = vrot.lane.b32.xlu0 %v5195, 64
      %v6136 = vpop.permute.xlu0 %6135
      %6137 = vrot.lane.b32.xlu0 %v5196, 64
      %v6138 = vpop.permute.xlu0 %6137
      %6139 = vrot.lane.b32.xlu0 %v5197, 64
      %v6140 = vpop.permute.xlu0 %6139
      %6141 = vrot.lane.b32.xlu0 %v5198, 64
      %v6142 = vpop.permute.xlu0 %6141
      %6143 = vrot.lane.b32.xlu0 %v5199, 64
      %v6144 = vpop.permute.xlu0 %6143
      %6145 = vrot.lane.b32.xlu0 %v5200, 64
      %v6146 = vpop.permute.xlu0 %6145
      %6147 = vrot.lane.b32.xlu0 %v5201, 64
      %v6148 = vpop.permute.xlu0 %6147
      %6149 = vrot.lane.b32.xlu0 %v5202, 64
      %v6150 = vpop.permute.xlu0 %6149
      %6151 = vrot.lane.b32.xlu0 %v5203, 64
      %v6152 = vpop.permute.xlu0 %6151
      %6153 = vrot.lane.b32.xlu0 %v5204, 64
      %v6154 = vpop.permute.xlu0 %6153
      %6155 = vrot.lane.b32.xlu0 %v5205, 64
      %v6156 = vpop.permute.xlu0 %6155
      %6157 = vrot.lane.b32.xlu0 %v5206, 64
      %v6158 = vpop.permute.xlu0 %6157
      %6159 = vrot.lane.b32.xlu0 %v5207, 64
      %v6160 = vpop.permute.xlu0 %6159
      %6161 = vrot.lane.b32.xlu0 %v5208, 64
      %v6162 = vpop.permute.xlu0 %6161
      %6163 = vrot.lane.b32.xlu0 %v5209, 64
      %v6164 = vpop.permute.xlu0 %6163
      %6165 = vrot.lane.b32.xlu0 %v5210, 64
      %v6166 = vpop.permute.xlu0 %6165
      %6167 = vrot.lane.b32.xlu0 %v5211, 64
      %v6168 = vpop.permute.xlu0 %6167
      %6169 = vrot.lane.b32.xlu0 %v5212, 64
      %v6170 = vpop.permute.xlu0 %6169
      %6171 = vrot.lane.b32.xlu0 %v5213, 64
      %v6172 = vpop.permute.xlu0 %6171
      %6173 = vrot.lane.b32.xlu0 %v5214, 64
      %v6174 = vpop.permute.xlu0 %6173
      %6175 = vrot.lane.b32.xlu0 %v5215, 64
      %v6176 = vpop.permute.xlu0 %6175
      %6177 = vrot.lane.b32.xlu0 %v5216, 64
      %v6178 = vpop.permute.xlu0 %6177
      %6179 = vrot.lane.b32.xlu0 %v5217, 64
      %v6180 = vpop.permute.xlu0 %6179
      %6181 = vrot.lane.b32.xlu0 %v5218, 64
      %v6182 = vpop.permute.xlu0 %6181
      %v6215 = vsel %vm948, %v4951, %v5252
      %v6216 = vsel %vm948, %v4952, %v5254
      %v6217 = vsel %vm948, %v4953, %v5256
      %v6218 = vsel %vm948, %v4954, %v5258
      %v6219 = vsel %vm948, %v4955, %v5260
      %v6220 = vsel %vm948, %v4956, %v5262
      %v6221 = vsel %vm948, %v4957, %v5264
      %v6222 = vsel %vm948, %v4958, %v5266
      %v6223 = vsel %vm948, %v4959, %v5268
      %v6224 = vsel %vm948, %v4960, %v5270
      %v6225 = vsel %vm948, %v4961, %v5272
      %v6226 = vsel %vm948, %v4962, %v5274
      %v6227 = vsel %vm948, %v4963, %v5276
      %v6228 = vsel %vm948, %v4964, %v5278
      %v6229 = vsel %vm948, %v4965, %v5280
      %v6230 = vsel %vm948, %v4966, %v5282
      %v6231 = vsel %vm948, %v4967, %v5284
      %v6232 = vsel %vm948, %v4968, %v5286
      %v6233 = vsel %vm948, %v4969, %v5288
      %v6234 = vsel %vm948, %v4970, %v5290
      %v6235 = vsel %vm948, %v4971, %v5292
      %v6236 = vsel %vm948, %v4972, %v5294
      %v6237 = vsel %vm948, %v4973, %v5296
      %v6238 = vsel %vm948, %v4974, %v5298
      %v6239 = vsel %vm948, %v4975, %v5300
      %v6240 = vsel %vm948, %v4976, %v5302
      %v6241 = vsel %vm948, %v4977, %v5304
      %v6242 = vsel %vm948, %v4978, %v5306
      %v6243 = vsel %vm948, %v4979, %v5308
      %v6244 = vsel %vm948, %v4980, %v5310
      %v6245 = vsel %vm948, %v4981, %v5312
      %v6246 = vsel %vm948, %v4982, %v5314
      %v6247 = vsel %vm2572, %v6215, %v5380
      %v6248 = vsel %vm2572, %v6216, %v5382
      %v6249 = vsel %vm2572, %v6217, %v5384
      %v6250 = vsel %vm2572, %v6218, %v5386
      %v6251 = vsel %vm2572, %v6219, %v5388
      %v6252 = vsel %vm2572, %v6220, %v5390
      %v6253 = vsel %vm2572, %v6221, %v5392
      %v6254 = vsel %vm2572, %v6222, %v5394
      %v6255 = vsel %vm2572, %v6223, %v5396
      %v6256 = vsel %vm2572, %v6224, %v5398
      %v6257 = vsel %vm2572, %v6225, %v5400
      %v6258 = vsel %vm2572, %v6226, %v5402
      %v6259 = vsel %vm2572, %v6227, %v5404
      %v6260 = vsel %vm2572, %v6228, %v5406
      %v6261 = vsel %vm2572, %v6229, %v5408
      %v6262 = vsel %vm2572, %v6230, %v5410
      %v6263 = vsel %vm2572, %v6231, %v5412
      %v6264 = vsel %vm2572, %v6232, %v5414
      %v6265 = vsel %vm2572, %v6233, %v5416
      %v6266 = vsel %vm2572, %v6234, %v5418
      %v6267 = vsel %vm2572, %v6235, %v5420
      %v6268 = vsel %vm2572, %v6236, %v5422
      %v6269 = vsel %vm2572, %v6237, %v5424
      %v6270 = vsel %vm2572, %v6238, %v5426
      %v6271 = vsel %vm2572, %v6239, %v5428
      %v6272 = vsel %vm2572, %v6240, %v5430
      %v6273 = vsel %vm2572, %v6241, %v5432
      %v6274 = vsel %vm2572, %v6242, %v5434
      %v6275 = vsel %vm2572, %v6243, %v5436
      %v6276 = vsel %vm2572, %v6244, %v5438
      %v6277 = vsel %vm2572, %v6245, %v5440
      %v6278 = vsel %vm2572, %v6246, %v5442
      %v6279 = vsel %vm2638, %v6247, %v5508
      %v6280 = vsel %vm2638, %v6248, %v5510
      %v6281 = vsel %vm2638, %v6249, %v5512
      %v6282 = vsel %vm2638, %v6250, %v5514
      %v6283 = vsel %vm2638, %v6251, %v5516
      %v6284 = vsel %vm2638, %v6252, %v5518
      %v6285 = vsel %vm2638, %v6253, %v5520
      %v6286 = vsel %vm2638, %v6254, %v5522
      %v6287 = vsel %vm2638, %v6255, %v5524
      %v6288 = vsel %vm2638, %v6256, %v5526
      %v6289 = vsel %vm2638, %v6257, %v5528
      %v6290 = vsel %vm2638, %v6258, %v5530
      %v6291 = vsel %vm2638, %v6259, %v5532
      %v6292 = vsel %vm2638, %v6260, %v5534
      %v6293 = vsel %vm2638, %v6261, %v5536
      %v6294 = vsel %vm2638, %v6262, %v5538
      %v6295 = vsel %vm2638, %v6263, %v5540
      %v6296 = vsel %vm2638, %v6264, %v5542
      %v6297 = vsel %vm2638, %v6265, %v5544
      %v6298 = vsel %vm2638, %v6266, %v5546
      %v6299 = vsel %vm2638, %v6267, %v5548
      %v6300 = vsel %vm2638, %v6268, %v5550
      %v6301 = vsel %vm2638, %v6269, %v5552
      %v6302 = vsel %vm2638, %v6270, %v5554
      %v6303 = vsel %vm2638, %v6271, %v5556
      %v6304 = vsel %vm2638, %v6272, %v5558
      %v6305 = vsel %vm2638, %v6273, %v5560
      %v6306 = vsel %vm2638, %v6274, %v5562
      %v6307 = vsel %vm2638, %v6275, %v5564
      %v6308 = vsel %vm2638, %v6276, %v5566
      %v6309 = vsel %vm2638, %v6277, %v5568
      %v6310 = vsel %vm2638, %v6278, %v5570
      %v6311 = vsel %vm2704, %v6279, %v5636
      %v6312 = vsel %vm2704, %v6280, %v5638
      %v6313 = vsel %vm2704, %v6281, %v5640
      %v6314 = vsel %vm2704, %v6282, %v5642
      %v6315 = vsel %vm2704, %v6283, %v5644
      %v6316 = vsel %vm2704, %v6284, %v5646
      %v6317 = vsel %vm2704, %v6285, %v5648
      %v6318 = vsel %vm2704, %v6286, %v5650
      %v6319 = vsel %vm2704, %v6287, %v5652
      %v6320 = vsel %vm2704, %v6288, %v5654
      %v6321 = vsel %vm2704, %v6289, %v5656
      %v6322 = vsel %vm2704, %v6290, %v5658
      %v6323 = vsel %vm2704, %v6291, %v5660
      %v6324 = vsel %vm2704, %v6292, %v5662
      %v6325 = vsel %vm2704, %v6293, %v5664
      %v6326 = vsel %vm2704, %v6294, %v5666
      %v6327 = vsel %vm2704, %v6295, %v5668
      %v6328 = vsel %vm2704, %v6296, %v5670
      %v6329 = vsel %vm2704, %v6297, %v5672
      %v6330 = vsel %vm2704, %v6298, %v5674
      %v6331 = vsel %vm2704, %v6299, %v5676
      %v6332 = vsel %vm2704, %v6300, %v5678
      %v6333 = vsel %vm2704, %v6301, %v5680
      %v6334 = vsel %vm2704, %v6302, %v5682
      %v6335 = vsel %vm2704, %v6303, %v5684
      %v6336 = vsel %vm2704, %v6304, %v5686
      %v6337 = vsel %vm2704, %v6305, %v5688
      %v6338 = vsel %vm2704, %v6306, %v5690
      %v6339 = vsel %vm2704, %v6307, %v5692
      %v6340 = vsel %vm2704, %v6308, %v5694
      %v6341 = vsel %vm2704, %v6309, %v5696
      %v6342 = vsel %vm2704, %v6310, %v5698
      %v6343 = vsel %vm4450, %v6311, %v5764
      %v6344 = vsel %vm4450, %v6312, %v5766
      %v6345 = vsel %vm4450, %v6313, %v5768
      %v6346 = vsel %vm4450, %v6314, %v5770
      %v6347 = vsel %vm4450, %v6315, %v5772
      %v6348 = vsel %vm4450, %v6316, %v5774
      %v6349 = vsel %vm4450, %v6317, %v5776
      %v6350 = vsel %vm4450, %v6318, %v5778
      %v6351 = vsel %vm4450, %v6319, %v5780
      %v6352 = vsel %vm4450, %v6320, %v5782
      %v6353 = vsel %vm4450, %v6321, %v5784
      %v6354 = vsel %vm4450, %v6322, %v5786
      %v6355 = vsel %vm4450, %v6323, %v5788
      %v6356 = vsel %vm4450, %v6324, %v5790
      %v6357 = vsel %vm4450, %v6325, %v5792
      %v6358 = vsel %vm4450, %v6326, %v5794
      %v6359 = vsel %vm4450, %v6327, %v5796
      %v6360 = vsel %vm4450, %v6328, %v5798
      %v6361 = vsel %vm4450, %v6329, %v5800
      %v6362 = vsel %vm4450, %v6330, %v5802
      %v6363 = vsel %vm4450, %v6331, %v5804
      %v6364 = vsel %vm4450, %v6332, %v5806
      %v6365 = vsel %vm4450, %v6333, %v5808
      %v6366 = vsel %vm4450, %v6334, %v5810
      %v6367 = vsel %vm4450, %v6335, %v5812
      %v6368 = vsel %vm4450, %v6336, %v5814
      %v6369 = vsel %vm4450, %v6337, %v5816
      %v6370 = vsel %vm4450, %v6338, %v5818
      %v6371 = vsel %vm4450, %v6339, %v5820
      %v6372 = vsel %vm4450, %v6340, %v5822
      %v6373 = vsel %vm4450, %v6341, %v5824
      %v6374 = vsel %vm4450, %v6342, %v5826
      %v6375 = vsel %vm4483, %v6343, %v5892
      %v6376 = vsel %vm4483, %v6344, %v5894
      %v6377 = vsel %vm4483, %v6345, %v5896
      %v6378 = vsel %vm4483, %v6346, %v5898
      %v6379 = vsel %vm4483, %v6347, %v5900
      %v6380 = vsel %vm4483, %v6348, %v5902
      %v6381 = vsel %vm4483, %v6349, %v5904
      %v6382 = vsel %vm4483, %v6350, %v5906
      %v6383 = vsel %vm4483, %v6351, %v5908
      %v6384 = vsel %vm4483, %v6352, %v5910
      %v6385 = vsel %vm4483, %v6353, %v5912
      %v6386 = vsel %vm4483, %v6354, %v5914
      %v6387 = vsel %vm4483, %v6355, %v5916
      %v6388 = vsel %vm4483, %v6356, %v5918
      %v6389 = vsel %vm4483, %v6357, %v5920
      %v6390 = vsel %vm4483, %v6358, %v5922
      %v6391 = vsel %vm4483, %v6359, %v5924
      %v6392 = vsel %vm4483, %v6360, %v5926
      %v6393 = vsel %vm4483, %v6361, %v5928
      %v6394 = vsel %vm4483, %v6362, %v5930
      %v6395 = vsel %vm4483, %v6363, %v5932
      %v6396 = vsel %vm4483, %v6364, %v5934
      %v6397 = vsel %vm4483, %v6365, %v5936
      %v6398 = vsel %vm4483, %v6366, %v5938
      %v6399 = vsel %vm4483, %v6367, %v5940
      %v6400 = vsel %vm4483, %v6368, %v5942
      %v6401 = vsel %vm4483, %v6369, %v5944
      %v6402 = vsel %vm4483, %v6370, %v5946
      %v6403 = vsel %vm4483, %v6371, %v5948
      %v6404 = vsel %vm4483, %v6372, %v5950
      %v6405 = vsel %vm4483, %v6373, %v5952
      %v6406 = vsel %vm4483, %v6374, %v5954
      %v6407 = vsel %vm4516, %v6375, %v5992
      %v6408 = vsel %vm4516, %v6376, %v5994
      %v6409 = vsel %vm4516, %v6377, %v5996
      %v6410 = vsel %vm4516, %v6378, %v5998
      %v6411 = vsel %vm4516, %v6379, %v6000
      %v6412 = vsel %vm4516, %v6380, %v6002
      %v6413 = vsel %vm4516, %v6381, %v6004
      %v6414 = vsel %vm4516, %v6382, %v6006
      %v6415 = vsel %vm4516, %v6383, %v6008
      %v6416 = vsel %vm4516, %v6384, %v6010
      %v6417 = vsel %vm4516, %v6385, %v6012
      %v6418 = vsel %vm4516, %v6386, %v6014
      %v6419 = vsel %vm4516, %v6387, %v6016
      %v6420 = vsel %vm4516, %v6388, %v6018
      %v6421 = vsel %vm4516, %v6389, %v6020
      %v6422 = vsel %vm4516, %v6390, %v6022
      %v6423 = vsel %vm4516, %v6391, %v6024
      %v6424 = vsel %vm4516, %v6392, %v6026
      %v6425 = vsel %vm4516, %v6393, %v6028
      %v6426 = vsel %vm4516, %v6394, %v6030
      %v6427 = vsel %vm4516, %v6395, %v6032
      %v6428 = vsel %vm4516, %v6396, %v6034
      %v6429 = vsel %vm4516, %v6397, %v6036
      %v6430 = vsel %vm4516, %v6398, %v6038
      %v6431 = vsel %vm4516, %v6399, %v6040
      %v6432 = vsel %vm4516, %v6400, %v6042
      %v6433 = vsel %vm4516, %v6401, %v6044
      %v6434 = vsel %vm4516, %v6402, %v6046
      %v6435 = vsel %vm4516, %v6403, %v6048
      %v6436 = vsel %vm4516, %v6404, %v6050
      %v6437 = vsel %vm4516, %v6405, %v6052
      %v6438 = vsel %vm4516, %v6406, %v6054
      %v6439 = vsel %vm4549, %v6407, %v6120
      %v6440 = vsel %vm4549, %v6408, %v6122
      %v6441 = vsel %vm4549, %v6409, %v6124
      %v6442 = vsel %vm4549, %v6410, %v6126
      %v6443 = vsel %vm4549, %v6411, %v6128
      %v6444 = vsel %vm4549, %v6412, %v6130
      %v6445 = vsel %vm4549, %v6413, %v6132
      %v6446 = vsel %vm4549, %v6414, %v6134
      %v6447 = vsel %vm4549, %v6415, %v6136
      %v6448 = vsel %vm4549, %v6416, %v6138
      %v6449 = vsel %vm4549, %v6417, %v6140
      %v6450 = vsel %vm4549, %v6418, %v6142
      %v6451 = vsel %vm4549, %v6419, %v6144
      %v6452 = vsel %vm4549, %v6420, %v6146
      %v6453 = vsel %vm4549, %v6421, %v6148
      %v6454 = vsel %vm4549, %v6422, %v6150
      %v6455 = vsel %vm4549, %v6423, %v6152
      %v6456 = vsel %vm4549, %v6424, %v6154
      %v6457 = vsel %vm4549, %v6425, %v6156
      %v6458 = vsel %vm4549, %v6426, %v6158
      %v6459 = vsel %vm4549, %v6427, %v6160
      %v6460 = vsel %vm4549, %v6428, %v6162
      %v6461 = vsel %vm4549, %v6429, %v6164
      %v6462 = vsel %vm4549, %v6430, %v6166
      %v6463 = vsel %vm4549, %v6431, %v6168
      %v6464 = vsel %vm4549, %v6432, %v6170
      %v6465 = vsel %vm4549, %v6433, %v6172
      %v6466 = vsel %vm4549, %v6434, %v6174
      %v6467 = vsel %vm4549, %v6435, %v6176
      %v6468 = vsel %vm4549, %v6436, %v6178
      %v6469 = vsel %vm4549, %v6437, %v6180
      %v6470 = vsel %vm4549, %v6438, %v6182
      %v6471 = vpack.c.bf16 %v6440, %v6439
      %v6472 = vpack.c.bf16 %v6442, %v6441
      %v6473 = vpack.c.bf16 %v6444, %v6443
      %v6474 = vpack.c.bf16 %v6446, %v6445
      %v6475 = vpack.c.bf16 %v6448, %v6447
      %v6476 = vpack.c.bf16 %v6450, %v6449
      %v6477 = vpack.c.bf16 %v6452, %v6451
      %v6478 = vpack.c.bf16 %v6454, %v6453
      %v6479 = vpack.c.bf16 %v6456, %v6455
      %v6480 = vpack.c.bf16 %v6458, %v6457
      %v6481 = vpack.c.bf16 %v6460, %v6459
      %v6482 = vpack.c.bf16 %v6462, %v6461
      %v6483 = vpack.c.bf16 %v6464, %v6463
      %v6484 = vpack.c.bf16 %v6466, %v6465
      %v6485 = vpack.c.bf16 %v6468, %v6467
      %v6486 = vpack.c.bf16 %v6470, %v6469
      %v6487 = vld [vmem:[%s5] sm:$0xf]
      %v6488 = vld [vmem:[%s5 + $0x4] sm:$0xf]
      %v6489 = vld [vmem:[%s5 + $0x8] sm:$0xf]
      %v6490 = vld [vmem:[%s5 + $0xc] sm:$0xf]
      %v6491 = vld [vmem:[%s5 + $0x10] sm:$0xf]
      %v6492 = vld [vmem:[%s5 + $0x14] sm:$0xf]
      %v6493 = vld [vmem:[%s5 + $0x18] sm:$0xf]
      %v6494 = vld [vmem:[%s5 + $0x1c] sm:$0xf]
      %v6495 = vld [vmem:[%s5 + $0x20] sm:$0xf]
      %v6496 = vld [vmem:[%s6] sm:$0x1]
      %v6498 = vlaneseq
      %v6499 = vshrl.u32 %v6498, 7
      %v6500 = vsub.s32 0, %v6499
      %v6501 = vrot.slane %v6496, %v6500
      %v6512 = vunpack.c.l.b16 %v6487
      %v6513 = vunpack.c.l.b16 %v6488
      %v6514 = vunpack.c.l.b16 %v6489
      %v6515 = vunpack.c.l.b16 %v6490
      %v6516 = vunpack.c.l.b16 %v6491
      %v6517 = vunpack.c.l.b16 %v6492
      %v6518 = vunpack.c.l.b16 %v6493
      %v6519 = vunpack.c.l.b16 %v6494
      %v6520 = vunpack.c.l.b16 %v6495
      %v6521 = vpack.c.b16 %v6513, %v6512
      %v6522 = vpack.c.b16 %v6515, %v6514
      %v6523 = vpack.c.b16 %v6517, %v6516
      %v6524 = vpack.c.b16 %v6519, %v6518
      %v6525 = vpack.c.b16 %v6520, %v6520
      %v6531 = vsel %vm4641, %v6471, 0
      %v6534 = vsel %vm4641, %v6472, 0
      %v6537 = vsel %vm4641, %v6473, 0
      %v6540 = vsel %vm4641, %v6474, 0
      %v6543 = vsel %vm4641, %v6475, 0
      %v6546 = vsel %vm4641, %v6476, 0
      %v6549 = vsel %vm4641, %v6477, 0
      %v6552 = vsel %vm4641, %v6478, 0
      %v6555 = vsel %vm4641, %v6479, 0
      %v6558 = vsel %vm4641, %v6480, 0
      %v6561 = vsel %vm4641, %v6481, 0
      %v6564 = vsel %vm4641, %v6482, 0
      %v6567 = vsel %vm4641, %v6483, 0
      %v6570 = vsel %vm4641, %v6484, 0
      %v6573 = vsel %vm4641, %v6485, 0
      %v6576 = vsel %vm4641, %v6486, 0
      %v6579 = vsel %vm4690, %v6525, 0
      %6581 = vmatprep.subr.bf16.mxu0 0
      %6582 = vmatpush1.bf16.msra.mxu0 0
      %6583 = vmatprep.subr.bf16.mxu0 0
      %6584 = vmatpush1.bf16.msra.mxu0 0
      %6585 = vmatprep.subr.bf16.mxu0 0
      %6586 = vmatpush1.bf16.msra.mxu0 0
      %6587 = vmatprep.subr.bf16.mxu0 0
      %6588 = vmatpush1.bf16.msra.mxu0 %v6579
      %6589 = vmatprep.subr.bf16.mxu0 0
      %6590 = vmatpush1.bf16.msra.mxu0 %v6524
      %6591 = vmatprep.subr.bf16.mxu0 0
      %6592 = vmatpush1.bf16.msra.mxu0 %v6523
      %6593 = vmatprep.subr.bf16.mxu0 0
      %6594 = vmatpush1.bf16.msra.mxu0 %v6522
      %6595 = vmatprep.subr.bf16.mxu0 0
      %6596 = vmatpush1.bf16.msra.mxu0 %v6521
      %6597 = vmatprep.subr.bf16.mxu0 0
      %6598 = vmatpush2.bf16.msra.mxu0 0
      %6599 = vmatprep.subr.bf16.mxu0 0
      %6600 = vmatpush2.bf16.msra.mxu0 0
      %6601 = vmatprep.subr.bf16.mxu0 0
      %6602 = vmatpush2.bf16.msra.mxu0 0
      %6603 = vmatprep.subr.bf16.mxu0 0
      %6604 = vmatpush2.bf16.msra.mxu0 0
      %6605 = vmatprep.subr.bf16.mxu0 0
      %6606 = vmatpush2.bf16.msra.mxu0 0
      %6607 = vmatprep.subr.bf16.mxu0 0
      %6608 = vmatpush2.bf16.msra.mxu0 0
      %6609 = vmatprep.subr.bf16.mxu0 0
      %6610 = vmatpush2.bf16.msra.mxu0 0
      %6611 = vmatprep.subr.bf16.mxu0 0
      %6612 = vmatpush2.bf16.msra.mxu0 0
      %6613 = vmatprep.mubr.bf16.mxu0 0
      %6614 = vmatmul.mubr.bf16.gmra.mxu0 %v6531
      %v6615 = vpop.f32.mrf.mxu0
      %v6616 = vadd.f32 %v6501, %v6615
      %v6617 = vpop.f32.mrf.mxu0
      %v6618 = vpop.f32.mrf.mxu0
      %v6619 = vadd.f32 %v6501, %v6618
      %v6620 = vpop.f32.mrf.mxu0
      %6621 = vmatprep.mubr.bf16.mxu0 0
      %6622 = vmatmul.mubr.bf16.gmra.mxu0 %v6534
      %v6623 = vpop.f32.mrf.mxu0
      %v6624 = vadd.f32 %v6501, %v6623
      %v6625 = vpop.f32.mrf.mxu0
      %v6626 = vpop.f32.mrf.mxu0
      %v6627 = vadd.f32 %v6501, %v6626
      %v6628 = vpop.f32.mrf.mxu0
      %6629 = vmatprep.mubr.bf16.mxu0 0
      %6630 = vmatmul.mubr.bf16.gmra.mxu0 %v6537
      %v6631 = vpop.f32.mrf.mxu0
      %v6632 = vadd.f32 %v6501, %v6631
      %v6633 = vpop.f32.mrf.mxu0
      %v6634 = vpop.f32.mrf.mxu0
      %v6635 = vadd.f32 %v6501, %v6634
      %v6636 = vpop.f32.mrf.mxu0
      %6637 = vmatprep.mubr.bf16.mxu0 0
      %6638 = vmatmul.mubr.bf16.gmra.mxu0 %v6540
      %v6639 = vpop.f32.mrf.mxu0
      %v6640 = vadd.f32 %v6501, %v6639
      %v6641 = vpop.f32.mrf.mxu0
      %v6642 = vpop.f32.mrf.mxu0
      %v6643 = vadd.f32 %v6501, %v6642
      %v6644 = vpop.f32.mrf.mxu0
      %6645 = vmatprep.mubr.bf16.mxu0 0
      %6646 = vmatmul.mubr.bf16.gmra.mxu0 %v6543
      %v6647 = vpop.f32.mrf.mxu0
      %v6648 = vadd.f32 %v6501, %v6647
      %v6649 = vpop.f32.mrf.mxu0
      %v6650 = vpop.f32.mrf.mxu0
      %v6651 = vadd.f32 %v6501, %v6650
      %v6652 = vpop.f32.mrf.mxu0
      %6653 = vmatprep.mubr.bf16.mxu0 0
      %6654 = vmatmul.mubr.bf16.gmra.mxu0 %v6546
      %v6655 = vpop.f32.mrf.mxu0
      %v6656 = vadd.f32 %v6501, %v6655
      %v6657 = vpop.f32.mrf.mxu0
      %v6658 = vpop.f32.mrf.mxu0
      %v6659 = vadd.f32 %v6501, %v6658
      %v6660 = vpop.f32.mrf.mxu0
      %6661 = vmatprep.mubr.bf16.mxu0 0
      %6662 = vmatmul.mubr.bf16.gmra.mxu0 %v6549
      %v6663 = vpop.f32.mrf.mxu0
      %v6664 = vadd.f32 %v6501, %v6663
      %v6665 = vpop.f32.mrf.mxu0
      %v6666 = vpop.f32.mrf.mxu0
      %v6667 = vadd.f32 %v6501, %v6666
      %v6668 = vpop.f32.mrf.mxu0
      %6669 = vmatprep.mubr.bf16.mxu0 0
      %6670 = vmatmul.mubr.bf16.gmra.mxu0 %v6552
      %v6671 = vpop.f32.mrf.mxu0
      %v6672 = vadd.f32 %v6501, %v6671
      %v6673 = vpop.f32.mrf.mxu0
      %v6674 = vpop.f32.mrf.mxu0
      %v6675 = vadd.f32 %v6501, %v6674
      %v6676 = vpop.f32.mrf.mxu0
      %6677 = vmatprep.mubr.bf16.mxu0 0
      %6678 = vmatmul.mubr.bf16.gmra.mxu0 %v6555
      %v6679 = vpop.f32.mrf.mxu0
      %v6680 = vadd.f32 %v6501, %v6679
      %v6681 = vpop.f32.mrf.mxu0
      %v6682 = vpop.f32.mrf.mxu0
      %v6683 = vadd.f32 %v6501, %v6682
      %v6684 = vpop.f32.mrf.mxu0
      %6685 = vmatprep.mubr.bf16.mxu0 0
      %6686 = vmatmul.mubr.bf16.gmra.mxu0 %v6558
      %v6687 = vpop.f32.mrf.mxu0
      %v6688 = vadd.f32 %v6501, %v6687
      %v6689 = vpop.f32.mrf.mxu0
      %v6690 = vpop.f32.mrf.mxu0
      %v6691 = vadd.f32 %v6501, %v6690
      %v6692 = vpop.f32.mrf.mxu0
      %6693 = vmatprep.mubr.bf16.mxu0 0
      %6694 = vmatmul.mubr.bf16.gmra.mxu0 %v6561
      %v6695 = vpop.f32.mrf.mxu0
      %v6696 = vadd.f32 %v6501, %v6695
      %v6697 = vpop.f32.mrf.mxu0
      %v6698 = vpop.f32.mrf.mxu0
      %v6699 = vadd.f32 %v6501, %v6698
      %v6700 = vpop.f32.mrf.mxu0
      %6701 = vmatprep.mubr.bf16.mxu0 0
      %6702 = vmatmul.mubr.bf16.gmra.mxu0 %v6564
      %v6703 = vpop.f32.mrf.mxu0
      %v6704 = vadd.f32 %v6501, %v6703
      %v6705 = vpop.f32.mrf.mxu0
      %v6706 = vpop.f32.mrf.mxu0
      %v6707 = vadd.f32 %v6501, %v6706
      %v6708 = vpop.f32.mrf.mxu0
      %6709 = vmatprep.mubr.bf16.mxu0 0
      %6710 = vmatmul.mubr.bf16.gmra.mxu0 %v6567
      %v6711 = vpop.f32.mrf.mxu0
      %v6712 = vadd.f32 %v6501, %v6711
      %v6713 = vpop.f32.mrf.mxu0
      %v6714 = vpop.f32.mrf.mxu0
      %v6715 = vadd.f32 %v6501, %v6714
      %v6716 = vpop.f32.mrf.mxu0
      %6717 = vmatprep.mubr.bf16.mxu0 0
      %6718 = vmatmul.mubr.bf16.gmra.mxu0 %v6570
      %v6719 = vpop.f32.mrf.mxu0
      %v6720 = vadd.f32 %v6501, %v6719
      %v6721 = vpop.f32.mrf.mxu0
      %v6722 = vpop.f32.mrf.mxu0
      %v6723 = vadd.f32 %v6501, %v6722
      %v6724 = vpop.f32.mrf.mxu0
      %6725 = vmatprep.mubr.bf16.mxu0 0
      %6726 = vmatmul.mubr.bf16.gmra.mxu0 %v6573
      %v6727 = vpop.f32.mrf.mxu0
      %v6728 = vadd.f32 %v6501, %v6727
      %v6729 = vpop.f32.mrf.mxu0
      %v6730 = vpop.f32.mrf.mxu0
      %v6731 = vadd.f32 %v6501, %v6730
      %v6732 = vpop.f32.mrf.mxu0
      %6733 = vmatprep.mubr.bf16.mxu0 0
      %6734 = vmatmul.mubr.bf16.gmra.mxu0 %v6576
      %v6735 = vpop.f32.mrf.mxu0
      %v6736 = vadd.f32 %v6501, %v6735
      %v6737 = vpop.f32.mrf.mxu0
      %v6738 = vpop.f32.mrf.mxu0
      %v6739 = vadd.f32 %v6501, %v6738
      %v6740 = vpop.f32.mrf.mxu0
      %6741 = vdwg.mxu0
      %v6742 = vadd.f32 %v2868, %v6616
      %v6743 = vadd.f32 %v2871, %v6619
      %v6744 = vadd.f32 %v2876, %v6624
      %v6745 = vadd.f32 %v2879, %v6627
      %v6746 = vadd.f32 %v2884, %v6632
      %v6747 = vadd.f32 %v2887, %v6635
      %v6748 = vadd.f32 %v2892, %v6640
      %v6749 = vadd.f32 %v2895, %v6643
      %v6750 = vadd.f32 %v2900, %v6648
      %v6751 = vadd.f32 %v2903, %v6651
      %v6752 = vadd.f32 %v2908, %v6656
      %v6753 = vadd.f32 %v2911, %v6659
      %v6754 = vadd.f32 %v2916, %v6664
      %v6755 = vadd.f32 %v2919, %v6667
      %v6756 = vadd.f32 %v2924, %v6672
      %v6757 = vadd.f32 %v2927, %v6675
      %v6758 = vadd.f32 %v2932, %v6680
      %v6759 = vadd.f32 %v2935, %v6683
      %v6760 = vadd.f32 %v2940, %v6688
      %v6761 = vadd.f32 %v2943, %v6691
      %v6762 = vadd.f32 %v2948, %v6696
      %v6763 = vadd.f32 %v2951, %v6699
      %v6764 = vadd.f32 %v2956, %v6704
      %v6765 = vadd.f32 %v2959, %v6707
      %v6766 = vadd.f32 %v2964, %v6712
      %v6767 = vadd.f32 %v2967, %v6715
      %v6768 = vadd.f32 %v2972, %v6720
      %v6769 = vadd.f32 %v2975, %v6723
      %v6770 = vadd.f32 %v2980, %v6728
      %v6771 = vadd.f32 %v2983, %v6731
      %v6772 = vadd.f32 %v2988, %v6736
      %v6773 = vadd.f32 %v2991, %v6739
      %6774 = vst.msk [vmem:[#allocation3 + $0x18] sm:$0xff] %vm948, %v6742
      %6775 = vst.msk [vmem:[#allocation3 + $0x20] sm:$0xff] %vm948, %v6743
      %6776 = vst.msk [vmem:[#allocation3 + $0x28] sm:$0xff] %vm948, %v6744
      %6777 = vst.msk [vmem:[#allocation3 + $0x30] sm:$0xff] %vm948, %v6745
      %6778 = vst.msk [vmem:[#allocation3 + $0x38] sm:$0xff] %vm948, %v6746
      %6779 = vst.msk [vmem:[#allocation3 + $0x40] sm:$0xff] %vm948, %v6747
      %6780 = vst.msk [vmem:[#allocation3 + $0x48] sm:$0xff] %vm948, %v6748
      %6781 = vst.msk [vmem:[#allocation3 + $0x50] sm:$0xff] %vm948, %v6749
      %6782 = vst.msk [vmem:[#allocation3 + $0x58] sm:$0xff] %vm948, %v6750
      %6783 = vst.msk [vmem:[#allocation3 + $0x60] sm:$0xff] %vm948, %v6751
      %6784 = vst.msk [vmem:[#allocation3 + $0x68] sm:$0xff] %vm948, %v6752
      %6785 = vst.msk [vmem:[#allocation3 + $0x70] sm:$0xff] %vm948, %v6753
      %6786 = vst.msk [vmem:[#allocation3 + $0x78] sm:$0xff] %vm948, %v6754
      %6787 = vst.msk [vmem:[#allocation3 + $0x80] sm:$0xff] %vm948, %v6755
      %6788 = vst.msk [vmem:[#allocation3 + $0x88] sm:$0xff] %vm948, %v6756
      %6789 = vst.msk [vmem:[#allocation3 + $0x90] sm:$0xff] %vm948, %v6757
      %6790 = vst.msk [vmem:[#allocation3 + $0x98] sm:$0xff] %vm948, %v6758
      %6791 = vst.msk [vmem:[#allocation3 + $0xa0] sm:$0xff] %vm948, %v6759
      %6792 = vst.msk [vmem:[#allocation3 + $0xa8] sm:$0xff] %vm948, %v6760
      %6793 = vst.msk [vmem:[#allocation3 + $0xb0] sm:$0xff] %vm948, %v6761
      %6794 = vst.msk [vmem:[#allocation3 + $0xb8] sm:$0xff] %vm948, %v6762
      %6795 = vst.msk [vmem:[#allocation3 + $0xc0] sm:$0xff] %vm948, %v6763
      %6796 = vst.msk [vmem:[#allocation3 + $0xc8] sm:$0xff] %vm948, %v6764
      %6797 = vst.msk [vmem:[#allocation3 + $0xd0] sm:$0xff] %vm948, %v6765
      %6798 = vst.msk [vmem:[#allocation3 + $0xd8] sm:$0xff] %vm948, %v6766
      %6799 = vst.msk [vmem:[#allocation3 + $0xe0] sm:$0xff] %vm948, %v6767
      %6800 = vst.msk [vmem:[#allocation3 + $0xe8] sm:$0xff] %vm948, %v6768
      %6801 = vst.msk [vmem:[#allocation3 + $0xf0] sm:$0xff] %vm948, %v6769
      %6802 = vst.msk [vmem:[#allocation3 + $0xf8] sm:$0xff] %vm948, %v6770
      %6803 = vst.msk [vmem:[#allocation3 + $0x100] sm:$0xff] %vm948, %v6771
      %6804 = vst.msk [vmem:[#allocation3 + $0x108] sm:$0xff] %vm948, %v6772
      %6805 = vst.msk [vmem:[#allocation3 + $0x110] sm:$0xff] %vm948, %v6773
      %v6806 = vld [vmem:[#allocation3 + $0x7] sm:$0xff]
      %v6807 = vld [vmem:[#allocation3 + $0xf] sm:$0xff]
      %v6808 = vld [vmem:[#allocation3 + $0x17] sm:$0xff]
      %v6809 = vld [vmem:[#allocation3 + $0x1f] sm:$0xff]
      %v6810 = vld [vmem:[#allocation3 + $0x27] sm:$0xff]
      %v6811 = vld [vmem:[#allocation3 + $0x2f] sm:$0xff]
      %v6812 = vld [vmem:[#allocation3 + $0x37] sm:$0xff]
      %v6813 = vld [vmem:[#allocation3 + $0x3f] sm:$0xff]
      %v6814 = vld [vmem:[#allocation3 + $0x47] sm:$0xff]
      %v6815 = vld [vmem:[#allocation3 + $0x4f] sm:$0xff]
      %v6816 = vld [vmem:[#allocation3 + $0x57] sm:$0xff]
      %v6817 = vld [vmem:[#allocation3 + $0x5f] sm:$0xff]
      %v6818 = vld [vmem:[#allocation3 + $0x67] sm:$0xff]
      %v6819 = vld [vmem:[#allocation3 + $0x6f] sm:$0xff]
      %v6820 = vld [vmem:[#allocation3 + $0x77] sm:$0xff]
      %v6821 = vld [vmem:[#allocation3 + $0x7f] sm:$0xff]
      %v6822 = vld [vmem:[#allocation3 + $0x87] sm:$0xff]
      %v6823 = vld [vmem:[#allocation3 + $0x8f] sm:$0xff]
      %v6824 = vld [vmem:[#allocation3 + $0x97] sm:$0xff]
      %v6825 = vld [vmem:[#allocation3 + $0x9f] sm:$0xff]
      %v6826 = vld [vmem:[#allocation3 + $0xa7] sm:$0xff]
      %v6827 = vld [vmem:[#allocation3 + $0xaf] sm:$0xff]
      %v6828 = vld [vmem:[#allocation3 + $0xb7] sm:$0xff]
      %v6829 = vld [vmem:[#allocation3 + $0xbf] sm:$0xff]
      %v6830 = vld [vmem:[#allocation3 + $0xc7] sm:$0xff]
      %v6831 = vld [vmem:[#allocation3 + $0xcf] sm:$0xff]
      %v6832 = vld [vmem:[#allocation3 + $0xd7] sm:$0xff]
      %v6833 = vld [vmem:[#allocation3 + $0xdf] sm:$0xff]
      %v6834 = vld [vmem:[#allocation3 + $0xe7] sm:$0xff]
      %v6835 = vld [vmem:[#allocation3 + $0xef] sm:$0xff]
      %v6836 = vld [vmem:[#allocation3 + $0xf7] sm:$0xff]
      %v6837 = vld [vmem:[#allocation3 + $0xff] sm:$0xff]
      %v6838 = vsel %vm1115, 0.0, %v6806
      %v6839 = vsel %vm1116, 0.0, %v6807
      %v6840 = vsel %vm1117, 0.0, %v6808
      %v6841 = vsel %vm1118, 0.0, %v6809
      %v6842 = vsel %vm1119, 0.0, %v6810
      %v6843 = vsel %vm1120, 0.0, %v6811
      %v6844 = vsel %vm1121, 0.0, %v6812
      %v6845 = vsel %vm1122, 0.0, %v6813
      %v6846 = vsel %vm1123, 0.0, %v6814
      %v6847 = vsel %vm1124, 0.0, %v6815
      %v6848 = vsel %vm1125, 0.0, %v6816
      %v6849 = vsel %vm1126, 0.0, %v6817
      %v6850 = vsel %vm1127, 0.0, %v6818
      %v6851 = vsel %vm1128, 0.0, %v6819
      %v6852 = vsel %vm1129, 0.0, %v6820
      %v6853 = vsel %vm1130, 0.0, %v6821
      %v6854 = vsel %vm1131, 0.0, %v6822
      %v6855 = vsel %vm1132, 0.0, %v6823
      %v6856 = vsel %vm1133, 0.0, %v6824
      %v6857 = vsel %vm1134, 0.0, %v6825
      %v6858 = vsel %vm1135, 0.0, %v6826
      %v6859 = vsel %vm1136, 0.0, %v6827
      %v6860 = vsel %vm1137, 0.0, %v6828
      %v6861 = vsel %vm1138, 0.0, %v6829
      %v6862 = vsel %vm1139, 0.0, %v6830
      %v6863 = vsel %vm1140, 0.0, %v6831
      %v6864 = vsel %vm1141, 0.0, %v6832
      %v6865 = vsel %vm1142, 0.0, %v6833
      %v6866 = vsel %vm1143, 0.0, %v6834
      %v6867 = vsel %vm1144, 0.0, %v6835
      %v6868 = vsel %vm1145, 0.0, %v6836
      %v6869 = vsel %vm1146, 0.0, %v6837
      %v6870 = vld [vmem:[#allocation3 + $0x8] sm:$0xff]
      %v6871 = vld [vmem:[#allocation3 + $0x10] sm:$0xff]
      %v6872 = vld [vmem:[#allocation3 + $0x18] sm:$0xff]
      %v6873 = vld [vmem:[#allocation3 + $0x20] sm:$0xff]
      %v6874 = vld [vmem:[#allocation3 + $0x28] sm:$0xff]
      %v6875 = vld [vmem:[#allocation3 + $0x30] sm:$0xff]
      %v6876 = vld [vmem:[#allocation3 + $0x38] sm:$0xff]
      %v6877 = vld [vmem:[#allocation3 + $0x40] sm:$0xff]
      %v6878 = vld [vmem:[#allocation3 + $0x48] sm:$0xff]
      %v6879 = vld [vmem:[#allocation3 + $0x50] sm:$0xff]
      %v6880 = vld [vmem:[#allocation3 + $0x58] sm:$0xff]
      %v6881 = vld [vmem:[#allocation3 + $0x60] sm:$0xff]
      %v6882 = vld [vmem:[#allocation3 + $0x68] sm:$0xff]
      %v6883 = vld [vmem:[#allocation3 + $0x70] sm:$0xff]
      %v6884 = vld [vmem:[#allocation3 + $0x78] sm:$0xff]
      %v6885 = vld [vmem:[#allocation3 + $0x80] sm:$0xff]
      %v6886 = vld [vmem:[#allocation3 + $0x88] sm:$0xff]
      %v6887 = vld [vmem:[#allocation3 + $0x90] sm:$0xff]
      %v6888 = vld [vmem:[#allocation3 + $0x98] sm:$0xff]
      %v6889 = vld [vmem:[#allocation3 + $0xa0] sm:$0xff]
      %v6890 = vld [vmem:[#allocation3 + $0xa8] sm:$0xff]
      %v6891 = vld [vmem:[#allocation3 + $0xb0] sm:$0xff]
      %v6892 = vld [vmem:[#allocation3 + $0xb8] sm:$0xff]
      %v6893 = vld [vmem:[#allocation3 + $0xc0] sm:$0xff]
      %v6894 = vld [vmem:[#allocation3 + $0xc8] sm:$0xff]
      %v6895 = vld [vmem:[#allocation3 + $0xd0] sm:$0xff]
      %v6896 = vld [vmem:[#allocation3 + $0xd8] sm:$0xff]
      %v6897 = vld [vmem:[#allocation3 + $0xe0] sm:$0xff]
      %v6898 = vld [vmem:[#allocation3 + $0xe8] sm:$0xff]
      %v6899 = vld [vmem:[#allocation3 + $0xf0] sm:$0xff]
      %v6900 = vld [vmem:[#allocation3 + $0xf8] sm:$0xff]
      %v6901 = vld [vmem:[#allocation3 + $0x100] sm:$0xff]
      %v6902 = vld [vmem:[#allocation3 + $0x9] sm:$0xff]
      %v6903 = vld [vmem:[#allocation3 + $0x11] sm:$0xff]
      %v6904 = vld [vmem:[#allocation3 + $0x19] sm:$0xff]
      %v6905 = vld [vmem:[#allocation3 + $0x21] sm:$0xff]
      %v6906 = vld [vmem:[#allocation3 + $0x29] sm:$0xff]
      %v6907 = vld [vmem:[#allocation3 + $0x31] sm:$0xff]
      %v6908 = vld [vmem:[#allocation3 + $0x39] sm:$0xff]
      %v6909 = vld [vmem:[#allocation3 + $0x41] sm:$0xff]
      %v6910 = vld [vmem:[#allocation3 + $0x49] sm:$0xff]
      %v6911 = vld [vmem:[#allocation3 + $0x51] sm:$0xff]
      %v6912 = vld [vmem:[#allocation3 + $0x59] sm:$0xff]
      %v6913 = vld [vmem:[#allocation3 + $0x61] sm:$0xff]
      %v6914 = vld [vmem:[#allocation3 + $0x69] sm:$0xff]
      %v6915 = vld [vmem:[#allocation3 + $0x71] sm:$0xff]
      %v6916 = vld [vmem:[#allocation3 + $0x79] sm:$0xff]
      %v6917 = vld [vmem:[#allocation3 + $0x81] sm:$0xff]
      %v6918 = vld [vmem:[#allocation3 + $0x89] sm:$0xff]
      %v6919 = vld [vmem:[#allocation3 + $0x91] sm:$0xff]
      %v6920 = vld [vmem:[#allocation3 + $0x99] sm:$0xff]
      %v6921 = vld [vmem:[#allocation3 + $0xa1] sm:$0xff]
      %v6922 = vld [vmem:[#allocation3 + $0xa9] sm:$0xff]
      %v6923 = vld [vmem:[#allocation3 + $0xb1] sm:$0xff]
      %v6924 = vld [vmem:[#allocation3 + $0xb9] sm:$0xff]
      %v6925 = vld [vmem:[#allocation3 + $0xc1] sm:$0xff]
      %v6926 = vld [vmem:[#allocation3 + $0xc9] sm:$0xff]
      %v6927 = vld [vmem:[#allocation3 + $0xd1] sm:$0xff]
      %v6928 = vld [vmem:[#allocation3 + $0xd9] sm:$0xff]
      %v6929 = vld [vmem:[#allocation3 + $0xe1] sm:$0xff]
      %v6930 = vld [vmem:[#allocation3 + $0xe9] sm:$0xff]
      %v6931 = vld [vmem:[#allocation3 + $0xf1] sm:$0xff]
      %v6932 = vld [vmem:[#allocation3 + $0xf9] sm:$0xff]
      %v6933 = vld [vmem:[#allocation3 + $0x101] sm:$0xff]
      %v6934 = vsel %vm1275, 0.0, %v6902
      %v6935 = vsel %vm1276, 0.0, %v6903
      %v6936 = vsel %vm1277, 0.0, %v6904
      %v6937 = vsel %vm1278, 0.0, %v6905
      %v6938 = vsel %vm1279, 0.0, %v6906
      %v6939 = vsel %vm1280, 0.0, %v6907
      %v6940 = vsel %vm1281, 0.0, %v6908
      %v6941 = vsel %vm1282, 0.0, %v6909
      %v6942 = vsel %vm1283, 0.0, %v6910
      %v6943 = vsel %vm1284, 0.0, %v6911
      %v6944 = vsel %vm1285, 0.0, %v6912
      %v6945 = vsel %vm1286, 0.0, %v6913
      %v6946 = vsel %vm1287, 0.0, %v6914
      %v6947 = vsel %vm1288, 0.0, %v6915
      %v6948 = vsel %vm1289, 0.0, %v6916
      %v6949 = vsel %vm1290, 0.0, %v6917
      %v6950 = vsel %vm1291, 0.0, %v6918
      %v6951 = vsel %vm1292, 0.0, %v6919
      %v6952 = vsel %vm1293, 0.0, %v6920
      %v6953 = vsel %vm1294, 0.0, %v6921
      %v6954 = vsel %vm1295, 0.0, %v6922
      %v6955 = vsel %vm1296, 0.0, %v6923
      %v6956 = vsel %vm1297, 0.0, %v6924
      %v6957 = vsel %vm1298, 0.0, %v6925
      %v6958 = vsel %vm1299, 0.0, %v6926
      %v6959 = vsel %vm1300, 0.0, %v6927
      %v6960 = vsel %vm1301, 0.0, %v6928
      %v6961 = vsel %vm1302, 0.0, %v6929
      %v6962 = vsel %vm1303, 0.0, %v6930
      %v6963 = vsel %vm1304, 0.0, %v6931
      %v6964 = vsel %vm1305, 0.0, %v6932
      %v6965 = vsel %vm1306, 0.0, %v6933
      %v6966 = vld [vmem:[#allocation3 + $0x107] sm:$0xff]
      %v6967 = vld [vmem:[#allocation3 + $0x10f] sm:$0xff]
      %v6968 = vsel %vm1115, 0.0, %v6808
      %v6969 = vsel %vm1116, 0.0, %v6809
      %v6970 = vsel %vm1117, 0.0, %v6810
      %v6971 = vsel %vm1118, 0.0, %v6811
      %v6972 = vsel %vm1119, 0.0, %v6812
      %v6973 = vsel %vm1120, 0.0, %v6813
      %v6974 = vsel %vm1121, 0.0, %v6814
      %v6975 = vsel %vm1122, 0.0, %v6815
      %v6976 = vsel %vm1123, 0.0, %v6816
      %v6977 = vsel %vm1124, 0.0, %v6817
      %v6978 = vsel %vm1125, 0.0, %v6818
      %v6979 = vsel %vm1126, 0.0, %v6819
      %v6980 = vsel %vm1127, 0.0, %v6820
      %v6981 = vsel %vm1128, 0.0, %v6821
      %v6982 = vsel %vm1129, 0.0, %v6822
      %v6983 = vsel %vm1130, 0.0, %v6823
      %v6984 = vsel %vm1131, 0.0, %v6824
      %v6985 = vsel %vm1132, 0.0, %v6825
      %v6986 = vsel %vm1133, 0.0, %v6826
      %v6987 = vsel %vm1134, 0.0, %v6827
      %v6988 = vsel %vm1135, 0.0, %v6828
      %v6989 = vsel %vm1136, 0.0, %v6829
      %v6990 = vsel %vm1137, 0.0, %v6830
      %v6991 = vsel %vm1138, 0.0, %v6831
      %v6992 = vsel %vm1139, 0.0, %v6832
      %v6993 = vsel %vm1140, 0.0, %v6833
      %v6994 = vsel %vm1141, 0.0, %v6834
      %v6995 = vsel %vm1142, 0.0, %v6835
      %v6996 = vsel %vm1143, 0.0, %v6836
      %v6997 = vsel %vm1144, 0.0, %v6837
      %v6998 = vsel %vm1145, 0.0, %v6966
      %v6999 = vsel %vm1146, 0.0, %v6967
      %v7000 = vld [vmem:[#allocation3 + $0x109] sm:$0xff]
      %v7001 = vld [vmem:[#allocation3 + $0x111] sm:$0xff]
      %v7002 = vsel %vm1275, 0.0, %v6904
      %v7003 = vsel %vm1276, 0.0, %v6905
      %v7004 = vsel %vm1277, 0.0, %v6906
      %v7005 = vsel %vm1278, 0.0, %v6907
      %v7006 = vsel %vm1279, 0.0, %v6908
      %v7007 = vsel %vm1280, 0.0, %v6909
      %v7008 = vsel %vm1281, 0.0, %v6910
      %v7009 = vsel %vm1282, 0.0, %v6911
      %v7010 = vsel %vm1283, 0.0, %v6912
      %v7011 = vsel %vm1284, 0.0, %v6913
      %v7012 = vsel %vm1285, 0.0, %v6914
      %v7013 = vsel %vm1286, 0.0, %v6915
      %v7014 = vsel %vm1287, 0.0, %v6916
      %v7015 = vsel %vm1288, 0.0, %v6917
      %v7016 = vsel %vm1289, 0.0, %v6918
      %v7017 = vsel %vm1290, 0.0, %v6919
      %v7018 = vsel %vm1291, 0.0, %v6920
      %v7019 = vsel %vm1292, 0.0, %v6921
      %v7020 = vsel %vm1293, 0.0, %v6922
      %v7021 = vsel %vm1294, 0.0, %v6923
      %v7022 = vsel %vm1295, 0.0, %v6924
      %v7023 = vsel %vm1296, 0.0, %v6925
      %v7024 = vsel %vm1297, 0.0, %v6926
      %v7025 = vsel %vm1298, 0.0, %v6927
      %v7026 = vsel %vm1299, 0.0, %v6928
      %v7027 = vsel %vm1300, 0.0, %v6929
      %v7028 = vsel %vm1301, 0.0, %v6930
      %v7029 = vsel %vm1302, 0.0, %v6931
      %v7030 = vsel %vm1303, 0.0, %v6932
      %v7031 = vsel %vm1304, 0.0, %v6933
      %v7032 = vsel %vm1305, 0.0, %v7000
      %v7033 = vsel %vm1306, 0.0, %v7001
      %v7034 = vld [vmem:[#allocation3 + $0x117] sm:$0xff]
      %v7035 = vld [vmem:[#allocation3 + $0x11f] sm:$0xff]
      %v7036 = vsel %vm1115, 0.0, %v6810
      %v7037 = vsel %vm1116, 0.0, %v6811
      %v7038 = vsel %vm1117, 0.0, %v6812
      %v7039 = vsel %vm1118, 0.0, %v6813
      %v7040 = vsel %vm1119, 0.0, %v6814
      %v7041 = vsel %vm1120, 0.0, %v6815
      %v7042 = vsel %vm1121, 0.0, %v6816
      %v7043 = vsel %vm1122, 0.0, %v6817
      %v7044 = vsel %vm1123, 0.0, %v6818
      %v7045 = vsel %vm1124, 0.0, %v6819
      %v7046 = vsel %vm1125, 0.0, %v6820
      %v7047 = vsel %vm1126, 0.0, %v6821
      %v7048 = vsel %vm1127, 0.0, %v6822
      %v7049 = vsel %vm1128, 0.0, %v6823
      %v7050 = vsel %vm1129, 0.0, %v6824
      %v7051 = vsel %vm1130, 0.0, %v6825
      %v7052 = vsel %vm1131, 0.0, %v6826
      %v7053 = vsel %vm1132, 0.0, %v6827
      %v7054 = vsel %vm1133, 0.0, %v6828
      %v7055 = vsel %vm1134, 0.0, %v6829
      %v7056 = vsel %vm1135, 0.0, %v6830
      %v7057 = vsel %vm1136, 0.0, %v6831
      %v7058 = vsel %vm1137, 0.0, %v6832
      %v7059 = vsel %vm1138, 0.0, %v6833
      %v7060 = vsel %vm1139, 0.0, %v6834
      %v7061 = vsel %vm1140, 0.0, %v6835
      %v7062 = vsel %vm1141, 0.0, %v6836
      %v7063 = vsel %vm1142, 0.0, %v6837
      %v7064 = vsel %vm1143, 0.0, %v6966
      %v7065 = vsel %vm1144, 0.0, %v6967
      %v7066 = vsel %vm1145, 0.0, %v7034
      %v7067 = vsel %vm1146, 0.0, %v7035
      %v7068 = vld [vmem:[#allocation3 + $0x108] sm:$0xff]
      %v7069 = vld [vmem:[#allocation3 + $0x110] sm:$0xff]
      %v7070 = vld [vmem:[#allocation3 + $0x118] sm:$0xff]
      %v7071 = vld [vmem:[#allocation3 + $0x120] sm:$0xff]
      %v7072 = vld [vmem:[#allocation3 + $0x119] sm:$0xff]
      %v7073 = vld [vmem:[#allocation3 + $0x121] sm:$0xff]
      %v7074 = vsel %vm1275, 0.0, %v6906
      %v7075 = vsel %vm1276, 0.0, %v6907
      %v7076 = vsel %vm1277, 0.0, %v6908
      %v7077 = vsel %vm1278, 0.0, %v6909
      %v7078 = vsel %vm1279, 0.0, %v6910
      %v7079 = vsel %vm1280, 0.0, %v6911
      %v7080 = vsel %vm1281, 0.0, %v6912
      %v7081 = vsel %vm1282, 0.0, %v6913
      %v7082 = vsel %vm1283, 0.0, %v6914
      %v7083 = vsel %vm1284, 0.0, %v6915
      %v7084 = vsel %vm1285, 0.0, %v6916
      %v7085 = vsel %vm1286, 0.0, %v6917
      %v7086 = vsel %vm1287, 0.0, %v6918
      %v7087 = vsel %vm1288, 0.0, %v6919
      %v7088 = vsel %vm1289, 0.0, %v6920
      %v7089 = vsel %vm1290, 0.0, %v6921
      %v7090 = vsel %vm1291, 0.0, %v6922
      %v7091 = vsel %vm1292, 0.0, %v6923
      %v7092 = vsel %vm1293, 0.0, %v6924
      %v7093 = vsel %vm1294, 0.0, %v6925
      %v7094 = vsel %vm1295, 0.0, %v6926
      %v7095 = vsel %vm1296, 0.0, %v6927
      %v7096 = vsel %vm1297, 0.0, %v6928
      %v7097 = vsel %vm1298, 0.0, %v6929
      %v7098 = vsel %vm1299, 0.0, %v6930
      %v7099 = vsel %vm1300, 0.0, %v6931
      %v7100 = vsel %vm1301, 0.0, %v6932
      %v7101 = vsel %vm1302, 0.0, %v6933
      %v7102 = vsel %vm1303, 0.0, %v7000
      %v7103 = vsel %vm1304, 0.0, %v7001
      %v7104 = vsel %vm1305, 0.0, %v7072
      %v7105 = vsel %vm1306, 0.0, %v7073
      %7138 = vrot.lane.b32.xlu0 %v6870, 8
      %v7139 = vpop.permute.xlu0 %7138
      %7140 = vrot.lane.b32.xlu0 %v6871, 8
      %v7141 = vpop.permute.xlu0 %7140
      %7142 = vrot.lane.b32.xlu0 %v6872, 8
      %v7143 = vpop.permute.xlu0 %7142
      %7144 = vrot.lane.b32.xlu0 %v6873, 8
      %v7145 = vpop.permute.xlu0 %7144
      %7146 = vrot.lane.b32.xlu0 %v6874, 8
      %v7147 = vpop.permute.xlu0 %7146
      %7148 = vrot.lane.b32.xlu0 %v6875, 8
      %v7149 = vpop.permute.xlu0 %7148
      %7150 = vrot.lane.b32.xlu0 %v6876, 8
      %v7151 = vpop.permute.xlu0 %7150
      %7152 = vrot.lane.b32.xlu0 %v6877, 8
      %v7153 = vpop.permute.xlu0 %7152
      %7154 = vrot.lane.b32.xlu0 %v6878, 8
      %v7155 = vpop.permute.xlu0 %7154
      %7156 = vrot.lane.b32.xlu0 %v6879, 8
      %v7157 = vpop.permute.xlu0 %7156
      %7158 = vrot.lane.b32.xlu0 %v6880, 8
      %v7159 = vpop.permute.xlu0 %7158
      %7160 = vrot.lane.b32.xlu0 %v6881, 8
      %v7161 = vpop.permute.xlu0 %7160
      %7162 = vrot.lane.b32.xlu0 %v6882, 8
      %v7163 = vpop.permute.xlu0 %7162
      %7164 = vrot.lane.b32.xlu0 %v6883, 8
      %v7165 = vpop.permute.xlu0 %7164
      %7166 = vrot.lane.b32.xlu0 %v6884, 8
      %v7167 = vpop.permute.xlu0 %7166
      %7168 = vrot.lane.b32.xlu0 %v6885, 8
      %v7169 = vpop.permute.xlu0 %7168
      %7170 = vrot.lane.b32.xlu0 %v6886, 8
      %v7171 = vpop.permute.xlu0 %7170
      %7172 = vrot.lane.b32.xlu0 %v6887, 8
      %v7173 = vpop.permute.xlu0 %7172
      %7174 = vrot.lane.b32.xlu0 %v6888, 8
      %v7175 = vpop.permute.xlu0 %7174
      %7176 = vrot.lane.b32.xlu0 %v6889, 8
      %v7177 = vpop.permute.xlu0 %7176
      %7178 = vrot.lane.b32.xlu0 %v6890, 8
      %v7179 = vpop.permute.xlu0 %7178
      %7180 = vrot.lane.b32.xlu0 %v6891, 8
      %v7181 = vpop.permute.xlu0 %7180
      %7182 = vrot.lane.b32.xlu0 %v6892, 8
      %v7183 = vpop.permute.xlu0 %7182
      %7184 = vrot.lane.b32.xlu0 %v6893, 8
      %v7185 = vpop.permute.xlu0 %7184
      %7186 = vrot.lane.b32.xlu0 %v6894, 8
      %v7187 = vpop.permute.xlu0 %7186
      %7188 = vrot.lane.b32.xlu0 %v6895, 8
      %v7189 = vpop.permute.xlu0 %7188
      %7190 = vrot.lane.b32.xlu0 %v6896, 8
      %v7191 = vpop.permute.xlu0 %7190
      %7192 = vrot.lane.b32.xlu0 %v6897, 8
      %v7193 = vpop.permute.xlu0 %7192
      %7194 = vrot.lane.b32.xlu0 %v6898, 8
      %v7195 = vpop.permute.xlu0 %7194
      %7196 = vrot.lane.b32.xlu0 %v6899, 8
      %v7197 = vpop.permute.xlu0 %7196
      %7198 = vrot.lane.b32.xlu0 %v6900, 8
      %v7199 = vpop.permute.xlu0 %7198
      %7200 = vrot.lane.b32.xlu0 %v6901, 8
      %v7201 = vpop.permute.xlu0 %7200
      %7266 = vrot.lane.b32.xlu0 %v6934, 16
      %v7267 = vpop.permute.xlu0 %7266
      %7268 = vrot.lane.b32.xlu0 %v6935, 16
      %v7269 = vpop.permute.xlu0 %7268
      %7270 = vrot.lane.b32.xlu0 %v6936, 16
      %v7271 = vpop.permute.xlu0 %7270
      %7272 = vrot.lane.b32.xlu0 %v6937, 16
      %v7273 = vpop.permute.xlu0 %7272
      %7274 = vrot.lane.b32.xlu0 %v6938, 16
      %v7275 = vpop.permute.xlu0 %7274
      %7276 = vrot.lane.b32.xlu0 %v6939, 16
      %v7277 = vpop.permute.xlu0 %7276
      %7278 = vrot.lane.b32.xlu0 %v6940, 16
      %v7279 = vpop.permute.xlu0 %7278
      %7280 = vrot.lane.b32.xlu0 %v6941, 16
      %v7281 = vpop.permute.xlu0 %7280
      %7282 = vrot.lane.b32.xlu0 %v6942, 16
      %v7283 = vpop.permute.xlu0 %7282
      %7284 = vrot.lane.b32.xlu0 %v6943, 16
      %v7285 = vpop.permute.xlu0 %7284
      %7286 = vrot.lane.b32.xlu0 %v6944, 16
      %v7287 = vpop.permute.xlu0 %7286
      %7288 = vrot.lane.b32.xlu0 %v6945, 16
      %v7289 = vpop.permute.xlu0 %7288
      %7290 = vrot.lane.b32.xlu0 %v6946, 16
      %v7291 = vpop.permute.xlu0 %7290
      %7292 = vrot.lane.b32.xlu0 %v6947, 16
      %v7293 = vpop.permute.xlu0 %7292
      %7294 = vrot.lane.b32.xlu0 %v6948, 16
      %v7295 = vpop.permute.xlu0 %7294
      %7296 = vrot.lane.b32.xlu0 %v6949, 16
      %v7297 = vpop.permute.xlu0 %7296
      %7298 = vrot.lane.b32.xlu0 %v6950, 16
      %v7299 = vpop.permute.xlu0 %7298
      %7300 = vrot.lane.b32.xlu0 %v6951, 16
      %v7301 = vpop.permute.xlu0 %7300
      %7302 = vrot.lane.b32.xlu0 %v6952, 16
      %v7303 = vpop.permute.xlu0 %7302
      %7304 = vrot.lane.b32.xlu0 %v6953, 16
      %v7305 = vpop.permute.xlu0 %7304
      %7306 = vrot.lane.b32.xlu0 %v6954, 16
      %v7307 = vpop.permute.xlu0 %7306
      %7308 = vrot.lane.b32.xlu0 %v6955, 16
      %v7309 = vpop.permute.xlu0 %7308
      %7310 = vrot.lane.b32.xlu0 %v6956, 16
      %v7311 = vpop.permute.xlu0 %7310
      %7312 = vrot.lane.b32.xlu0 %v6957, 16
      %v7313 = vpop.permute.xlu0 %7312
      %7314 = vrot.lane.b32.xlu0 %v6958, 16
      %v7315 = vpop.permute.xlu0 %7314
      %7316 = vrot.lane.b32.xlu0 %v6959, 16
      %v7317 = vpop.permute.xlu0 %7316
      %7318 = vrot.lane.b32.xlu0 %v6960, 16
      %v7319 = vpop.permute.xlu0 %7318
      %7320 = vrot.lane.b32.xlu0 %v6961, 16
      %v7321 = vpop.permute.xlu0 %7320
      %7322 = vrot.lane.b32.xlu0 %v6962, 16
      %v7323 = vpop.permute.xlu0 %7322
      %7324 = vrot.lane.b32.xlu0 %v6963, 16
      %v7325 = vpop.permute.xlu0 %7324
      %7326 = vrot.lane.b32.xlu0 %v6964, 16
      %v7327 = vpop.permute.xlu0 %7326
      %7328 = vrot.lane.b32.xlu0 %v6965, 16
      %v7329 = vpop.permute.xlu0 %7328
      %7394 = vrot.lane.b32.xlu0 %v6968, 24
      %v7395 = vpop.permute.xlu0 %7394
      %7396 = vrot.lane.b32.xlu0 %v6969, 24
      %v7397 = vpop.permute.xlu0 %7396
      %7398 = vrot.lane.b32.xlu0 %v6970, 24
      %v7399 = vpop.permute.xlu0 %7398
      %7400 = vrot.lane.b32.xlu0 %v6971, 24
      %v7401 = vpop.permute.xlu0 %7400
      %7402 = vrot.lane.b32.xlu0 %v6972, 24
      %v7403 = vpop.permute.xlu0 %7402
      %7404 = vrot.lane.b32.xlu0 %v6973, 24
      %v7405 = vpop.permute.xlu0 %7404
      %7406 = vrot.lane.b32.xlu0 %v6974, 24
      %v7407 = vpop.permute.xlu0 %7406
      %7408 = vrot.lane.b32.xlu0 %v6975, 24
      %v7409 = vpop.permute.xlu0 %7408
      %7410 = vrot.lane.b32.xlu0 %v6976, 24
      %v7411 = vpop.permute.xlu0 %7410
      %7412 = vrot.lane.b32.xlu0 %v6977, 24
      %v7413 = vpop.permute.xlu0 %7412
      %7414 = vrot.lane.b32.xlu0 %v6978, 24
      %v7415 = vpop.permute.xlu0 %7414
      %7416 = vrot.lane.b32.xlu0 %v6979, 24
      %v7417 = vpop.permute.xlu0 %7416
      %7418 = vrot.lane.b32.xlu0 %v6980, 24
      %v7419 = vpop.permute.xlu0 %7418
      %7420 = vrot.lane.b32.xlu0 %v6981, 24
      %v7421 = vpop.permute.xlu0 %7420
      %7422 = vrot.lane.b32.xlu0 %v6982, 24
      %v7423 = vpop.permute.xlu0 %7422
      %7424 = vrot.lane.b32.xlu0 %v6983, 24
      %v7425 = vpop.permute.xlu0 %7424
      %7426 = vrot.lane.b32.xlu0 %v6984, 24
      %v7427 = vpop.permute.xlu0 %7426
      %7428 = vrot.lane.b32.xlu0 %v6985, 24
      %v7429 = vpop.permute.xlu0 %7428
      %7430 = vrot.lane.b32.xlu0 %v6986, 24
      %v7431 = vpop.permute.xlu0 %7430
      %7432 = vrot.lane.b32.xlu0 %v6987, 24
      %v7433 = vpop.permute.xlu0 %7432
      %7434 = vrot.lane.b32.xlu0 %v6988, 24
      %v7435 = vpop.permute.xlu0 %7434
      %7436 = vrot.lane.b32.xlu0 %v6989, 24
      %v7437 = vpop.permute.xlu0 %7436
      %7438 = vrot.lane.b32.xlu0 %v6990, 24
      %v7439 = vpop.permute.xlu0 %7438
      %7440 = vrot.lane.b32.xlu0 %v6991, 24
      %v7441 = vpop.permute.xlu0 %7440
      %7442 = vrot.lane.b32.xlu0 %v6992, 24
      %v7443 = vpop.permute.xlu0 %7442
      %7444 = vrot.lane.b32.xlu0 %v6993, 24
      %v7445 = vpop.permute.xlu0 %7444
      %7446 = vrot.lane.b32.xlu0 %v6994, 24
      %v7447 = vpop.permute.xlu0 %7446
      %7448 = vrot.lane.b32.xlu0 %v6995, 24
      %v7449 = vpop.permute.xlu0 %7448
      %7450 = vrot.lane.b32.xlu0 %v6996, 24
      %v7451 = vpop.permute.xlu0 %7450
      %7452 = vrot.lane.b32.xlu0 %v6997, 24
      %v7453 = vpop.permute.xlu0 %7452
      %7454 = vrot.lane.b32.xlu0 %v6998, 24
      %v7455 = vpop.permute.xlu0 %7454
      %7456 = vrot.lane.b32.xlu0 %v6999, 24
      %v7457 = vpop.permute.xlu0 %7456
      %7522 = vrot.lane.b32.xlu0 %v6742, 32
      %v7523 = vpop.permute.xlu0 %7522
      %7524 = vrot.lane.b32.xlu0 %v6743, 32
      %v7525 = vpop.permute.xlu0 %7524
      %7526 = vrot.lane.b32.xlu0 %v6744, 32
      %v7527 = vpop.permute.xlu0 %7526
      %7528 = vrot.lane.b32.xlu0 %v6745, 32
      %v7529 = vpop.permute.xlu0 %7528
      %7530 = vrot.lane.b32.xlu0 %v6746, 32
      %v7531 = vpop.permute.xlu0 %7530
      %7532 = vrot.lane.b32.xlu0 %v6747, 32
      %v7533 = vpop.permute.xlu0 %7532
      %7534 = vrot.lane.b32.xlu0 %v6748, 32
      %v7535 = vpop.permute.xlu0 %7534
      %7536 = vrot.lane.b32.xlu0 %v6749, 32
      %v7537 = vpop.permute.xlu0 %7536
      %7538 = vrot.lane.b32.xlu0 %v6750, 32
      %v7539 = vpop.permute.xlu0 %7538
      %7540 = vrot.lane.b32.xlu0 %v6751, 32
      %v7541 = vpop.permute.xlu0 %7540
      %7542 = vrot.lane.b32.xlu0 %v6752, 32
      %v7543 = vpop.permute.xlu0 %7542
      %7544 = vrot.lane.b32.xlu0 %v6753, 32
      %v7545 = vpop.permute.xlu0 %7544
      %7546 = vrot.lane.b32.xlu0 %v6754, 32
      %v7547 = vpop.permute.xlu0 %7546
      %7548 = vrot.lane.b32.xlu0 %v6755, 32
      %v7549 = vpop.permute.xlu0 %7548
      %7550 = vrot.lane.b32.xlu0 %v6756, 32
      %v7551 = vpop.permute.xlu0 %7550
      %7552 = vrot.lane.b32.xlu0 %v6757, 32
      %v7553 = vpop.permute.xlu0 %7552
      %7554 = vrot.lane.b32.xlu0 %v6758, 32
      %v7555 = vpop.permute.xlu0 %7554
      %7556 = vrot.lane.b32.xlu0 %v6759, 32
      %v7557 = vpop.permute.xlu0 %7556
      %7558 = vrot.lane.b32.xlu0 %v6760, 32
      %v7559 = vpop.permute.xlu0 %7558
      %7560 = vrot.lane.b32.xlu0 %v6761, 32
      %v7561 = vpop.permute.xlu0 %7560
      %7562 = vrot.lane.b32.xlu0 %v6762, 32
      %v7563 = vpop.permute.xlu0 %7562
      %7564 = vrot.lane.b32.xlu0 %v6763, 32
      %v7565 = vpop.permute.xlu0 %7564
      %7566 = vrot.lane.b32.xlu0 %v6764, 32
      %v7567 = vpop.permute.xlu0 %7566
      %7568 = vrot.lane.b32.xlu0 %v6765, 32
      %v7569 = vpop.permute.xlu0 %7568
      %7570 = vrot.lane.b32.xlu0 %v6766, 32
      %v7571 = vpop.permute.xlu0 %7570
      %7572 = vrot.lane.b32.xlu0 %v6767, 32
      %v7573 = vpop.permute.xlu0 %7572
      %7574 = vrot.lane.b32.xlu0 %v6768, 32
      %v7575 = vpop.permute.xlu0 %7574
      %7576 = vrot.lane.b32.xlu0 %v6769, 32
      %v7577 = vpop.permute.xlu0 %7576
      %7578 = vrot.lane.b32.xlu0 %v6770, 32
      %v7579 = vpop.permute.xlu0 %7578
      %7580 = vrot.lane.b32.xlu0 %v6771, 32
      %v7581 = vpop.permute.xlu0 %7580
      %7582 = vrot.lane.b32.xlu0 %v6772, 32
      %v7583 = vpop.permute.xlu0 %7582
      %7584 = vrot.lane.b32.xlu0 %v6773, 32
      %v7585 = vpop.permute.xlu0 %7584
      %7650 = vrot.lane.b32.xlu0 %v7002, 40
      %v7651 = vpop.permute.xlu0 %7650
      %7652 = vrot.lane.b32.xlu0 %v7003, 40
      %v7653 = vpop.permute.xlu0 %7652
      %7654 = vrot.lane.b32.xlu0 %v7004, 40
      %v7655 = vpop.permute.xlu0 %7654
      %7656 = vrot.lane.b32.xlu0 %v7005, 40
      %v7657 = vpop.permute.xlu0 %7656
      %7658 = vrot.lane.b32.xlu0 %v7006, 40
      %v7659 = vpop.permute.xlu0 %7658
      %7660 = vrot.lane.b32.xlu0 %v7007, 40
      %v7661 = vpop.permute.xlu0 %7660
      %7662 = vrot.lane.b32.xlu0 %v7008, 40
      %v7663 = vpop.permute.xlu0 %7662
      %7664 = vrot.lane.b32.xlu0 %v7009, 40
      %v7665 = vpop.permute.xlu0 %7664
      %7666 = vrot.lane.b32.xlu0 %v7010, 40
      %v7667 = vpop.permute.xlu0 %7666
      %7668 = vrot.lane.b32.xlu0 %v7011, 40
      %v7669 = vpop.permute.xlu0 %7668
      %7670 = vrot.lane.b32.xlu0 %v7012, 40
      %v7671 = vpop.permute.xlu0 %7670
      %7672 = vrot.lane.b32.xlu0 %v7013, 40
      %v7673 = vpop.permute.xlu0 %7672
      %7674 = vrot.lane.b32.xlu0 %v7014, 40
      %v7675 = vpop.permute.xlu0 %7674
      %7676 = vrot.lane.b32.xlu0 %v7015, 40
      %v7677 = vpop.permute.xlu0 %7676
      %7678 = vrot.lane.b32.xlu0 %v7016, 40
      %v7679 = vpop.permute.xlu0 %7678
      %7680 = vrot.lane.b32.xlu0 %v7017, 40
      %v7681 = vpop.permute.xlu0 %7680
      %7682 = vrot.lane.b32.xlu0 %v7018, 40
      %v7683 = vpop.permute.xlu0 %7682
      %7684 = vrot.lane.b32.xlu0 %v7019, 40
      %v7685 = vpop.permute.xlu0 %7684
      %7686 = vrot.lane.b32.xlu0 %v7020, 40
      %v7687 = vpop.permute.xlu0 %7686
      %7688 = vrot.lane.b32.xlu0 %v7021, 40
      %v7689 = vpop.permute.xlu0 %7688
      %7690 = vrot.lane.b32.xlu0 %v7022, 40
      %v7691 = vpop.permute.xlu0 %7690
      %7692 = vrot.lane.b32.xlu0 %v7023, 40
      %v7693 = vpop.permute.xlu0 %7692
      %7694 = vrot.lane.b32.xlu0 %v7024, 40
      %v7695 = vpop.permute.xlu0 %7694
      %7696 = vrot.lane.b32.xlu0 %v7025, 40
      %v7697 = vpop.permute.xlu0 %7696
      %7698 = vrot.lane.b32.xlu0 %v7026, 40
      %v7699 = vpop.permute.xlu0 %7698
      %7700 = vrot.lane.b32.xlu0 %v7027, 40
      %v7701 = vpop.permute.xlu0 %7700
      %7702 = vrot.lane.b32.xlu0 %v7028, 40
      %v7703 = vpop.permute.xlu0 %7702
      %7704 = vrot.lane.b32.xlu0 %v7029, 40
      %v7705 = vpop.permute.xlu0 %7704
      %7706 = vrot.lane.b32.xlu0 %v7030, 40
      %v7707 = vpop.permute.xlu0 %7706
      %7708 = vrot.lane.b32.xlu0 %v7031, 40
      %v7709 = vpop.permute.xlu0 %7708
      %7710 = vrot.lane.b32.xlu0 %v7032, 40
      %v7711 = vpop.permute.xlu0 %7710
      %7712 = vrot.lane.b32.xlu0 %v7033, 40
      %v7713 = vpop.permute.xlu0 %7712
      %7778 = vrot.lane.b32.xlu0 %v7036, 48
      %v7779 = vpop.permute.xlu0 %7778
      %7780 = vrot.lane.b32.xlu0 %v7037, 48
      %v7781 = vpop.permute.xlu0 %7780
      %7782 = vrot.lane.b32.xlu0 %v7038, 48
      %v7783 = vpop.permute.xlu0 %7782
      %7784 = vrot.lane.b32.xlu0 %v7039, 48
      %v7785 = vpop.permute.xlu0 %7784
      %7786 = vrot.lane.b32.xlu0 %v7040, 48
      %v7787 = vpop.permute.xlu0 %7786
      %7788 = vrot.lane.b32.xlu0 %v7041, 48
      %v7789 = vpop.permute.xlu0 %7788
      %7790 = vrot.lane.b32.xlu0 %v7042, 48
      %v7791 = vpop.permute.xlu0 %7790
      %7792 = vrot.lane.b32.xlu0 %v7043, 48
      %v7793 = vpop.permute.xlu0 %7792
      %7794 = vrot.lane.b32.xlu0 %v7044, 48
      %v7795 = vpop.permute.xlu0 %7794
      %7796 = vrot.lane.b32.xlu0 %v7045, 48
      %v7797 = vpop.permute.xlu0 %7796
      %7798 = vrot.lane.b32.xlu0 %v7046, 48
      %v7799 = vpop.permute.xlu0 %7798
      %7800 = vrot.lane.b32.xlu0 %v7047, 48
      %v7801 = vpop.permute.xlu0 %7800
      %7802 = vrot.lane.b32.xlu0 %v7048, 48
      %v7803 = vpop.permute.xlu0 %7802
      %7804 = vrot.lane.b32.xlu0 %v7049, 48
      %v7805 = vpop.permute.xlu0 %7804
      %7806 = vrot.lane.b32.xlu0 %v7050, 48
      %v7807 = vpop.permute.xlu0 %7806
      %7808 = vrot.lane.b32.xlu0 %v7051, 48
      %v7809 = vpop.permute.xlu0 %7808
      %7810 = vrot.lane.b32.xlu0 %v7052, 48
      %v7811 = vpop.permute.xlu0 %7810
      %7812 = vrot.lane.b32.xlu0 %v7053, 48
      %v7813 = vpop.permute.xlu0 %7812
      %7814 = vrot.lane.b32.xlu0 %v7054, 48
      %v7815 = vpop.permute.xlu0 %7814
      %7816 = vrot.lane.b32.xlu0 %v7055, 48
      %v7817 = vpop.permute.xlu0 %7816
      %7818 = vrot.lane.b32.xlu0 %v7056, 48
      %v7819 = vpop.permute.xlu0 %7818
      %7820 = vrot.lane.b32.xlu0 %v7057, 48
      %v7821 = vpop.permute.xlu0 %7820
      %7822 = vrot.lane.b32.xlu0 %v7058, 48
      %v7823 = vpop.permute.xlu0 %7822
      %7824 = vrot.lane.b32.xlu0 %v7059, 48
      %v7825 = vpop.permute.xlu0 %7824
      %7826 = vrot.lane.b32.xlu0 %v7060, 48
      %v7827 = vpop.permute.xlu0 %7826
      %7828 = vrot.lane.b32.xlu0 %v7061, 48
      %v7829 = vpop.permute.xlu0 %7828
      %7830 = vrot.lane.b32.xlu0 %v7062, 48
      %v7831 = vpop.permute.xlu0 %7830
      %7832 = vrot.lane.b32.xlu0 %v7063, 48
      %v7833 = vpop.permute.xlu0 %7832
      %7834 = vrot.lane.b32.xlu0 %v7064, 48
      %v7835 = vpop.permute.xlu0 %7834
      %7836 = vrot.lane.b32.xlu0 %v7065, 48
      %v7837 = vpop.permute.xlu0 %7836
      %7838 = vrot.lane.b32.xlu0 %v7066, 48
      %v7839 = vpop.permute.xlu0 %7838
      %7840 = vrot.lane.b32.xlu0 %v7067, 48
      %v7841 = vpop.permute.xlu0 %7840
      %7878 = vrot.lane.b32.xlu0 %v6874, 56
      %v7879 = vpop.permute.xlu0 %7878
      %7880 = vrot.lane.b32.xlu0 %v6875, 56
      %v7881 = vpop.permute.xlu0 %7880
      %7882 = vrot.lane.b32.xlu0 %v6876, 56
      %v7883 = vpop.permute.xlu0 %7882
      %7884 = vrot.lane.b32.xlu0 %v6877, 56
      %v7885 = vpop.permute.xlu0 %7884
      %7886 = vrot.lane.b32.xlu0 %v6878, 56
      %v7887 = vpop.permute.xlu0 %7886
      %7888 = vrot.lane.b32.xlu0 %v6879, 56
      %v7889 = vpop.permute.xlu0 %7888
      %7890 = vrot.lane.b32.xlu0 %v6880, 56
      %v7891 = vpop.permute.xlu0 %7890
      %7892 = vrot.lane.b32.xlu0 %v6881, 56
      %v7893 = vpop.permute.xlu0 %7892
      %7894 = vrot.lane.b32.xlu0 %v6882, 56
      %v7895 = vpop.permute.xlu0 %7894
      %7896 = vrot.lane.b32.xlu0 %v6883, 56
      %v7897 = vpop.permute.xlu0 %7896
      %7898 = vrot.lane.b32.xlu0 %v6884, 56
      %v7899 = vpop.permute.xlu0 %7898
      %7900 = vrot.lane.b32.xlu0 %v6885, 56
      %v7901 = vpop.permute.xlu0 %7900
      %7902 = vrot.lane.b32.xlu0 %v6886, 56
      %v7903 = vpop.permute.xlu0 %7902
      %7904 = vrot.lane.b32.xlu0 %v6887, 56
      %v7905 = vpop.permute.xlu0 %7904
      %7906 = vrot.lane.b32.xlu0 %v6888, 56
      %v7907 = vpop.permute.xlu0 %7906
      %7908 = vrot.lane.b32.xlu0 %v6889, 56
      %v7909 = vpop.permute.xlu0 %7908
      %7910 = vrot.lane.b32.xlu0 %v6890, 56
      %v7911 = vpop.permute.xlu0 %7910
      %7912 = vrot.lane.b32.xlu0 %v6891, 56
      %v7913 = vpop.permute.xlu0 %7912
      %7914 = vrot.lane.b32.xlu0 %v6892, 56
      %v7915 = vpop.permute.xlu0 %7914
      %7916 = vrot.lane.b32.xlu0 %v6893, 56
      %v7917 = vpop.permute.xlu0 %7916
      %7918 = vrot.lane.b32.xlu0 %v6894, 56
      %v7919 = vpop.permute.xlu0 %7918
      %7920 = vrot.lane.b32.xlu0 %v6895, 56
      %v7921 = vpop.permute.xlu0 %7920
      %7922 = vrot.lane.b32.xlu0 %v6896, 56
      %v7923 = vpop.permute.xlu0 %7922
      %7924 = vrot.lane.b32.xlu0 %v6897, 56
      %v7925 = vpop.permute.xlu0 %7924
      %7926 = vrot.lane.b32.xlu0 %v6898, 56
      %v7927 = vpop.permute.xlu0 %7926
      %7928 = vrot.lane.b32.xlu0 %v6899, 56
      %v7929 = vpop.permute.xlu0 %7928
      %7930 = vrot.lane.b32.xlu0 %v6900, 56
      %v7931 = vpop.permute.xlu0 %7930
      %7932 = vrot.lane.b32.xlu0 %v6901, 56
      %v7933 = vpop.permute.xlu0 %7932
      %7934 = vrot.lane.b32.xlu0 %v7068, 56
      %v7935 = vpop.permute.xlu0 %7934
      %7936 = vrot.lane.b32.xlu0 %v7069, 56
      %v7937 = vpop.permute.xlu0 %7936
      %7938 = vrot.lane.b32.xlu0 %v7070, 56
      %v7939 = vpop.permute.xlu0 %7938
      %7940 = vrot.lane.b32.xlu0 %v7071, 56
      %v7941 = vpop.permute.xlu0 %7940
      %8006 = vrot.lane.b32.xlu0 %v7074, 64
      %v8007 = vpop.permute.xlu0 %8006
      %8008 = vrot.lane.b32.xlu0 %v7075, 64
      %v8009 = vpop.permute.xlu0 %8008
      %8010 = vrot.lane.b32.xlu0 %v7076, 64
      %v8011 = vpop.permute.xlu0 %8010
      %8012 = vrot.lane.b32.xlu0 %v7077, 64
      %v8013 = vpop.permute.xlu0 %8012
      %8014 = vrot.lane.b32.xlu0 %v7078, 64
      %v8015 = vpop.permute.xlu0 %8014
      %8016 = vrot.lane.b32.xlu0 %v7079, 64
      %v8017 = vpop.permute.xlu0 %8016
      %8018 = vrot.lane.b32.xlu0 %v7080, 64
      %v8019 = vpop.permute.xlu0 %8018
      %8020 = vrot.lane.b32.xlu0 %v7081, 64
      %v8021 = vpop.permute.xlu0 %8020
      %8022 = vrot.lane.b32.xlu0 %v7082, 64
      %v8023 = vpop.permute.xlu0 %8022
      %8024 = vrot.lane.b32.xlu0 %v7083, 64
      %v8025 = vpop.permute.xlu0 %8024
      %8026 = vrot.lane.b32.xlu0 %v7084, 64
      %v8027 = vpop.permute.xlu0 %8026
      %8028 = vrot.lane.b32.xlu0 %v7085, 64
      %v8029 = vpop.permute.xlu0 %8028
      %8030 = vrot.lane.b32.xlu0 %v7086, 64
      %v8031 = vpop.permute.xlu0 %8030
      %8032 = vrot.lane.b32.xlu0 %v7087, 64
      %v8033 = vpop.permute.xlu0 %8032
      %8034 = vrot.lane.b32.xlu0 %v7088, 64
      %v8035 = vpop.permute.xlu0 %8034
      %8036 = vrot.lane.b32.xlu0 %v7089, 64
      %v8037 = vpop.permute.xlu0 %8036
      %8038 = vrot.lane.b32.xlu0 %v7090, 64
      %v8039 = vpop.permute.xlu0 %8038
      %8040 = vrot.lane.b32.xlu0 %v7091, 64
      %v8041 = vpop.permute.xlu0 %8040
      %8042 = vrot.lane.b32.xlu0 %v7092, 64
      %v8043 = vpop.permute.xlu0 %8042
      %8044 = vrot.lane.b32.xlu0 %v7093, 64
      %v8045 = vpop.permute.xlu0 %8044
      %8046 = vrot.lane.b32.xlu0 %v7094, 64
      %v8047 = vpop.permute.xlu0 %8046
      %8048 = vrot.lane.b32.xlu0 %v7095, 64
      %v8049 = vpop.permute.xlu0 %8048
      %8050 = vrot.lane.b32.xlu0 %v7096, 64
      %v8051 = vpop.permute.xlu0 %8050
      %8052 = vrot.lane.b32.xlu0 %v7097, 64
      %v8053 = vpop.permute.xlu0 %8052
      %8054 = vrot.lane.b32.xlu0 %v7098, 64
      %v8055 = vpop.permute.xlu0 %8054
      %8056 = vrot.lane.b32.xlu0 %v7099, 64
      %v8057 = vpop.permute.xlu0 %8056
      %8058 = vrot.lane.b32.xlu0 %v7100, 64
      %v8059 = vpop.permute.xlu0 %8058
      %8060 = vrot.lane.b32.xlu0 %v7101, 64
      %v8061 = vpop.permute.xlu0 %8060
      %8062 = vrot.lane.b32.xlu0 %v7102, 64
      %v8063 = vpop.permute.xlu0 %8062
      %8064 = vrot.lane.b32.xlu0 %v7103, 64
      %v8065 = vpop.permute.xlu0 %8064
      %8066 = vrot.lane.b32.xlu0 %v7104, 64
      %v8067 = vpop.permute.xlu0 %8066
      %8068 = vrot.lane.b32.xlu0 %v7105, 64
      %v8069 = vpop.permute.xlu0 %8068
      %v8102 = vsel %vm948, %v6838, %v7139
      %v8103 = vsel %vm948, %v6839, %v7141
      %v8104 = vsel %vm948, %v6840, %v7143
      %v8105 = vsel %vm948, %v6841, %v7145
      %v8106 = vsel %vm948, %v6842, %v7147
      %v8107 = vsel %vm948, %v6843, %v7149
      %v8108 = vsel %vm948, %v6844, %v7151
      %v8109 = vsel %vm948, %v6845, %v7153
      %v8110 = vsel %vm948, %v6846, %v7155
      %v8111 = vsel %vm948, %v6847, %v7157
      %v8112 = vsel %vm948, %v6848, %v7159
      %v8113 = vsel %vm948, %v6849, %v7161
      %v8114 = vsel %vm948, %v6850, %v7163
      %v8115 = vsel %vm948, %v6851, %v7165
      %v8116 = vsel %vm948, %v6852, %v7167
      %v8117 = vsel %vm948, %v6853, %v7169
      %v8118 = vsel %vm948, %v6854, %v7171
      %v8119 = vsel %vm948, %v6855, %v7173
      %v8120 = vsel %vm948, %v6856, %v7175
      %v8121 = vsel %vm948, %v6857, %v7177
      %v8122 = vsel %vm948, %v6858, %v7179
      %v8123 = vsel %vm948, %v6859, %v7181
      %v8124 = vsel %vm948, %v6860, %v7183
      %v8125 = vsel %vm948, %v6861, %v7185
      %v8126 = vsel %vm948, %v6862, %v7187
      %v8127 = vsel %vm948, %v6863, %v7189
      %v8128 = vsel %vm948, %v6864, %v7191
      %v8129 = vsel %vm948, %v6865, %v7193
      %v8130 = vsel %vm948, %v6866, %v7195
      %v8131 = vsel %vm948, %v6867, %v7197
      %v8132 = vsel %vm948, %v6868, %v7199
      %v8133 = vsel %vm948, %v6869, %v7201
      %v8134 = vsel %vm2572, %v8102, %v7267
      %v8135 = vsel %vm2572, %v8103, %v7269
      %v8136 = vsel %vm2572, %v8104, %v7271
      %v8137 = vsel %vm2572, %v8105, %v7273
      %v8138 = vsel %vm2572, %v8106, %v7275
      %v8139 = vsel %vm2572, %v8107, %v7277
      %v8140 = vsel %vm2572, %v8108, %v7279
      %v8141 = vsel %vm2572, %v8109, %v7281
      %v8142 = vsel %vm2572, %v8110, %v7283
      %v8143 = vsel %vm2572, %v8111, %v7285
      %v8144 = vsel %vm2572, %v8112, %v7287
      %v8145 = vsel %vm2572, %v8113, %v7289
      %v8146 = vsel %vm2572, %v8114, %v7291
      %v8147 = vsel %vm2572, %v8115, %v7293
      %v8148 = vsel %vm2572, %v8116, %v7295
      %v8149 = vsel %vm2572, %v8117, %v7297
      %v8150 = vsel %vm2572, %v8118, %v7299
      %v8151 = vsel %vm2572, %v8119, %v7301
      %v8152 = vsel %vm2572, %v8120, %v7303
      %v8153 = vsel %vm2572, %v8121, %v7305
      %v8154 = vsel %vm2572, %v8122, %v7307
      %v8155 = vsel %vm2572, %v8123, %v7309
      %v8156 = vsel %vm2572, %v8124, %v7311
      %v8157 = vsel %vm2572, %v8125, %v7313
      %v8158 = vsel %vm2572, %v8126, %v7315
      %v8159 = vsel %vm2572, %v8127, %v7317
      %v8160 = vsel %vm2572, %v8128, %v7319
      %v8161 = vsel %vm2572, %v8129, %v7321
      %v8162 = vsel %vm2572, %v8130, %v7323
      %v8163 = vsel %vm2572, %v8131, %v7325
      %v8164 = vsel %vm2572, %v8132, %v7327
      %v8165 = vsel %vm2572, %v8133, %v7329
      %v8166 = vsel %vm2638, %v8134, %v7395
      %v8167 = vsel %vm2638, %v8135, %v7397
      %v8168 = vsel %vm2638, %v8136, %v7399
      %v8169 = vsel %vm2638, %v8137, %v7401
      %v8170 = vsel %vm2638, %v8138, %v7403
      %v8171 = vsel %vm2638, %v8139, %v7405
      %v8172 = vsel %vm2638, %v8140, %v7407
      %v8173 = vsel %vm2638, %v8141, %v7409
      %v8174 = vsel %vm2638, %v8142, %v7411
      %v8175 = vsel %vm2638, %v8143, %v7413
      %v8176 = vsel %vm2638, %v8144, %v7415
      %v8177 = vsel %vm2638, %v8145, %v7417
      %v8178 = vsel %vm2638, %v8146, %v7419
      %v8179 = vsel %vm2638, %v8147, %v7421
      %v8180 = vsel %vm2638, %v8148, %v7423
      %v8181 = vsel %vm2638, %v8149, %v7425
      %v8182 = vsel %vm2638, %v8150, %v7427
      %v8183 = vsel %vm2638, %v8151, %v7429
      %v8184 = vsel %vm2638, %v8152, %v7431
      %v8185 = vsel %vm2638, %v8153, %v7433
      %v8186 = vsel %vm2638, %v8154, %v7435
      %v8187 = vsel %vm2638, %v8155, %v7437
      %v8188 = vsel %vm2638, %v8156, %v7439
      %v8189 = vsel %vm2638, %v8157, %v7441
      %v8190 = vsel %vm2638, %v8158, %v7443
      %v8191 = vsel %vm2638, %v8159, %v7445
      %v8192 = vsel %vm2638, %v8160, %v7447
      %v8193 = vsel %vm2638, %v8161, %v7449
      %v8194 = vsel %vm2638, %v8162, %v7451
      %v8195 = vsel %vm2638, %v8163, %v7453
      %v8196 = vsel %vm2638, %v8164, %v7455
      %v8197 = vsel %vm2638, %v8165, %v7457
      %v8198 = vsel %vm2704, %v8166, %v7523
      %v8199 = vsel %vm2704, %v8167, %v7525
      %v8200 = vsel %vm2704, %v8168, %v7527
      %v8201 = vsel %vm2704, %v8169, %v7529
      %v8202 = vsel %vm2704, %v8170, %v7531
      %v8203 = vsel %vm2704, %v8171, %v7533
      %v8204 = vsel %vm2704, %v8172, %v7535
      %v8205 = vsel %vm2704, %v8173, %v7537
      %v8206 = vsel %vm2704, %v8174, %v7539
      %v8207 = vsel %vm2704, %v8175, %v7541
      %v8208 = vsel %vm2704, %v8176, %v7543
      %v8209 = vsel %vm2704, %v8177, %v7545
      %v8210 = vsel %vm2704, %v8178, %v7547
      %v8211 = vsel %vm2704, %v8179, %v7549
      %v8212 = vsel %vm2704, %v8180, %v7551
      %v8213 = vsel %vm2704, %v8181, %v7553
      %v8214 = vsel %vm2704, %v8182, %v7555
      %v8215 = vsel %vm2704, %v8183, %v7557
      %v8216 = vsel %vm2704, %v8184, %v7559
      %v8217 = vsel %vm2704, %v8185, %v7561
      %v8218 = vsel %vm2704, %v8186, %v7563
      %v8219 = vsel %vm2704, %v8187, %v7565
      %v8220 = vsel %vm2704, %v8188, %v7567
      %v8221 = vsel %vm2704, %v8189, %v7569
      %v8222 = vsel %vm2704, %v8190, %v7571
      %v8223 = vsel %vm2704, %v8191, %v7573
      %v8224 = vsel %vm2704, %v8192, %v7575
      %v8225 = vsel %vm2704, %v8193, %v7577
      %v8226 = vsel %vm2704, %v8194, %v7579
      %v8227 = vsel %vm2704, %v8195, %v7581
      %v8228 = vsel %vm2704, %v8196, %v7583
      %v8229 = vsel %vm2704, %v8197, %v7585
      %v8230 = vsel %vm4450, %v8198, %v7651
      %v8231 = vsel %vm4450, %v8199, %v7653
      %v8232 = vsel %vm4450, %v8200, %v7655
      %v8233 = vsel %vm4450, %v8201, %v7657
      %v8234 = vsel %vm4450, %v8202, %v7659
      %v8235 = vsel %vm4450, %v8203, %v7661
      %v8236 = vsel %vm4450, %v8204, %v7663
      %v8237 = vsel %vm4450, %v8205, %v7665
      %v8238 = vsel %vm4450, %v8206, %v7667
      %v8239 = vsel %vm4450, %v8207, %v7669
      %v8240 = vsel %vm4450, %v8208, %v7671
      %v8241 = vsel %vm4450, %v8209, %v7673
      %v8242 = vsel %vm4450, %v8210, %v7675
      %v8243 = vsel %vm4450, %v8211, %v7677
      %v8244 = vsel %vm4450, %v8212, %v7679
      %v8245 = vsel %vm4450, %v8213, %v7681
      %v8246 = vsel %vm4450, %v8214, %v7683
      %v8247 = vsel %vm4450, %v8215, %v7685
      %v8248 = vsel %vm4450, %v8216, %v7687
      %v8249 = vsel %vm4450, %v8217, %v7689
      %v8250 = vsel %vm4450, %v8218, %v7691
      %v8251 = vsel %vm4450, %v8219, %v7693
      %v8252 = vsel %vm4450, %v8220, %v7695
      %v8253 = vsel %vm4450, %v8221, %v7697
      %v8254 = vsel %vm4450, %v8222, %v7699
      %v8255 = vsel %vm4450, %v8223, %v7701
      %v8256 = vsel %vm4450, %v8224, %v7703
      %v8257 = vsel %vm4450, %v8225, %v7705
      %v8258 = vsel %vm4450, %v8226, %v7707
      %v8259 = vsel %vm4450, %v8227, %v7709
      %v8260 = vsel %vm4450, %v8228, %v7711
      %v8261 = vsel %vm4450, %v8229, %v7713
      %v8262 = vsel %vm4483, %v8230, %v7779
      %v8263 = vsel %vm4483, %v8231, %v7781
      %v8264 = vsel %vm4483, %v8232, %v7783
      %v8265 = vsel %vm4483, %v8233, %v7785
      %v8266 = vsel %vm4483, %v8234, %v7787
      %v8267 = vsel %vm4483, %v8235, %v7789
      %v8268 = vsel %vm4483, %v8236, %v7791
      %v8269 = vsel %vm4483, %v8237, %v7793
      %v8270 = vsel %vm4483, %v8238, %v7795
      %v8271 = vsel %vm4483, %v8239, %v7797
      %v8272 = vsel %vm4483, %v8240, %v7799
      %v8273 = vsel %vm4483, %v8241, %v7801
      %v8274 = vsel %vm4483, %v8242, %v7803
      %v8275 = vsel %vm4483, %v8243, %v7805
      %v8276 = vsel %vm4483, %v8244, %v7807
      %v8277 = vsel %vm4483, %v8245, %v7809
      %v8278 = vsel %vm4483, %v8246, %v7811
      %v8279 = vsel %vm4483, %v8247, %v7813
      %v8280 = vsel %vm4483, %v8248, %v7815
      %v8281 = vsel %vm4483, %v8249, %v7817
      %v8282 = vsel %vm4483, %v8250, %v7819
      %v8283 = vsel %vm4483, %v8251, %v7821
      %v8284 = vsel %vm4483, %v8252, %v7823
      %v8285 = vsel %vm4483, %v8253, %v7825
      %v8286 = vsel %vm4483, %v8254, %v7827
      %v8287 = vsel %vm4483, %v8255, %v7829
      %v8288 = vsel %vm4483, %v8256, %v7831
      %v8289 = vsel %vm4483, %v8257, %v7833
      %v8290 = vsel %vm4483, %v8258, %v7835
      %v8291 = vsel %vm4483, %v8259, %v7837
      %v8292 = vsel %vm4483, %v8260, %v7839
      %v8293 = vsel %vm4483, %v8261, %v7841
      %v8294 = vsel %vm4516, %v8262, %v7879
      %v8295 = vsel %vm4516, %v8263, %v7881
      %v8296 = vsel %vm4516, %v8264, %v7883
      %v8297 = vsel %vm4516, %v8265, %v7885
      %v8298 = vsel %vm4516, %v8266, %v7887
      %v8299 = vsel %vm4516, %v8267, %v7889
      %v8300 = vsel %vm4516, %v8268, %v7891
      %v8301 = vsel %vm4516, %v8269, %v7893
      %v8302 = vsel %vm4516, %v8270, %v7895
      %v8303 = vsel %vm4516, %v8271, %v7897
      %v8304 = vsel %vm4516, %v8272, %v7899
      %v8305 = vsel %vm4516, %v8273, %v7901
      %v8306 = vsel %vm4516, %v8274, %v7903
      %v8307 = vsel %vm4516, %v8275, %v7905
      %v8308 = vsel %vm4516, %v8276, %v7907
      %v8309 = vsel %vm4516, %v8277, %v7909
      %v8310 = vsel %vm4516, %v8278, %v7911
      %v8311 = vsel %vm4516, %v8279, %v7913
      %v8312 = vsel %vm4516, %v8280, %v7915
      %v8313 = vsel %vm4516, %v8281, %v7917
      %v8314 = vsel %vm4516, %v8282, %v7919
      %v8315 = vsel %vm4516, %v8283, %v7921
      %v8316 = vsel %vm4516, %v8284, %v7923
      %v8317 = vsel %vm4516, %v8285, %v7925
      %v8318 = vsel %vm4516, %v8286, %v7927
      %v8319 = vsel %vm4516, %v8287, %v7929
      %v8320 = vsel %vm4516, %v8288, %v7931
      %v8321 = vsel %vm4516, %v8289, %v7933
      %v8322 = vsel %vm4516, %v8290, %v7935
      %v8323 = vsel %vm4516, %v8291, %v7937
      %v8324 = vsel %vm4516, %v8292, %v7939
      %v8325 = vsel %vm4516, %v8293, %v7941
      %v8326 = vsel %vm4549, %v8294, %v8007
      %v8327 = vsel %vm4549, %v8295, %v8009
      %v8328 = vsel %vm4549, %v8296, %v8011
      %v8329 = vsel %vm4549, %v8297, %v8013
      %v8330 = vsel %vm4549, %v8298, %v8015
      %v8331 = vsel %vm4549, %v8299, %v8017
      %v8332 = vsel %vm4549, %v8300, %v8019
      %v8333 = vsel %vm4549, %v8301, %v8021
      %v8334 = vsel %vm4549, %v8302, %v8023
      %v8335 = vsel %vm4549, %v8303, %v8025
      %v8336 = vsel %vm4549, %v8304, %v8027
      %v8337 = vsel %vm4549, %v8305, %v8029
      %v8338 = vsel %vm4549, %v8306, %v8031
      %v8339 = vsel %vm4549, %v8307, %v8033
      %v8340 = vsel %vm4549, %v8308, %v8035
      %v8341 = vsel %vm4549, %v8309, %v8037
      %v8342 = vsel %vm4549, %v8310, %v8039
      %v8343 = vsel %vm4549, %v8311, %v8041
      %v8344 = vsel %vm4549, %v8312, %v8043
      %v8345 = vsel %vm4549, %v8313, %v8045
      %v8346 = vsel %vm4549, %v8314, %v8047
      %v8347 = vsel %vm4549, %v8315, %v8049
      %v8348 = vsel %vm4549, %v8316, %v8051
      %v8349 = vsel %vm4549, %v8317, %v8053
      %v8350 = vsel %vm4549, %v8318, %v8055
      %v8351 = vsel %vm4549, %v8319, %v8057
      %v8352 = vsel %vm4549, %v8320, %v8059
      %v8353 = vsel %vm4549, %v8321, %v8061
      %v8354 = vsel %vm4549, %v8322, %v8063
      %v8355 = vsel %vm4549, %v8323, %v8065
      %v8356 = vsel %vm4549, %v8324, %v8067
      %v8357 = vsel %vm4549, %v8325, %v8069
      %v8358 = vpack.c.bf16 %v8327, %v8326
      %v8359 = vpack.c.bf16 %v8329, %v8328
      %v8360 = vpack.c.bf16 %v8331, %v8330
      %v8361 = vpack.c.bf16 %v8333, %v8332
      %v8362 = vpack.c.bf16 %v8335, %v8334
      %v8363 = vpack.c.bf16 %v8337, %v8336
      %v8364 = vpack.c.bf16 %v8339, %v8338
      %v8365 = vpack.c.bf16 %v8341, %v8340
      %v8366 = vpack.c.bf16 %v8343, %v8342
      %v8367 = vpack.c.bf16 %v8345, %v8344
      %v8368 = vpack.c.bf16 %v8347, %v8346
      %v8369 = vpack.c.bf16 %v8349, %v8348
      %v8370 = vpack.c.bf16 %v8351, %v8350
      %v8371 = vpack.c.bf16 %v8353, %v8352
      %v8372 = vpack.c.bf16 %v8355, %v8354
      %v8373 = vpack.c.bf16 %v8357, %v8356
      %v8374 = vld [vmem:[%s7] sm:$0xf]
      %v8375 = vld [vmem:[%s7 + $0x4] sm:$0xf]
      %v8376 = vld [vmem:[%s7 + $0x8] sm:$0xf]
      %v8377 = vld [vmem:[%s7 + $0xc] sm:$0xf]
      %v8378 = vld [vmem:[%s7 + $0x10] sm:$0xf]
      %v8379 = vld [vmem:[%s7 + $0x14] sm:$0xf]
      %v8380 = vld [vmem:[%s7 + $0x18] sm:$0xf]
      %v8381 = vld [vmem:[%s7 + $0x1c] sm:$0xf]
      %v8382 = vld [vmem:[%s7 + $0x20] sm:$0xf]
      %v8383 = vld [vmem:[%s8] sm:$0x1]
      %v8385 = vlaneseq
      %v8386 = vshrl.u32 %v8385, 7
      %v8387 = vsub.s32 0, %v8386
      %v8388 = vrot.slane %v8383, %v8387
      %v8399 = vunpack.c.l.b16 %v8374
      %v8400 = vunpack.c.l.b16 %v8375
      %v8401 = vunpack.c.l.b16 %v8376
      %v8402 = vunpack.c.l.b16 %v8377
      %v8403 = vunpack.c.l.b16 %v8378
      %v8404 = vunpack.c.l.b16 %v8379
      %v8405 = vunpack.c.l.b16 %v8380
      %v8406 = vunpack.c.l.b16 %v8381
      %v8407 = vunpack.c.l.b16 %v8382
      %v8408 = vpack.c.b16 %v8400, %v8399
      %v8409 = vpack.c.b16 %v8402, %v8401
      %v8410 = vpack.c.b16 %v8404, %v8403
      %v8411 = vpack.c.b16 %v8406, %v8405
      %v8412 = vpack.c.b16 %v8407, %v8407
      %v8418 = vsel %vm4641, %v8358, 0
      %v8421 = vsel %vm4641, %v8359, 0
      %v8424 = vsel %vm4641, %v8360, 0
      %v8427 = vsel %vm4641, %v8361, 0
      %v8430 = vsel %vm4641, %v8362, 0
      %v8433 = vsel %vm4641, %v8363, 0
      %v8436 = vsel %vm4641, %v8364, 0
      %v8439 = vsel %vm4641, %v8365, 0
      %v8442 = vsel %vm4641, %v8366, 0
      %v8445 = vsel %vm4641, %v8367, 0
      %v8448 = vsel %vm4641, %v8368, 0
      %v8451 = vsel %vm4641, %v8369, 0
      %v8454 = vsel %vm4641, %v8370, 0
      %v8457 = vsel %vm4641, %v8371, 0
      %v8460 = vsel %vm4641, %v8372, 0
      %v8463 = vsel %vm4641, %v8373, 0
      %v8466 = vsel %vm4690, %v8412, 0
      %8468 = vmatprep.subr.bf16.mxu0 0
      %8469 = vmatpush1.bf16.msra.mxu0 0
      %8470 = vmatprep.subr.bf16.mxu0 0
      %8471 = vmatpush1.bf16.msra.mxu0 0
      %8472 = vmatprep.subr.bf16.mxu0 0
      %8473 = vmatpush1.bf16.msra.mxu0 0
      %8474 = vmatprep.subr.bf16.mxu0 0
      %8475 = vmatpush1.bf16.msra.mxu0 %v8466
      %8476 = vmatprep.subr.bf16.mxu0 0
      %8477 = vmatpush1.bf16.msra.mxu0 %v8411
      %8478 = vmatprep.subr.bf16.mxu0 0
      %8479 = vmatpush1.bf16.msra.mxu0 %v8410
      %8480 = vmatprep.subr.bf16.mxu0 0
      %8481 = vmatpush1.bf16.msra.mxu0 %v8409
      %8482 = vmatprep.subr.bf16.mxu0 0
      %8483 = vmatpush1.bf16.msra.mxu0 %v8408
      %8484 = vmatprep.subr.bf16.mxu0 0
      %8485 = vmatpush2.bf16.msra.mxu0 0
      %8486 = vmatprep.subr.bf16.mxu0 0
      %8487 = vmatpush2.bf16.msra.mxu0 0
      %8488 = vmatprep.subr.bf16.mxu0 0
      %8489 = vmatpush2.bf16.msra.mxu0 0
      %8490 = vmatprep.subr.bf16.mxu0 0
      %8491 = vmatpush2.bf16.msra.mxu0 0
      %8492 = vmatprep.subr.bf16.mxu0 0
      %8493 = vmatpush2.bf16.msra.mxu0 0
      %8494 = vmatprep.subr.bf16.mxu0 0
      %8495 = vmatpush2.bf16.msra.mxu0 0
      %8496 = vmatprep.subr.bf16.mxu0 0
      %8497 = vmatpush2.bf16.msra.mxu0 0
      %8498 = vmatprep.subr.bf16.mxu0 0
      %8499 = vmatpush2.bf16.msra.mxu0 0
      %8500 = vmatprep.mubr.bf16.mxu0 0
      %8501 = vmatmul.mubr.bf16.gmra.mxu0 %v8418
      %v8502 = vpop.f32.mrf.mxu0
      %v8503 = vadd.f32 %v8388, %v8502
      %v8504 = vpop.f32.mrf.mxu0
      %v8505 = vpop.f32.mrf.mxu0
      %v8506 = vadd.f32 %v8388, %v8505
      %v8507 = vpop.f32.mrf.mxu0
      %8508 = vmatprep.mubr.bf16.mxu0 0
      %8509 = vmatmul.mubr.bf16.gmra.mxu0 %v8421
      %v8510 = vpop.f32.mrf.mxu0
      %v8511 = vadd.f32 %v8388, %v8510
      %v8512 = vpop.f32.mrf.mxu0
      %v8513 = vpop.f32.mrf.mxu0
      %v8514 = vadd.f32 %v8388, %v8513
      %v8515 = vpop.f32.mrf.mxu0
      %8516 = vmatprep.mubr.bf16.mxu0 0
      %8517 = vmatmul.mubr.bf16.gmra.mxu0 %v8424
      %v8518 = vpop.f32.mrf.mxu0
      %v8519 = vadd.f32 %v8388, %v8518
      %v8520 = vpop.f32.mrf.mxu0
      %v8521 = vpop.f32.mrf.mxu0
      %v8522 = vadd.f32 %v8388, %v8521
      %v8523 = vpop.f32.mrf.mxu0
      %8524 = vmatprep.mubr.bf16.mxu0 0
      %8525 = vmatmul.mubr.bf16.gmra.mxu0 %v8427
      %v8526 = vpop.f32.mrf.mxu0
      %v8527 = vadd.f32 %v8388, %v8526
      %v8528 = vpop.f32.mrf.mxu0
      %v8529 = vpop.f32.mrf.mxu0
      %v8530 = vadd.f32 %v8388, %v8529
      %v8531 = vpop.f32.mrf.mxu0
      %8532 = vmatprep.mubr.bf16.mxu0 0
      %8533 = vmatmul.mubr.bf16.gmra.mxu0 %v8430
      %v8534 = vpop.f32.mrf.mxu0
      %v8535 = vadd.f32 %v8388, %v8534
      %v8536 = vpop.f32.mrf.mxu0
      %v8537 = vpop.f32.mrf.mxu0
      %v8538 = vadd.f32 %v8388, %v8537
      %v8539 = vpop.f32.mrf.mxu0
      %8540 = vmatprep.mubr.bf16.mxu0 0
      %8541 = vmatmul.mubr.bf16.gmra.mxu0 %v8433
      %v8542 = vpop.f32.mrf.mxu0
      %v8543 = vadd.f32 %v8388, %v8542
      %v8544 = vpop.f32.mrf.mxu0
      %v8545 = vpop.f32.mrf.mxu0
      %v8546 = vadd.f32 %v8388, %v8545
      %v8547 = vpop.f32.mrf.mxu0
      %8548 = vmatprep.mubr.bf16.mxu0 0
      %8549 = vmatmul.mubr.bf16.gmra.mxu0 %v8436
      %v8550 = vpop.f32.mrf.mxu0
      %v8551 = vadd.f32 %v8388, %v8550
      %v8552 = vpop.f32.mrf.mxu0
      %v8553 = vpop.f32.mrf.mxu0
      %v8554 = vadd.f32 %v8388, %v8553
      %v8555 = vpop.f32.mrf.mxu0
      %8556 = vmatprep.mubr.bf16.mxu0 0
      %8557 = vmatmul.mubr.bf16.gmra.mxu0 %v8439
      %v8558 = vpop.f32.mrf.mxu0
      %v8559 = vadd.f32 %v8388, %v8558
      %v8560 = vpop.f32.mrf.mxu0
      %v8561 = vpop.f32.mrf.mxu0
      %v8562 = vadd.f32 %v8388, %v8561
      %v8563 = vpop.f32.mrf.mxu0
      %8564 = vmatprep.mubr.bf16.mxu0 0
      %8565 = vmatmul.mubr.bf16.gmra.mxu0 %v8442
      %v8566 = vpop.f32.mrf.mxu0
      %v8567 = vadd.f32 %v8388, %v8566
      %v8568 = vpop.f32.mrf.mxu0
      %v8569 = vpop.f32.mrf.mxu0
      %v8570 = vadd.f32 %v8388, %v8569
      %v8571 = vpop.f32.mrf.mxu0
      %8572 = vmatprep.mubr.bf16.mxu0 0
      %8573 = vmatmul.mubr.bf16.gmra.mxu0 %v8445
      %v8574 = vpop.f32.mrf.mxu0
      %v8575 = vadd.f32 %v8388, %v8574
      %v8576 = vpop.f32.mrf.mxu0
      %v8577 = vpop.f32.mrf.mxu0
      %v8578 = vadd.f32 %v8388, %v8577
      %v8579 = vpop.f32.mrf.mxu0
      %8580 = vmatprep.mubr.bf16.mxu0 0
      %8581 = vmatmul.mubr.bf16.gmra.mxu0 %v8448
      %v8582 = vpop.f32.mrf.mxu0
      %v8583 = vadd.f32 %v8388, %v8582
      %v8584 = vpop.f32.mrf.mxu0
      %v8585 = vpop.f32.mrf.mxu0
      %v8586 = vadd.f32 %v8388, %v8585
      %v8587 = vpop.f32.mrf.mxu0
      %8588 = vmatprep.mubr.bf16.mxu0 0
      %8589 = vmatmul.mubr.bf16.gmra.mxu0 %v8451
      %v8590 = vpop.f32.mrf.mxu0
      %v8591 = vadd.f32 %v8388, %v8590
      %v8592 = vpop.f32.mrf.mxu0
      %v8593 = vpop.f32.mrf.mxu0
      %v8594 = vadd.f32 %v8388, %v8593
      %v8595 = vpop.f32.mrf.mxu0
      %8596 = vmatprep.mubr.bf16.mxu0 0
      %8597 = vmatmul.mubr.bf16.gmra.mxu0 %v8454
      %v8598 = vpop.f32.mrf.mxu0
      %v8599 = vadd.f32 %v8388, %v8598
      %v8600 = vpop.f32.mrf.mxu0
      %v8601 = vpop.f32.mrf.mxu0
      %v8602 = vadd.f32 %v8388, %v8601
      %v8603 = vpop.f32.mrf.mxu0
      %8604 = vmatprep.mubr.bf16.mxu0 0
      %8605 = vmatmul.mubr.bf16.gmra.mxu0 %v8457
      %v8606 = vpop.f32.mrf.mxu0
      %v8607 = vadd.f32 %v8388, %v8606
      %v8608 = vpop.f32.mrf.mxu0
      %v8609 = vpop.f32.mrf.mxu0
      %v8610 = vadd.f32 %v8388, %v8609
      %v8611 = vpop.f32.mrf.mxu0
      %8612 = vmatprep.mubr.bf16.mxu0 0
      %8613 = vmatmul.mubr.bf16.gmra.mxu0 %v8460
      %v8614 = vpop.f32.mrf.mxu0
      %v8615 = vadd.f32 %v8388, %v8614
      %v8616 = vpop.f32.mrf.mxu0
      %v8617 = vpop.f32.mrf.mxu0
      %v8618 = vadd.f32 %v8388, %v8617
      %v8619 = vpop.f32.mrf.mxu0
      %8620 = vmatprep.mubr.bf16.mxu0 0
      %8621 = vmatmul.mubr.bf16.gmra.mxu0 %v8463
      %v8622 = vpop.f32.mrf.mxu0
      %v8623 = vadd.f32 %v8388, %v8622
      %v8624 = vpop.f32.mrf.mxu0
      %v8625 = vpop.f32.mrf.mxu0
      %v8626 = vadd.f32 %v8388, %v8625
      %v8627 = vpop.f32.mrf.mxu0
      %8628 = vdwg.mxu0
      %v8629 = vmax.f32 %v8503, 0.0
      %v8630 = vmax.f32 %v8506, 0.0
      %v8631 = vmax.f32 %v8511, 0.0
      %v8632 = vmax.f32 %v8514, 0.0
      %v8633 = vmax.f32 %v8519, 0.0
      %v8634 = vmax.f32 %v8522, 0.0
      %v8635 = vmax.f32 %v8527, 0.0
      %v8636 = vmax.f32 %v8530, 0.0
      %v8637 = vmax.f32 %v8535, 0.0
      %v8638 = vmax.f32 %v8538, 0.0
      %v8639 = vmax.f32 %v8543, 0.0
      %v8640 = vmax.f32 %v8546, 0.0
      %v8641 = vmax.f32 %v8551, 0.0
      %v8642 = vmax.f32 %v8554, 0.0
      %v8643 = vmax.f32 %v8559, 0.0
      %v8644 = vmax.f32 %v8562, 0.0
      %v8645 = vmax.f32 %v8567, 0.0
      %v8646 = vmax.f32 %v8570, 0.0
      %v8647 = vmax.f32 %v8575, 0.0
      %v8648 = vmax.f32 %v8578, 0.0
      %v8649 = vmax.f32 %v8583, 0.0
      %v8650 = vmax.f32 %v8586, 0.0
      %v8651 = vmax.f32 %v8591, 0.0
      %v8652 = vmax.f32 %v8594, 0.0
      %v8653 = vmax.f32 %v8599, 0.0
      %v8654 = vmax.f32 %v8602, 0.0
      %v8655 = vmax.f32 %v8607, 0.0
      %v8656 = vmax.f32 %v8610, 0.0
      %v8657 = vmax.f32 %v8615, 0.0
      %v8658 = vmax.f32 %v8618, 0.0
      %v8659 = vmax.f32 %v8623, 0.0
      %v8660 = vmax.f32 %v8626, 0.0
      %8661 = vst.msk [vmem:[#allocation3 + $0x18] sm:$0xff] %vm948, %v8629
      %8662 = vst.msk [vmem:[#allocation3 + $0x20] sm:$0xff] %vm948, %v8630
      %8663 = vst.msk [vmem:[#allocation3 + $0x28] sm:$0xff] %vm948, %v8631
      %8664 = vst.msk [vmem:[#allocation3 + $0x30] sm:$0xff] %vm948, %v8632
      %8665 = vst.msk [vmem:[#allocation3 + $0x38] sm:$0xff] %vm948, %v8633
      %8666 = vst.msk [vmem:[#allocation3 + $0x40] sm:$0xff] %vm948, %v8634
      %8667 = vst.msk [vmem:[#allocation3 + $0x48] sm:$0xff] %vm948, %v8635
      %8668 = vst.msk [vmem:[#allocation3 + $0x50] sm:$0xff] %vm948, %v8636
      %8669 = vst.msk [vmem:[#allocation3 + $0x58] sm:$0xff] %vm948, %v8637
      %8670 = vst.msk [vmem:[#allocation3 + $0x60] sm:$0xff] %vm948, %v8638
      %8671 = vst.msk [vmem:[#allocation3 + $0x68] sm:$0xff] %vm948, %v8639
      %8672 = vst.msk [vmem:[#allocation3 + $0x70] sm:$0xff] %vm948, %v8640
      %8673 = vst.msk [vmem:[#allocation3 + $0x78] sm:$0xff] %vm948, %v8641
      %8674 = vst.msk [vmem:[#allocation3 + $0x80] sm:$0xff] %vm948, %v8642
      %8675 = vst.msk [vmem:[#allocation3 + $0x88] sm:$0xff] %vm948, %v8643
      %8676 = vst.msk [vmem:[#allocation3 + $0x90] sm:$0xff] %vm948, %v8644
      %8677 = vst.msk [vmem:[#allocation3 + $0x98] sm:$0xff] %vm948, %v8645
      %8678 = vst.msk [vmem:[#allocation3 + $0xa0] sm:$0xff] %vm948, %v8646
      %8679 = vst.msk [vmem:[#allocation3 + $0xa8] sm:$0xff] %vm948, %v8647
      %8680 = vst.msk [vmem:[#allocation3 + $0xb0] sm:$0xff] %vm948, %v8648
      %8681 = vst.msk [vmem:[#allocation3 + $0xb8] sm:$0xff] %vm948, %v8649
      %8682 = vst.msk [vmem:[#allocation3 + $0xc0] sm:$0xff] %vm948, %v8650
      %8683 = vst.msk [vmem:[#allocation3 + $0xc8] sm:$0xff] %vm948, %v8651
      %8684 = vst.msk [vmem:[#allocation3 + $0xd0] sm:$0xff] %vm948, %v8652
      %8685 = vst.msk [vmem:[#allocation3 + $0xd8] sm:$0xff] %vm948, %v8653
      %8686 = vst.msk [vmem:[#allocation3 + $0xe0] sm:$0xff] %vm948, %v8654
      %8687 = vst.msk [vmem:[#allocation3 + $0xe8] sm:$0xff] %vm948, %v8655
      %8688 = vst.msk [vmem:[#allocation3 + $0xf0] sm:$0xff] %vm948, %v8656
      %8689 = vst.msk [vmem:[#allocation3 + $0xf8] sm:$0xff] %vm948, %v8657
      %8690 = vst.msk [vmem:[#allocation3 + $0x100] sm:$0xff] %vm948, %v8658
      %8691 = vst.msk [vmem:[#allocation3 + $0x108] sm:$0xff] %vm948, %v8659
      %8692 = vst.msk [vmem:[#allocation3 + $0x110] sm:$0xff] %vm948, %v8660
      %v8693 = vld [vmem:[#allocation3 + $0x7] sm:$0xff]
      %v8694 = vld [vmem:[#allocation3 + $0xf] sm:$0xff]
      %v8695 = vld [vmem:[#allocation3 + $0x17] sm:$0xff]
      %v8696 = vld [vmem:[#allocation3 + $0x1f] sm:$0xff]
      %v8697 = vld [vmem:[#allocation3 + $0x27] sm:$0xff]
      %v8698 = vld [vmem:[#allocation3 + $0x2f] sm:$0xff]
      %v8699 = vld [vmem:[#allocation3 + $0x37] sm:$0xff]
      %v8700 = vld [vmem:[#allocation3 + $0x3f] sm:$0xff]
      %v8701 = vld [vmem:[#allocation3 + $0x47] sm:$0xff]
      %v8702 = vld [vmem:[#allocation3 + $0x4f] sm:$0xff]
      %v8703 = vld [vmem:[#allocation3 + $0x57] sm:$0xff]
      %v8704 = vld [vmem:[#allocation3 + $0x5f] sm:$0xff]
      %v8705 = vld [vmem:[#allocation3 + $0x67] sm:$0xff]
      %v8706 = vld [vmem:[#allocation3 + $0x6f] sm:$0xff]
      %v8707 = vld [vmem:[#allocation3 + $0x77] sm:$0xff]
      %v8708 = vld [vmem:[#allocation3 + $0x7f] sm:$0xff]
      %v8709 = vld [vmem:[#allocation3 + $0x87] sm:$0xff]
      %v8710 = vld [vmem:[#allocation3 + $0x8f] sm:$0xff]
      %v8711 = vld [vmem:[#allocation3 + $0x97] sm:$0xff]
      %v8712 = vld [vmem:[#allocation3 + $0x9f] sm:$0xff]
      %v8713 = vld [vmem:[#allocation3 + $0xa7] sm:$0xff]
      %v8714 = vld [vmem:[#allocation3 + $0xaf] sm:$0xff]
      %v8715 = vld [vmem:[#allocation3 + $0xb7] sm:$0xff]
      %v8716 = vld [vmem:[#allocation3 + $0xbf] sm:$0xff]
      %v8717 = vld [vmem:[#allocation3 + $0xc7] sm:$0xff]
      %v8718 = vld [vmem:[#allocation3 + $0xcf] sm:$0xff]
      %v8719 = vld [vmem:[#allocation3 + $0xd7] sm:$0xff]
      %v8720 = vld [vmem:[#allocation3 + $0xdf] sm:$0xff]
      %v8721 = vld [vmem:[#allocation3 + $0xe7] sm:$0xff]
      %v8722 = vld [vmem:[#allocation3 + $0xef] sm:$0xff]
      %v8723 = vld [vmem:[#allocation3 + $0xf7] sm:$0xff]
      %v8724 = vld [vmem:[#allocation3 + $0xff] sm:$0xff]
      %v8725 = vsel %vm1115, 0.0, %v8693
      %v8726 = vsel %vm1116, 0.0, %v8694
      %v8727 = vsel %vm1117, 0.0, %v8695
      %v8728 = vsel %vm1118, 0.0, %v8696
      %v8729 = vsel %vm1119, 0.0, %v8697
      %v8730 = vsel %vm1120, 0.0, %v8698
      %v8731 = vsel %vm1121, 0.0, %v8699
      %v8732 = vsel %vm1122, 0.0, %v8700
      %v8733 = vsel %vm1123, 0.0, %v8701
      %v8734 = vsel %vm1124, 0.0, %v8702
      %v8735 = vsel %vm1125, 0.0, %v8703
      %v8736 = vsel %vm1126, 0.0, %v8704
      %v8737 = vsel %vm1127, 0.0, %v8705
      %v8738 = vsel %vm1128, 0.0, %v8706
      %v8739 = vsel %vm1129, 0.0, %v8707
      %v8740 = vsel %vm1130, 0.0, %v8708
      %v8741 = vsel %vm1131, 0.0, %v8709
      %v8742 = vsel %vm1132, 0.0, %v8710
      %v8743 = vsel %vm1133, 0.0, %v8711
      %v8744 = vsel %vm1134, 0.0, %v8712
      %v8745 = vsel %vm1135, 0.0, %v8713
      %v8746 = vsel %vm1136, 0.0, %v8714
      %v8747 = vsel %vm1137, 0.0, %v8715
      %v8748 = vsel %vm1138, 0.0, %v8716
      %v8749 = vsel %vm1139, 0.0, %v8717
      %v8750 = vsel %vm1140, 0.0, %v8718
      %v8751 = vsel %vm1141, 0.0, %v8719
      %v8752 = vsel %vm1142, 0.0, %v8720
      %v8753 = vsel %vm1143, 0.0, %v8721
      %v8754 = vsel %vm1144, 0.0, %v8722
      %v8755 = vsel %vm1145, 0.0, %v8723
      %v8756 = vsel %vm1146, 0.0, %v8724
      %v8757 = vld [vmem:[#allocation3 + $0x8] sm:$0xff]
      %v8758 = vld [vmem:[#allocation3 + $0x10] sm:$0xff]
      %v8759 = vld [vmem:[#allocation3 + $0x18] sm:$0xff]
      %v8760 = vld [vmem:[#allocation3 + $0x20] sm:$0xff]
      %v8761 = vld [vmem:[#allocation3 + $0x28] sm:$0xff]
      %v8762 = vld [vmem:[#allocation3 + $0x30] sm:$0xff]
      %v8763 = vld [vmem:[#allocation3 + $0x38] sm:$0xff]
      %v8764 = vld [vmem:[#allocation3 + $0x40] sm:$0xff]
      %v8765 = vld [vmem:[#allocation3 + $0x48] sm:$0xff]
      %v8766 = vld [vmem:[#allocation3 + $0x50] sm:$0xff]
      %v8767 = vld [vmem:[#allocation3 + $0x58] sm:$0xff]
      %v8768 = vld [vmem:[#allocation3 + $0x60] sm:$0xff]
      %v8769 = vld [vmem:[#allocation3 + $0x68] sm:$0xff]
      %v8770 = vld [vmem:[#allocation3 + $0x70] sm:$0xff]
      %v8771 = vld [vmem:[#allocation3 + $0x78] sm:$0xff]
      %v8772 = vld [vmem:[#allocation3 + $0x80] sm:$0xff]
      %v8773 = vld [vmem:[#allocation3 + $0x88] sm:$0xff]
      %v8774 = vld [vmem:[#allocation3 + $0x90] sm:$0xff]
      %v8775 = vld [vmem:[#allocation3 + $0x98] sm:$0xff]
      %v8776 = vld [vmem:[#allocation3 + $0xa0] sm:$0xff]
      %v8777 = vld [vmem:[#allocation3 + $0xa8] sm:$0xff]
      %v8778 = vld [vmem:[#allocation3 + $0xb0] sm:$0xff]
      %v8779 = vld [vmem:[#allocation3 + $0xb8] sm:$0xff]
      %v8780 = vld [vmem:[#allocation3 + $0xc0] sm:$0xff]
      %v8781 = vld [vmem:[#allocation3 + $0xc8] sm:$0xff]
      %v8782 = vld [vmem:[#allocation3 + $0xd0] sm:$0xff]
      %v8783 = vld [vmem:[#allocation3 + $0xd8] sm:$0xff]
      %v8784 = vld [vmem:[#allocation3 + $0xe0] sm:$0xff]
      %v8785 = vld [vmem:[#allocation3 + $0xe8] sm:$0xff]
      %v8786 = vld [vmem:[#allocation3 + $0xf0] sm:$0xff]
      %v8787 = vld [vmem:[#allocation3 + $0xf8] sm:$0xff]
      %v8788 = vld [vmem:[#allocation3 + $0x100] sm:$0xff]
      %v8789 = vld [vmem:[#allocation3 + $0x9] sm:$0xff]
      %v8790 = vld [vmem:[#allocation3 + $0x11] sm:$0xff]
      %v8791 = vld [vmem:[#allocation3 + $0x19] sm:$0xff]
      %v8792 = vld [vmem:[#allocation3 + $0x21] sm:$0xff]
      %v8793 = vld [vmem:[#allocation3 + $0x29] sm:$0xff]
      %v8794 = vld [vmem:[#allocation3 + $0x31] sm:$0xff]
      %v8795 = vld [vmem:[#allocation3 + $0x39] sm:$0xff]
      %v8796 = vld [vmem:[#allocation3 + $0x41] sm:$0xff]
      %v8797 = vld [vmem:[#allocation3 + $0x49] sm:$0xff]
      %v8798 = vld [vmem:[#allocation3 + $0x51] sm:$0xff]
      %v8799 = vld [vmem:[#allocation3 + $0x59] sm:$0xff]
      %v8800 = vld [vmem:[#allocation3 + $0x61] sm:$0xff]
      %v8801 = vld [vmem:[#allocation3 + $0x69] sm:$0xff]
      %v8802 = vld [vmem:[#allocation3 + $0x71] sm:$0xff]
      %v8803 = vld [vmem:[#allocation3 + $0x79] sm:$0xff]
      %v8804 = vld [vmem:[#allocation3 + $0x81] sm:$0xff]
      %v8805 = vld [vmem:[#allocation3 + $0x89] sm:$0xff]
      %v8806 = vld [vmem:[#allocation3 + $0x91] sm:$0xff]
      %v8807 = vld [vmem:[#allocation3 + $0x99] sm:$0xff]
      %v8808 = vld [vmem:[#allocation3 + $0xa1] sm:$0xff]
      %v8809 = vld [vmem:[#allocation3 + $0xa9] sm:$0xff]
      %v8810 = vld [vmem:[#allocation3 + $0xb1] sm:$0xff]
      %v8811 = vld [vmem:[#allocation3 + $0xb9] sm:$0xff]
      %v8812 = vld [vmem:[#allocation3 + $0xc1] sm:$0xff]
      %v8813 = vld [vmem:[#allocation3 + $0xc9] sm:$0xff]
      %v8814 = vld [vmem:[#allocation3 + $0xd1] sm:$0xff]
      %v8815 = vld [vmem:[#allocation3 + $0xd9] sm:$0xff]
      %v8816 = vld [vmem:[#allocation3 + $0xe1] sm:$0xff]
      %v8817 = vld [vmem:[#allocation3 + $0xe9] sm:$0xff]
      %v8818 = vld [vmem:[#allocation3 + $0xf1] sm:$0xff]
      %v8819 = vld [vmem:[#allocation3 + $0xf9] sm:$0xff]
      %v8820 = vld [vmem:[#allocation3 + $0x101] sm:$0xff]
      %v8821 = vsel %vm1275, 0.0, %v8789
      %v8822 = vsel %vm1276, 0.0, %v8790
      %v8823 = vsel %vm1277, 0.0, %v8791
      %v8824 = vsel %vm1278, 0.0, %v8792
      %v8825 = vsel %vm1279, 0.0, %v8793
      %v8826 = vsel %vm1280, 0.0, %v8794
      %v8827 = vsel %vm1281, 0.0, %v8795
      %v8828 = vsel %vm1282, 0.0, %v8796
      %v8829 = vsel %vm1283, 0.0, %v8797
      %v8830 = vsel %vm1284, 0.0, %v8798
      %v8831 = vsel %vm1285, 0.0, %v8799
      %v8832 = vsel %vm1286, 0.0, %v8800
      %v8833 = vsel %vm1287, 0.0, %v8801
      %v8834 = vsel %vm1288, 0.0, %v8802
      %v8835 = vsel %vm1289, 0.0, %v8803
      %v8836 = vsel %vm1290, 0.0, %v8804
      %v8837 = vsel %vm1291, 0.0, %v8805
      %v8838 = vsel %vm1292, 0.0, %v8806
      %v8839 = vsel %vm1293, 0.0, %v8807
      %v8840 = vsel %vm1294, 0.0, %v8808
      %v8841 = vsel %vm1295, 0.0, %v8809
      %v8842 = vsel %vm1296, 0.0, %v8810
      %v8843 = vsel %vm1297, 0.0, %v8811
      %v8844 = vsel %vm1298, 0.0, %v8812
      %v8845 = vsel %vm1299, 0.0, %v8813
      %v8846 = vsel %vm1300, 0.0, %v8814
      %v8847 = vsel %vm1301, 0.0, %v8815
      %v8848 = vsel %vm1302, 0.0, %v8816
      %v8849 = vsel %vm1303, 0.0, %v8817
      %v8850 = vsel %vm1304, 0.0, %v8818
      %v8851 = vsel %vm1305, 0.0, %v8819
      %v8852 = vsel %vm1306, 0.0, %v8820
      %v8853 = vld [vmem:[#allocation3 + $0x107] sm:$0xff]
      %v8854 = vld [vmem:[#allocation3 + $0x10f] sm:$0xff]
      %v8855 = vsel %vm1115, 0.0, %v8695
      %v8856 = vsel %vm1116, 0.0, %v8696
      %v8857 = vsel %vm1117, 0.0, %v8697
      %v8858 = vsel %vm1118, 0.0, %v8698
      %v8859 = vsel %vm1119, 0.0, %v8699
      %v8860 = vsel %vm1120, 0.0, %v8700
      %v8861 = vsel %vm1121, 0.0, %v8701
      %v8862 = vsel %vm1122, 0.0, %v8702
      %v8863 = vsel %vm1123, 0.0, %v8703
      %v8864 = vsel %vm1124, 0.0, %v8704
      %v8865 = vsel %vm1125, 0.0, %v8705
      %v8866 = vsel %vm1126, 0.0, %v8706
      %v8867 = vsel %vm1127, 0.0, %v8707
      %v8868 = vsel %vm1128, 0.0, %v8708
      %v8869 = vsel %vm1129, 0.0, %v8709
      %v8870 = vsel %vm1130, 0.0, %v8710
      %v8871 = vsel %vm1131, 0.0, %v8711
      %v8872 = vsel %vm1132, 0.0, %v8712
      %v8873 = vsel %vm1133, 0.0, %v8713
      %v8874 = vsel %vm1134, 0.0, %v8714
      %v8875 = vsel %vm1135, 0.0, %v8715
      %v8876 = vsel %vm1136, 0.0, %v8716
      %v8877 = vsel %vm1137, 0.0, %v8717
      %v8878 = vsel %vm1138, 0.0, %v8718
      %v8879 = vsel %vm1139, 0.0, %v8719
      %v8880 = vsel %vm1140, 0.0, %v8720
      %v8881 = vsel %vm1141, 0.0, %v8721
      %v8882 = vsel %vm1142, 0.0, %v8722
      %v8883 = vsel %vm1143, 0.0, %v8723
      %v8884 = vsel %vm1144, 0.0, %v8724
      %v8885 = vsel %vm1145, 0.0, %v8853
      %v8886 = vsel %vm1146, 0.0, %v8854
      %v8887 = vld [vmem:[#allocation3 + $0x109] sm:$0xff]
      %v8888 = vld [vmem:[#allocation3 + $0x111] sm:$0xff]
      %v8889 = vsel %vm1275, 0.0, %v8791
      %v8890 = vsel %vm1276, 0.0, %v8792
      %v8891 = vsel %vm1277, 0.0, %v8793
      %v8892 = vsel %vm1278, 0.0, %v8794
      %v8893 = vsel %vm1279, 0.0, %v8795
      %v8894 = vsel %vm1280, 0.0, %v8796
      %v8895 = vsel %vm1281, 0.0, %v8797
      %v8896 = vsel %vm1282, 0.0, %v8798
      %v8897 = vsel %vm1283, 0.0, %v8799
      %v8898 = vsel %vm1284, 0.0, %v8800
      %v8899 = vsel %vm1285, 0.0, %v8801
      %v8900 = vsel %vm1286, 0.0, %v8802
      %v8901 = vsel %vm1287, 0.0, %v8803
      %v8902 = vsel %vm1288, 0.0, %v8804
      %v8903 = vsel %vm1289, 0.0, %v8805
      %v8904 = vsel %vm1290, 0.0, %v8806
      %v8905 = vsel %vm1291, 0.0, %v8807
      %v8906 = vsel %vm1292, 0.0, %v8808
      %v8907 = vsel %vm1293, 0.0, %v8809
      %v8908 = vsel %vm1294, 0.0, %v8810
      %v8909 = vsel %vm1295, 0.0, %v8811
      %v8910 = vsel %vm1296, 0.0, %v8812
      %v8911 = vsel %vm1297, 0.0, %v8813
      %v8912 = vsel %vm1298, 0.0, %v8814
      %v8913 = vsel %vm1299, 0.0, %v8815
      %v8914 = vsel %vm1300, 0.0, %v8816
      %v8915 = vsel %vm1301, 0.0, %v8817
      %v8916 = vsel %vm1302, 0.0, %v8818
      %v8917 = vsel %vm1303, 0.0, %v8819
      %v8918 = vsel %vm1304, 0.0, %v8820
      %v8919 = vsel %vm1305, 0.0, %v8887
      %v8920 = vsel %vm1306, 0.0, %v8888
      %v8921 = vld [vmem:[#allocation3 + $0x117] sm:$0xff]
      %v8922 = vld [vmem:[#allocation3 + $0x11f] sm:$0xff]
      %v8923 = vsel %vm1115, 0.0, %v8697
      %v8924 = vsel %vm1116, 0.0, %v8698
      %v8925 = vsel %vm1117, 0.0, %v8699
      %v8926 = vsel %vm1118, 0.0, %v8700
      %v8927 = vsel %vm1119, 0.0, %v8701
      %v8928 = vsel %vm1120, 0.0, %v8702
      %v8929 = vsel %vm1121, 0.0, %v8703
      %v8930 = vsel %vm1122, 0.0, %v8704
      %v8931 = vsel %vm1123, 0.0, %v8705
      %v8932 = vsel %vm1124, 0.0, %v8706
      %v8933 = vsel %vm1125, 0.0, %v8707
      %v8934 = vsel %vm1126, 0.0, %v8708
      %v8935 = vsel %vm1127, 0.0, %v8709
      %v8936 = vsel %vm1128, 0.0, %v8710
      %v8937 = vsel %vm1129, 0.0, %v8711
      %v8938 = vsel %vm1130, 0.0, %v8712
      %v8939 = vsel %vm1131, 0.0, %v8713
      %v8940 = vsel %vm1132, 0.0, %v8714
      %v8941 = vsel %vm1133, 0.0, %v8715
      %v8942 = vsel %vm1134, 0.0, %v8716
      %v8943 = vsel %vm1135, 0.0, %v8717
      %v8944 = vsel %vm1136, 0.0, %v8718
      %v8945 = vsel %vm1137, 0.0, %v8719
      %v8946 = vsel %vm1138, 0.0, %v8720
      %v8947 = vsel %vm1139, 0.0, %v8721
      %v8948 = vsel %vm1140, 0.0, %v8722
      %v8949 = vsel %vm1141, 0.0, %v8723
      %v8950 = vsel %vm1142, 0.0, %v8724
      %v8951 = vsel %vm1143, 0.0, %v8853
      %v8952 = vsel %vm1144, 0.0, %v8854
      %v8953 = vsel %vm1145, 0.0, %v8921
      %v8954 = vsel %vm1146, 0.0, %v8922
      %v8955 = vld [vmem:[#allocation3 + $0x108] sm:$0xff]
      %v8956 = vld [vmem:[#allocation3 + $0x110] sm:$0xff]
      %v8957 = vld [vmem:[#allocation3 + $0x118] sm:$0xff]
      %v8958 = vld [vmem:[#allocation3 + $0x120] sm:$0xff]
      %v8959 = vld [vmem:[#allocation3 + $0x119] sm:$0xff]
      %v8960 = vld [vmem:[#allocation3 + $0x121] sm:$0xff]
      %v8961 = vsel %vm1275, 0.0, %v8793
      %v8962 = vsel %vm1276, 0.0, %v8794
      %v8963 = vsel %vm1277, 0.0, %v8795
      %v8964 = vsel %vm1278, 0.0, %v8796
      %v8965 = vsel %vm1279, 0.0, %v8797
      %v8966 = vsel %vm1280, 0.0, %v8798
      %v8967 = vsel %vm1281, 0.0, %v8799
      %v8968 = vsel %vm1282, 0.0, %v8800
      %v8969 = vsel %vm1283, 0.0, %v8801
      %v8970 = vsel %vm1284, 0.0, %v8802
      %v8971 = vsel %vm1285, 0.0, %v8803
      %v8972 = vsel %vm1286, 0.0, %v8804
      %v8973 = vsel %vm1287, 0.0, %v8805
      %v8974 = vsel %vm1288, 0.0, %v8806
      %v8975 = vsel %vm1289, 0.0, %v8807
      %v8976 = vsel %vm1290, 0.0, %v8808
      %v8977 = vsel %vm1291, 0.0, %v8809
      %v8978 = vsel %vm1292, 0.0, %v8810
      %v8979 = vsel %vm1293, 0.0, %v8811
      %v8980 = vsel %vm1294, 0.0, %v8812
      %v8981 = vsel %vm1295, 0.0, %v8813
      %v8982 = vsel %vm1296, 0.0, %v8814
      %v8983 = vsel %vm1297, 0.0, %v8815
      %v8984 = vsel %vm1298, 0.0, %v8816
      %v8985 = vsel %vm1299, 0.0, %v8817
      %v8986 = vsel %vm1300, 0.0, %v8818
      %v8987 = vsel %vm1301, 0.0, %v8819
      %v8988 = vsel %vm1302, 0.0, %v8820
      %v8989 = vsel %vm1303, 0.0, %v8887
      %v8990 = vsel %vm1304, 0.0, %v8888
      %v8991 = vsel %vm1305, 0.0, %v8959
      %v8992 = vsel %vm1306, 0.0, %v8960
      %9025 = vrot.lane.b32.xlu0 %v8757, 8
      %v9026 = vpop.permute.xlu0 %9025
      %9027 = vrot.lane.b32.xlu0 %v8758, 8
      %v9028 = vpop.permute.xlu0 %9027
      %9029 = vrot.lane.b32.xlu0 %v8759, 8
      %v9030 = vpop.permute.xlu0 %9029
      %9031 = vrot.lane.b32.xlu0 %v8760, 8
      %v9032 = vpop.permute.xlu0 %9031
      %9033 = vrot.lane.b32.xlu0 %v8761, 8
      %v9034 = vpop.permute.xlu0 %9033
      %9035 = vrot.lane.b32.xlu0 %v8762, 8
      %v9036 = vpop.permute.xlu0 %9035
      %9037 = vrot.lane.b32.xlu0 %v8763, 8
      %v9038 = vpop.permute.xlu0 %9037
      %9039 = vrot.lane.b32.xlu0 %v8764, 8
      %v9040 = vpop.permute.xlu0 %9039
      %9041 = vrot.lane.b32.xlu0 %v8765, 8
      %v9042 = vpop.permute.xlu0 %9041
      %9043 = vrot.lane.b32.xlu0 %v8766, 8
      %v9044 = vpop.permute.xlu0 %9043
      %9045 = vrot.lane.b32.xlu0 %v8767, 8
      %v9046 = vpop.permute.xlu0 %9045
      %9047 = vrot.lane.b32.xlu0 %v8768, 8
      %v9048 = vpop.permute.xlu0 %9047
      %9049 = vrot.lane.b32.xlu0 %v8769, 8
      %v9050 = vpop.permute.xlu0 %9049
      %9051 = vrot.lane.b32.xlu0 %v8770, 8
      %v9052 = vpop.permute.xlu0 %9051
      %9053 = vrot.lane.b32.xlu0 %v8771, 8
      %v9054 = vpop.permute.xlu0 %9053
      %9055 = vrot.lane.b32.xlu0 %v8772, 8
      %v9056 = vpop.permute.xlu0 %9055
      %9057 = vrot.lane.b32.xlu0 %v8773, 8
      %v9058 = vpop.permute.xlu0 %9057
      %9059 = vrot.lane.b32.xlu0 %v8774, 8
      %v9060 = vpop.permute.xlu0 %9059
      %9061 = vrot.lane.b32.xlu0 %v8775, 8
      %v9062 = vpop.permute.xlu0 %9061
      %9063 = vrot.lane.b32.xlu0 %v8776, 8
      %v9064 = vpop.permute.xlu0 %9063
      %9065 = vrot.lane.b32.xlu0 %v8777, 8
      %v9066 = vpop.permute.xlu0 %9065
      %9067 = vrot.lane.b32.xlu0 %v8778, 8
      %v9068 = vpop.permute.xlu0 %9067
      %9069 = vrot.lane.b32.xlu0 %v8779, 8
      %v9070 = vpop.permute.xlu0 %9069
      %9071 = vrot.lane.b32.xlu0 %v8780, 8
      %v9072 = vpop.permute.xlu0 %9071
      %9073 = vrot.lane.b32.xlu0 %v8781, 8
      %v9074 = vpop.permute.xlu0 %9073
      %9075 = vrot.lane.b32.xlu0 %v8782, 8
      %v9076 = vpop.permute.xlu0 %9075
      %9077 = vrot.lane.b32.xlu0 %v8783, 8
      %v9078 = vpop.permute.xlu0 %9077
      %9079 = vrot.lane.b32.xlu0 %v8784, 8
      %v9080 = vpop.permute.xlu0 %9079
      %9081 = vrot.lane.b32.xlu0 %v8785, 8
      %v9082 = vpop.permute.xlu0 %9081
      %9083 = vrot.lane.b32.xlu0 %v8786, 8
      %v9084 = vpop.permute.xlu0 %9083
      %9085 = vrot.lane.b32.xlu0 %v8787, 8
      %v9086 = vpop.permute.xlu0 %9085
      %9087 = vrot.lane.b32.xlu0 %v8788, 8
      %v9088 = vpop.permute.xlu0 %9087
      %9153 = vrot.lane.b32.xlu0 %v8821, 16
      %v9154 = vpop.permute.xlu0 %9153
      %9155 = vrot.lane.b32.xlu0 %v8822, 16
      %v9156 = vpop.permute.xlu0 %9155
      %9157 = vrot.lane.b32.xlu0 %v8823, 16
      %v9158 = vpop.permute.xlu0 %9157
      %9159 = vrot.lane.b32.xlu0 %v8824, 16
      %v9160 = vpop.permute.xlu0 %9159
      %9161 = vrot.lane.b32.xlu0 %v8825, 16
      %v9162 = vpop.permute.xlu0 %9161
      %9163 = vrot.lane.b32.xlu0 %v8826, 16
      %v9164 = vpop.permute.xlu0 %9163
      %9165 = vrot.lane.b32.xlu0 %v8827, 16
      %v9166 = vpop.permute.xlu0 %9165
      %9167 = vrot.lane.b32.xlu0 %v8828, 16
      %v9168 = vpop.permute.xlu0 %9167
      %9169 = vrot.lane.b32.xlu0 %v8829, 16
      %v9170 = vpop.permute.xlu0 %9169
      %9171 = vrot.lane.b32.xlu0 %v8830, 16
      %v9172 = vpop.permute.xlu0 %9171
      %9173 = vrot.lane.b32.xlu0 %v8831, 16
      %v9174 = vpop.permute.xlu0 %9173
      %9175 = vrot.lane.b32.xlu0 %v8832, 16
      %v9176 = vpop.permute.xlu0 %9175
      %9177 = vrot.lane.b32.xlu0 %v8833, 16
      %v9178 = vpop.permute.xlu0 %9177
      %9179 = vrot.lane.b32.xlu0 %v8834, 16
      %v9180 = vpop.permute.xlu0 %9179
      %9181 = vrot.lane.b32.xlu0 %v8835, 16
      %v9182 = vpop.permute.xlu0 %9181
      %9183 = vrot.lane.b32.xlu0 %v8836, 16
      %v9184 = vpop.permute.xlu0 %9183
      %9185 = vrot.lane.b32.xlu0 %v8837, 16
      %v9186 = vpop.permute.xlu0 %9185
      %9187 = vrot.lane.b32.xlu0 %v8838, 16
      %v9188 = vpop.permute.xlu0 %9187
      %9189 = vrot.lane.b32.xlu0 %v8839, 16
      %v9190 = vpop.permute.xlu0 %9189
      %9191 = vrot.lane.b32.xlu0 %v8840, 16
      %v9192 = vpop.permute.xlu0 %9191
      %9193 = vrot.lane.b32.xlu0 %v8841, 16
      %v9194 = vpop.permute.xlu0 %9193
      %9195 = vrot.lane.b32.xlu0 %v8842, 16
      %v9196 = vpop.permute.xlu0 %9195
      %9197 = vrot.lane.b32.xlu0 %v8843, 16
      %v9198 = vpop.permute.xlu0 %9197
      %9199 = vrot.lane.b32.xlu0 %v8844, 16
      %v9200 = vpop.permute.xlu0 %9199
      %9201 = vrot.lane.b32.xlu0 %v8845, 16
      %v9202 = vpop.permute.xlu0 %9201
      %9203 = vrot.lane.b32.xlu0 %v8846, 16
      %v9204 = vpop.permute.xlu0 %9203
      %9205 = vrot.lane.b32.xlu0 %v8847, 16
      %v9206 = vpop.permute.xlu0 %9205
      %9207 = vrot.lane.b32.xlu0 %v8848, 16
      %v9208 = vpop.permute.xlu0 %9207
      %9209 = vrot.lane.b32.xlu0 %v8849, 16
      %v9210 = vpop.permute.xlu0 %9209
      %9211 = vrot.lane.b32.xlu0 %v8850, 16
      %v9212 = vpop.permute.xlu0 %9211
      %9213 = vrot.lane.b32.xlu0 %v8851, 16
      %v9214 = vpop.permute.xlu0 %9213
      %9215 = vrot.lane.b32.xlu0 %v8852, 16
      %v9216 = vpop.permute.xlu0 %9215
      %9281 = vrot.lane.b32.xlu0 %v8855, 24
      %v9282 = vpop.permute.xlu0 %9281
      %9283 = vrot.lane.b32.xlu0 %v8856, 24
      %v9284 = vpop.permute.xlu0 %9283
      %9285 = vrot.lane.b32.xlu0 %v8857, 24
      %v9286 = vpop.permute.xlu0 %9285
      %9287 = vrot.lane.b32.xlu0 %v8858, 24
      %v9288 = vpop.permute.xlu0 %9287
      %9289 = vrot.lane.b32.xlu0 %v8859, 24
      %v9290 = vpop.permute.xlu0 %9289
      %9291 = vrot.lane.b32.xlu0 %v8860, 24
      %v9292 = vpop.permute.xlu0 %9291
      %9293 = vrot.lane.b32.xlu0 %v8861, 24
      %v9294 = vpop.permute.xlu0 %9293
      %9295 = vrot.lane.b32.xlu0 %v8862, 24
      %v9296 = vpop.permute.xlu0 %9295
      %9297 = vrot.lane.b32.xlu0 %v8863, 24
      %v9298 = vpop.permute.xlu0 %9297
      %9299 = vrot.lane.b32.xlu0 %v8864, 24
      %v9300 = vpop.permute.xlu0 %9299
      %9301 = vrot.lane.b32.xlu0 %v8865, 24
      %v9302 = vpop.permute.xlu0 %9301
      %9303 = vrot.lane.b32.xlu0 %v8866, 24
      %v9304 = vpop.permute.xlu0 %9303
      %9305 = vrot.lane.b32.xlu0 %v8867, 24
      %v9306 = vpop.permute.xlu0 %9305
      %9307 = vrot.lane.b32.xlu0 %v8868, 24
      %v9308 = vpop.permute.xlu0 %9307
      %9309 = vrot.lane.b32.xlu0 %v8869, 24
      %v9310 = vpop.permute.xlu0 %9309
      %9311 = vrot.lane.b32.xlu0 %v8870, 24
      %v9312 = vpop.permute.xlu0 %9311
      %9313 = vrot.lane.b32.xlu0 %v8871, 24
      %v9314 = vpop.permute.xlu0 %9313
      %9315 = vrot.lane.b32.xlu0 %v8872, 24
      %v9316 = vpop.permute.xlu0 %9315
      %9317 = vrot.lane.b32.xlu0 %v8873, 24
      %v9318 = vpop.permute.xlu0 %9317
      %9319 = vrot.lane.b32.xlu0 %v8874, 24
      %v9320 = vpop.permute.xlu0 %9319
      %9321 = vrot.lane.b32.xlu0 %v8875, 24
      %v9322 = vpop.permute.xlu0 %9321
      %9323 = vrot.lane.b32.xlu0 %v8876, 24
      %v9324 = vpop.permute.xlu0 %9323
      %9325 = vrot.lane.b32.xlu0 %v8877, 24
      %v9326 = vpop.permute.xlu0 %9325
      %9327 = vrot.lane.b32.xlu0 %v8878, 24
      %v9328 = vpop.permute.xlu0 %9327
      %9329 = vrot.lane.b32.xlu0 %v8879, 24
      %v9330 = vpop.permute.xlu0 %9329
      %9331 = vrot.lane.b32.xlu0 %v8880, 24
      %v9332 = vpop.permute.xlu0 %9331
      %9333 = vrot.lane.b32.xlu0 %v8881, 24
      %v9334 = vpop.permute.xlu0 %9333
      %9335 = vrot.lane.b32.xlu0 %v8882, 24
      %v9336 = vpop.permute.xlu0 %9335
      %9337 = vrot.lane.b32.xlu0 %v8883, 24
      %v9338 = vpop.permute.xlu0 %9337
      %9339 = vrot.lane.b32.xlu0 %v8884, 24
      %v9340 = vpop.permute.xlu0 %9339
      %9341 = vrot.lane.b32.xlu0 %v8885, 24
      %v9342 = vpop.permute.xlu0 %9341
      %9343 = vrot.lane.b32.xlu0 %v8886, 24
      %v9344 = vpop.permute.xlu0 %9343
      %9409 = vrot.lane.b32.xlu0 %v8629, 32
      %v9410 = vpop.permute.xlu0 %9409
      %9411 = vrot.lane.b32.xlu0 %v8630, 32
      %v9412 = vpop.permute.xlu0 %9411
      %9413 = vrot.lane.b32.xlu0 %v8631, 32
      %v9414 = vpop.permute.xlu0 %9413
      %9415 = vrot.lane.b32.xlu0 %v8632, 32
      %v9416 = vpop.permute.xlu0 %9415
      %9417 = vrot.lane.b32.xlu0 %v8633, 32
      %v9418 = vpop.permute.xlu0 %9417
      %9419 = vrot.lane.b32.xlu0 %v8634, 32
      %v9420 = vpop.permute.xlu0 %9419
      %9421 = vrot.lane.b32.xlu0 %v8635, 32
      %v9422 = vpop.permute.xlu0 %9421
      %9423 = vrot.lane.b32.xlu0 %v8636, 32
      %v9424 = vpop.permute.xlu0 %9423
      %9425 = vrot.lane.b32.xlu0 %v8637, 32
      %v9426 = vpop.permute.xlu0 %9425
      %9427 = vrot.lane.b32.xlu0 %v8638, 32
      %v9428 = vpop.permute.xlu0 %9427
      %9429 = vrot.lane.b32.xlu0 %v8639, 32
      %v9430 = vpop.permute.xlu0 %9429
      %9431 = vrot.lane.b32.xlu0 %v8640, 32
      %v9432 = vpop.permute.xlu0 %9431
      %9433 = vrot.lane.b32.xlu0 %v8641, 32
      %v9434 = vpop.permute.xlu0 %9433
      %9435 = vrot.lane.b32.xlu0 %v8642, 32
      %v9436 = vpop.permute.xlu0 %9435
      %9437 = vrot.lane.b32.xlu0 %v8643, 32
      %v9438 = vpop.permute.xlu0 %9437
      %9439 = vrot.lane.b32.xlu0 %v8644, 32
      %v9440 = vpop.permute.xlu0 %9439
      %9441 = vrot.lane.b32.xlu0 %v8645, 32
      %v9442 = vpop.permute.xlu0 %9441
      %9443 = vrot.lane.b32.xlu0 %v8646, 32
      %v9444 = vpop.permute.xlu0 %9443
      %9445 = vrot.lane.b32.xlu0 %v8647, 32
      %v9446 = vpop.permute.xlu0 %9445
      %9447 = vrot.lane.b32.xlu0 %v8648, 32
      %v9448 = vpop.permute.xlu0 %9447
      %9449 = vrot.lane.b32.xlu0 %v8649, 32
      %v9450 = vpop.permute.xlu0 %9449
      %9451 = vrot.lane.b32.xlu0 %v8650, 32
      %v9452 = vpop.permute.xlu0 %9451
      %9453 = vrot.lane.b32.xlu0 %v8651, 32
      %v9454 = vpop.permute.xlu0 %9453
      %9455 = vrot.lane.b32.xlu0 %v8652, 32
      %v9456 = vpop.permute.xlu0 %9455
      %9457 = vrot.lane.b32.xlu0 %v8653, 32
      %v9458 = vpop.permute.xlu0 %9457
      %9459 = vrot.lane.b32.xlu0 %v8654, 32
      %v9460 = vpop.permute.xlu0 %9459
      %9461 = vrot.lane.b32.xlu0 %v8655, 32
      %v9462 = vpop.permute.xlu0 %9461
      %9463 = vrot.lane.b32.xlu0 %v8656, 32
      %v9464 = vpop.permute.xlu0 %9463
      %9465 = vrot.lane.b32.xlu0 %v8657, 32
      %v9466 = vpop.permute.xlu0 %9465
      %9467 = vrot.lane.b32.xlu0 %v8658, 32
      %v9468 = vpop.permute.xlu0 %9467
      %9469 = vrot.lane.b32.xlu0 %v8659, 32
      %v9470 = vpop.permute.xlu0 %9469
      %9471 = vrot.lane.b32.xlu0 %v8660, 32
      %v9472 = vpop.permute.xlu0 %9471
      %9537 = vrot.lane.b32.xlu0 %v8889, 40
      %v9538 = vpop.permute.xlu0 %9537
      %9539 = vrot.lane.b32.xlu0 %v8890, 40
      %v9540 = vpop.permute.xlu0 %9539
      %9541 = vrot.lane.b32.xlu0 %v8891, 40
      %v9542 = vpop.permute.xlu0 %9541
      %9543 = vrot.lane.b32.xlu0 %v8892, 40
      %v9544 = vpop.permute.xlu0 %9543
      %9545 = vrot.lane.b32.xlu0 %v8893, 40
      %v9546 = vpop.permute.xlu0 %9545
      %9547 = vrot.lane.b32.xlu0 %v8894, 40
      %v9548 = vpop.permute.xlu0 %9547
      %9549 = vrot.lane.b32.xlu0 %v8895, 40
      %v9550 = vpop.permute.xlu0 %9549
      %9551 = vrot.lane.b32.xlu0 %v8896, 40
      %v9552 = vpop.permute.xlu0 %9551
      %9553 = vrot.lane.b32.xlu0 %v8897, 40
      %v9554 = vpop.permute.xlu0 %9553
      %9555 = vrot.lane.b32.xlu0 %v8898, 40
      %v9556 = vpop.permute.xlu0 %9555
      %9557 = vrot.lane.b32.xlu0 %v8899, 40
      %v9558 = vpop.permute.xlu0 %9557
      %9559 = vrot.lane.b32.xlu0 %v8900, 40
      %v9560 = vpop.permute.xlu0 %9559
      %9561 = vrot.lane.b32.xlu0 %v8901, 40
      %v9562 = vpop.permute.xlu0 %9561
      %9563 = vrot.lane.b32.xlu0 %v8902, 40
      %v9564 = vpop.permute.xlu0 %9563
      %9565 = vrot.lane.b32.xlu0 %v8903, 40
      %v9566 = vpop.permute.xlu0 %9565
      %9567 = vrot.lane.b32.xlu0 %v8904, 40
      %v9568 = vpop.permute.xlu0 %9567
      %9569 = vrot.lane.b32.xlu0 %v8905, 40
      %v9570 = vpop.permute.xlu0 %9569
      %9571 = vrot.lane.b32.xlu0 %v8906, 40
      %v9572 = vpop.permute.xlu0 %9571
      %9573 = vrot.lane.b32.xlu0 %v8907, 40
      %v9574 = vpop.permute.xlu0 %9573
      %9575 = vrot.lane.b32.xlu0 %v8908, 40
      %v9576 = vpop.permute.xlu0 %9575
      %9577 = vrot.lane.b32.xlu0 %v8909, 40
      %v9578 = vpop.permute.xlu0 %9577
      %9579 = vrot.lane.b32.xlu0 %v8910, 40
      %v9580 = vpop.permute.xlu0 %9579
      %9581 = vrot.lane.b32.xlu0 %v8911, 40
      %v9582 = vpop.permute.xlu0 %9581
      %9583 = vrot.lane.b32.xlu0 %v8912, 40
      %v9584 = vpop.permute.xlu0 %9583
      %9585 = vrot.lane.b32.xlu0 %v8913, 40
      %v9586 = vpop.permute.xlu0 %9585
      %9587 = vrot.lane.b32.xlu0 %v8914, 40
      %v9588 = vpop.permute.xlu0 %9587
      %9589 = vrot.lane.b32.xlu0 %v8915, 40
      %v9590 = vpop.permute.xlu0 %9589
      %9591 = vrot.lane.b32.xlu0 %v8916, 40
      %v9592 = vpop.permute.xlu0 %9591
      %9593 = vrot.lane.b32.xlu0 %v8917, 40
      %v9594 = vpop.permute.xlu0 %9593
      %9595 = vrot.lane.b32.xlu0 %v8918, 40
      %v9596 = vpop.permute.xlu0 %9595
      %9597 = vrot.lane.b32.xlu0 %v8919, 40
      %v9598 = vpop.permute.xlu0 %9597
      %9599 = vrot.lane.b32.xlu0 %v8920, 40
      %v9600 = vpop.permute.xlu0 %9599
      %9665 = vrot.lane.b32.xlu0 %v8923, 48
      %v9666 = vpop.permute.xlu0 %9665
      %9667 = vrot.lane.b32.xlu0 %v8924, 48
      %v9668 = vpop.permute.xlu0 %9667
      %9669 = vrot.lane.b32.xlu0 %v8925, 48
      %v9670 = vpop.permute.xlu0 %9669
      %9671 = vrot.lane.b32.xlu0 %v8926, 48
      %v9672 = vpop.permute.xlu0 %9671
      %9673 = vrot.lane.b32.xlu0 %v8927, 48
      %v9674 = vpop.permute.xlu0 %9673
      %9675 = vrot.lane.b32.xlu0 %v8928, 48
      %v9676 = vpop.permute.xlu0 %9675
      %9677 = vrot.lane.b32.xlu0 %v8929, 48
      %v9678 = vpop.permute.xlu0 %9677
      %9679 = vrot.lane.b32.xlu0 %v8930, 48
      %v9680 = vpop.permute.xlu0 %9679
      %9681 = vrot.lane.b32.xlu0 %v8931, 48
      %v9682 = vpop.permute.xlu0 %9681
      %9683 = vrot.lane.b32.xlu0 %v8932, 48
      %v9684 = vpop.permute.xlu0 %9683
      %9685 = vrot.lane.b32.xlu0 %v8933, 48
      %v9686 = vpop.permute.xlu0 %9685
      %9687 = vrot.lane.b32.xlu0 %v8934, 48
      %v9688 = vpop.permute.xlu0 %9687
      %9689 = vrot.lane.b32.xlu0 %v8935, 48
      %v9690 = vpop.permute.xlu0 %9689
      %9691 = vrot.lane.b32.xlu0 %v8936, 48
      %v9692 = vpop.permute.xlu0 %9691
      %9693 = vrot.lane.b32.xlu0 %v8937, 48
      %v9694 = vpop.permute.xlu0 %9693
      %9695 = vrot.lane.b32.xlu0 %v8938, 48
      %v9696 = vpop.permute.xlu0 %9695
      %9697 = vrot.lane.b32.xlu0 %v8939, 48
      %v9698 = vpop.permute.xlu0 %9697
      %9699 = vrot.lane.b32.xlu0 %v8940, 48
      %v9700 = vpop.permute.xlu0 %9699
      %9701 = vrot.lane.b32.xlu0 %v8941, 48
      %v9702 = vpop.permute.xlu0 %9701
      %9703 = vrot.lane.b32.xlu0 %v8942, 48
      %v9704 = vpop.permute.xlu0 %9703
      %9705 = vrot.lane.b32.xlu0 %v8943, 48
      %v9706 = vpop.permute.xlu0 %9705
      %9707 = vrot.lane.b32.xlu0 %v8944, 48
      %v9708 = vpop.permute.xlu0 %9707
      %9709 = vrot.lane.b32.xlu0 %v8945, 48
      %v9710 = vpop.permute.xlu0 %9709
      %9711 = vrot.lane.b32.xlu0 %v8946, 48
      %v9712 = vpop.permute.xlu0 %9711
      %9713 = vrot.lane.b32.xlu0 %v8947, 48
      %v9714 = vpop.permute.xlu0 %9713
      %9715 = vrot.lane.b32.xlu0 %v8948, 48
      %v9716 = vpop.permute.xlu0 %9715
      %9717 = vrot.lane.b32.xlu0 %v8949, 48
      %v9718 = vpop.permute.xlu0 %9717
      %9719 = vrot.lane.b32.xlu0 %v8950, 48
      %v9720 = vpop.permute.xlu0 %9719
      %9721 = vrot.lane.b32.xlu0 %v8951, 48
      %v9722 = vpop.permute.xlu0 %9721
      %9723 = vrot.lane.b32.xlu0 %v8952, 48
      %v9724 = vpop.permute.xlu0 %9723
      %9725 = vrot.lane.b32.xlu0 %v8953, 48
      %v9726 = vpop.permute.xlu0 %9725
      %9727 = vrot.lane.b32.xlu0 %v8954, 48
      %v9728 = vpop.permute.xlu0 %9727
      %9765 = vrot.lane.b32.xlu0 %v8761, 56
      %v9766 = vpop.permute.xlu0 %9765
      %9767 = vrot.lane.b32.xlu0 %v8762, 56
      %v9768 = vpop.permute.xlu0 %9767
      %9769 = vrot.lane.b32.xlu0 %v8763, 56
      %v9770 = vpop.permute.xlu0 %9769
      %9771 = vrot.lane.b32.xlu0 %v8764, 56
      %v9772 = vpop.permute.xlu0 %9771
      %9773 = vrot.lane.b32.xlu0 %v8765, 56
      %v9774 = vpop.permute.xlu0 %9773
      %9775 = vrot.lane.b32.xlu0 %v8766, 56
      %v9776 = vpop.permute.xlu0 %9775
      %9777 = vrot.lane.b32.xlu0 %v8767, 56
      %v9778 = vpop.permute.xlu0 %9777
      %9779 = vrot.lane.b32.xlu0 %v8768, 56
      %v9780 = vpop.permute.xlu0 %9779
      %9781 = vrot.lane.b32.xlu0 %v8769, 56
      %v9782 = vpop.permute.xlu0 %9781
      %9783 = vrot.lane.b32.xlu0 %v8770, 56
      %v9784 = vpop.permute.xlu0 %9783
      %9785 = vrot.lane.b32.xlu0 %v8771, 56
      %v9786 = vpop.permute.xlu0 %9785
      %9787 = vrot.lane.b32.xlu0 %v8772, 56
      %v9788 = vpop.permute.xlu0 %9787
      %9789 = vrot.lane.b32.xlu0 %v8773, 56
      %v9790 = vpop.permute.xlu0 %9789
      %9791 = vrot.lane.b32.xlu0 %v8774, 56
      %v9792 = vpop.permute.xlu0 %9791
      %9793 = vrot.lane.b32.xlu0 %v8775, 56
      %v9794 = vpop.permute.xlu0 %9793
      %9795 = vrot.lane.b32.xlu0 %v8776, 56
      %v9796 = vpop.permute.xlu0 %9795
      %9797 = vrot.lane.b32.xlu0 %v8777, 56
      %v9798 = vpop.permute.xlu0 %9797
      %9799 = vrot.lane.b32.xlu0 %v8778, 56
      %v9800 = vpop.permute.xlu0 %9799
      %9801 = vrot.lane.b32.xlu0 %v8779, 56
      %v9802 = vpop.permute.xlu0 %9801
      %9803 = vrot.lane.b32.xlu0 %v8780, 56
      %v9804 = vpop.permute.xlu0 %9803
      %9805 = vrot.lane.b32.xlu0 %v8781, 56
      %v9806 = vpop.permute.xlu0 %9805
      %9807 = vrot.lane.b32.xlu0 %v8782, 56
      %v9808 = vpop.permute.xlu0 %9807
      %9809 = vrot.lane.b32.xlu0 %v8783, 56
      %v9810 = vpop.permute.xlu0 %9809
      %9811 = vrot.lane.b32.xlu0 %v8784, 56
      %v9812 = vpop.permute.xlu0 %9811
      %9813 = vrot.lane.b32.xlu0 %v8785, 56
      %v9814 = vpop.permute.xlu0 %9813
      %9815 = vrot.lane.b32.xlu0 %v8786, 56
      %v9816 = vpop.permute.xlu0 %9815
      %9817 = vrot.lane.b32.xlu0 %v8787, 56
      %v9818 = vpop.permute.xlu0 %9817
      %9819 = vrot.lane.b32.xlu0 %v8788, 56
      %v9820 = vpop.permute.xlu0 %9819
      %9821 = vrot.lane.b32.xlu0 %v8955, 56
      %v9822 = vpop.permute.xlu0 %9821
      %9823 = vrot.lane.b32.xlu0 %v8956, 56
      %v9824 = vpop.permute.xlu0 %9823
      %9825 = vrot.lane.b32.xlu0 %v8957, 56
      %v9826 = vpop.permute.xlu0 %9825
      %9827 = vrot.lane.b32.xlu0 %v8958, 56
      %v9828 = vpop.permute.xlu0 %9827
      %9893 = vrot.lane.b32.xlu0 %v8961, 64
      %v9894 = vpop.permute.xlu0 %9893
      %9895 = vrot.lane.b32.xlu0 %v8962, 64
      %v9896 = vpop.permute.xlu0 %9895
      %9897 = vrot.lane.b32.xlu0 %v8963, 64
      %v9898 = vpop.permute.xlu0 %9897
      %9899 = vrot.lane.b32.xlu0 %v8964, 64
      %v9900 = vpop.permute.xlu0 %9899
      %9901 = vrot.lane.b32.xlu0 %v8965, 64
      %v9902 = vpop.permute.xlu0 %9901
      %9903 = vrot.lane.b32.xlu0 %v8966, 64
      %v9904 = vpop.permute.xlu0 %9903
      %9905 = vrot.lane.b32.xlu0 %v8967, 64
      %v9906 = vpop.permute.xlu0 %9905
      %9907 = vrot.lane.b32.xlu0 %v8968, 64
      %v9908 = vpop.permute.xlu0 %9907
      %9909 = vrot.lane.b32.xlu0 %v8969, 64
      %v9910 = vpop.permute.xlu0 %9909
      %9911 = vrot.lane.b32.xlu0 %v8970, 64
      %v9912 = vpop.permute.xlu0 %9911
      %9913 = vrot.lane.b32.xlu0 %v8971, 64
      %v9914 = vpop.permute.xlu0 %9913
      %9915 = vrot.lane.b32.xlu0 %v8972, 64
      %v9916 = vpop.permute.xlu0 %9915
      %9917 = vrot.lane.b32.xlu0 %v8973, 64
      %v9918 = vpop.permute.xlu0 %9917
      %9919 = vrot.lane.b32.xlu0 %v8974, 64
      %v9920 = vpop.permute.xlu0 %9919
      %9921 = vrot.lane.b32.xlu0 %v8975, 64
      %v9922 = vpop.permute.xlu0 %9921
      %9923 = vrot.lane.b32.xlu0 %v8976, 64
      %v9924 = vpop.permute.xlu0 %9923
      %9925 = vrot.lane.b32.xlu0 %v8977, 64
      %v9926 = vpop.permute.xlu0 %9925
      %9927 = vrot.lane.b32.xlu0 %v8978, 64
      %v9928 = vpop.permute.xlu0 %9927
      %9929 = vrot.lane.b32.xlu0 %v8979, 64
      %v9930 = vpop.permute.xlu0 %9929
      %9931 = vrot.lane.b32.xlu0 %v8980, 64
      %v9932 = vpop.permute.xlu0 %9931
      %9933 = vrot.lane.b32.xlu0 %v8981, 64
      %v9934 = vpop.permute.xlu0 %9933
      %9935 = vrot.lane.b32.xlu0 %v8982, 64
      %v9936 = vpop.permute.xlu0 %9935
      %9937 = vrot.lane.b32.xlu0 %v8983, 64
      %v9938 = vpop.permute.xlu0 %9937
      %9939 = vrot.lane.b32.xlu0 %v8984, 64
      %v9940 = vpop.permute.xlu0 %9939
      %9941 = vrot.lane.b32.xlu0 %v8985, 64
      %v9942 = vpop.permute.xlu0 %9941
      %9943 = vrot.lane.b32.xlu0 %v8986, 64
      %v9944 = vpop.permute.xlu0 %9943
      %9945 = vrot.lane.b32.xlu0 %v8987, 64
      %v9946 = vpop.permute.xlu0 %9945
      %9947 = vrot.lane.b32.xlu0 %v8988, 64
      %v9948 = vpop.permute.xlu0 %9947
      %9949 = vrot.lane.b32.xlu0 %v8989, 64
      %v9950 = vpop.permute.xlu0 %9949
      %9951 = vrot.lane.b32.xlu0 %v8990, 64
      %v9952 = vpop.permute.xlu0 %9951
      %9953 = vrot.lane.b32.xlu0 %v8991, 64
      %v9954 = vpop.permute.xlu0 %9953
      %9955 = vrot.lane.b32.xlu0 %v8992, 64
      %v9956 = vpop.permute.xlu0 %9955
      %v9989 = vsel %vm948, %v8725, %v9026
      %v9990 = vsel %vm948, %v8726, %v9028
      %v9991 = vsel %vm948, %v8727, %v9030
      %v9992 = vsel %vm948, %v8728, %v9032
      %v9993 = vsel %vm948, %v8729, %v9034
      %v9994 = vsel %vm948, %v8730, %v9036
      %v9995 = vsel %vm948, %v8731, %v9038
      %v9996 = vsel %vm948, %v8732, %v9040
      %v9997 = vsel %vm948, %v8733, %v9042
      %v9998 = vsel %vm948, %v8734, %v9044
      %v9999 = vsel %vm948, %v8735, %v9046
      %v10000 = vsel %vm948, %v8736, %v9048
      %v10001 = vsel %vm948, %v8737, %v9050
      %v10002 = vsel %vm948, %v8738, %v9052
      %v10003 = vsel %vm948, %v8739, %v9054
      %v10004 = vsel %vm948, %v8740, %v9056
      %v10005 = vsel %vm948, %v8741, %v9058
      %v10006 = vsel %vm948, %v8742, %v9060
      %v10007 = vsel %vm948, %v8743, %v9062
      %v10008 = vsel %vm948, %v8744, %v9064
      %v10009 = vsel %vm948, %v8745, %v9066
      %v10010 = vsel %vm948, %v8746, %v9068
      %v10011 = vsel %vm948, %v8747, %v9070
      %v10012 = vsel %vm948, %v8748, %v9072
      %v10013 = vsel %vm948, %v8749, %v9074
      %v10014 = vsel %vm948, %v8750, %v9076
      %v10015 = vsel %vm948, %v8751, %v9078
      %v10016 = vsel %vm948, %v8752, %v9080
      %v10017 = vsel %vm948, %v8753, %v9082
      %v10018 = vsel %vm948, %v8754, %v9084
      %v10019 = vsel %vm948, %v8755, %v9086
      %v10020 = vsel %vm948, %v8756, %v9088
      %v10021 = vsel %vm2572, %v9989, %v9154
      %v10022 = vsel %vm2572, %v9990, %v9156
      %v10023 = vsel %vm2572, %v9991, %v9158
      %v10024 = vsel %vm2572, %v9992, %v9160
      %v10025 = vsel %vm2572, %v9993, %v9162
      %v10026 = vsel %vm2572, %v9994, %v9164
      %v10027 = vsel %vm2572, %v9995, %v9166
      %v10028 = vsel %vm2572, %v9996, %v9168
      %v10029 = vsel %vm2572, %v9997, %v9170
      %v10030 = vsel %vm2572, %v9998, %v9172
      %v10031 = vsel %vm2572, %v9999, %v9174
      %v10032 = vsel %vm2572, %v10000, %v9176
      %v10033 = vsel %vm2572, %v10001, %v9178
      %v10034 = vsel %vm2572, %v10002, %v9180
      %v10035 = vsel %vm2572, %v10003, %v9182
      %v10036 = vsel %vm2572, %v10004, %v9184
      %v10037 = vsel %vm2572, %v10005, %v9186
      %v10038 = vsel %vm2572, %v10006, %v9188
      %v10039 = vsel %vm2572, %v10007, %v9190
      %v10040 = vsel %vm2572, %v10008, %v9192
      %v10041 = vsel %vm2572, %v10009, %v9194
      %v10042 = vsel %vm2572, %v10010, %v9196
      %v10043 = vsel %vm2572, %v10011, %v9198
      %v10044 = vsel %vm2572, %v10012, %v9200
      %v10045 = vsel %vm2572, %v10013, %v9202
      %v10046 = vsel %vm2572, %v10014, %v9204
      %v10047 = vsel %vm2572, %v10015, %v9206
      %v10048 = vsel %vm2572, %v10016, %v9208
      %v10049 = vsel %vm2572, %v10017, %v9210
      %v10050 = vsel %vm2572, %v10018, %v9212
      %v10051 = vsel %vm2572, %v10019, %v9214
      %v10052 = vsel %vm2572, %v10020, %v9216
      %v10053 = vsel %vm2638, %v10021, %v9282
      %v10054 = vsel %vm2638, %v10022, %v9284
      %v10055 = vsel %vm2638, %v10023, %v9286
      %v10056 = vsel %vm2638, %v10024, %v9288
      %v10057 = vsel %vm2638, %v10025, %v9290
      %v10058 = vsel %vm2638, %v10026, %v9292
      %v10059 = vsel %vm2638, %v10027, %v9294
      %v10060 = vsel %vm2638, %v10028, %v9296
      %v10061 = vsel %vm2638, %v10029, %v9298
      %v10062 = vsel %vm2638, %v10030, %v9300
      %v10063 = vsel %vm2638, %v10031, %v9302
      %v10064 = vsel %vm2638, %v10032, %v9304
      %v10065 = vsel %vm2638, %v10033, %v9306
      %v10066 = vsel %vm2638, %v10034, %v9308
      %v10067 = vsel %vm2638, %v10035, %v9310
      %v10068 = vsel %vm2638, %v10036, %v9312
      %v10069 = vsel %vm2638, %v10037, %v9314
      %v10070 = vsel %vm2638, %v10038, %v9316
      %v10071 = vsel %vm2638, %v10039, %v9318
      %v10072 = vsel %vm2638, %v10040, %v9320
      %v10073 = vsel %vm2638, %v10041, %v9322
      %v10074 = vsel %vm2638, %v10042, %v9324
      %v10075 = vsel %vm2638, %v10043, %v9326
      %v10076 = vsel %vm2638, %v10044, %v9328
      %v10077 = vsel %vm2638, %v10045, %v9330
      %v10078 = vsel %vm2638, %v10046, %v9332
      %v10079 = vsel %vm2638, %v10047, %v9334
      %v10080 = vsel %vm2638, %v10048, %v9336
      %v10081 = vsel %vm2638, %v10049, %v9338
      %v10082 = vsel %vm2638, %v10050, %v9340
      %v10083 = vsel %vm2638, %v10051, %v9342
      %v10084 = vsel %vm2638, %v10052, %v9344
      %v10085 = vsel %vm2704, %v10053, %v9410
      %v10086 = vsel %vm2704, %v10054, %v9412
      %v10087 = vsel %vm2704, %v10055, %v9414
      %v10088 = vsel %vm2704, %v10056, %v9416
      %v10089 = vsel %vm2704, %v10057, %v9418
      %v10090 = vsel %vm2704, %v10058, %v9420
      %v10091 = vsel %vm2704, %v10059, %v9422
      %v10092 = vsel %vm2704, %v10060, %v9424
      %v10093 = vsel %vm2704, %v10061, %v9426
      %v10094 = vsel %vm2704, %v10062, %v9428
      %v10095 = vsel %vm2704, %v10063, %v9430
      %v10096 = vsel %vm2704, %v10064, %v9432
      %v10097 = vsel %vm2704, %v10065, %v9434
      %v10098 = vsel %vm2704, %v10066, %v9436
      %v10099 = vsel %vm2704, %v10067, %v9438
      %v10100 = vsel %vm2704, %v10068, %v9440
      %v10101 = vsel %vm2704, %v10069, %v9442
      %v10102 = vsel %vm2704, %v10070, %v9444
      %v10103 = vsel %vm2704, %v10071, %v9446
      %v10104 = vsel %vm2704, %v10072, %v9448
      %v10105 = vsel %vm2704, %v10073, %v9450
      %v10106 = vsel %vm2704, %v10074, %v9452
      %v10107 = vsel %vm2704, %v10075, %v9454
      %v10108 = vsel %vm2704, %v10076, %v9456
      %v10109 = vsel %vm2704, %v10077, %v9458
      %v10110 = vsel %vm2704, %v10078, %v9460
      %v10111 = vsel %vm2704, %v10079, %v9462
      %v10112 = vsel %vm2704, %v10080, %v9464
      %v10113 = vsel %vm2704, %v10081, %v9466
      %v10114 = vsel %vm2704, %v10082, %v9468
      %v10115 = vsel %vm2704, %v10083, %v9470
      %v10116 = vsel %vm2704, %v10084, %v9472
      %v10117 = vsel %vm4450, %v10085, %v9538
      %v10118 = vsel %vm4450, %v10086, %v9540
      %v10119 = vsel %vm4450, %v10087, %v9542
      %v10120 = vsel %vm4450, %v10088, %v9544
      %v10121 = vsel %vm4450, %v10089, %v9546
      %v10122 = vsel %vm4450, %v10090, %v9548
      %v10123 = vsel %vm4450, %v10091, %v9550
      %v10124 = vsel %vm4450, %v10092, %v9552
      %v10125 = vsel %vm4450, %v10093, %v9554
      %v10126 = vsel %vm4450, %v10094, %v9556
      %v10127 = vsel %vm4450, %v10095, %v9558
      %v10128 = vsel %vm4450, %v10096, %v9560
      %v10129 = vsel %vm4450, %v10097, %v9562
      %v10130 = vsel %vm4450, %v10098, %v9564
      %v10131 = vsel %vm4450, %v10099, %v9566
      %v10132 = vsel %vm4450, %v10100, %v9568
      %v10133 = vsel %vm4450, %v10101, %v9570
      %v10134 = vsel %vm4450, %v10102, %v9572
      %v10135 = vsel %vm4450, %v10103, %v9574
      %v10136 = vsel %vm4450, %v10104, %v9576
      %v10137 = vsel %vm4450, %v10105, %v9578
      %v10138 = vsel %vm4450, %v10106, %v9580
      %v10139 = vsel %vm4450, %v10107, %v9582
      %v10140 = vsel %vm4450, %v10108, %v9584
      %v10141 = vsel %vm4450, %v10109, %v9586
      %v10142 = vsel %vm4450, %v10110, %v9588
      %v10143 = vsel %vm4450, %v10111, %v9590
      %v10144 = vsel %vm4450, %v10112, %v9592
      %v10145 = vsel %vm4450, %v10113, %v9594
      %v10146 = vsel %vm4450, %v10114, %v9596
      %v10147 = vsel %vm4450, %v10115, %v9598
      %v10148 = vsel %vm4450, %v10116, %v9600
      %v10149 = vsel %vm4483, %v10117, %v9666
      %v10150 = vsel %vm4483, %v10118, %v9668
      %v10151 = vsel %vm4483, %v10119, %v9670
      %v10152 = vsel %vm4483, %v10120, %v9672
      %v10153 = vsel %vm4483, %v10121, %v9674
      %v10154 = vsel %vm4483, %v10122, %v9676
      %v10155 = vsel %vm4483, %v10123, %v9678
      %v10156 = vsel %vm4483, %v10124, %v9680
      %v10157 = vsel %vm4483, %v10125, %v9682
      %v10158 = vsel %vm4483, %v10126, %v9684
      %v10159 = vsel %vm4483, %v10127, %v9686
      %v10160 = vsel %vm4483, %v10128, %v9688
      %v10161 = vsel %vm4483, %v10129, %v9690
      %v10162 = vsel %vm4483, %v10130, %v9692
      %v10163 = vsel %vm4483, %v10131, %v9694
      %v10164 = vsel %vm4483, %v10132, %v9696
      %v10165 = vsel %vm4483, %v10133, %v9698
      %v10166 = vsel %vm4483, %v10134, %v9700
      %v10167 = vsel %vm4483, %v10135, %v9702
      %v10168 = vsel %vm4483, %v10136, %v9704
      %v10169 = vsel %vm4483, %v10137, %v9706
      %v10170 = vsel %vm4483, %v10138, %v9708
      %v10171 = vsel %vm4483, %v10139, %v9710
      %v10172 = vsel %vm4483, %v10140, %v9712
      %v10173 = vsel %vm4483, %v10141, %v9714
      %v10174 = vsel %vm4483, %v10142, %v9716
      %v10175 = vsel %vm4483, %v10143, %v9718
      %v10176 = vsel %vm4483, %v10144, %v9720
      %v10177 = vsel %vm4483, %v10145, %v9722
      %v10178 = vsel %vm4483, %v10146, %v9724
      %v10179 = vsel %vm4483, %v10147, %v9726
      %v10180 = vsel %vm4483, %v10148, %v9728
      %v10181 = vsel %vm4516, %v10149, %v9766
      %v10182 = vsel %vm4516, %v10150, %v9768
      %v10183 = vsel %vm4516, %v10151, %v9770
      %v10184 = vsel %vm4516, %v10152, %v9772
      %v10185 = vsel %vm4516, %v10153, %v9774
      %v10186 = vsel %vm4516, %v10154, %v9776
      %v10187 = vsel %vm4516, %v10155, %v9778
      %v10188 = vsel %vm4516, %v10156, %v9780
      %v10189 = vsel %vm4516, %v10157, %v9782
      %v10190 = vsel %vm4516, %v10158, %v9784
      %v10191 = vsel %vm4516, %v10159, %v9786
      %v10192 = vsel %vm4516, %v10160, %v9788
      %v10193 = vsel %vm4516, %v10161, %v9790
      %v10194 = vsel %vm4516, %v10162, %v9792
      %v10195 = vsel %vm4516, %v10163, %v9794
      %v10196 = vsel %vm4516, %v10164, %v9796
      %v10197 = vsel %vm4516, %v10165, %v9798
      %v10198 = vsel %vm4516, %v10166, %v9800
      %v10199 = vsel %vm4516, %v10167, %v9802
      %v10200 = vsel %vm4516, %v10168, %v9804
      %v10201 = vsel %vm4516, %v10169, %v9806
      %v10202 = vsel %vm4516, %v10170, %v9808
      %v10203 = vsel %vm4516, %v10171, %v9810
      %v10204 = vsel %vm4516, %v10172, %v9812
      %v10205 = vsel %vm4516, %v10173, %v9814
      %v10206 = vsel %vm4516, %v10174, %v9816
      %v10207 = vsel %vm4516, %v10175, %v9818
      %v10208 = vsel %vm4516, %v10176, %v9820
      %v10209 = vsel %vm4516, %v10177, %v9822
      %v10210 = vsel %vm4516, %v10178, %v9824
      %v10211 = vsel %vm4516, %v10179, %v9826
      %v10212 = vsel %vm4516, %v10180, %v9828
      %v10213 = vsel %vm4549, %v10181, %v9894
      %v10214 = vsel %vm4549, %v10182, %v9896
      %v10215 = vsel %vm4549, %v10183, %v9898
      %v10216 = vsel %vm4549, %v10184, %v9900
      %v10217 = vsel %vm4549, %v10185, %v9902
      %v10218 = vsel %vm4549, %v10186, %v9904
      %v10219 = vsel %vm4549, %v10187, %v9906
      %v10220 = vsel %vm4549, %v10188, %v9908
      %v10221 = vsel %vm4549, %v10189, %v9910
      %v10222 = vsel %vm4549, %v10190, %v9912
      %v10223 = vsel %vm4549, %v10191, %v9914
      %v10224 = vsel %vm4549, %v10192, %v9916
      %v10225 = vsel %vm4549, %v10193, %v9918
      %v10226 = vsel %vm4549, %v10194, %v9920
      %v10227 = vsel %vm4549, %v10195, %v9922
      %v10228 = vsel %vm4549, %v10196, %v9924
      %v10229 = vsel %vm4549, %v10197, %v9926
      %v10230 = vsel %vm4549, %v10198, %v9928
      %v10231 = vsel %vm4549, %v10199, %v9930
      %v10232 = vsel %vm4549, %v10200, %v9932
      %v10233 = vsel %vm4549, %v10201, %v9934
      %v10234 = vsel %vm4549, %v10202, %v9936
      %v10235 = vsel %vm4549, %v10203, %v9938
      %v10236 = vsel %vm4549, %v10204, %v9940
      %v10237 = vsel %vm4549, %v10205, %v9942
      %v10238 = vsel %vm4549, %v10206, %v9944
      %v10239 = vsel %vm4549, %v10207, %v9946
      %v10240 = vsel %vm4549, %v10208, %v9948
      %v10241 = vsel %vm4549, %v10209, %v9950
      %v10242 = vsel %vm4549, %v10210, %v9952
      %v10243 = vsel %vm4549, %v10211, %v9954
      %v10244 = vsel %vm4549, %v10212, %v9956
      %v10245 = vpack.c.bf16 %v10214, %v10213
      %v10246 = vpack.c.bf16 %v10216, %v10215
      %v10247 = vpack.c.bf16 %v10218, %v10217
      %v10248 = vpack.c.bf16 %v10220, %v10219
      %v10249 = vpack.c.bf16 %v10222, %v10221
      %v10250 = vpack.c.bf16 %v10224, %v10223
      %v10251 = vpack.c.bf16 %v10226, %v10225
      %v10252 = vpack.c.bf16 %v10228, %v10227
      %v10253 = vpack.c.bf16 %v10230, %v10229
      %v10254 = vpack.c.bf16 %v10232, %v10231
      %v10255 = vpack.c.bf16 %v10234, %v10233
      %v10256 = vpack.c.bf16 %v10236, %v10235
      %v10257 = vpack.c.bf16 %v10238, %v10237
      %v10258 = vpack.c.bf16 %v10240, %v10239
      %v10259 = vpack.c.bf16 %v10242, %v10241
      %v10260 = vpack.c.bf16 %v10244, %v10243
      %v10261 = vld [vmem:[%s9] sm:$0xf]
      %v10262 = vld [vmem:[%s9 + $0x4] sm:$0xf]
      %v10263 = vld [vmem:[%s9 + $0x8] sm:$0xf]
      %v10264 = vld [vmem:[%s9 + $0xc] sm:$0xf]
      %v10265 = vld [vmem:[%s9 + $0x10] sm:$0xf]
      %v10266 = vld [vmem:[%s9 + $0x14] sm:$0xf]
      %v10267 = vld [vmem:[%s9 + $0x18] sm:$0xf]
      %v10268 = vld [vmem:[%s9 + $0x1c] sm:$0xf]
      %v10269 = vld [vmem:[%s9 + $0x20] sm:$0xf]
      %v10270 = vld [vmem:[%s10] sm:$0x1]
      %v10272 = vlaneseq
      %v10273 = vshrl.u32 %v10272, 7
      %v10274 = vsub.s32 0, %v10273
      %v10275 = vrot.slane %v10270, %v10274
      %v10286 = vunpack.c.l.b16 %v10261
      %v10287 = vunpack.c.l.b16 %v10262
      %v10288 = vunpack.c.l.b16 %v10263
      %v10289 = vunpack.c.l.b16 %v10264
      %v10290 = vunpack.c.l.b16 %v10265
      %v10291 = vunpack.c.l.b16 %v10266
      %v10292 = vunpack.c.l.b16 %v10267
      %v10293 = vunpack.c.l.b16 %v10268
      %v10294 = vunpack.c.l.b16 %v10269
      %v10295 = vpack.c.b16 %v10287, %v10286
      %v10296 = vpack.c.b16 %v10289, %v10288
      %v10297 = vpack.c.b16 %v10291, %v10290
      %v10298 = vpack.c.b16 %v10293, %v10292
      %v10299 = vpack.c.b16 %v10294, %v10294
      %v10305 = vsel %vm4641, %v10245, 0
      %v10308 = vsel %vm4641, %v10246, 0
      %v10311 = vsel %vm4641, %v10247, 0
      %v10314 = vsel %vm4641, %v10248, 0
      %v10317 = vsel %vm4641, %v10249, 0
      %v10320 = vsel %vm4641, %v10250, 0
      %v10323 = vsel %vm4641, %v10251, 0
      %v10326 = vsel %vm4641, %v10252, 0
      %v10329 = vsel %vm4641, %v10253, 0
      %v10332 = vsel %vm4641, %v10254, 0
      %v10335 = vsel %vm4641, %v10255, 0
      %v10338 = vsel %vm4641, %v10256, 0
      %v10341 = vsel %vm4641, %v10257, 0
      %v10344 = vsel %vm4641, %v10258, 0
      %v10347 = vsel %vm4641, %v10259, 0
      %v10350 = vsel %vm4641, %v10260, 0
      %v10353 = vsel %vm4690, %v10299, 0
      %10355 = vmatprep.subr.bf16.mxu0 0
      %10356 = vmatpush1.bf16.msra.mxu0 0
      %10357 = vmatprep.subr.bf16.mxu0 0
      %10358 = vmatpush1.bf16.msra.mxu0 0
      %10359 = vmatprep.subr.bf16.mxu0 0
      %10360 = vmatpush1.bf16.msra.mxu0 0
      %10361 = vmatprep.subr.bf16.mxu0 0
      %10362 = vmatpush1.bf16.msra.mxu0 %v10353
      %10363 = vmatprep.subr.bf16.mxu0 0
      %10364 = vmatpush1.bf16.msra.mxu0 %v10298
      %10365 = vmatprep.subr.bf16.mxu0 0
      %10366 = vmatpush1.bf16.msra.mxu0 %v10297
      %10367 = vmatprep.subr.bf16.mxu0 0
      %10368 = vmatpush1.bf16.msra.mxu0 %v10296
      %10369 = vmatprep.subr.bf16.mxu0 0
      %10370 = vmatpush1.bf16.msra.mxu0 %v10295
      %10371 = vmatprep.subr.bf16.mxu0 0
      %10372 = vmatpush2.bf16.msra.mxu0 0
      %10373 = vmatprep.subr.bf16.mxu0 0
      %10374 = vmatpush2.bf16.msra.mxu0 0
      %10375 = vmatprep.subr.bf16.mxu0 0
      %10376 = vmatpush2.bf16.msra.mxu0 0
      %10377 = vmatprep.subr.bf16.mxu0 0
      %10378 = vmatpush2.bf16.msra.mxu0 0
      %10379 = vmatprep.subr.bf16.mxu0 0
      %10380 = vmatpush2.bf16.msra.mxu0 0
      %10381 = vmatprep.subr.bf16.mxu0 0
      %10382 = vmatpush2.bf16.msra.mxu0 0
      %10383 = vmatprep.subr.bf16.mxu0 0
      %10384 = vmatpush2.bf16.msra.mxu0 0
      %10385 = vmatprep.subr.bf16.mxu0 0
      %10386 = vmatpush2.bf16.msra.mxu0 0
      %10387 = vmatprep.mubr.bf16.mxu0 0
      %10388 = vmatmul.mubr.bf16.gmra.mxu0 %v10305
      %v10389 = vpop.f32.mrf.mxu0
      %v10390 = vadd.f32 %v10275, %v10389
      %v10391 = vpop.f32.mrf.mxu0
      %v10392 = vpop.f32.mrf.mxu0
      %v10393 = vadd.f32 %v10275, %v10392
      %v10394 = vpop.f32.mrf.mxu0
      %10395 = vmatprep.mubr.bf16.mxu0 0
      %10396 = vmatmul.mubr.bf16.gmra.mxu0 %v10308
      %v10397 = vpop.f32.mrf.mxu0
      %v10398 = vadd.f32 %v10275, %v10397
      %v10399 = vpop.f32.mrf.mxu0
      %v10400 = vpop.f32.mrf.mxu0
      %v10401 = vadd.f32 %v10275, %v10400
      %v10402 = vpop.f32.mrf.mxu0
      %10403 = vmatprep.mubr.bf16.mxu0 0
      %10404 = vmatmul.mubr.bf16.gmra.mxu0 %v10311
      %v10405 = vpop.f32.mrf.mxu0
      %v10406 = vadd.f32 %v10275, %v10405
      %v10407 = vpop.f32.mrf.mxu0
      %v10408 = vpop.f32.mrf.mxu0
      %v10409 = vadd.f32 %v10275, %v10408
      %v10410 = vpop.f32.mrf.mxu0
      %10411 = vmatprep.mubr.bf16.mxu0 0
      %10412 = vmatmul.mubr.bf16.gmra.mxu0 %v10314
      %v10413 = vpop.f32.mrf.mxu0
      %v10414 = vadd.f32 %v10275, %v10413
      %v10415 = vpop.f32.mrf.mxu0
      %v10416 = vpop.f32.mrf.mxu0
      %v10417 = vadd.f32 %v10275, %v10416
      %v10418 = vpop.f32.mrf.mxu0
      %10419 = vmatprep.mubr.bf16.mxu0 0
      %10420 = vmatmul.mubr.bf16.gmra.mxu0 %v10317
      %v10421 = vpop.f32.mrf.mxu0
      %v10422 = vadd.f32 %v10275, %v10421
      %v10423 = vpop.f32.mrf.mxu0
      %v10424 = vpop.f32.mrf.mxu0
      %v10425 = vadd.f32 %v10275, %v10424
      %v10426 = vpop.f32.mrf.mxu0
      %10427 = vmatprep.mubr.bf16.mxu0 0
      %10428 = vmatmul.mubr.bf16.gmra.mxu0 %v10320
      %v10429 = vpop.f32.mrf.mxu0
      %v10430 = vadd.f32 %v10275, %v10429
      %v10431 = vpop.f32.mrf.mxu0
      %v10432 = vpop.f32.mrf.mxu0
      %v10433 = vadd.f32 %v10275, %v10432
      %v10434 = vpop.f32.mrf.mxu0
      %10435 = vmatprep.mubr.bf16.mxu0 0
      %10436 = vmatmul.mubr.bf16.gmra.mxu0 %v10323
      %v10437 = vpop.f32.mrf.mxu0
      %v10438 = vadd.f32 %v10275, %v10437
      %v10439 = vpop.f32.mrf.mxu0
      %v10440 = vpop.f32.mrf.mxu0
      %v10441 = vadd.f32 %v10275, %v10440
      %v10442 = vpop.f32.mrf.mxu0
      %10443 = vmatprep.mubr.bf16.mxu0 0
      %10444 = vmatmul.mubr.bf16.gmra.mxu0 %v10326
      %v10445 = vpop.f32.mrf.mxu0
      %v10446 = vadd.f32 %v10275, %v10445
      %v10447 = vpop.f32.mrf.mxu0
      %v10448 = vpop.f32.mrf.mxu0
      %v10449 = vadd.f32 %v10275, %v10448
      %v10450 = vpop.f32.mrf.mxu0
      %10451 = vmatprep.mubr.bf16.mxu0 0
      %10452 = vmatmul.mubr.bf16.gmra.mxu0 %v10329
      %v10453 = vpop.f32.mrf.mxu0
      %v10454 = vadd.f32 %v10275, %v10453
      %v10455 = vpop.f32.mrf.mxu0
      %v10456 = vpop.f32.mrf.mxu0
      %v10457 = vadd.f32 %v10275, %v10456
      %v10458 = vpop.f32.mrf.mxu0
      %10459 = vmatprep.mubr.bf16.mxu0 0
      %10460 = vmatmul.mubr.bf16.gmra.mxu0 %v10332
      %v10461 = vpop.f32.mrf.mxu0
      %v10462 = vadd.f32 %v10275, %v10461
      %v10463 = vpop.f32.mrf.mxu0
      %v10464 = vpop.f32.mrf.mxu0
      %v10465 = vadd.f32 %v10275, %v10464
      %v10466 = vpop.f32.mrf.mxu0
      %10467 = vmatprep.mubr.bf16.mxu0 0
      %10468 = vmatmul.mubr.bf16.gmra.mxu0 %v10335
      %v10469 = vpop.f32.mrf.mxu0
      %v10470 = vadd.f32 %v10275, %v10469
      %v10471 = vpop.f32.mrf.mxu0
      %v10472 = vpop.f32.mrf.mxu0
      %v10473 = vadd.f32 %v10275, %v10472
      %v10474 = vpop.f32.mrf.mxu0
      %10475 = vmatprep.mubr.bf16.mxu0 0
      %10476 = vmatmul.mubr.bf16.gmra.mxu0 %v10338
      %v10477 = vpop.f32.mrf.mxu0
      %v10478 = vadd.f32 %v10275, %v10477
      %v10479 = vpop.f32.mrf.mxu0
      %v10480 = vpop.f32.mrf.mxu0
      %v10481 = vadd.f32 %v10275, %v10480
      %v10482 = vpop.f32.mrf.mxu0
      %10483 = vmatprep.mubr.bf16.mxu0 0
      %10484 = vmatmul.mubr.bf16.gmra.mxu0 %v10341
      %v10485 = vpop.f32.mrf.mxu0
      %v10486 = vadd.f32 %v10275, %v10485
      %v10487 = vpop.f32.mrf.mxu0
      %v10488 = vpop.f32.mrf.mxu0
      %v10489 = vadd.f32 %v10275, %v10488
      %v10490 = vpop.f32.mrf.mxu0
      %10491 = vmatprep.mubr.bf16.mxu0 0
      %10492 = vmatmul.mubr.bf16.gmra.mxu0 %v10344
      %v10493 = vpop.f32.mrf.mxu0
      %v10494 = vadd.f32 %v10275, %v10493
      %v10495 = vpop.f32.mrf.mxu0
      %v10496 = vpop.f32.mrf.mxu0
      %v10497 = vadd.f32 %v10275, %v10496
      %v10498 = vpop.f32.mrf.mxu0
      %10499 = vmatprep.mubr.bf16.mxu0 0
      %10500 = vmatmul.mubr.bf16.gmra.mxu0 %v10347
      %v10501 = vpop.f32.mrf.mxu0
      %v10502 = vadd.f32 %v10275, %v10501
      %v10503 = vpop.f32.mrf.mxu0
      %v10504 = vpop.f32.mrf.mxu0
      %v10505 = vadd.f32 %v10275, %v10504
      %v10506 = vpop.f32.mrf.mxu0
      %10507 = vmatprep.mubr.bf16.mxu0 0
      %10508 = vmatmul.mubr.bf16.gmra.mxu0 %v10350
      %v10509 = vpop.f32.mrf.mxu0
      %v10510 = vadd.f32 %v10275, %v10509
      %v10511 = vpop.f32.mrf.mxu0
      %v10512 = vpop.f32.mrf.mxu0
      %v10513 = vadd.f32 %v10275, %v10512
      %v10514 = vpop.f32.mrf.mxu0
      %10515 = vdwg.mxu0
      %v10516 = vadd.f32 %v6742, %v10390
      %v10517 = vadd.f32 %v6743, %v10393
      %v10518 = vadd.f32 %v6744, %v10398
      %v10519 = vadd.f32 %v6745, %v10401
      %v10520 = vadd.f32 %v6746, %v10406
      %v10521 = vadd.f32 %v6747, %v10409
      %v10522 = vadd.f32 %v6748, %v10414
      %v10523 = vadd.f32 %v6749, %v10417
      %v10524 = vadd.f32 %v6750, %v10422
      %v10525 = vadd.f32 %v6751, %v10425
      %v10526 = vadd.f32 %v6752, %v10430
      %v10527 = vadd.f32 %v6753, %v10433
      %v10528 = vadd.f32 %v6754, %v10438
      %v10529 = vadd.f32 %v6755, %v10441
      %v10530 = vadd.f32 %v6756, %v10446
      %v10531 = vadd.f32 %v6757, %v10449
      %v10532 = vadd.f32 %v6758, %v10454
      %v10533 = vadd.f32 %v6759, %v10457
      %v10534 = vadd.f32 %v6760, %v10462
      %v10535 = vadd.f32 %v6761, %v10465
      %v10536 = vadd.f32 %v6762, %v10470
      %v10537 = vadd.f32 %v6763, %v10473
      %v10538 = vadd.f32 %v6764, %v10478
      %v10539 = vadd.f32 %v6765, %v10481
      %v10540 = vadd.f32 %v6766, %v10486
      %v10541 = vadd.f32 %v6767, %v10489
      %v10542 = vadd.f32 %v6768, %v10494
      %v10543 = vadd.f32 %v6769, %v10497
      %v10544 = vadd.f32 %v6770, %v10502
      %v10545 = vadd.f32 %v6771, %v10505
      %v10546 = vadd.f32 %v6772, %v10510
      %v10547 = vadd.f32 %v6773, %v10513
      %v10548 = vmax.f32 %v10516, 0.0
      %v10549 = vmax.f32 %v10517, 0.0
      %v10550 = vmax.f32 %v10518, 0.0
      %v10551 = vmax.f32 %v10519, 0.0
      %v10552 = vmax.f32 %v10520, 0.0
      %v10553 = vmax.f32 %v10521, 0.0
      %v10554 = vmax.f32 %v10522, 0.0
      %v10555 = vmax.f32 %v10523, 0.0
      %v10556 = vmax.f32 %v10524, 0.0
      %v10557 = vmax.f32 %v10525, 0.0
      %v10558 = vmax.f32 %v10526, 0.0
      %v10559 = vmax.f32 %v10527, 0.0
      %v10560 = vmax.f32 %v10528, 0.0
      %v10561 = vmax.f32 %v10529, 0.0
      %v10562 = vmax.f32 %v10530, 0.0
      %v10563 = vmax.f32 %v10531, 0.0
      %v10564 = vmax.f32 %v10532, 0.0
      %v10565 = vmax.f32 %v10533, 0.0
      %v10566 = vmax.f32 %v10534, 0.0
      %v10567 = vmax.f32 %v10535, 0.0
      %v10568 = vmax.f32 %v10536, 0.0
      %v10569 = vmax.f32 %v10537, 0.0
      %v10570 = vmax.f32 %v10538, 0.0
      %v10571 = vmax.f32 %v10539, 0.0
      %v10572 = vmax.f32 %v10540, 0.0
      %v10573 = vmax.f32 %v10541, 0.0
      %v10574 = vmax.f32 %v10542, 0.0
      %v10575 = vmax.f32 %v10543, 0.0
      %v10576 = vmax.f32 %v10544, 0.0
      %v10577 = vmax.f32 %v10545, 0.0
      %v10578 = vmax.f32 %v10546, 0.0
      %v10579 = vmax.f32 %v10547, 0.0
      %10580 = vst.msk [vmem:[%s421] sm:$0xff] %vm948, %v10548
      %10581 = vst.msk [vmem:[%s421 + $0x8] sm:$0xff] %vm948, %v10549
      %10582 = vst.msk [vmem:[%s421 + $0x10] sm:$0xff] %vm948, %v10550
      %10583 = vst.msk [vmem:[%s421 + $0x18] sm:$0xff] %vm948, %v10551
      %10584 = vst.msk [vmem:[%s421 + $0x20] sm:$0xff] %vm948, %v10552
      %10585 = vst.msk [vmem:[%s421 + $0x28] sm:$0xff] %vm948, %v10553
      %10586 = vst.msk [vmem:[%s421 + $0x30] sm:$0xff] %vm948, %v10554
      %10587 = vst.msk [vmem:[%s421 + $0x38] sm:$0xff] %vm948, %v10555
      %10588 = vst.msk [vmem:[%s421 + $0x40] sm:$0xff] %vm948, %v10556
      %10589 = vst.msk [vmem:[%s421 + $0x48] sm:$0xff] %vm948, %v10557
      %10590 = vst.msk [vmem:[%s421 + $0x50] sm:$0xff] %vm948, %v10558
      %10591 = vst.msk [vmem:[%s421 + $0x58] sm:$0xff] %vm948, %v10559
      %10592 = vst.msk [vmem:[%s421 + $0x60] sm:$0xff] %vm948, %v10560
      %10593 = vst.msk [vmem:[%s421 + $0x68] sm:$0xff] %vm948, %v10561
      %10594 = vst.msk [vmem:[%s421 + $0x70] sm:$0xff] %vm948, %v10562
      %10595 = vst.msk [vmem:[%s421 + $0x78] sm:$0xff] %vm948, %v10563
      %10596 = vst.msk [vmem:[%s421 + $0x80] sm:$0xff] %vm948, %v10564
      %10597 = vst.msk [vmem:[%s421 + $0x88] sm:$0xff] %vm948, %v10565
      %10598 = vst.msk [vmem:[%s421 + $0x90] sm:$0xff] %vm948, %v10566
      %10599 = vst.msk [vmem:[%s421 + $0x98] sm:$0xff] %vm948, %v10567
      %10600 = vst.msk [vmem:[%s421 + $0xa0] sm:$0xff] %vm948, %v10568
      %10601 = vst.msk [vmem:[%s421 + $0xa8] sm:$0xff] %vm948, %v10569
      %10602 = vst.msk [vmem:[%s421 + $0xb0] sm:$0xff] %vm948, %v10570
      %10603 = vst.msk [vmem:[%s421 + $0xb8] sm:$0xff] %vm948, %v10571
      %10604 = vst.msk [vmem:[%s421 + $0xc0] sm:$0xff] %vm948, %v10572
      %10605 = vst.msk [vmem:[%s421 + $0xc8] sm:$0xff] %vm948, %v10573
      %10606 = vst.msk [vmem:[%s421 + $0xd0] sm:$0xff] %vm948, %v10574
      %10607 = vst.msk [vmem:[%s421 + $0xd8] sm:$0xff] %vm948, %v10575
      %10608 = vst.msk [vmem:[%s421 + $0xe0] sm:$0xff] %vm948, %v10576
      %10609 = vst.msk [vmem:[%s421 + $0xe8] sm:$0xff] %vm948, %v10577
      %10610 = vst.msk [vmem:[%s421 + $0xf0] sm:$0xff] %vm948, %v10578
      %10611 = vst.msk [vmem:[%s421 + $0xf8] sm:$0xff] %vm948, %v10579
      %v10612 = vld [vmem:[%s421] ss:$2 sm:$0xff]
      %s10613 = scalar_lea.vmem %s421, 16
      %v10614 = vld [vmem:[%s10613] ss:$2 sm:$0xff]
      %s10615 = scalar_lea.vmem %s421, 32
      %v10616 = vld [vmem:[%s10615] ss:$2 sm:$0xff]
      %s10617 = scalar_lea.vmem %s421, 48
      %v10618 = vld [vmem:[%s10617] ss:$2 sm:$0xff]
      %s10619 = scalar_lea.vmem %s421, 64
      %v10620 = vld [vmem:[%s10619] ss:$2 sm:$0xff]
      %s10621 = scalar_lea.vmem %s421, 80
      %v10622 = vld [vmem:[%s10621] ss:$2 sm:$0xff]
      %s10623 = scalar_lea.vmem %s421, 96
      %v10624 = vld [vmem:[%s10623] ss:$2 sm:$0xff]
      %s10625 = scalar_lea.vmem %s421, 112
      %v10626 = vld [vmem:[%s10625] ss:$2 sm:$0xff]
      %s10627 = scalar_lea.vmem %s421, 128
      %v10628 = vld [vmem:[%s10627] ss:$2 sm:$0xff]
      %s10629 = scalar_lea.vmem %s421, 144
      %v10630 = vld [vmem:[%s10629] ss:$2 sm:$0xff]
      %s10631 = scalar_lea.vmem %s421, 160
      %v10632 = vld [vmem:[%s10631] ss:$2 sm:$0xff]
      %s10633 = scalar_lea.vmem %s421, 176
      %v10634 = vld [vmem:[%s10633] ss:$2 sm:$0xff]
      %s10635 = scalar_lea.vmem %s421, 192
      %v10636 = vld [vmem:[%s10635] ss:$2 sm:$0xff]
      %s10637 = scalar_lea.vmem %s421, 208
      %v10638 = vld [vmem:[%s10637] ss:$2 sm:$0xff]
      %s10639 = scalar_lea.vmem %s421, 224
      %v10640 = vld [vmem:[%s10639] ss:$2 sm:$0xff]
      %s10641 = scalar_lea.vmem %s421, 240
      %v10642 = vld [vmem:[%s10641] ss:$2 sm:$0xff]
      %s10643 = scalar_lea.vmem %s421, 1
      %v10644 = vld [vmem:[%s10643] ss:$2 sm:$0xff]
      %s10645 = scalar_lea.vmem %s421, 17
      %v10646 = vld [vmem:[%s10645] ss:$2 sm:$0xff]
      %s10647 = scalar_lea.vmem %s421, 33
      %v10648 = vld [vmem:[%s10647] ss:$2 sm:$0xff]
      %s10649 = scalar_lea.vmem %s421, 49
      %v10650 = vld [vmem:[%s10649] ss:$2 sm:$0xff]
      %s10651 = scalar_lea.vmem %s421, 65
      %v10652 = vld [vmem:[%s10651] ss:$2 sm:$0xff]
      %s10653 = scalar_lea.vmem %s421, 81
      %v10654 = vld [vmem:[%s10653] ss:$2 sm:$0xff]
      %s10655 = scalar_lea.vmem %s421, 97
      %v10656 = vld [vmem:[%s10655] ss:$2 sm:$0xff]
      %s10657 = scalar_lea.vmem %s421, 113
      %v10658 = vld [vmem:[%s10657] ss:$2 sm:$0xff]
      %s10659 = scalar_lea.vmem %s421, 129
      %v10660 = vld [vmem:[%s10659] ss:$2 sm:$0xff]
      %s10661 = scalar_lea.vmem %s421, 145
      %v10662 = vld [vmem:[%s10661] ss:$2 sm:$0xff]
      %s10663 = scalar_lea.vmem %s421, 161
      %v10664 = vld [vmem:[%s10663] ss:$2 sm:$0xff]
      %s10665 = scalar_lea.vmem %s421, 177
      %v10666 = vld [vmem:[%s10665] ss:$2 sm:$0xff]
      %s10667 = scalar_lea.vmem %s421, 193
      %v10668 = vld [vmem:[%s10667] ss:$2 sm:$0xff]
      %s10669 = scalar_lea.vmem %s421, 209
      %v10670 = vld [vmem:[%s10669] ss:$2 sm:$0xff]
      %s10671 = scalar_lea.vmem %s421, 225
      %v10672 = vld [vmem:[%s10671] ss:$2 sm:$0xff]
      %s10673 = scalar_lea.vmem %s421, 241
      %v10674 = vld [vmem:[%s10673] ss:$2 sm:$0xff]
      %v10675 = vmax.f32 %v10612, %v10644
      %v10676 = vmax.f32 %v10614, %v10646
      %v10677 = vmax.f32 %v10616, %v10648
      %v10678 = vmax.f32 %v10618, %v10650
      %v10679 = vmax.f32 %v10620, %v10652
      %v10680 = vmax.f32 %v10622, %v10654
      %v10681 = vmax.f32 %v10624, %v10656
      %v10682 = vmax.f32 %v10626, %v10658
      %v10683 = vmax.f32 %v10628, %v10660
      %v10684 = vmax.f32 %v10630, %v10662
      %v10685 = vmax.f32 %v10632, %v10664
      %v10686 = vmax.f32 %v10634, %v10666
      %v10687 = vmax.f32 %v10636, %v10668
      %v10688 = vmax.f32 %v10638, %v10670
      %v10689 = vmax.f32 %v10640, %v10672
      %v10690 = vmax.f32 %v10642, %v10674
      %10691 = vst.msk [vmem:[#allocation4] sm:$0xff] %vm948, %v10675
      %10692 = vst.msk [vmem:[#allocation4 + $0x8] sm:$0xff] %vm948, %v10676
      %10693 = vst.msk [vmem:[#allocation4 + $0x10] sm:$0xff] %vm948, %v10677
      %10694 = vst.msk [vmem:[#allocation4 + $0x18] sm:$0xff] %vm948, %v10678
      %10695 = vst.msk [vmem:[#allocation4 + $0x20] sm:$0xff] %vm948, %v10679
      %10696 = vst.msk [vmem:[#allocation4 + $0x28] sm:$0xff] %vm948, %v10680
      %10697 = vst.msk [vmem:[#allocation4 + $0x30] sm:$0xff] %vm948, %v10681
      %10698 = vst.msk [vmem:[#allocation4 + $0x38] sm:$0xff] %vm948, %v10682
      %10699 = vst.msk [vmem:[#allocation4 + $0x40] sm:$0xff] %vm948, %v10683
      %10700 = vst.msk [vmem:[#allocation4 + $0x48] sm:$0xff] %vm948, %v10684
      %10701 = vst.msk [vmem:[#allocation4 + $0x50] sm:$0xff] %vm948, %v10685
      %10702 = vst.msk [vmem:[#allocation4 + $0x58] sm:$0xff] %vm948, %v10686
      %10703 = vst.msk [vmem:[#allocation4 + $0x60] sm:$0xff] %vm948, %v10687
      %10704 = vst.msk [vmem:[#allocation4 + $0x68] sm:$0xff] %vm948, %v10688
      %10705 = vst.msk [vmem:[#allocation4 + $0x70] sm:$0xff] %vm948, %v10689
      %10706 = vst.msk [vmem:[#allocation4 + $0x78] sm:$0xff] %vm948, %v10690
      %v10707 = vld [vmem:[#allocation4] sm:$0xff]
      %v10708 = vld [vmem:[#allocation4 + $0x8] sm:$0xff]
      %v10709 = vmax.f32 %v10707, %v10708
      %10710 = vst.msk [vmem:[%s426] sm:$0xff] %vm948, %v10709
      %v10711 = vld [vmem:[#allocation4 + $0x10] sm:$0xff]
      %v10712 = vld [vmem:[#allocation4 + $0x18] sm:$0xff]
      %v10713 = vmax.f32 %v10711, %v10712
      %10714 = vst.msk [vmem:[%s426 + $0x8] sm:$0xff] %vm948, %v10713
      %v10715 = vld [vmem:[#allocation4 + $0x20] sm:$0xff]
      %v10716 = vld [vmem:[#allocation4 + $0x28] sm:$0xff]
      %v10717 = vmax.f32 %v10715, %v10716
      %10718 = vst.msk [vmem:[%s426 + $0x10] sm:$0xff] %vm948, %v10717
      %v10719 = vld [vmem:[#allocation4 + $0x30] sm:$0xff]
      %v10720 = vld [vmem:[#allocation4 + $0x38] sm:$0xff]
      %v10721 = vmax.f32 %v10719, %v10720
      %10722 = vst.msk [vmem:[%s426 + $0x18] sm:$0xff] %vm948, %v10721
      %v10723 = vld [vmem:[#allocation4 + $0x40] sm:$0xff]
      %v10724 = vld [vmem:[#allocation4 + $0x48] sm:$0xff]
      %v10725 = vmax.f32 %v10723, %v10724
      %10726 = vst.msk [vmem:[%s426 + $0x20] sm:$0xff] %vm948, %v10725
      %v10727 = vld [vmem:[#allocation4 + $0x50] sm:$0xff]
      %v10728 = vld [vmem:[#allocation4 + $0x58] sm:$0xff]
      %v10729 = vmax.f32 %v10727, %v10728
      %10730 = vst.msk [vmem:[%s426 + $0x28] sm:$0xff] %vm948, %v10729
      %v10731 = vld [vmem:[#allocation4 + $0x60] sm:$0xff]
      %v10732 = vld [vmem:[#allocation4 + $0x68] sm:$0xff]
      %v10733 = vmax.f32 %v10731, %v10732
      %10734 = vst.msk [vmem:[%s426 + $0x30] sm:$0xff] %vm948, %v10733
      %v10735 = vld [vmem:[#allocation4 + $0x70] sm:$0xff]
      %v10736 = vld [vmem:[#allocation4 + $0x78] sm:$0xff]
      %v10737 = vmax.f32 %v10735, %v10736
      %10738 = vst.msk [vmem:[%s426 + $0x38] sm:$0xff] %vm948, %v10737
      %p10739 = scmp.lt.s32.totalorder %s24, 1
      %s10740 = scalar_select %p10739, %s24, 1
      %s10741 = smul.addr %s10740, 32
      %s10742 = smul.addr %s10741, 8
      %s10743 = scalar_lea.vmem %s11, %s10742
      %p10744 = scmp.lt.s32.totalorder %s24, 1
      %s10745 = scalar_select %p10744, %s24, 1
      %s10746 = smul.addr %s10745, 8
      %s10747 = smul.addr %s10746, 8
      %s10748 = scalar_lea.vmem %s12, %s10747
      // Predicated region
      $region65: #{tpu_custom_call.1} parent=63 // pred_check
        %p10749 = pneg %p278
      $region66: #{tpu_custom_call.1} parent=63 // pred_check_branch
        %10751 = sbr.rel (%p10749) target = $region68
      $region67: #{tpu_custom_call.1} parent=63 // pred_region
        _
      $region68: #{tpu_custom_call.1} parent=63 // pred_fallthru
        _
      // Predicated region
      $region69: #{tpu_custom_call.1} parent=63 // pred_check
        %p10752 = pneg %p304
      $region70: #{tpu_custom_call.1} parent=63 // pred_check_branch
        %10754 = sbr.rel (%p10752) target = $region72
      $region71: #{tpu_custom_call.1} parent=63 // pred_region
        _
      $region72: #{tpu_custom_call.1} parent=63 // pred_fallthru
        _
    $region64: #{tpu_custom_call.1} parent=5 // pred_fallthru
      _
    %p10755 = scmp.le.s32.totalorder 2, %s19
    // Predicated region
    $region73: #{tpu_custom_call.1} parent=5 // pred_check
      %p10756 = pneg %p10755
    $region74: #{tpu_custom_call.1} parent=5 // pred_check_branch
      %10758 = sbr.rel (%p10756) target = $region76
    $region75: #{tpu_custom_call.1} parent=5 // pred_region
      %s10759 = ssub.s32 %s19, 2
      // Predicated region
      $region77: #{tpu_custom_call.1} parent=75 // pred_check
        %p10760 = pneg %p284
      $region78: #{tpu_custom_call.1} parent=75 // pred_check_branch
        %10762 = sbr.rel (%p10760) target = $region80
      $region79: #{tpu_custom_call.1} parent=75 // pred_region
        %p10763 = scmp.lt.s32.totalorder %s25, 1
        %s10764 = scalar_select %p10763, %s25, 1
        %s10765 = smul.addr %s10764, 32
        %s10766 = smul.addr %s10765, 8
        %s10767 = scalar_lea.vmem %s11, %s10766
      $region80: #{tpu_custom_call.1} parent=75 // pred_fallthru
        _
      // Predicated region
      $region81: #{tpu_custom_call.1} parent=75 // pred_check
        %p10768 = pneg %p310
      $region82: #{tpu_custom_call.1} parent=75 // pred_check_branch
        %10770 = sbr.rel (%p10768) target = $region84
      $region83: #{tpu_custom_call.1} parent=75 // pred_region
        %p10771 = scmp.lt.s32.totalorder %s25, 1
        %s10772 = scalar_select %p10771, %s25, 1
        %s10773 = smul.addr %s10772, 8
        %s10774 = smul.addr %s10773, 8
        %s10775 = scalar_lea.vmem %s12, %s10774
      $region84: #{tpu_custom_call.1} parent=75 // pred_fallthru
        _
    $region76: #{tpu_custom_call.1} parent=5 // pred_fallthru
      _
  $region6: #{tpu_custom_call.1} parent=0 // loop_footer
    %s23 = sadd.s32 1, %s19
  $region7: #{tpu_custom_call.1} parent=0 // loop_footer_branch
    %18 = sbr.rel target = $region3
  $region8: #{tpu_custom_call.1} parent=0 // loop_exit
    _

</llo_original>
